<compile_context>
chip_gen: v5e
topology: v5e:2x2
jax: 0.10.0
libtpu: 0.0.40
codegen_flags: <defaults>
</compile_context>

<pallas_src>
import functools

import numpy as np
import jax
import jax.numpy as jnp
from jax import lax
from jax.experimental import pallas as pl
from jax.experimental.pallas import tpu as pltpu

HIDDEN = 128          # self.hidden_size in the PyTorch module
NUM_LAYERS = 2        # self.num_layers
SUBLANE = 8
LANE = 128


def _round_up(x, m):
    return -(-x // m) * m


def _padded_buf_bytes(rows, cols, itemsize):
    # Conservative VMEM footprint of a 2-D buffer: rows padded to 32 sublanes
    # (covers f32 and packed bf16 tiling), cols padded to 128 lanes.
    return _round_up(max(rows, 1), 32) * _round_up(max(cols, 1), 128) * itemsize


def _vmem_limit_bytes(T, B_BLK, F_in):
    """Real budget arithmetic for the scoped-VMEM limit (per grid block)."""
    H = HIDDEN
    blocked = (_padded_buf_bytes(T * B_BLK, F_in, 2)       # input block (bf16)
               + _padded_buf_bytes(T * B_BLK, LANE, 4)     # output block (f32)
               + 2 * _padded_buf_bytes(B_BLK, LANE, 4))    # scale + shift
    weights = (_padded_buf_bytes(F_in, 4 * H, 2)           # w_ih0 (bf16)
               + _padded_buf_bytes(H, 4 * H, 2)            # w_hh0
               + _padded_buf_bytes(2 * H, 4 * H, 2)        # w1
               + _padded_buf_bytes(H, LANE, 2)             # w_head
               + 2 * _padded_buf_bytes(1, 4 * H, 4)        # b0, b1 (f32)
               + _padded_buf_bytes(1, LANE, 4))            # b_head
    scratch = (_padded_buf_bytes(T * B_BLK, 4 * H, 4)      # g0 history
               + _padded_buf_bytes(T * B_BLK, H, 4)        # h1 history
               + _padded_buf_bytes(B_BLK, 2 * H, 2))       # [h0|h1] bf16
    need = 2 * (blocked + weights) + scratch + (2 << 20)   # x2 double-buffering + headroom
    return int(min(max(need, 16 << 20), 64 << 20))         # cap at v7x physical VMEM


def _sig(x):
    # sigmoid(x) == 0.5 * tanh(0.5 * x) + 0.5 : one EUP push instead of exp+recip.
    return 0.5 * jnp.tanh(0.5 * x) + 0.5


# ----------------------------------------------------------------------------
# Pallas kernel: 2-layer LSTM recurrence + deferred distribution heads
# ----------------------------------------------------------------------------
def _deepar_kernel(inp_ref, w_ih0_ref, b0_ref, w_hh0_ref, w1_ref, b1_ref,
                   w_head_ref, b_head_ref, scale_ref, shift_ref,
                   out_ref, g0_ref, h1_ref, hcat_ref, *, T, B, c_out):
    H = HIDDEN

    # (1) Hoisted layer-0 input projection: one (T*B, F) @ (F, 4H) bf16 matmul,
    #     f32 accumulation, bias folded, written to a VMEM scratch.
    g0_ref[...] = (jnp.dot(inp_ref[...], w_ih0_ref[...],
                           preferred_element_type=jnp.float32)
                   + b0_ref[...])

    # (2) Persistent [h0 | h1] bf16 scratch (initial hidden states are zero);
    #     pre-broadcast the layer-1 bias once (JAX does not CSE broadcasts).
    hcat_ref[...] = jnp.zeros_like(hcat_ref)
    b1b = jnp.broadcast_to(b1_ref[...], (B, 4 * H))

    def step(t, carry):
        c0, c1 = carry
        row = pl.multiple_of(t * B, SUBLANE)

        # Layer 0: only the recurrent half lives on the serial path; the input
        # half was precomputed into g0_ref. h0(prev) is read straight from the
        # persistent scratch (already bf16) -> no per-step concat/copy.
        g0 = g0_ref[pl.ds(row, B), :] + jnp.dot(
            hcat_ref[:, :H], w_hh0_ref[...], preferred_element_type=jnp.float32)
        i0 = _sig(g0[:, 0 * H:1 * H])
        f0 = _sig(g0[:, 1 * H:2 * H])
        n0 = jnp.tanh(g0[:, 2 * H:3 * H])
        o0 = _sig(g0[:, 3 * H:4 * H])
        c0 = f0 * c0 + i0 * n0
        h0 = o0 * jnp.tanh(c0)
        hcat_ref[:, :H] = h0.astype(jnp.bfloat16)

        # Layer 1: input + recurrent matmuls fused -> one MXU push per step,
        # fed directly from the [h0(new) | h1(prev)] scratch.
        g1 = jnp.dot(hcat_ref[...], w1_ref[...],
                     preferred_element_type=jnp.float32) + b1b
        i1 = _sig(g1[:, 0 * H:1 * H])
        f1 = _sig(g1[:, 1 * H:2 * H])
        n1 = jnp.tanh(g1[:, 2 * H:3 * H])
        o1 = _sig(g1[:, 3 * H:4 * H])
        c1 = f1 * c1 + i1 * n1
        h1 = o1 * jnp.tanh(c1)
        hcat_ref[:, H:] = h1.astype(jnp.bfloat16)

        # (3) Only the hidden state (lane-dense H = 128) is stored per step;
        #     heads + de-normalization are deferred to one post-loop pass.
        h1_ref[pl.ds(row, B), :] = h1
        return (c0, c1)

    z = jnp.zeros((B, H), jnp.float32)
    # (4) Full unroll for short recurrences, capped unroll for long ones.
    lax.fori_loop(0, T, step, (z, z), unroll=(True if T <= 16 else 8))

    # (5) Deferred heads: one (T*B, H) @ (H, 128) bf16 matmul (mean|sigma|pad
    #     lanes fused, lane-dense), softplus on the sigma lanes,
    #     de-normalization, single bulk (T, B, 128) output store.
    head = (jnp.dot(h1_ref[...].astype(jnp.bfloat16), w_head_ref[...],
                    preferred_element_type=jnp.float32)
            + b_head_ref[...])
    col = lax.broadcasted_iota(jnp.int32, head.shape, 1)
    proc = jnp.where(col < c_out, head, jax.nn.softplus(head))
    out_ref[...] = (proc.reshape(T, B, LANE) * scale_ref[...][None, :, :]
                    + shift_ref[...][None, :, :])


def run_lstm_kernel(inp_blk, fused, scale_blk, shift_blk, T, B_BLK, nB, c_out):
    H = HIDDEN
    F_in = inp_blk.shape[-1]

    def _full2d(arr):
        return pl.BlockSpec(arr.shape, lambda i: (0, 0))

    in_specs = [
        pl.BlockSpec((None, T * B_BLK, F_in), lambda i: (i, 0, 0)),   # input block
        _full2d(fused["w_ih0"]), _full2d(fused["b0"]), _full2d(fused["w_hh0"]),
        _full2d(fused["w1"]), _full2d(fused["b1"]),
        _full2d(fused["w_head"]), _full2d(fused["b_head"]),
        pl.BlockSpec((None, B_BLK, LANE), lambda i: (i, 0, 0)),       # scale
        pl.BlockSpec((None, B_BLK, LANE), lambda i: (i, 0, 0)),       # shift
    ]
    out_specs = pl.BlockSpec((None, T, B_BLK, LANE), lambda i: (i, 0, 0, 0))

    kernel = functools.partial(_deepar_kernel, T=T, B=B_BLK, c_out=c_out)
    out4 = pl.pallas_call(
        kernel,
        out_shape=jax.ShapeDtypeStruct((nB, T, B_BLK, LANE), jnp.float32),
        grid=(nB,),
        in_specs=in_specs,
        out_specs=out_specs,
        scratch_shapes=[pltpu.VMEM((T * B_BLK, 4 * H), jnp.float32),   # g0 history
                        pltpu.VMEM((T * B_BLK, H), jnp.float32),       # h1 history
                        pltpu.VMEM((B_BLK, 2 * H), jnp.bfloat16)],     # [h0|h1]
        compiler_params=pltpu.CompilerParams(
            dimension_semantics=("parallel",),
            vmem_limit_bytes=_vmem_limit_bytes(T, B_BLK, F_in)),
    )(inp_blk,
      fused["w_ih0"], fused["b0"], fused["w_hh0"],
      fused["w1"], fused["b1"],
      fused["w_head"], fused["b_head"],
      scale_blk, shift_blk)
    return out4


# ----------------------------------------------------------------------------
# Glue: embeddings, normalization, teacher-forced input construction
# ----------------------------------------------------------------------------
def get_embeddings(given_enc, meta_x, time_tables, meta_tables, time_cat, meta_cat):
    time_cat_list = [time_tables[i][given_enc[:, :, -time_cat + i].astype(jnp.int32)]
                     for i in range(time_cat)]
    given_enc_embed = jnp.concatenate(
        [given_enc[:, :, :-time_cat]] + time_cat_list, axis=-1)
    meta_cat_list = [meta_tables[i][meta_x[:, -meta_cat + i].astype(jnp.int32)]
                     for i in range(meta_cat)]
    meta_x_embed = jnp.concatenate(
        [meta_x[:, :-meta_cat]] + meta_cat_list, axis=-1)
    return given_enc_embed, meta_x_embed


def deepar_as_forward(given_enc, x_enc, x_mark_enc, meta_x, params, cfg):
    """Training-mode forward: returns cat([means, sigmas], dim=-1)."""
    seq_len, pred_len = cfg["seq_len"], cfg["pred_len"]
    T = seq_len + pred_len
    c_out = cfg["tgt_num"]
    assert 2 * c_out <= LANE, "head padding assumes 2*c_out <= 128"
    B = x_enc.shape[0]

    given_enc_embed, meta_x_embed = get_embeddings(
        given_enc, meta_x, params["time_tables"], params["meta_tables"],
        cfg["time_cat"], cfg["meta_cat"])

    # use_norm=True instance normalization (matches torch: var unbiased=False)
    norm_mean = jnp.mean(x_enc, axis=1, keepdims=True)
    x_n = x_enc - norm_mean
    norm_std = jnp.sqrt(jnp.var(x_n, axis=1, keepdims=True) + 1e-5)
    x_n = x_n / norm_std

    # Teacher forcing (is_train=True). Matches PyTorch exactly:
    #   t == 0 : prev_y = x_n[:, 0]
    #   t  > 0 : prev_y = x_n[:, min(t-1, seq_len-1)]
    idx = np.array([0] + [min(t - 1, seq_len - 1) for t in range(1, T)],
                   dtype=np.int32)
    prev_ys = x_n[:, idx, :]                                   # (B, T, tgt_num)

    meta_bcast = jnp.broadcast_to(meta_x_embed[:, None, :],
                                  (B, T, meta_x_embed.shape[-1]))
    inp = jnp.concatenate([prev_ys, given_enc_embed, x_mark_enc, meta_bcast],
                          axis=-1).astype(jnp.float32)         # (B, T, F)
    F_in = inp.shape[-1]

    # Batch blocking: grid over batch blocks (parallel on v7x megacore), pad to
    # a multiple of 8 sublanes so every (B_BLK, .) tile uses full vregs.
    B_BLK = min(64, _round_up(B, SUBLANE))
    B_pad = _round_up(B, B_BLK)
    nB = B_pad // B_BLK
    pad = B_pad - B

    inp_p = jnp.pad(inp, ((0, pad), (0, 0), (0, 0))) if pad else inp
    # (B_pad, T, F) -> (nB, T*B_BLK, F): time-major inside each batch block.
    inp_blk = (inp_p.reshape(nB, B_BLK, T, F_in)
               .transpose(0, 2, 1, 3)
               .reshape(nB, T * B_BLK, F_in)
               .astype(jnp.bfloat16))

    # Lane-dense (128-wide) de-normalization scale/shift, one row per batch
    # element (no T-fold tiling in HBM; broadcast happens in the kernel).
    nm = norm_mean[:, 0, :]                                    # (B, c_out)
    ns = norm_std[:, 0, :]
    if pad:
        nm = jnp.pad(nm, ((0, pad), (0, 0)))
        ns = jnp.pad(ns, ((0, pad), (0, 0)))
    scale = jnp.zeros((B_pad, LANE), jnp.float32)
    scale = scale.at[:, :c_out].set(ns).at[:, c_out:2 * c_out].set(ns)
    shift = jnp.zeros((B_pad, LANE), jnp.float32).at[:, :c_out].set(nm)
    scale_blk = scale.reshape(nB, B_BLK, LANE)
    shift_blk = shift.reshape(nB, B_BLK, LANE)

    # Fused weights: bf16 matmul operands, f32 biases; head padded to 128 lanes.
    w_head = jnp.zeros((HIDDEN, LANE), jnp.float32)
    w_head = (w_head.at[:, :c_out].set(params["wm"])
              .at[:, c_out:2 * c_out].set(params["ws"]))
    b_head = jnp.zeros((1, LANE), jnp.float32)
    b_head = (b_head.at[:, :c_out].set(params["bm"])
              .at[:, c_out:2 * c_out].set(params["bs"]))
    fused = {
        "w_ih0": params["w_ih0"].astype(jnp.bfloat16),
        "b0": params["b0"],
        "w_hh0": params["w_hh0"].astype(jnp.bfloat16),
        "w1": jnp.concatenate([params["w_ih1"], params["w_hh1"]],
                              axis=0).astype(jnp.bfloat16),
        "b1": params["b1"],
        "w_head": w_head.astype(jnp.bfloat16),
        "b_head": b_head,
    }

    out4 = run_lstm_kernel(inp_blk, fused, scale_blk, shift_blk,
                           T, B_BLK, nB, c_out)                # (nB, T, B_BLK, 128)
    out = (out4.transpose(0, 2, 1, 3)
           .reshape(B_pad, T, LANE)[:B, :, :2 * c_out])        # (B, T, 2*c_out)
    return out


# ----------------------------------------------------------------------------
# Pure-JAX f32 reference (same math, unfused weights) for a correctness check
# ----------------------------------------------------------------------------
def reference_lstm(inp_tm, params, norm_mean, norm_std):
    H = HIDDEN

    def cell(x, h, c, w_ih, w_hh, b):
        g = x @ w_ih + h @ w_hh + b
        i = jax.nn.sigmoid(g[:, 0 * H:1 * H])
        f = jax.nn.sigmoid(g[:, 1 * H:2 * H])
        gg = jnp.tanh(g[:, 2 * H:3 * H])
        o = jax.nn.sigmoid(g[:, 3 * H:4 * H])
        c_new = f * c + i * gg
        return o * jnp.tanh(c_new), c_new

    def step(carry, x_t):
        h0, c0, h1, c1 = carry
        h0, c0 = cell(x_t, h0, c0, params["w_ih0"], params["w_hh0"], params["b0"])
        h1, c1 = cell(h0, h1, c1, params["w_ih1"], params["w_hh1"], params["b1"])
        mean_t = h1 @ params["wm"] + params["bm"]
        sig_t = jax.nn.softplus(h1 @ params["ws"] + params["bs"])
        return (h0, c0, h1, c1), (mean_t * norm_std + norm_mean, sig_t * norm_std)

    B = inp_tm.shape[1]
    z = jnp.zeros((B, H), jnp.float32)
    _, (means_tm, sigmas_tm) = lax.scan(step, (z, z, z, z), inp_tm)
    return means_tm, sigmas_tm


# ----------------------------------------------------------------------------
# Parameter init + demo
# ----------------------------------------------------------------------------
def init_params(cfg, key):
    H = HIDDEN
    c_out = cfg["tgt_num"]
    input_size = cfg["input_size"]
    k = 1.0 / np.sqrt(H)
    keys = jax.random.split(key, 16)

    def unif(kk, shape):
        return jax.random.uniform(kk, shape, jnp.float32, -k, k)

    params = {
        # LSTM weights, pre-transposed to (in, 4H); biases b_ih + b_hh merged.
        "w_ih0": unif(keys[0], (input_size, 4 * H)),
        "w_hh0": unif(keys[1], (H, 4 * H)),
        "b0":    unif(keys[2], (1, 4 * H)) + unif(keys[3], (1, 4 * H)),
        "w_ih1": unif(keys[4], (H, 4 * H)),
        "w_hh1": unif(keys[5], (H, 4 * H)),
        "b1":    unif(keys[6], (1, 4 * H)) + unif(keys[7], (1, 4 * H)),
        "wm": unif(keys[8], (H, c_out)),
        "bm": unif(keys[9], (1, c_out)),
        "ws": unif(keys[10], (H, c_out)),
        "bs": unif(keys[11], (1, c_out)),
        "time_tables": [jax.random.normal(keys[12 + i],
                                          (cfg["time_num_class"][i],
                                           cfg["time_cat_embed"][i]), jnp.float32)
                        for i in range(cfg["time_cat"])],
        "meta_tables": [jax.random.normal(keys[14 + i],
                                          (cfg["meta_num_class"][i],
                                           cfg["meta_cat_embed"][i]), jnp.float32)
                        for i in range(cfg["meta_cat"])],
    }
    return params


if __name__ == "__main__":
    # Small config consistent with the module's __init__.
    cfg = dict(
        seq_len=8, pred_len=4,
        time_num=2, time_cat=2, time_num_class=[5, 7], time_cat_embed=[3, 4],
        meta_num=1, meta_cat=1, meta_num_class=[6], meta_cat_embed=[2],
        tgt_num=2, time_cov_size=3,
    )
    cfg["input_size"] = (cfg["tgt_num"]
                         + cfg["time_num"] + sum(cfg["time_cat_embed"])
                         + cfg["time_cov_size"]
                         + cfg["meta_num"] + sum(cfg["meta_cat_embed"]))   # 17
    B = 2
    T = cfg["seq_len"] + cfg["pred_len"]                                   # 12

    key = jax.random.PRNGKey(0)
    kp, k1, k2, k3, k4, k5, k6 = jax.random.split(key, 7)
    params = init_params(cfg, kp)

    # given_enc: (B, T, time_num + time_cat); last time_cat cols are category ids.
    given_num = jax.random.normal(k1, (B, T, cfg["time_num"]), jnp.float32)
    given_cat = jnp.stack(
        [jax.random.randint(k2, (B, T), 0, cfg["time_num_class"][0]),
         jax.random.randint(k3, (B, T), 0, cfg["time_num_class"][1])],
        axis=-1).astype(jnp.float32)
    given_enc = jnp.concatenate([given_num, given_cat], axis=-1)           # (2,12,4)

    x_enc = jax.random.normal(k4, (B, T, cfg["tgt_num"]), jnp.float32)     # (2,12,2)
    x_mark_enc = jax.random.normal(k5, (B, T, cfg["time_cov_size"]),
                                   jnp.float32)                            # (2,12,3)
    meta_num_feat = jax.random.normal(k6, (B, cfg["meta_num"]), jnp.float32)
    meta_cat_feat = jax.random.randint(k2, (B, cfg["meta_cat"]), 0,
                                       cfg["meta_num_class"][0]).astype(jnp.float32)
    meta_x = jnp.concatenate([meta_num_feat, meta_cat_feat], axis=-1)      # (2,2)

    out = deepar_as_forward(given_enc, x_enc, x_mark_enc, meta_x, params, cfg)
    out = jax.block_until_ready(out)
    assert out.shape == (B, T, 2 * cfg["tgt_num"]), out.shape

    # Correctness check against a pure-JAX f32 reference of the same recurrence
    # (kernel uses bf16 matmul operands with f32 accumulation; for these shapes
    # the compounded error stays well within the 5e-3 tolerance).
    given_enc_embed, meta_x_embed = get_embeddings(
        given_enc, meta_x, params["time_tables"], params["meta_tables"],
        cfg["time_cat"], cfg["meta_cat"])
    norm_mean = jnp.mean(x_enc, axis=1, keepdims=True)
    x_n = x_enc - norm_mean
    norm_std = jnp.sqrt(jnp.var(x_n, axis=1, keepdims=True) + 1e-5)
    x_n = x_n / norm_std
    idx = np.array([0] + [min(t - 1, cfg["seq_len"] - 1) for t in range(1, T)],
                   dtype=np.int32)
    inp = jnp.concatenate(
        [x_n[:, idx, :], given_enc_embed, x_mark_enc,
         jnp.broadcast_to(meta_x_embed[:, None, :],
                          (B, T, meta_x_embed.shape[-1]))], axis=-1)
    inp_tm = jnp.transpose(inp, (1, 0, 2)).astype(jnp.float32)
    m_ref, s_ref = reference_lstm(inp_tm, params,
                                  norm_mean[:, 0, :], norm_std[:, 0, :])
    ref = jnp.concatenate([jnp.transpose(m_ref, (1, 0, 2)),
                           jnp.transpose(s_ref, (1, 0, 2))], axis=-1)
    np.testing.assert_allclose(np.asarray(out), np.asarray(ref),
                               rtol=5e-3, atol=5e-3)

    print("KERNEL_OK")
</pallas_src>

<mosaic_0001>
module attributes {stable_mosaic.version = 11 : i64} {
  func.func @_deepar_kernel(%arg0: i32, %arg1: memref<1x96x17xbf16, #tpu.memory_space<vmem>>, %arg2: memref<17x512xbf16, #tpu.memory_space<vmem>>, %arg3: memref<1x512xf32, #tpu.memory_space<vmem>>, %arg4: memref<128x512xbf16, #tpu.memory_space<vmem>>, %arg5: memref<256x512xbf16, #tpu.memory_space<vmem>>, %arg6: memref<1x512xf32, #tpu.memory_space<vmem>>, %arg7: memref<128x128xbf16, #tpu.memory_space<vmem>>, %arg8: memref<1x128xf32, #tpu.memory_space<vmem>>, %arg9: memref<1x8x128xf32, #tpu.memory_space<vmem>>, %arg10: memref<1x8x128xf32, #tpu.memory_space<vmem>>, %arg11: memref<1x12x8x128xf32, #tpu.memory_space<vmem>>, %arg12: memref<96x512xf32, #tpu.memory_space<vmem>>, %arg13: memref<96x128xf32, #tpu.memory_space<vmem>>, %arg14: memref<8x256xbf16, #tpu.memory_space<vmem>>) attributes {dimension_semantics = [#tpu.dimension_semantics<parallel>], iteration_bounds = array<i64: 1>, scalar_prefetch = 0 : i64, scratch_operands = 3 : i64, tpu.core_type = #tpu.core_type<tc>, window_params = [{transform_indices = @transform_0, window_bounds = array<i64: 1, 96, 17>}, {pipeline_mode = #tpu.pipeline_mode<synchronous>, transform_indices = @transform_1, window_bounds = array<i64: 17, 512>}, {pipeline_mode = #tpu.pipeline_mode<synchronous>, transform_indices = @transform_2, window_bounds = array<i64: 1, 512>}, {pipeline_mode = #tpu.pipeline_mode<synchronous>, transform_indices = @transform_3, window_bounds = array<i64: 128, 512>}, {pipeline_mode = #tpu.pipeline_mode<synchronous>, transform_indices = @transform_4, window_bounds = array<i64: 256, 512>}, {pipeline_mode = #tpu.pipeline_mode<synchronous>, transform_indices = @transform_5, window_bounds = array<i64: 1, 512>}, {pipeline_mode = #tpu.pipeline_mode<synchronous>, transform_indices = @transform_6, window_bounds = array<i64: 128, 128>}, {pipeline_mode = #tpu.pipeline_mode<synchronous>, transform_indices = @transform_7, window_bounds = array<i64: 1, 128>}, {transform_indices = @transform_8, window_bounds = array<i64: 1, 8, 128>}, {transform_indices = @transform_9, window_bounds = array<i64: 1, 8, 128>}, {transform_indices = @transform_10, window_bounds = array<i64: 1, 12, 8, 128>}]} {
    %c0 = arith.constant 0 : index
    %c0_0 = arith.constant 0 : index
    %c0_1 = arith.constant 0 : index
    %0 = vector.load %arg1[%c0, %c0_0, %c0_1] : memref<1x96x17xbf16, #tpu.memory_space<vmem>>, vector<1x96x17xbf16>
    %1 = vector.shape_cast %0 : vector<1x96x17xbf16> to vector<96x17xbf16>
    %c0_2 = arith.constant 0 : index
    %c0_3 = arith.constant 0 : index
    %2 = vector.load %arg2[%c0_2, %c0_3] : memref<17x512xbf16, #tpu.memory_space<vmem>>, vector<17x512xbf16>
    %cst = arith.constant dense<0.000000e+00> : vector<96x512xf32>
    %3 = tpu.matmul %1, %2, %cst {dimension_numbers = #tpu.dot_dimension_numbers<[1], [0], [0], [1], [0, 0, 1, 1], [], []>} : vector<96x17xbf16>, vector<17x512xbf16>, vector<96x512xf32> -> vector<96x512xf32>
    %c0_4 = arith.constant 0 : index
    %c0_5 = arith.constant 0 : index
    %4 = vector.load %arg3[%c0_4, %c0_5] : memref<1x512xf32, #tpu.memory_space<vmem>>, vector<1x512xf32>
    %5 = vector.broadcast %4 : vector<1x512xf32> to vector<96x512xf32>
    %6 = arith.addf %3, %5 : vector<96x512xf32>
    %c0_6 = arith.constant 0 : index
    %c0_7 = arith.constant 0 : index
    %7 = vector.load %arg12[%c0_6, %c0_7] : memref<96x512xf32, #tpu.memory_space<vmem>>, vector<96x512xf32>
    tpu.vector_store %arg12[%c0_6, %c0_7], %6 {strides = array<i32>} : memref<96x512xf32, #tpu.memory_space<vmem>>, vector<96x512xf32>,
    %cst_8 = arith.constant 0.000000e+00 : bf16
    %8 = vector.broadcast %cst_8 : bf16 to vector<8x256xbf16>
    %c0_9 = arith.constant 0 : index
    %c0_10 = arith.constant 0 : index
    %9 = vector.load %arg14[%c0_9, %c0_10] : memref<8x256xbf16, #tpu.memory_space<vmem>>, vector<8x256xbf16>
    tpu.vector_store %arg14[%c0_9, %c0_10], %8 {strides = array<i32>} : memref<8x256xbf16, #tpu.memory_space<vmem>>, vector<8x256xbf16>,
    %c0_11 = arith.constant 0 : index
    %c0_12 = arith.constant 0 : index
    %10 = vector.load %arg6[%c0_11, %c0_12] : memref<1x512xf32, #tpu.memory_space<vmem>>, vector<1x512xf32>
    %11 = vector.shape_cast %10 : vector<1x512xf32> to vector<1x512xf32>
    %12 = vector.broadcast %11 : vector<1x512xf32> to vector<8x512xf32>
    %cst_13 = arith.constant 0.000000e+00 : f32
    %13 = vector.broadcast %cst_13 : f32 to vector<8x128xf32>
    %c0_i32 = arith.constant 0 : i32
    %c8_i32 = arith.constant 8 : i32
    %14 = arith.muli %c0_i32, %c8_i32 : i32
    %15 = tpu.assume_multiple %14, 8 : i32
    %16 = arith.index_cast %15 : i32 to index
    %c0_14 = arith.constant 0 : index
    %17 = vector.load %arg12[%16, %c0_14] : memref<96x512xf32, #tpu.memory_space<vmem>>, vector<8x512xf32>
    %c0_15 = arith.constant 0 : index
    %c0_16 = arith.constant 0 : index
    %18 = vector.load %arg14[%c0_15, %c0_16] : memref<8x256xbf16, #tpu.memory_space<vmem>>, vector<8x128xbf16>
    %c0_17 = arith.constant 0 : index
    %c0_18 = arith.constant 0 : index
    %19 = vector.load %arg4[%c0_17, %c0_18] : memref<128x512xbf16, #tpu.memory_space<vmem>>, vector<128x512xbf16>
    %cst_19 = arith.constant dense<0.000000e+00> : vector<8x512xf32>
    %20 = tpu.matmul %18, %19, %cst_19 {dimension_numbers = #tpu.dot_dimension_numbers<[1], [0], [0], [1], [0, 0, 1, 1], [], []>} : vector<8x128xbf16>, vector<128x512xbf16>, vector<8x512xf32> -> vector<8x512xf32>
    %21 = arith.addf %17, %20 : vector<8x512xf32>
    %22 = vector.extract_strided_slice %21 {offsets = [0, 0], sizes = [8, 128], strides = [1, 1]} : vector<8x512xf32> to vector<8x128xf32>
    %cst_20 = arith.constant 5.000000e-01 : f32
    %23 = vector.broadcast %cst_20 : f32 to vector<8x128xf32>
    %24 = arith.mulf %23, %22 : vector<8x128xf32>
    %25 = math.tanh %24 : vector<8x128xf32>
    %cst_21 = arith.constant 5.000000e-01 : f32
    %26 = vector.broadcast %cst_21 : f32 to vector<8x128xf32>
    %27 = arith.mulf %26, %25 : vector<8x128xf32>
    %cst_22 = arith.constant 5.000000e-01 : f32
    %28 = vector.broadcast %cst_22 : f32 to vector<8x128xf32>
    %29 = arith.addf %27, %28 : vector<8x128xf32>
    %30 = vector.extract_strided_slice %21 {offsets = [0, 128], sizes = [8, 128], strides = [1, 1]} : vector<8x512xf32> to vector<8x128xf32>
    %cst_23 = arith.constant 5.000000e-01 : f32
    %31 = vector.broadcast %cst_23 : f32 to vector<8x128xf32>
    %32 = arith.mulf %31, %30 : vector<8x128xf32>
    %33 = math.tanh %32 : vector<8x128xf32>
    %cst_24 = arith.constant 5.000000e-01 : f32
    %34 = vector.broadcast %cst_24 : f32 to vector<8x128xf32>
    %35 = arith.mulf %34, %33 : vector<8x128xf32>
    %cst_25 = arith.constant 5.000000e-01 : f32
    %36 = vector.broadcast %cst_25 : f32 to vector<8x128xf32>
    %37 = arith.addf %35, %36 : vector<8x128xf32>
    %38 = vector.extract_strided_slice %21 {offsets = [0, 256], sizes = [8, 128], strides = [1, 1]} : vector<8x512xf32> to vector<8x128xf32>
    %39 = math.tanh %38 : vector<8x128xf32>
    %40 = vector.extract_strided_slice %21 {offsets = [0, 384], sizes = [8, 128], strides = [1, 1]} : vector<8x512xf32> to vector<8x128xf32>
    %cst_26 = arith.constant 5.000000e-01 : f32
    %41 = vector.broadcast %cst_26 : f32 to vector<8x128xf32>
    %42 = arith.mulf %41, %40 : vector<8x128xf32>
    %43 = math.tanh %42 : vector<8x128xf32>
    %cst_27 = arith.constant 5.000000e-01 : f32
    %44 = vector.broadcast %cst_27 : f32 to vector<8x128xf32>
    %45 = arith.mulf %44, %43 : vector<8x128xf32>
    %cst_28 = arith.constant 5.000000e-01 : f32
    %46 = vector.broadcast %cst_28 : f32 to vector<8x128xf32>
    %47 = arith.addf %45, %46 : vector<8x128xf32>
    %48 = arith.mulf %37, %13 : vector<8x128xf32>
    %49 = arith.mulf %29, %39 : vector<8x128xf32>
    %50 = arith.addf %48, %49 : vector<8x128xf32>
    %51 = math.tanh %50 : vector<8x128xf32>
    %52 = arith.mulf %47, %51 : vector<8x128xf32>
    %53 = arith.truncf %52 : vector<8x128xf32> to vector<8x128xbf16>
    %c0_29 = arith.constant 0 : index
    %c0_30 = arith.constant 0 : index
    %54 = vector.load %arg14[%c0_29, %c0_30] : memref<8x256xbf16, #tpu.memory_space<vmem>>, vector<8x128xbf16>
    tpu.vector_store %arg14[%c0_29, %c0_30], %53 {strides = array<i32>} : memref<8x256xbf16, #tpu.memory_space<vmem>>, vector<8x128xbf16>,
    %c0_31 = arith.constant 0 : index
    %c0_32 = arith.constant 0 : index
    %55 = vector.load %arg14[%c0_31, %c0_32] : memref<8x256xbf16, #tpu.memory_space<vmem>>, vector<8x256xbf16>
    %c0_33 = arith.constant 0 : index
    %c0_34 = arith.constant 0 : index
    %56 = vector.load %arg5[%c0_33, %c0_34] : memref<256x512xbf16, #tpu.memory_space<vmem>>, vector<256x512xbf16>
    %cst_35 = arith.constant dense<0.000000e+00> : vector<8x512xf32>
    %57 = tpu.matmul %55, %56, %cst_35 {dimension_numbers = #tpu.dot_dimension_numbers<[1], [0], [0], [1], [0, 0, 1, 1], [], []>} : vector<8x256xbf16>, vector<256x512xbf16>, vector<8x512xf32> -> vector<8x512xf32>
    %58 = arith.addf %57, %12 : vector<8x512xf32>
    %59 = vector.extract_strided_slice %58 {offsets = [0, 0], sizes = [8, 128], strides = [1, 1]} : vector<8x512xf32> to vector<8x128xf32>
    %cst_36 = arith.constant 5.000000e-01 : f32
    %60 = vector.broadcast %cst_36 : f32 to vector<8x128xf32>
    %61 = arith.mulf %60, %59 : vector<8x128xf32>
    %62 = math.tanh %61 : vector<8x128xf32>
    %cst_37 = arith.constant 5.000000e-01 : f32
    %63 = vector.broadcast %cst_37 : f32 to vector<8x128xf32>
    %64 = arith.mulf %63, %62 : vector<8x128xf32>
    %cst_38 = arith.constant 5.000000e-01 : f32
    %65 = vector.broadcast %cst_38 : f32 to vector<8x128xf32>
    %66 = arith.addf %64, %65 : vector<8x128xf32>
    %67 = vector.extract_strided_slice %58 {offsets = [0, 128], sizes = [8, 128], strides = [1, 1]} : vector<8x512xf32> to vector<8x128xf32>
    %cst_39 = arith.constant 5.000000e-01 : f32
    %68 = vector.broadcast %cst_39 : f32 to vector<8x128xf32>
    %69 = arith.mulf %68, %67 : vector<8x128xf32>
    %70 = math.tanh %69 : vector<8x128xf32>
    %cst_40 = arith.constant 5.000000e-01 : f32
    %71 = vector.broadcast %cst_40 : f32 to vector<8x128xf32>
    %72 = arith.mulf %71, %70 : vector<8x128xf32>
    %cst_41 = arith.constant 5.000000e-01 : f32
    %73 = vector.broadcast %cst_41 : f32 to vector<8x128xf32>
    %74 = arith.addf %72, %73 : vector<8x128xf32>
    %75 = vector.extract_strided_slice %58 {offsets = [0, 256], sizes = [8, 128], strides = [1, 1]} : vector<8x512xf32> to vector<8x128xf32>
    %76 = math.tanh %75 : vector<8x128xf32>
    %77 = vector.extract_strided_slice %58 {offsets = [0, 384], sizes = [8, 128], strides = [1, 1]} : vector<8x512xf32> to vector<8x128xf32>
    %cst_42 = arith.constant 5.000000e-01 : f32
    %78 = vector.broadcast %cst_42 : f32 to vector<8x128xf32>
    %79 = arith.mulf %78, %77 : vector<8x128xf32>
    %80 = math.tanh %79 : vector<8x128xf32>
    %cst_43 = arith.constant 5.000000e-01 : f32
    %81 = vector.broadcast %cst_43 : f32 to vector<8x128xf32>
    %82 = arith.mulf %81, %80 : vector<8x128xf32>
    %cst_44 = arith.constant 5.000000e-01 : f32
    %83 = vector.broadcast %cst_44 : f32 to vector<8x128xf32>
    %84 = arith.addf %82, %83 : vector<8x128xf32>
    %85 = arith.mulf %74, %13 : vector<8x128xf32>
    %86 = arith.mulf %66, %76 : vector<8x128xf32>
    %87 = arith.addf %85, %86 : vector<8x128xf32>
    %88 = math.tanh %87 : vector<8x128xf32>
    %89 = arith.mulf %84, %88 : vector<8x128xf32>
    %90 = arith.truncf %89 : vector<8x128xf32> to vector<8x128xbf16>
    %c0_45 = arith.constant 0 : index
    %c128 = arith.constant 128 : index
    %91 = vector.load %arg14[%c0_45, %c128] : memref<8x256xbf16, #tpu.memory_space<vmem>>, vector<8x128xbf16>
    tpu.vector_store %arg14[%c0_45, %c128], %90 {strides = array<i32>} : memref<8x256xbf16, #tpu.memory_space<vmem>>, vector<8x128xbf16>,
    %92 = arith.index_cast %15 : i32 to index
    %c0_46 = arith.constant 0 : index
    %93 = vector.load %arg13[%92, %c0_46] : memref<96x128xf32, #tpu.memory_space<vmem>>, vector<8x128xf32>
    tpu.vector_store %arg13[%92, %c0_46], %89 {strides = array<i32>} : memref<96x128xf32, #tpu.memory_space<vmem>>, vector<8x128xf32>,
    %c1_i32 = arith.constant 1 : i32
    %c8_i32_47 = arith.constant 8 : i32
    %94 = arith.muli %c1_i32, %c8_i32_47 : i32
    %95 = tpu.assume_multiple %94, 8 : i32
    %96 = arith.index_cast %95 : i32 to index
    %c0_48 = arith.constant 0 : index
    %97 = vector.load %arg12[%96, %c0_48] : memref<96x512xf32, #tpu.memory_space<vmem>>, vector<8x512xf32>
    %c0_49 = arith.constant 0 : index
    %c0_50 = arith.constant 0 : index
    %98 = vector.load %arg14[%c0_49, %c0_50] : memref<8x256xbf16, #tpu.memory_space<vmem>>, vector<8x128xbf16>
    %c0_51 = arith.constant 0 : index
    %c0_52 = arith.constant 0 : index
    %99 = vector.load %arg4[%c0_51, %c0_52] : memref<128x512xbf16, #tpu.memory_space<vmem>>, vector<128x512xbf16>
    %cst_53 = arith.constant dense<0.000000e+00> : vector<8x512xf32>
    %100 = tpu.matmul %98, %99, %cst_53 {dimension_numbers = #tpu.dot_dimension_numbers<[1], [0], [0], [1], [0, 0, 1, 1], [], []>} : vector<8x128xbf16>, vector<128x512xbf16>, vector<8x512xf32> -> vector<8x512xf32>
    %101 = arith.addf %97, %100 : vector<8x512xf32>
    %102 = vector.extract_strided_slice %101 {offsets = [0, 0], sizes = [8, 128], strides = [1, 1]} : vector<8x512xf32> to vector<8x128xf32>
    %cst_54 = arith.constant 5.000000e-01 : f32
    %103 = vector.broadcast %cst_54 : f32 to vector<8x128xf32>
    %104 = arith.mulf %103, %102 : vector<8x128xf32>
    %105 = math.tanh %104 : vector<8x128xf32>
    %cst_55 = arith.constant 5.000000e-01 : f32
    %106 = vector.broadcast %cst_55 : f32 to vector<8x128xf32>
    %107 = arith.mulf %106, %105 : vector<8x128xf32>
    %cst_56 = arith.constant 5.000000e-01 : f32
    %108 = vector.broadcast %cst_56 : f32 to vector<8x128xf32>
    %109 = arith.addf %107, %108 : vector<8x128xf32>
    %110 = vector.extract_strided_slice %101 {offsets = [0, 128], sizes = [8, 128], strides = [1, 1]} : vector<8x512xf32> to vector<8x128xf32>
    %cst_57 = arith.constant 5.000000e-01 : f32
    %111 = vector.broadcast %cst_57 : f32 to vector<8x128xf32>
    %112 = arith.mulf %111, %110 : vector<8x128xf32>
    %113 = math.tanh %112 : vector<8x128xf32>
    %cst_58 = arith.constant 5.000000e-01 : f32
    %114 = vector.broadcast %cst_58 : f32 to vector<8x128xf32>
    %115 = arith.mulf %114, %113 : vector<8x128xf32>
    %cst_59 = arith.constant 5.000000e-01 : f32
    %116 = vector.broadcast %cst_59 : f32 to vector<8x128xf32>
    %117 = arith.addf %115, %116 : vector<8x128xf32>
    %118 = vector.extract_strided_slice %101 {offsets = [0, 256], sizes = [8, 128], strides = [1, 1]} : vector<8x512xf32> to vector<8x128xf32>
    %119 = math.tanh %118 : vector<8x128xf32>
    %120 = vector.extract_strided_slice %101 {offsets = [0, 384], sizes = [8, 128], strides = [1, 1]} : vector<8x512xf32> to vector<8x128xf32>
    %cst_60 = arith.constant 5.000000e-01 : f32
    %121 = vector.broadcast %cst_60 : f32 to vector<8x128xf32>
    %122 = arith.mulf %121, %120 : vector<8x128xf32>
    %123 = math.tanh %122 : vector<8x128xf32>
    %cst_61 = arith.constant 5.000000e-01 : f32
    %124 = vector.broadcast %cst_61 : f32 to vector<8x128xf32>
    %125 = arith.mulf %124, %123 : vector<8x128xf32>
    %cst_62 = arith.constant 5.000000e-01 : f32
    %126 = vector.broadcast %cst_62 : f32 to vector<8x128xf32>
    %127 = arith.addf %125, %126 : vector<8x128xf32>
    %128 = arith.mulf %117, %50 : vector<8x128xf32>
    %129 = arith.mulf %109, %119 : vector<8x128xf32>
    %130 = arith.addf %128, %129 : vector<8x128xf32>
    %131 = math.tanh %130 : vector<8x128xf32>
    %132 = arith.mulf %127, %131 : vector<8x128xf32>
    %133 = arith.truncf %132 : vector<8x128xf32> to vector<8x128xbf16>
    %c0_63 = arith.constant 0 : index
    %c0_64 = arith.constant 0 : index
    %134 = vector.load %arg14[%c0_63, %c0_64] : memref<8x256xbf16, #tpu.memory_space<vmem>>, vector<8x128xbf16>
    tpu.vector_store %arg14[%c0_63, %c0_64], %133 {strides = array<i32>} : memref<8x256xbf16, #tpu.memory_space<vmem>>, vector<8x128xbf16>,
    %c0_65 = arith.constant 0 : index
    %c0_66 = arith.constant 0 : index
    %135 = vector.load %arg14[%c0_65, %c0_66] : memref<8x256xbf16, #tpu.memory_space<vmem>>, vector<8x256xbf16>
    %c0_67 = arith.constant 0 : index
    %c0_68 = arith.constant 0 : index
    %136 = vector.load %arg5[%c0_67, %c0_68] : memref<256x512xbf16, #tpu.memory_space<vmem>>, vector<256x512xbf16>
    %cst_69 = arith.constant dense<0.000000e+00> : vector<8x512xf32>
    %137 = tpu.matmul %135, %136, %cst_69 {dimension_numbers = #tpu.dot_dimension_numbers<[1], [0], [0], [1], [0, 0, 1, 1], [], []>} : vector<8x256xbf16>, vector<256x512xbf16>, vector<8x512xf32> -> vector<8x512xf32>
    %138 = arith.addf %137, %12 : vector<8x512xf32>
    %139 = vector.extract_strided_slice %138 {offsets = [0, 0], sizes = [8, 128], strides = [1, 1]} : vector<8x512xf32> to vector<8x128xf32>
    %cst_70 = arith.constant 5.000000e-01 : f32
    %140 = vector.broadcast %cst_70 : f32 to vector<8x128xf32>
    %141 = arith.mulf %140, %139 : vector<8x128xf32>
    %142 = math.tanh %141 : vector<8x128xf32>
    %cst_71 = arith.constant 5.000000e-01 : f32
    %143 = vector.broadcast %cst_71 : f32 to vector<8x128xf32>
    %144 = arith.mulf %143, %142 : vector<8x128xf32>
    %cst_72 = arith.constant 5.000000e-01 : f32
    %145 = vector.broadcast %cst_72 : f32 to vector<8x128xf32>
    %146 = arith.addf %144, %145 : vector<8x128xf32>
    %147 = vector.extract_strided_slice %138 {offsets = [0, 128], sizes = [8, 128], strides = [1, 1]} : vector<8x512xf32> to vector<8x128xf32>
    %cst_73 = arith.constant 5.000000e-01 : f32
    %148 = vector.broadcast %cst_73 : f32 to vector<8x128xf32>
    %149 = arith.mulf %148, %147 : vector<8x128xf32>
    %150 = math.tanh %149 : vector<8x128xf32>
    %cst_74 = arith.constant 5.000000e-01 : f32
    %151 = vector.broadcast %cst_74 : f32 to vector<8x128xf32>
    %152 = arith.mulf %151, %150 : vector<8x128xf32>
    %cst_75 = arith.constant 5.000000e-01 : f32
    %153 = vector.broadcast %cst_75 : f32 to vector<8x128xf32>
    %154 = arith.addf %152, %153 : vector<8x128xf32>
    %155 = vector.extract_strided_slice %138 {offsets = [0, 256], sizes = [8, 128], strides = [1, 1]} : vector<8x512xf32> to vector<8x128xf32>
    %156 = math.tanh %155 : vector<8x128xf32>
    %157 = vector.extract_strided_slice %138 {offsets = [0, 384], sizes = [8, 128], strides = [1, 1]} : vector<8x512xf32> to vector<8x128xf32>
    %cst_76 = arith.constant 5.000000e-01 : f32
    %158 = vector.broadcast %cst_76 : f32 to vector<8x128xf32>
    %159 = arith.mulf %158, %157 : vector<8x128xf32>
    %160 = math.tanh %159 : vector<8x128xf32>
    %cst_77 = arith.constant 5.000000e-01 : f32
    %161 = vector.broadcast %cst_77 : f32 to vector<8x128xf32>
    %162 = arith.mulf %161, %160 : vector<8x128xf32>
    %cst_78 = arith.constant 5.000000e-01 : f32
    %163 = vector.broadcast %cst_78 : f32 to vector<8x128xf32>
    %164 = arith.addf %162, %163 : vector<8x128xf32>
    %165 = arith.mulf %154, %87 : vector<8x128xf32>
    %166 = arith.mulf %146, %156 : vector<8x128xf32>
    %167 = arith.addf %165, %166 : vector<8x128xf32>
    %168 = math.tanh %167 : vector<8x128xf32>
    %169 = arith.mulf %164, %168 : vector<8x128xf32>
    %170 = arith.truncf %169 : vector<8x128xf32> to vector<8x128xbf16>
    %c0_79 = arith.constant 0 : index
    %c128_80 = arith.constant 128 : index
    %171 = vector.load %arg14[%c0_79, %c128_80] : memref<8x256xbf16, #tpu.memory_space<vmem>>, vector<8x128xbf16>
    tpu.vector_store %arg14[%c0_79, %c128_80], %170 {strides = array<i32>} : memref<8x256xbf16, #tpu.memory_space<vmem>>, vector<8x128xbf16>,
    %172 = arith.index_cast %95 : i32 to index
    %c0_81 = arith.constant 0 : index
    %173 = vector.load %arg13[%172, %c0_81] : memref<96x128xf32, #tpu.memory_space<vmem>>, vector<8x128xf32>
    tpu.vector_store %arg13[%172, %c0_81], %169 {strides = array<i32>} : memref<96x128xf32, #tpu.memory_space<vmem>>, vector<8x128xf32>,
    %c2_i32 = arith.constant 2 : i32
    %c8_i32_82 = arith.constant 8 : i32
    %174 = arith.muli %c2_i32, %c8_i32_82 : i32
    %175 = tpu.assume_multiple %174, 8 : i32
    %176 = arith.index_cast %175 : i32 to index
    %c0_83 = arith.constant 0 : index
    %177 = vector.load %arg12[%176, %c0_83] : memref<96x512xf32, #tpu.memory_space<vmem>>, vector<8x512xf32>
    %c0_84 = arith.constant 0 : index
    %c0_85 = arith.constant 0 : index
    %178 = vector.load %arg14[%c0_84, %c0_85] : memref<8x256xbf16, #tpu.memory_space<vmem>>, vector<8x128xbf16>
    %c0_86 = arith.constant 0 : index
    %c0_87 = arith.constant 0 : index
    %179 = vector.load %arg4[%c0_86, %c0_87] : memref<128x512xbf16, #tpu.memory_space<vmem>>, vector<128x512xbf16>
    %cst_88 = arith.constant dense<0.000000e+00> : vector<8x512xf32>
    %180 = tpu.matmul %178, %179, %cst_88 {dimension_numbers = #tpu.dot_dimension_numbers<[1], [0], [0], [1], [0, 0, 1, 1], [], []>} : vector<8x128xbf16>, vector<128x512xbf16>, vector<8x512xf32> -> vector<8x512xf32>
    %181 = arith.addf %177, %180 : vector<8x512xf32>
    %182 = vector.extract_strided_slice %181 {offsets = [0, 0], sizes = [8, 128], strides = [1, 1]} : vector<8x512xf32> to vector<8x128xf32>
    %cst_89 = arith.constant 5.000000e-01 : f32
    %183 = vector.broadcast %cst_89 : f32 to vector<8x128xf32>
    %184 = arith.mulf %183, %182 : vector<8x128xf32>
    %185 = math.tanh %184 : vector<8x128xf32>
    %cst_90 = arith.constant 5.000000e-01 : f32
    %186 = vector.broadcast %cst_90 : f32 to vector<8x128xf32>
    %187 = arith.mulf %186, %185 : vector<8x128xf32>
    %cst_91 = arith.constant 5.000000e-01 : f32
    %188 = vector.broadcast %cst_91 : f32 to vector<8x128xf32>
    %189 = arith.addf %187, %188 : vector<8x128xf32>
    %190 = vector.extract_strided_slice %181 {offsets = [0, 128], sizes = [8, 128], strides = [1, 1]} : vector<8x512xf32> to vector<8x128xf32>
    %cst_92 = arith.constant 5.000000e-01 : f32
    %191 = vector.broadcast %cst_92 : f32 to vector<8x128xf32>
    %192 = arith.mulf %191, %190 : vector<8x128xf32>
    %193 = math.tanh %192 : vector<8x128xf32>
    %cst_93 = arith.constant 5.000000e-01 : f32
    %194 = vector.broadcast %cst_93 : f32 to vector<8x128xf32>
    %195 = arith.mulf %194, %193 : vector<8x128xf32>
    %cst_94 = arith.constant 5.000000e-01 : f32
    %196 = vector.broadcast %cst_94 : f32 to vector<8x128xf32>
    %197 = arith.addf %195, %196 : vector<8x128xf32>
    %198 = vector.extract_strided_slice %181 {offsets = [0, 256], sizes = [8, 128], strides = [1, 1]} : vector<8x512xf32> to vector<8x128xf32>
    %199 = math.tanh %198 : vector<8x128xf32>
    %200 = vector.extract_strided_slice %181 {offsets = [0, 384], sizes = [8, 128], strides = [1, 1]} : vector<8x512xf32> to vector<8x128xf32>
    %cst_95 = arith.constant 5.000000e-01 : f32
    %201 = vector.broadcast %cst_95 : f32 to vector<8x128xf32>
    %202 = arith.mulf %201, %200 : vector<8x128xf32>
    %203 = math.tanh %202 : vector<8x128xf32>
    %cst_96 = arith.constant 5.000000e-01 : f32
    %204 = vector.broadcast %cst_96 : f32 to vector<8x128xf32>
    %205 = arith.mulf %204, %203 : vector<8x128xf32>
    %cst_97 = arith.constant 5.000000e-01 : f32
    %206 = vector.broadcast %cst_97 : f32 to vector<8x128xf32>
    %207 = arith.addf %205, %206 : vector<8x128xf32>
    %208 = arith.mulf %197, %130 : vector<8x128xf32>
    %209 = arith.mulf %189, %199 : vector<8x128xf32>
    %210 = arith.addf %208, %209 : vector<8x128xf32>
    %211 = math.tanh %210 : vector<8x128xf32>
    %212 = arith.mulf %207, %211 : vector<8x128xf32>
    %213 = arith.truncf %212 : vector<8x128xf32> to vector<8x128xbf16>
    %c0_98 = arith.constant 0 : index
    %c0_99 = arith.constant 0 : index
    %214 = vector.load %arg14[%c0_98, %c0_99] : memref<8x256xbf16, #tpu.memory_space<vmem>>, vector<8x128xbf16>
    tpu.vector_store %arg14[%c0_98, %c0_99], %213 {strides = array<i32>} : memref<8x256xbf16, #tpu.memory_space<vmem>>, vector<8x128xbf16>,
    %c0_100 = arith.constant 0 : index
    %c0_101 = arith.constant 0 : index
    %215 = vector.load %arg14[%c0_100, %c0_101] : memref<8x256xbf16, #tpu.memory_space<vmem>>, vector<8x256xbf16>
    %c0_102 = arith.constant 0 : index
    %c0_103 = arith.constant 0 : index
    %216 = vector.load %arg5[%c0_102, %c0_103] : memref<256x512xbf16, #tpu.memory_space<vmem>>, vector<256x512xbf16>
    %cst_104 = arith.constant dense<0.000000e+00> : vector<8x512xf32>
    %217 = tpu.matmul %215, %216, %cst_104 {dimension_numbers = #tpu.dot_dimension_numbers<[1], [0], [0], [1], [0, 0, 1, 1], [], []>} : vector<8x256xbf16>, vector<256x512xbf16>, vector<8x512xf32> -> vector<8x512xf32>
    %218 = arith.addf %217, %12 : vector<8x512xf32>
    %219 = vector.extract_strided_slice %218 {offsets = [0, 0], sizes = [8, 128], strides = [1, 1]} : vector<8x512xf32> to vector<8x128xf32>
    %cst_105 = arith.constant 5.000000e-01 : f32
    %220 = vector.broadcast %cst_105 : f32 to vector<8x128xf32>
    %221 = arith.mulf %220, %219 : vector<8x128xf32>
    %222 = math.tanh %221 : vector<8x128xf32>
    %cst_106 = arith.constant 5.000000e-01 : f32
    %223 = vector.broadcast %cst_106 : f32 to vector<8x128xf32>
    %224 = arith.mulf %223, %222 : vector<8x128xf32>
    %cst_107 = arith.constant 5.000000e-01 : f32
    %225 = vector.broadcast %cst_107 : f32 to vector<8x128xf32>
    %226 = arith.addf %224, %225 : vector<8x128xf32>
    %227 = vector.extract_strided_slice %218 {offsets = [0, 128], sizes = [8, 128], strides = [1, 1]} : vector<8x512xf32> to vector<8x128xf32>
    %cst_108 = arith.constant 5.000000e-01 : f32
    %228 = vector.broadcast %cst_108 : f32 to vector<8x128xf32>
    %229 = arith.mulf %228, %227 : vector<8x128xf32>
    %230 = math.tanh %229 : vector<8x128xf32>
    %cst_109 = arith.constant 5.000000e-01 : f32
    %231 = vector.broadcast %cst_109 : f32 to vector<8x128xf32>
    %232 = arith.mulf %231, %230 : vector<8x128xf32>
    %cst_110 = arith.constant 5.000000e-01 : f32
    %233 = vector.broadcast %cst_110 : f32 to vector<8x128xf32>
    %234 = arith.addf %232, %233 : vector<8x128xf32>
    %235 = vector.extract_strided_slice %218 {offsets = [0, 256], sizes = [8, 128], strides = [1, 1]} : vector<8x512xf32> to vector<8x128xf32>
    %236 = math.tanh %235 : vector<8x128xf32>
    %237 = vector.extract_strided_slice %218 {offsets = [0, 384], sizes = [8, 128], strides = [1, 1]} : vector<8x512xf32> to vector<8x128xf32>
    %cst_111 = arith.constant 5.000000e-01 : f32
    %238 = vector.broadcast %cst_111 : f32 to vector<8x128xf32>
    %239 = arith.mulf %238, %237 : vector<8x128xf32>
    %240 = math.tanh %239 : vector<8x128xf32>
    %cst_112 = arith.constant 5.000000e-01 : f32
    %241 = vector.broadcast %cst_112 : f32 to vector<8x128xf32>
    %242 = arith.mulf %241, %240 : vector<8x128xf32>
    %cst_113 = arith.constant 5.000000e-01 : f32
    %243 = vector.broadcast %cst_113 : f32 to vector<8x128xf32>
    %244 = arith.addf %242, %243 : vector<8x128xf32>
    %245 = arith.mulf %234, %167 : vector<8x128xf32>
    %246 = arith.mulf %226, %236 : vector<8x128xf32>
    %247 = arith.addf %245, %246 : vector<8x128xf32>
    %248 = math.tanh %247 : vector<8x128xf32>
    %249 = arith.mulf %244, %248 : vector<8x128xf32>
    %250 = arith.truncf %249 : vector<8x128xf32> to vector<8x128xbf16>
    %c0_114 = arith.constant 0 : index
    %c128_115 = arith.constant 128 : index
    %251 = vector.load %arg14[%c0_114, %c128_115] : memref<8x256xbf16, #tpu.memory_space<vmem>>, vector<8x128xbf16>
    tpu.vector_store %arg14[%c0_114, %c128_115], %250 {strides = array<i32>} : memref<8x256xbf16, #tpu.memory_space<vmem>>, vector<8x128xbf16>,
    %252 = arith.index_cast %175 : i32 to index
    %c0_116 = arith.constant 0 : index
    %253 = vector.load %arg13[%252, %c0_116] : memref<96x128xf32, #tpu.memory_space<vmem>>, vector<8x128xf32>
    tpu.vector_store %arg13[%252, %c0_116], %249 {strides = array<i32>} : memref<96x128xf32, #tpu.memory_space<vmem>>, vector<8x128xf32>,
    %c3_i32 = arith.constant 3 : i32
    %c8_i32_117 = arith.constant 8 : i32
    %254 = arith.muli %c3_i32, %c8_i32_117 : i32
    %255 = tpu.assume_multiple %254, 8 : i32
    %256 = arith.index_cast %255 : i32 to index
    %c0_118 = arith.constant 0 : index
    %257 = vector.load %arg12[%256, %c0_118] : memref<96x512xf32, #tpu.memory_space<vmem>>, vector<8x512xf32>
    %c0_119 = arith.constant 0 : index
    %c0_120 = arith.constant 0 : index
    %258 = vector.load %arg14[%c0_119, %c0_120] : memref<8x256xbf16, #tpu.memory_space<vmem>>, vector<8x128xbf16>
    %c0_121 = arith.constant 0 : index
    %c0_122 = arith.constant 0 : index
    %259 = vector.load %arg4[%c0_121, %c0_122] : memref<128x512xbf16, #tpu.memory_space<vmem>>, vector<128x512xbf16>
    %cst_123 = arith.constant dense<0.000000e+00> : vector<8x512xf32>
    %260 = tpu.matmul %258, %259, %cst_123 {dimension_numbers = #tpu.dot_dimension_numbers<[1], [0], [0], [1], [0, 0, 1, 1], [], []>} : vector<8x128xbf16>, vector<128x512xbf16>, vector<8x512xf32> -> vector<8x512xf32>
    %261 = arith.addf %257, %260 : vector<8x512xf32>
    %262 = vector.extract_strided_slice %261 {offsets = [0, 0], sizes = [8, 128], strides = [1, 1]} : vector<8x512xf32> to vector<8x128xf32>
    %cst_124 = arith.constant 5.000000e-01 : f32
    %263 = vector.broadcast %cst_124 : f32 to vector<8x128xf32>
    %264 = arith.mulf %263, %262 : vector<8x128xf32>
    %265 = math.tanh %264 : vector<8x128xf32>
    %cst_125 = arith.constant 5.000000e-01 : f32
    %266 = vector.broadcast %cst_125 : f32 to vector<8x128xf32>
    %267 = arith.mulf %266, %265 : vector<8x128xf32>
    %cst_126 = arith.constant 5.000000e-01 : f32
    %268 = vector.broadcast %cst_126 : f32 to vector<8x128xf32>
    %269 = arith.addf %267, %268 : vector<8x128xf32>
    %270 = vector.extract_strided_slice %261 {offsets = [0, 128], sizes = [8, 128], strides = [1, 1]} : vector<8x512xf32> to vector<8x128xf32>
    %cst_127 = arith.constant 5.000000e-01 : f32
    %271 = vector.broadcast %cst_127 : f32 to vector<8x128xf32>
    %272 = arith.mulf %271, %270 : vector<8x128xf32>
    %273 = math.tanh %272 : vector<8x128xf32>
    %cst_128 = arith.constant 5.000000e-01 : f32
    %274 = vector.broadcast %cst_128 : f32 to vector<8x128xf32>
    %275 = arith.mulf %274, %273 : vector<8x128xf32>
    %cst_129 = arith.constant 5.000000e-01 : f32
    %276 = vector.broadcast %cst_129 : f32 to vector<8x128xf32>
    %277 = arith.addf %275, %276 : vector<8x128xf32>
    %278 = vector.extract_strided_slice %261 {offsets = [0, 256], sizes = [8, 128], strides = [1, 1]} : vector<8x512xf32> to vector<8x128xf32>
    %279 = math.tanh %278 : vector<8x128xf32>
    %280 = vector.extract_strided_slice %261 {offsets = [0, 384], sizes = [8, 128], strides = [1, 1]} : vector<8x512xf32> to vector<8x128xf32>
    %cst_130 = arith.constant 5.000000e-01 : f32
    %281 = vector.broadcast %cst_130 : f32 to vector<8x128xf32>
    %282 = arith.mulf %281, %280 : vector<8x128xf32>
    %283 = math.tanh %282 : vector<8x128xf32>
    %cst_131 = arith.constant 5.000000e-01 : f32
    %284 = vector.broadcast %cst_131 : f32 to vector<8x128xf32>
    %285 = arith.mulf %284, %283 : vector<8x128xf32>
    %cst_132 = arith.constant 5.000000e-01 : f32
    %286 = vector.broadcast %cst_132 : f32 to vector<8x128xf32>
    %287 = arith.addf %285, %286 : vector<8x128xf32>
    %288 = arith.mulf %277, %210 : vector<8x128xf32>
    %289 = arith.mulf %269, %279 : vector<8x128xf32>
    %290 = arith.addf %288, %289 : vector<8x128xf32>
    %291 = math.tanh %290 : vector<8x128xf32>
    %292 = arith.mulf %287, %291 : vector<8x128xf32>
    %293 = arith.truncf %292 : vector<8x128xf32> to vector<8x128xbf16>
    %c0_133 = arith.constant 0 : index
    %c0_134 = arith.constant 0 : index
    %294 = vector.load %arg14[%c0_133, %c0_134] : memref<8x256xbf16, #tpu.memory_space<vmem>>, vector<8x128xbf16>
    tpu.vector_store %arg14[%c0_133, %c0_134], %293 {strides = array<i32>} : memref<8x256xbf16, #tpu.memory_space<vmem>>, vector<8x128xbf16>,
    %c0_135 = arith.constant 0 : index
    %c0_136 = arith.constant 0 : index
    %295 = vector.load %arg14[%c0_135, %c0_136] : memref<8x256xbf16, #tpu.memory_space<vmem>>, vector<8x256xbf16>
    %c0_137 = arith.constant 0 : index
    %c0_138 = arith.constant 0 : index
    %296 = vector.load %arg5[%c0_137, %c0_138] : memref<256x512xbf16, #tpu.memory_space<vmem>>, vector<256x512xbf16>
    %cst_139 = arith.constant dense<0.000000e+00> : vector<8x512xf32>
    %297 = tpu.matmul %295, %296, %cst_139 {dimension_numbers = #tpu.dot_dimension_numbers<[1], [0], [0], [1], [0, 0, 1, 1], [], []>} : vector<8x256xbf16>, vector<256x512xbf16>, vector<8x512xf32> -> vector<8x512xf32>
    %298 = arith.addf %297, %12 : vector<8x512xf32>
    %299 = vector.extract_strided_slice %298 {offsets = [0, 0], sizes = [8, 128], strides = [1, 1]} : vector<8x512xf32> to vector<8x128xf32>
    %cst_140 = arith.constant 5.000000e-01 : f32
    %300 = vector.broadcast %cst_140 : f32 to vector<8x128xf32>
    %301 = arith.mulf %300, %299 : vector<8x128xf32>
    %302 = math.tanh %301 : vector<8x128xf32>
    %cst_141 = arith.constant 5.000000e-01 : f32
    %303 = vector.broadcast %cst_141 : f32 to vector<8x128xf32>
    %304 = arith.mulf %303, %302 : vector<8x128xf32>
    %cst_142 = arith.constant 5.000000e-01 : f32
    %305 = vector.broadcast %cst_142 : f32 to vector<8x128xf32>
    %306 = arith.addf %304, %305 : vector<8x128xf32>
    %307 = vector.extract_strided_slice %298 {offsets = [0, 128], sizes = [8, 128], strides = [1, 1]} : vector<8x512xf32> to vector<8x128xf32>
    %cst_143 = arith.constant 5.000000e-01 : f32
    %308 = vector.broadcast %cst_143 : f32 to vector<8x128xf32>
    %309 = arith.mulf %308, %307 : vector<8x128xf32>
    %310 = math.tanh %309 : vector<8x128xf32>
    %cst_144 = arith.constant 5.000000e-01 : f32
    %311 = vector.broadcast %cst_144 : f32 to vector<8x128xf32>
    %312 = arith.mulf %311, %310 : vector<8x128xf32>
    %cst_145 = arith.constant 5.000000e-01 : f32
    %313 = vector.broadcast %cst_145 : f32 to vector<8x128xf32>
    %314 = arith.addf %312, %313 : vector<8x128xf32>
    %315 = vector.extract_strided_slice %298 {offsets = [0, 256], sizes = [8, 128], strides = [1, 1]} : vector<8x512xf32> to vector<8x128xf32>
    %316 = math.tanh %315 : vector<8x128xf32>
    %317 = vector.extract_strided_slice %298 {offsets = [0, 384], sizes = [8, 128], strides = [1, 1]} : vector<8x512xf32> to vector<8x128xf32>
    %cst_146 = arith.constant 5.000000e-01 : f32
    %318 = vector.broadcast %cst_146 : f32 to vector<8x128xf32>
    %319 = arith.mulf %318, %317 : vector<8x128xf32>
    %320 = math.tanh %319 : vector<8x128xf32>
    %cst_147 = arith.constant 5.000000e-01 : f32
    %321 = vector.broadcast %cst_147 : f32 to vector<8x128xf32>
    %322 = arith.mulf %321, %320 : vector<8x128xf32>
    %cst_148 = arith.constant 5.000000e-01 : f32
    %323 = vector.broadcast %cst_148 : f32 to vector<8x128xf32>
    %324 = arith.addf %322, %323 : vector<8x128xf32>
    %325 = arith.mulf %314, %247 : vector<8x128xf32>
    %326 = arith.mulf %306, %316 : vector<8x128xf32>
    %327 = arith.addf %325, %326 : vector<8x128xf32>
    %328 = math.tanh %327 : vector<8x128xf32>
    %329 = arith.mulf %324, %328 : vector<8x128xf32>
    %330 = arith.truncf %329 : vector<8x128xf32> to vector<8x128xbf16>
    %c0_149 = arith.constant 0 : index
    %c128_150 = arith.constant 128 : index
    %331 = vector.load %arg14[%c0_149, %c128_150] : memref<8x256xbf16, #tpu.memory_space<vmem>>, vector<8x128xbf16>
    tpu.vector_store %arg14[%c0_149, %c128_150], %330 {strides = array<i32>} : memref<8x256xbf16, #tpu.memory_space<vmem>>, vector<8x128xbf16>,
    %332 = arith.index_cast %255 : i32 to index
    %c0_151 = arith.constant 0 : index
    %333 = vector.load %arg13[%332, %c0_151] : memref<96x128xf32, #tpu.memory_space<vmem>>, vector<8x128xf32>
    tpu.vector_store %arg13[%332, %c0_151], %329 {strides = array<i32>} : memref<96x128xf32, #tpu.memory_space<vmem>>, vector<8x128xf32>,
    %c4_i32 = arith.constant 4 : i32
    %c8_i32_152 = arith.constant 8 : i32
    %334 = arith.muli %c4_i32, %c8_i32_152 : i32
    %335 = tpu.assume_multiple %334, 8 : i32
    %336 = arith.index_cast %335 : i32 to index
    %c0_153 = arith.constant 0 : index
    %337 = vector.load %arg12[%336, %c0_153] : memref<96x512xf32, #tpu.memory_space<vmem>>, vector<8x512xf32>
    %c0_154 = arith.constant 0 : index
    %c0_155 = arith.constant 0 : index
    %338 = vector.load %arg14[%c0_154, %c0_155] : memref<8x256xbf16, #tpu.memory_space<vmem>>, vector<8x128xbf16>
    %c0_156 = arith.constant 0 : index
    %c0_157 = arith.constant 0 : index
    %339 = vector.load %arg4[%c0_156, %c0_157] : memref<128x512xbf16, #tpu.memory_space<vmem>>, vector<128x512xbf16>
    %cst_158 = arith.constant dense<0.000000e+00> : vector<8x512xf32>
    %340 = tpu.matmul %338, %339, %cst_158 {dimension_numbers = #tpu.dot_dimension_numbers<[1], [0], [0], [1], [0, 0, 1, 1], [], []>} : vector<8x128xbf16>, vector<128x512xbf16>, vector<8x512xf32> -> vector<8x512xf32>
    %341 = arith.addf %337, %340 : vector<8x512xf32>
    %342 = vector.extract_strided_slice %341 {offsets = [0, 0], sizes = [8, 128], strides = [1, 1]} : vector<8x512xf32> to vector<8x128xf32>
    %cst_159 = arith.constant 5.000000e-01 : f32
    %343 = vector.broadcast %cst_159 : f32 to vector<8x128xf32>
    %344 = arith.mulf %343, %342 : vector<8x128xf32>
    %345 = math.tanh %344 : vector<8x128xf32>
    %cst_160 = arith.constant 5.000000e-01 : f32
    %346 = vector.broadcast %cst_160 : f32 to vector<8x128xf32>
    %347 = arith.mulf %346, %345 : vector<8x128xf32>
    %cst_161 = arith.constant 5.000000e-01 : f32
    %348 = vector.broadcast %cst_161 : f32 to vector<8x128xf32>
    %349 = arith.addf %347, %348 : vector<8x128xf32>
    %350 = vector.extract_strided_slice %341 {offsets = [0, 128], sizes = [8, 128], strides = [1, 1]} : vector<8x512xf32> to vector<8x128xf32>
    %cst_162 = arith.constant 5.000000e-01 : f32
    %351 = vector.broadcast %cst_162 : f32 to vector<8x128xf32>
    %352 = arith.mulf %351, %350 : vector<8x128xf32>
    %353 = math.tanh %352 : vector<8x128xf32>
    %cst_163 = arith.constant 5.000000e-01 : f32
    %354 = vector.broadcast %cst_163 : f32 to vector<8x128xf32>
    %355 = arith.mulf %354, %353 : vector<8x128xf32>
    %cst_164 = arith.constant 5.000000e-01 : f32
    %356 = vector.broadcast %cst_164 : f32 to vector<8x128xf32>
    %357 = arith.addf %355, %356 : vector<8x128xf32>
    %358 = vector.extract_strided_slice %341 {offsets = [0, 256], sizes = [8, 128], strides = [1, 1]} : vector<8x512xf32> to vector<8x128xf32>
    %359 = math.tanh %358 : vector<8x128xf32>
    %360 = vector.extract_strided_slice %341 {offsets = [0, 384], sizes = [8, 128], strides = [1, 1]} : vector<8x512xf32> to vector<8x128xf32>
    %cst_165 = arith.constant 5.000000e-01 : f32
    %361 = vector.broadcast %cst_165 : f32 to vector<8x128xf32>
    %362 = arith.mulf %361, %360 : vector<8x128xf32>
    %363 = math.tanh %362 : vector<8x128xf32>
    %cst_166 = arith.constant 5.000000e-01 : f32
    %364 = vector.broadcast %cst_166 : f32 to vector<8x128xf32>
    %365 = arith.mulf %364, %363 : vector<8x128xf32>
    %cst_167 = arith.constant 5.000000e-01 : f32
    %366 = vector.broadcast %cst_167 : f32 to vector<8x128xf32>
    %367 = arith.addf %365, %366 : vector<8x128xf32>
    %368 = arith.mulf %357, %290 : vector<8x128xf32>
    %369 = arith.mulf %349, %359 : vector<8x128xf32>
    %370 = arith.addf %368, %369 : vector<8x128xf32>
    %371 = math.tanh %370 : vector<8x128xf32>
    %372 = arith.mulf %367, %371 : vector<8x128xf32>
    %373 = arith.truncf %372 : vector<8x128xf32> to vector<8x128xbf16>
    %c0_168 = arith.constant 0 : index
    %c0_169 = arith.constant 0 : index
    %374 = vector.load %arg14[%c0_168, %c0_169] : memref<8x256xbf16, #tpu.memory_space<vmem>>, vector<8x128xbf16>
    tpu.vector_store %arg14[%c0_168, %c0_169], %373 {strides = array<i32>} : memref<8x256xbf16, #tpu.memory_space<vmem>>, vector<8x128xbf16>,
    %c0_170 = arith.constant 0 : index
    %c0_171 = arith.constant 0 : index
    %375 = vector.load %arg14[%c0_170, %c0_171] : memref<8x256xbf16, #tpu.memory_space<vmem>>, vector<8x256xbf16>
    %c0_172 = arith.constant 0 : index
    %c0_173 = arith.constant 0 : index
    %376 = vector.load %arg5[%c0_172, %c0_173] : memref<256x512xbf16, #tpu.memory_space<vmem>>, vector<256x512xbf16>
    %cst_174 = arith.constant dense<0.000000e+00> : vector<8x512xf32>
    %377 = tpu.matmul %375, %376, %cst_174 {dimension_numbers = #tpu.dot_dimension_numbers<[1], [0], [0], [1], [0, 0, 1, 1], [], []>} : vector<8x256xbf16>, vector<256x512xbf16>, vector<8x512xf32> -> vector<8x512xf32>
    %378 = arith.addf %377, %12 : vector<8x512xf32>
    %379 = vector.extract_strided_slice %378 {offsets = [0, 0], sizes = [8, 128], strides = [1, 1]} : vector<8x512xf32> to vector<8x128xf32>
    %cst_175 = arith.constant 5.000000e-01 : f32
    %380 = vector.broadcast %cst_175 : f32 to vector<8x128xf32>
    %381 = arith.mulf %380, %379 : vector<8x128xf32>
    %382 = math.tanh %381 : vector<8x128xf32>
    %cst_176 = arith.constant 5.000000e-01 : f32
    %383 = vector.broadcast %cst_176 : f32 to vector<8x128xf32>
    %384 = arith.mulf %383, %382 : vector<8x128xf32>
    %cst_177 = arith.constant 5.000000e-01 : f32
    %385 = vector.broadcast %cst_177 : f32 to vector<8x128xf32>
    %386 = arith.addf %384, %385 : vector<8x128xf32>
    %387 = vector.extract_strided_slice %378 {offsets = [0, 128], sizes = [8, 128], strides = [1, 1]} : vector<8x512xf32> to vector<8x128xf32>
    %cst_178 = arith.constant 5.000000e-01 : f32
    %388 = vector.broadcast %cst_178 : f32 to vector<8x128xf32>
    %389 = arith.mulf %388, %387 : vector<8x128xf32>
    %390 = math.tanh %389 : vector<8x128xf32>
    %cst_179 = arith.constant 5.000000e-01 : f32
    %391 = vector.broadcast %cst_179 : f32 to vector<8x128xf32>
    %392 = arith.mulf %391, %390 : vector<8x128xf32>
    %cst_180 = arith.constant 5.000000e-01 : f32
    %393 = vector.broadcast %cst_180 : f32 to vector<8x128xf32>
    %394 = arith.addf %392, %393 : vector<8x128xf32>
    %395 = vector.extract_strided_slice %378 {offsets = [0, 256], sizes = [8, 128], strides = [1, 1]} : vector<8x512xf32> to vector<8x128xf32>
    %396 = math.tanh %395 : vector<8x128xf32>
    %397 = vector.extract_strided_slice %378 {offsets = [0, 384], sizes = [8, 128], strides = [1, 1]} : vector<8x512xf32> to vector<8x128xf32>
    %cst_181 = arith.constant 5.000000e-01 : f32
    %398 = vector.broadcast %cst_181 : f32 to vector<8x128xf32>
    %399 = arith.mulf %398, %397 : vector<8x128xf32>
    %400 = math.tanh %399 : vector<8x128xf32>
    %cst_182 = arith.constant 5.000000e-01 : f32
    %401 = vector.broadcast %cst_182 : f32 to vector<8x128xf32>
    %402 = arith.mulf %401, %400 : vector<8x128xf32>
    %cst_183 = arith.constant 5.000000e-01 : f32
    %403 = vector.broadcast %cst_183 : f32 to vector<8x128xf32>
    %404 = arith.addf %402, %403 : vector<8x128xf32>
    %405 = arith.mulf %394, %327 : vector<8x128xf32>
    %406 = arith.mulf %386, %396 : vector<8x128xf32>
    %407 = arith.addf %405, %406 : vector<8x128xf32>
    %408 = math.tanh %407 : vector<8x128xf32>
    %409 = arith.mulf %404, %408 : vector<8x128xf32>
    %410 = arith.truncf %409 : vector<8x128xf32> to vector<8x128xbf16>
    %c0_184 = arith.constant 0 : index
    %c128_185 = arith.constant 128 : index
    %411 = vector.load %arg14[%c0_184, %c128_185] : memref<8x256xbf16, #tpu.memory_space<vmem>>, vector<8x128xbf16>
    tpu.vector_store %arg14[%c0_184, %c128_185], %410 {strides = array<i32>} : memref<8x256xbf16, #tpu.memory_space<vmem>>, vector<8x128xbf16>,
    %412 = arith.index_cast %335 : i32 to index
    %c0_186 = arith.constant 0 : index
    %413 = vector.load %arg13[%412, %c0_186] : memref<96x128xf32, #tpu.memory_space<vmem>>, vector<8x128xf32>
    tpu.vector_store %arg13[%412, %c0_186], %409 {strides = array<i32>} : memref<96x128xf32, #tpu.memory_space<vmem>>, vector<8x128xf32>,
    %c5_i32 = arith.constant 5 : i32
    %c8_i32_187 = arith.constant 8 : i32
    %414 = arith.muli %c5_i32, %c8_i32_187 : i32
    %415 = tpu.assume_multiple %414, 8 : i32
    %416 = arith.index_cast %415 : i32 to index
    %c0_188 = arith.constant 0 : index
    %417 = vector.load %arg12[%416, %c0_188] : memref<96x512xf32, #tpu.memory_space<vmem>>, vector<8x512xf32>
    %c0_189 = arith.constant 0 : index
    %c0_190 = arith.constant 0 : index
    %418 = vector.load %arg14[%c0_189, %c0_190] : memref<8x256xbf16, #tpu.memory_space<vmem>>, vector<8x128xbf16>
    %c0_191 = arith.constant 0 : index
    %c0_192 = arith.constant 0 : index
    %419 = vector.load %arg4[%c0_191, %c0_192] : memref<128x512xbf16, #tpu.memory_space<vmem>>, vector<128x512xbf16>
    %cst_193 = arith.constant dense<0.000000e+00> : vector<8x512xf32>
    %420 = tpu.matmul %418, %419, %cst_193 {dimension_numbers = #tpu.dot_dimension_numbers<[1], [0], [0], [1], [0, 0, 1, 1], [], []>} : vector<8x128xbf16>, vector<128x512xbf16>, vector<8x512xf32> -> vector<8x512xf32>
    %421 = arith.addf %417, %420 : vector<8x512xf32>
    %422 = vector.extract_strided_slice %421 {offsets = [0, 0], sizes = [8, 128], strides = [1, 1]} : vector<8x512xf32> to vector<8x128xf32>
    %cst_194 = arith.constant 5.000000e-01 : f32
    %423 = vector.broadcast %cst_194 : f32 to vector<8x128xf32>
    %424 = arith.mulf %423, %422 : vector<8x128xf32>
    %425 = math.tanh %424 : vector<8x128xf32>
    %cst_195 = arith.constant 5.000000e-01 : f32
    %426 = vector.broadcast %cst_195 : f32 to vector<8x128xf32>
    %427 = arith.mulf %426, %425 : vector<8x128xf32>
    %cst_196 = arith.constant 5.000000e-01 : f32
    %428 = vector.broadcast %cst_196 : f32 to vector<8x128xf32>
    %429 = arith.addf %427, %428 : vector<8x128xf32>
    %430 = vector.extract_strided_slice %421 {offsets = [0, 128], sizes = [8, 128], strides = [1, 1]} : vector<8x512xf32> to vector<8x128xf32>
    %cst_197 = arith.constant 5.000000e-01 : f32
    %431 = vector.broadcast %cst_197 : f32 to vector<8x128xf32>
    %432 = arith.mulf %431, %430 : vector<8x128xf32>
    %433 = math.tanh %432 : vector<8x128xf32>
    %cst_198 = arith.constant 5.000000e-01 : f32
    %434 = vector.broadcast %cst_198 : f32 to vector<8x128xf32>
    %435 = arith.mulf %434, %433 : vector<8x128xf32>
    %cst_199 = arith.constant 5.000000e-01 : f32
    %436 = vector.broadcast %cst_199 : f32 to vector<8x128xf32>
    %437 = arith.addf %435, %436 : vector<8x128xf32>
    %438 = vector.extract_strided_slice %421 {offsets = [0, 256], sizes = [8, 128], strides = [1, 1]} : vector<8x512xf32> to vector<8x128xf32>
    %439 = math.tanh %438 : vector<8x128xf32>
    %440 = vector.extract_strided_slice %421 {offsets = [0, 384], sizes = [8, 128], strides = [1, 1]} : vector<8x512xf32> to vector<8x128xf32>
    %cst_200 = arith.constant 5.000000e-01 : f32
    %441 = vector.broadcast %cst_200 : f32 to vector<8x128xf32>
    %442 = arith.mulf %441, %440 : vector<8x128xf32>
    %443 = math.tanh %442 : vector<8x128xf32>
    %cst_201 = arith.constant 5.000000e-01 : f32
    %444 = vector.broadcast %cst_201 : f32 to vector<8x128xf32>
    %445 = arith.mulf %444, %443 : vector<8x128xf32>
    %cst_202 = arith.constant 5.000000e-01 : f32
    %446 = vector.broadcast %cst_202 : f32 to vector<8x128xf32>
    %447 = arith.addf %445, %446 : vector<8x128xf32>
    %448 = arith.mulf %437, %370 : vector<8x128xf32>
    %449 = arith.mulf %429, %439 : vector<8x128xf32>
    %450 = arith.addf %448, %449 : vector<8x128xf32>
    %451 = math.tanh %450 : vector<8x128xf32>
    %452 = arith.mulf %447, %451 : vector<8x128xf32>
    %453 = arith.truncf %452 : vector<8x128xf32> to vector<8x128xbf16>
    %c0_203 = arith.constant 0 : index
    %c0_204 = arith.constant 0 : index
    %454 = vector.load %arg14[%c0_203, %c0_204] : memref<8x256xbf16, #tpu.memory_space<vmem>>, vector<8x128xbf16>
    tpu.vector_store %arg14[%c0_203, %c0_204], %453 {strides = array<i32>} : memref<8x256xbf16, #tpu.memory_space<vmem>>, vector<8x128xbf16>,
    %c0_205 = arith.constant 0 : index
    %c0_206 = arith.constant 0 : index
    %455 = vector.load %arg14[%c0_205, %c0_206] : memref<8x256xbf16, #tpu.memory_space<vmem>>, vector<8x256xbf16>
    %c0_207 = arith.constant 0 : index
    %c0_208 = arith.constant 0 : index
    %456 = vector.load %arg5[%c0_207, %c0_208] : memref<256x512xbf16, #tpu.memory_space<vmem>>, vector<256x512xbf16>
    %cst_209 = arith.constant dense<0.000000e+00> : vector<8x512xf32>
    %457 = tpu.matmul %455, %456, %cst_209 {dimension_numbers = #tpu.dot_dimension_numbers<[1], [0], [0], [1], [0, 0, 1, 1], [], []>} : vector<8x256xbf16>, vector<256x512xbf16>, vector<8x512xf32> -> vector<8x512xf32>
    %458 = arith.addf %457, %12 : vector<8x512xf32>
    %459 = vector.extract_strided_slice %458 {offsets = [0, 0], sizes = [8, 128], strides = [1, 1]} : vector<8x512xf32> to vector<8x128xf32>
    %cst_210 = arith.constant 5.000000e-01 : f32
    %460 = vector.broadcast %cst_210 : f32 to vector<8x128xf32>
    %461 = arith.mulf %460, %459 : vector<8x128xf32>
    %462 = math.tanh %461 : vector<8x128xf32>
    %cst_211 = arith.constant 5.000000e-01 : f32
    %463 = vector.broadcast %cst_211 : f32 to vector<8x128xf32>
    %464 = arith.mulf %463, %462 : vector<8x128xf32>
    %cst_212 = arith.constant 5.000000e-01 : f32
    %465 = vector.broadcast %cst_212 : f32 to vector<8x128xf32>
    %466 = arith.addf %464, %465 : vector<8x128xf32>
    %467 = vector.extract_strided_slice %458 {offsets = [0, 128], sizes = [8, 128], strides = [1, 1]} : vector<8x512xf32> to vector<8x128xf32>
    %cst_213 = arith.constant 5.000000e-01 : f32
    %468 = vector.broadcast %cst_213 : f32 to vector<8x128xf32>
    %469 = arith.mulf %468, %467 : vector<8x128xf32>
    %470 = math.tanh %469 : vector<8x128xf32>
    %cst_214 = arith.constant 5.000000e-01 : f32
    %471 = vector.broadcast %cst_214 : f32 to vector<8x128xf32>
    %472 = arith.mulf %471, %470 : vector<8x128xf32>
    %cst_215 = arith.constant 5.000000e-01 : f32
    %473 = vector.broadcast %cst_215 : f32 to vector<8x128xf32>
    %474 = arith.addf %472, %473 : vector<8x128xf32>
    %475 = vector.extract_strided_slice %458 {offsets = [0, 256], sizes = [8, 128], strides = [1, 1]} : vector<8x512xf32> to vector<8x128xf32>
    %476 = math.tanh %475 : vector<8x128xf32>
    %477 = vector.extract_strided_slice %458 {offsets = [0, 384], sizes = [8, 128], strides = [1, 1]} : vector<8x512xf32> to vector<8x128xf32>
    %cst_216 = arith.constant 5.000000e-01 : f32
    %478 = vector.broadcast %cst_216 : f32 to vector<8x128xf32>
    %479 = arith.mulf %478, %477 : vector<8x128xf32>
    %480 = math.tanh %479 : vector<8x128xf32>
    %cst_217 = arith.constant 5.000000e-01 : f32
    %481 = vector.broadcast %cst_217 : f32 to vector<8x128xf32>
    %482 = arith.mulf %481, %480 : vector<8x128xf32>
    %cst_218 = arith.constant 5.000000e-01 : f32
    %483 = vector.broadcast %cst_218 : f32 to vector<8x128xf32>
    %484 = arith.addf %482, %483 : vector<8x128xf32>
    %485 = arith.mulf %474, %407 : vector<8x128xf32>
    %486 = arith.mulf %466, %476 : vector<8x128xf32>
    %487 = arith.addf %485, %486 : vector<8x128xf32>
    %488 = math.tanh %487 : vector<8x128xf32>
    %489 = arith.mulf %484, %488 : vector<8x128xf32>
    %490 = arith.truncf %489 : vector<8x128xf32> to vector<8x128xbf16>
    %c0_219 = arith.constant 0 : index
    %c128_220 = arith.constant 128 : index
    %491 = vector.load %arg14[%c0_219, %c128_220] : memref<8x256xbf16, #tpu.memory_space<vmem>>, vector<8x128xbf16>
    tpu.vector_store %arg14[%c0_219, %c128_220], %490 {strides = array<i32>} : memref<8x256xbf16, #tpu.memory_space<vmem>>, vector<8x128xbf16>,
    %492 = arith.index_cast %415 : i32 to index
    %c0_221 = arith.constant 0 : index
    %493 = vector.load %arg13[%492, %c0_221] : memref<96x128xf32, #tpu.memory_space<vmem>>, vector<8x128xf32>
    tpu.vector_store %arg13[%492, %c0_221], %489 {strides = array<i32>} : memref<96x128xf32, #tpu.memory_space<vmem>>, vector<8x128xf32>,
    %c6_i32 = arith.constant 6 : i32
    %c8_i32_222 = arith.constant 8 : i32
    %494 = arith.muli %c6_i32, %c8_i32_222 : i32
    %495 = tpu.assume_multiple %494, 8 : i32
    %496 = arith.index_cast %495 : i32 to index
    %c0_223 = arith.constant 0 : index
    %497 = vector.load %arg12[%496, %c0_223] : memref<96x512xf32, #tpu.memory_space<vmem>>, vector<8x512xf32>
    %c0_224 = arith.constant 0 : index
    %c0_225 = arith.constant 0 : index
    %498 = vector.load %arg14[%c0_224, %c0_225] : memref<8x256xbf16, #tpu.memory_space<vmem>>, vector<8x128xbf16>
    %c0_226 = arith.constant 0 : index
    %c0_227 = arith.constant 0 : index
    %499 = vector.load %arg4[%c0_226, %c0_227] : memref<128x512xbf16, #tpu.memory_space<vmem>>, vector<128x512xbf16>
    %cst_228 = arith.constant dense<0.000000e+00> : vector<8x512xf32>
    %500 = tpu.matmul %498, %499, %cst_228 {dimension_numbers = #tpu.dot_dimension_numbers<[1], [0], [0], [1], [0, 0, 1, 1], [], []>} : vector<8x128xbf16>, vector<128x512xbf16>, vector<8x512xf32> -> vector<8x512xf32>
    %501 = arith.addf %497, %500 : vector<8x512xf32>
    %502 = vector.extract_strided_slice %501 {offsets = [0, 0], sizes = [8, 128], strides = [1, 1]} : vector<8x512xf32> to vector<8x128xf32>
    %cst_229 = arith.constant 5.000000e-01 : f32
    %503 = vector.broadcast %cst_229 : f32 to vector<8x128xf32>
    %504 = arith.mulf %503, %502 : vector<8x128xf32>
    %505 = math.tanh %504 : vector<8x128xf32>
    %cst_230 = arith.constant 5.000000e-01 : f32
    %506 = vector.broadcast %cst_230 : f32 to vector<8x128xf32>
    %507 = arith.mulf %506, %505 : vector<8x128xf32>
    %cst_231 = arith.constant 5.000000e-01 : f32
    %508 = vector.broadcast %cst_231 : f32 to vector<8x128xf32>
    %509 = arith.addf %507, %508 : vector<8x128xf32>
    %510 = vector.extract_strided_slice %501 {offsets = [0, 128], sizes = [8, 128], strides = [1, 1]} : vector<8x512xf32> to vector<8x128xf32>
    %cst_232 = arith.constant 5.000000e-01 : f32
    %511 = vector.broadcast %cst_232 : f32 to vector<8x128xf32>
    %512 = arith.mulf %511, %510 : vector<8x128xf32>
    %513 = math.tanh %512 : vector<8x128xf32>
    %cst_233 = arith.constant 5.000000e-01 : f32
    %514 = vector.broadcast %cst_233 : f32 to vector<8x128xf32>
    %515 = arith.mulf %514, %513 : vector<8x128xf32>
    %cst_234 = arith.constant 5.000000e-01 : f32
    %516 = vector.broadcast %cst_234 : f32 to vector<8x128xf32>
    %517 = arith.addf %515, %516 : vector<8x128xf32>
    %518 = vector.extract_strided_slice %501 {offsets = [0, 256], sizes = [8, 128], strides = [1, 1]} : vector<8x512xf32> to vector<8x128xf32>
    %519 = math.tanh %518 : vector<8x128xf32>
    %520 = vector.extract_strided_slice %501 {offsets = [0, 384], sizes = [8, 128], strides = [1, 1]} : vector<8x512xf32> to vector<8x128xf32>
    %cst_235 = arith.constant 5.000000e-01 : f32
    %521 = vector.broadcast %cst_235 : f32 to vector<8x128xf32>
    %522 = arith.mulf %521, %520 : vector<8x128xf32>
    %523 = math.tanh %522 : vector<8x128xf32>
    %cst_236 = arith.constant 5.000000e-01 : f32
    %524 = vector.broadcast %cst_236 : f32 to vector<8x128xf32>
    %525 = arith.mulf %524, %523 : vector<8x128xf32>
    %cst_237 = arith.constant 5.000000e-01 : f32
    %526 = vector.broadcast %cst_237 : f32 to vector<8x128xf32>
    %527 = arith.addf %525, %526 : vector<8x128xf32>
    %528 = arith.mulf %517, %450 : vector<8x128xf32>
    %529 = arith.mulf %509, %519 : vector<8x128xf32>
    %530 = arith.addf %528, %529 : vector<8x128xf32>
    %531 = math.tanh %530 : vector<8x128xf32>
    %532 = arith.mulf %527, %531 : vector<8x128xf32>
    %533 = arith.truncf %532 : vector<8x128xf32> to vector<8x128xbf16>
    %c0_238 = arith.constant 0 : index
    %c0_239 = arith.constant 0 : index
    %534 = vector.load %arg14[%c0_238, %c0_239] : memref<8x256xbf16, #tpu.memory_space<vmem>>, vector<8x128xbf16>
    tpu.vector_store %arg14[%c0_238, %c0_239], %533 {strides = array<i32>} : memref<8x256xbf16, #tpu.memory_space<vmem>>, vector<8x128xbf16>,
    %c0_240 = arith.constant 0 : index
    %c0_241 = arith.constant 0 : index
    %535 = vector.load %arg14[%c0_240, %c0_241] : memref<8x256xbf16, #tpu.memory_space<vmem>>, vector<8x256xbf16>
    %c0_242 = arith.constant 0 : index
    %c0_243 = arith.constant 0 : index
    %536 = vector.load %arg5[%c0_242, %c0_243] : memref<256x512xbf16, #tpu.memory_space<vmem>>, vector<256x512xbf16>
    %cst_244 = arith.constant dense<0.000000e+00> : vector<8x512xf32>
    %537 = tpu.matmul %535, %536, %cst_244 {dimension_numbers = #tpu.dot_dimension_numbers<[1], [0], [0], [1], [0, 0, 1, 1], [], []>} : vector<8x256xbf16>, vector<256x512xbf16>, vector<8x512xf32> -> vector<8x512xf32>
    %538 = arith.addf %537, %12 : vector<8x512xf32>
    %539 = vector.extract_strided_slice %538 {offsets = [0, 0], sizes = [8, 128], strides = [1, 1]} : vector<8x512xf32> to vector<8x128xf32>
    %cst_245 = arith.constant 5.000000e-01 : f32
    %540 = vector.broadcast %cst_245 : f32 to vector<8x128xf32>
    %541 = arith.mulf %540, %539 : vector<8x128xf32>
    %542 = math.tanh %541 : vector<8x128xf32>
    %cst_246 = arith.constant 5.000000e-01 : f32
    %543 = vector.broadcast %cst_246 : f32 to vector<8x128xf32>
    %544 = arith.mulf %543, %542 : vector<8x128xf32>
    %cst_247 = arith.constant 5.000000e-01 : f32
    %545 = vector.broadcast %cst_247 : f32 to vector<8x128xf32>
    %546 = arith.addf %544, %545 : vector<8x128xf32>
    %547 = vector.extract_strided_slice %538 {offsets = [0, 128], sizes = [8, 128], strides = [1, 1]} : vector<8x512xf32> to vector<8x128xf32>
    %cst_248 = arith.constant 5.000000e-01 : f32
    %548 = vector.broadcast %cst_248 : f32 to vector<8x128xf32>
    %549 = arith.mulf %548, %547 : vector<8x128xf32>
    %550 = math.tanh %549 : vector<8x128xf32>
    %cst_249 = arith.constant 5.000000e-01 : f32
    %551 = vector.broadcast %cst_249 : f32 to vector<8x128xf32>
    %552 = arith.mulf %551, %550 : vector<8x128xf32>
    %cst_250 = arith.constant 5.000000e-01 : f32
    %553 = vector.broadcast %cst_250 : f32 to vector<8x128xf32>
    %554 = arith.addf %552, %553 : vector<8x128xf32>
    %555 = vector.extract_strided_slice %538 {offsets = [0, 256], sizes = [8, 128], strides = [1, 1]} : vector<8x512xf32> to vector<8x128xf32>
    %556 = math.tanh %555 : vector<8x128xf32>
    %557 = vector.extract_strided_slice %538 {offsets = [0, 384], sizes = [8, 128], strides = [1, 1]} : vector<8x512xf32> to vector<8x128xf32>
    %cst_251 = arith.constant 5.000000e-01 : f32
    %558 = vector.broadcast %cst_251 : f32 to vector<8x128xf32>
    %559 = arith.mulf %558, %557 : vector<8x128xf32>
    %560 = math.tanh %559 : vector<8x128xf32>
    %cst_252 = arith.constant 5.000000e-01 : f32
    %561 = vector.broadcast %cst_252 : f32 to vector<8x128xf32>
    %562 = arith.mulf %561, %560 : vector<8x128xf32>
    %cst_253 = arith.constant 5.000000e-01 : f32
    %563 = vector.broadcast %cst_253 : f32 to vector<8x128xf32>
    %564 = arith.addf %562, %563 : vector<8x128xf32>
    %565 = arith.mulf %554, %487 : vector<8x128xf32>
    %566 = arith.mulf %546, %556 : vector<8x128xf32>
    %567 = arith.addf %565, %566 : vector<8x128xf32>
    %568 = math.tanh %567 : vector<8x128xf32>
    %569 = arith.mulf %564, %568 : vector<8x128xf32>
    %570 = arith.truncf %569 : vector<8x128xf32> to vector<8x128xbf16>
    %c0_254 = arith.constant 0 : index
    %c128_255 = arith.constant 128 : index
    %571 = vector.load %arg14[%c0_254, %c128_255] : memref<8x256xbf16, #tpu.memory_space<vmem>>, vector<8x128xbf16>
    tpu.vector_store %arg14[%c0_254, %c128_255], %570 {strides = array<i32>} : memref<8x256xbf16, #tpu.memory_space<vmem>>, vector<8x128xbf16>,
    %572 = arith.index_cast %495 : i32 to index
    %c0_256 = arith.constant 0 : index
    %573 = vector.load %arg13[%572, %c0_256] : memref<96x128xf32, #tpu.memory_space<vmem>>, vector<8x128xf32>
    tpu.vector_store %arg13[%572, %c0_256], %569 {strides = array<i32>} : memref<96x128xf32, #tpu.memory_space<vmem>>, vector<8x128xf32>,
    %c7_i32 = arith.constant 7 : i32
    %c8_i32_257 = arith.constant 8 : i32
    %574 = arith.muli %c7_i32, %c8_i32_257 : i32
    %575 = tpu.assume_multiple %574, 8 : i32
    %576 = arith.index_cast %575 : i32 to index
    %c0_258 = arith.constant 0 : index
    %577 = vector.load %arg12[%576, %c0_258] : memref<96x512xf32, #tpu.memory_space<vmem>>, vector<8x512xf32>
    %c0_259 = arith.constant 0 : index
    %c0_260 = arith.constant 0 : index
    %578 = vector.load %arg14[%c0_259, %c0_260] : memref<8x256xbf16, #tpu.memory_space<vmem>>, vector<8x128xbf16>
    %c0_261 = arith.constant 0 : index
    %c0_262 = arith.constant 0 : index
    %579 = vector.load %arg4[%c0_261, %c0_262] : memref<128x512xbf16, #tpu.memory_space<vmem>>, vector<128x512xbf16>
    %cst_263 = arith.constant dense<0.000000e+00> : vector<8x512xf32>
    %580 = tpu.matmul %578, %579, %cst_263 {dimension_numbers = #tpu.dot_dimension_numbers<[1], [0], [0], [1], [0, 0, 1, 1], [], []>} : vector<8x128xbf16>, vector<128x512xbf16>, vector<8x512xf32> -> vector<8x512xf32>
    %581 = arith.addf %577, %580 : vector<8x512xf32>
    %582 = vector.extract_strided_slice %581 {offsets = [0, 0], sizes = [8, 128], strides = [1, 1]} : vector<8x512xf32> to vector<8x128xf32>
    %cst_264 = arith.constant 5.000000e-01 : f32
    %583 = vector.broadcast %cst_264 : f32 to vector<8x128xf32>
    %584 = arith.mulf %583, %582 : vector<8x128xf32>
    %585 = math.tanh %584 : vector<8x128xf32>
    %cst_265 = arith.constant 5.000000e-01 : f32
    %586 = vector.broadcast %cst_265 : f32 to vector<8x128xf32>
    %587 = arith.mulf %586, %585 : vector<8x128xf32>
    %cst_266 = arith.constant 5.000000e-01 : f32
    %588 = vector.broadcast %cst_266 : f32 to vector<8x128xf32>
    %589 = arith.addf %587, %588 : vector<8x128xf32>
    %590 = vector.extract_strided_slice %581 {offsets = [0, 128], sizes = [8, 128], strides = [1, 1]} : vector<8x512xf32> to vector<8x128xf32>
    %cst_267 = arith.constant 5.000000e-01 : f32
    %591 = vector.broadcast %cst_267 : f32 to vector<8x128xf32>
    %592 = arith.mulf %591, %590 : vector<8x128xf32>
    %593 = math.tanh %592 : vector<8x128xf32>
    %cst_268 = arith.constant 5.000000e-01 : f32
    %594 = vector.broadcast %cst_268 : f32 to vector<8x128xf32>
    %595 = arith.mulf %594, %593 : vector<8x128xf32>
    %cst_269 = arith.constant 5.000000e-01 : f32
    %596 = vector.broadcast %cst_269 : f32 to vector<8x128xf32>
    %597 = arith.addf %595, %596 : vector<8x128xf32>
    %598 = vector.extract_strided_slice %581 {offsets = [0, 256], sizes = [8, 128], strides = [1, 1]} : vector<8x512xf32> to vector<8x128xf32>
    %599 = math.tanh %598 : vector<8x128xf32>
    %600 = vector.extract_strided_slice %581 {offsets = [0, 384], sizes = [8, 128], strides = [1, 1]} : vector<8x512xf32> to vector<8x128xf32>
    %cst_270 = arith.constant 5.000000e-01 : f32
    %601 = vector.broadcast %cst_270 : f32 to vector<8x128xf32>
    %602 = arith.mulf %601, %600 : vector<8x128xf32>
    %603 = math.tanh %602 : vector<8x128xf32>
    %cst_271 = arith.constant 5.000000e-01 : f32
    %604 = vector.broadcast %cst_271 : f32 to vector<8x128xf32>
    %605 = arith.mulf %604, %603 : vector<8x128xf32>
    %cst_272 = arith.constant 5.000000e-01 : f32
    %606 = vector.broadcast %cst_272 : f32 to vector<8x128xf32>
    %607 = arith.addf %605, %606 : vector<8x128xf32>
    %608 = arith.mulf %597, %530 : vector<8x128xf32>
    %609 = arith.mulf %589, %599 : vector<8x128xf32>
    %610 = arith.addf %608, %609 : vector<8x128xf32>
    %611 = math.tanh %610 : vector<8x128xf32>
    %612 = arith.mulf %607, %611 : vector<8x128xf32>
    %613 = arith.truncf %612 : vector<8x128xf32> to vector<8x128xbf16>
    %c0_273 = arith.constant 0 : index
    %c0_274 = arith.constant 0 : index
    %614 = vector.load %arg14[%c0_273, %c0_274] : memref<8x256xbf16, #tpu.memory_space<vmem>>, vector<8x128xbf16>
    tpu.vector_store %arg14[%c0_273, %c0_274], %613 {strides = array<i32>} : memref<8x256xbf16, #tpu.memory_space<vmem>>, vector<8x128xbf16>,
    %c0_275 = arith.constant 0 : index
    %c0_276 = arith.constant 0 : index
    %615 = vector.load %arg14[%c0_275, %c0_276] : memref<8x256xbf16, #tpu.memory_space<vmem>>, vector<8x256xbf16>
    %c0_277 = arith.constant 0 : index
    %c0_278 = arith.constant 0 : index
    %616 = vector.load %arg5[%c0_277, %c0_278] : memref<256x512xbf16, #tpu.memory_space<vmem>>, vector<256x512xbf16>
    %cst_279 = arith.constant dense<0.000000e+00> : vector<8x512xf32>
    %617 = tpu.matmul %615, %616, %cst_279 {dimension_numbers = #tpu.dot_dimension_numbers<[1], [0], [0], [1], [0, 0, 1, 1], [], []>} : vector<8x256xbf16>, vector<256x512xbf16>, vector<8x512xf32> -> vector<8x512xf32>
    %618 = arith.addf %617, %12 : vector<8x512xf32>
    %619 = vector.extract_strided_slice %618 {offsets = [0, 0], sizes = [8, 128], strides = [1, 1]} : vector<8x512xf32> to vector<8x128xf32>
    %cst_280 = arith.constant 5.000000e-01 : f32
    %620 = vector.broadcast %cst_280 : f32 to vector<8x128xf32>
    %621 = arith.mulf %620, %619 : vector<8x128xf32>
    %622 = math.tanh %621 : vector<8x128xf32>
    %cst_281 = arith.constant 5.000000e-01 : f32
    %623 = vector.broadcast %cst_281 : f32 to vector<8x128xf32>
    %624 = arith.mulf %623, %622 : vector<8x128xf32>
    %cst_282 = arith.constant 5.000000e-01 : f32
    %625 = vector.broadcast %cst_282 : f32 to vector<8x128xf32>
    %626 = arith.addf %624, %625 : vector<8x128xf32>
    %627 = vector.extract_strided_slice %618 {offsets = [0, 128], sizes = [8, 128], strides = [1, 1]} : vector<8x512xf32> to vector<8x128xf32>
    %cst_283 = arith.constant 5.000000e-01 : f32
    %628 = vector.broadcast %cst_283 : f32 to vector<8x128xf32>
    %629 = arith.mulf %628, %627 : vector<8x128xf32>
    %630 = math.tanh %629 : vector<8x128xf32>
    %cst_284 = arith.constant 5.000000e-01 : f32
    %631 = vector.broadcast %cst_284 : f32 to vector<8x128xf32>
    %632 = arith.mulf %631, %630 : vector<8x128xf32>
    %cst_285 = arith.constant 5.000000e-01 : f32
    %633 = vector.broadcast %cst_285 : f32 to vector<8x128xf32>
    %634 = arith.addf %632, %633 : vector<8x128xf32>
    %635 = vector.extract_strided_slice %618 {offsets = [0, 256], sizes = [8, 128], strides = [1, 1]} : vector<8x512xf32> to vector<8x128xf32>
    %636 = math.tanh %635 : vector<8x128xf32>
    %637 = vector.extract_strided_slice %618 {offsets = [0, 384], sizes = [8, 128], strides = [1, 1]} : vector<8x512xf32> to vector<8x128xf32>
    %cst_286 = arith.constant 5.000000e-01 : f32
    %638 = vector.broadcast %cst_286 : f32 to vector<8x128xf32>
    %639 = arith.mulf %638, %637 : vector<8x128xf32>
    %640 = math.tanh %639 : vector<8x128xf32>
    %cst_287 = arith.constant 5.000000e-01 : f32
    %641 = vector.broadcast %cst_287 : f32 to vector<8x128xf32>
    %642 = arith.mulf %641, %640 : vector<8x128xf32>
    %cst_288 = arith.constant 5.000000e-01 : f32
    %643 = vector.broadcast %cst_288 : f32 to vector<8x128xf32>
    %644 = arith.addf %642, %643 : vector<8x128xf32>
    %645 = arith.mulf %634, %567 : vector<8x128xf32>
    %646 = arith.mulf %626, %636 : vector<8x128xf32>
    %647 = arith.addf %645, %646 : vector<8x128xf32>
    %648 = math.tanh %647 : vector<8x128xf32>
    %649 = arith.mulf %644, %648 : vector<8x128xf32>
    %650 = arith.truncf %649 : vector<8x128xf32> to vector<8x128xbf16>
    %c0_289 = arith.constant 0 : index
    %c128_290 = arith.constant 128 : index
    %651 = vector.load %arg14[%c0_289, %c128_290] : memref<8x256xbf16, #tpu.memory_space<vmem>>, vector<8x128xbf16>
    tpu.vector_store %arg14[%c0_289, %c128_290], %650 {strides = array<i32>} : memref<8x256xbf16, #tpu.memory_space<vmem>>, vector<8x128xbf16>,
    %652 = arith.index_cast %575 : i32 to index
    %c0_291 = arith.constant 0 : index
    %653 = vector.load %arg13[%652, %c0_291] : memref<96x128xf32, #tpu.memory_space<vmem>>, vector<8x128xf32>
    tpu.vector_store %arg13[%652, %c0_291], %649 {strides = array<i32>} : memref<96x128xf32, #tpu.memory_space<vmem>>, vector<8x128xf32>,
    %c8_i32_292 = arith.constant 8 : i32
    %c8_i32_293 = arith.constant 8 : i32
    %654 = arith.muli %c8_i32_292, %c8_i32_293 : i32
    %655 = tpu.assume_multiple %654, 8 : i32
    %656 = arith.index_cast %655 : i32 to index
    %c0_294 = arith.constant 0 : index
    %657 = vector.load %arg12[%656, %c0_294] : memref<96x512xf32, #tpu.memory_space<vmem>>, vector<8x512xf32>
    %c0_295 = arith.constant 0 : index
    %c0_296 = arith.constant 0 : index
    %658 = vector.load %arg14[%c0_295, %c0_296] : memref<8x256xbf16, #tpu.memory_space<vmem>>, vector<8x128xbf16>
    %c0_297 = arith.constant 0 : index
    %c0_298 = arith.constant 0 : index
    %659 = vector.load %arg4[%c0_297, %c0_298] : memref<128x512xbf16, #tpu.memory_space<vmem>>, vector<128x512xbf16>
    %cst_299 = arith.constant dense<0.000000e+00> : vector<8x512xf32>
    %660 = tpu.matmul %658, %659, %cst_299 {dimension_numbers = #tpu.dot_dimension_numbers<[1], [0], [0], [1], [0, 0, 1, 1], [], []>} : vector<8x128xbf16>, vector<128x512xbf16>, vector<8x512xf32> -> vector<8x512xf32>
    %661 = arith.addf %657, %660 : vector<8x512xf32>
    %662 = vector.extract_strided_slice %661 {offsets = [0, 0], sizes = [8, 128], strides = [1, 1]} : vector<8x512xf32> to vector<8x128xf32>
    %cst_300 = arith.constant 5.000000e-01 : f32
    %663 = vector.broadcast %cst_300 : f32 to vector<8x128xf32>
    %664 = arith.mulf %663, %662 : vector<8x128xf32>
    %665 = math.tanh %664 : vector<8x128xf32>
    %cst_301 = arith.constant 5.000000e-01 : f32
    %666 = vector.broadcast %cst_301 : f32 to vector<8x128xf32>
    %667 = arith.mulf %666, %665 : vector<8x128xf32>
    %cst_302 = arith.constant 5.000000e-01 : f32
    %668 = vector.broadcast %cst_302 : f32 to vector<8x128xf32>
    %669 = arith.addf %667, %668 : vector<8x128xf32>
    %670 = vector.extract_strided_slice %661 {offsets = [0, 128], sizes = [8, 128], strides = [1, 1]} : vector<8x512xf32> to vector<8x128xf32>
    %cst_303 = arith.constant 5.000000e-01 : f32
    %671 = vector.broadcast %cst_303 : f32 to vector<8x128xf32>
    %672 = arith.mulf %671, %670 : vector<8x128xf32>
    %673 = math.tanh %672 : vector<8x128xf32>
    %cst_304 = arith.constant 5.000000e-01 : f32
    %674 = vector.broadcast %cst_304 : f32 to vector<8x128xf32>
    %675 = arith.mulf %674, %673 : vector<8x128xf32>
    %cst_305 = arith.constant 5.000000e-01 : f32
    %676 = vector.broadcast %cst_305 : f32 to vector<8x128xf32>
    %677 = arith.addf %675, %676 : vector<8x128xf32>
    %678 = vector.extract_strided_slice %661 {offsets = [0, 256], sizes = [8, 128], strides = [1, 1]} : vector<8x512xf32> to vector<8x128xf32>
    %679 = math.tanh %678 : vector<8x128xf32>
    %680 = vector.extract_strided_slice %661 {offsets = [0, 384], sizes = [8, 128], strides = [1, 1]} : vector<8x512xf32> to vector<8x128xf32>
    %cst_306 = arith.constant 5.000000e-01 : f32
    %681 = vector.broadcast %cst_306 : f32 to vector<8x128xf32>
    %682 = arith.mulf %681, %680 : vector<8x128xf32>
    %683 = math.tanh %682 : vector<8x128xf32>
    %cst_307 = arith.constant 5.000000e-01 : f32
    %684 = vector.broadcast %cst_307 : f32 to vector<8x128xf32>
    %685 = arith.mulf %684, %683 : vector<8x128xf32>
    %cst_308 = arith.constant 5.000000e-01 : f32
    %686 = vector.broadcast %cst_308 : f32 to vector<8x128xf32>
    %687 = arith.addf %685, %686 : vector<8x128xf32>
    %688 = arith.mulf %677, %610 : vector<8x128xf32>
    %689 = arith.mulf %669, %679 : vector<8x128xf32>
    %690 = arith.addf %688, %689 : vector<8x128xf32>
    %691 = math.tanh %690 : vector<8x128xf32>
    %692 = arith.mulf %687, %691 : vector<8x128xf32>
    %693 = arith.truncf %692 : vector<8x128xf32> to vector<8x128xbf16>
    %c0_309 = arith.constant 0 : index
    %c0_310 = arith.constant 0 : index
    %694 = vector.load %arg14[%c0_309, %c0_310] : memref<8x256xbf16, #tpu.memory_space<vmem>>, vector<8x128xbf16>
    tpu.vector_store %arg14[%c0_309, %c0_310], %693 {strides = array<i32>} : memref<8x256xbf16, #tpu.memory_space<vmem>>, vector<8x128xbf16>,
    %c0_311 = arith.constant 0 : index
    %c0_312 = arith.constant 0 : index
    %695 = vector.load %arg14[%c0_311, %c0_312] : memref<8x256xbf16, #tpu.memory_space<vmem>>, vector<8x256xbf16>
    %c0_313 = arith.constant 0 : index
    %c0_314 = arith.constant 0 : index
    %696 = vector.load %arg5[%c0_313, %c0_314] : memref<256x512xbf16, #tpu.memory_space<vmem>>, vector<256x512xbf16>
    %cst_315 = arith.constant dense<0.000000e+00> : vector<8x512xf32>
    %697 = tpu.matmul %695, %696, %cst_315 {dimension_numbers = #tpu.dot_dimension_numbers<[1], [0], [0], [1], [0, 0, 1, 1], [], []>} : vector<8x256xbf16>, vector<256x512xbf16>, vector<8x512xf32> -> vector<8x512xf32>
    %698 = arith.addf %697, %12 : vector<8x512xf32>
    %699 = vector.extract_strided_slice %698 {offsets = [0, 0], sizes = [8, 128], strides = [1, 1]} : vector<8x512xf32> to vector<8x128xf32>
    %cst_316 = arith.constant 5.000000e-01 : f32
    %700 = vector.broadcast %cst_316 : f32 to vector<8x128xf32>
    %701 = arith.mulf %700, %699 : vector<8x128xf32>
    %702 = math.tanh %701 : vector<8x128xf32>
    %cst_317 = arith.constant 5.000000e-01 : f32
    %703 = vector.broadcast %cst_317 : f32 to vector<8x128xf32>
    %704 = arith.mulf %703, %702 : vector<8x128xf32>
    %cst_318 = arith.constant 5.000000e-01 : f32
    %705 = vector.broadcast %cst_318 : f32 to vector<8x128xf32>
    %706 = arith.addf %704, %705 : vector<8x128xf32>
    %707 = vector.extract_strided_slice %698 {offsets = [0, 128], sizes = [8, 128], strides = [1, 1]} : vector<8x512xf32> to vector<8x128xf32>
    %cst_319 = arith.constant 5.000000e-01 : f32
    %708 = vector.broadcast %cst_319 : f32 to vector<8x128xf32>
    %709 = arith.mulf %708, %707 : vector<8x128xf32>
    %710 = math.tanh %709 : vector<8x128xf32>
    %cst_320 = arith.constant 5.000000e-01 : f32
    %711 = vector.broadcast %cst_320 : f32 to vector<8x128xf32>
    %712 = arith.mulf %711, %710 : vector<8x128xf32>
    %cst_321 = arith.constant 5.000000e-01 : f32
    %713 = vector.broadcast %cst_321 : f32 to vector<8x128xf32>
    %714 = arith.addf %712, %713 : vector<8x128xf32>
    %715 = vector.extract_strided_slice %698 {offsets = [0, 256], sizes = [8, 128], strides = [1, 1]} : vector<8x512xf32> to vector<8x128xf32>
    %716 = math.tanh %715 : vector<8x128xf32>
    %717 = vector.extract_strided_slice %698 {offsets = [0, 384], sizes = [8, 128], strides = [1, 1]} : vector<8x512xf32> to vector<8x128xf32>
    %cst_322 = arith.constant 5.000000e-01 : f32
    %718 = vector.broadcast %cst_322 : f32 to vector<8x128xf32>
    %719 = arith.mulf %718, %717 : vector<8x128xf32>
    %720 = math.tanh %719 : vector<8x128xf32>
    %cst_323 = arith.constant 5.000000e-01 : f32
    %721 = vector.broadcast %cst_323 : f32 to vector<8x128xf32>
    %722 = arith.mulf %721, %720 : vector<8x128xf32>
    %cst_324 = arith.constant 5.000000e-01 : f32
    %723 = vector.broadcast %cst_324 : f32 to vector<8x128xf32>
    %724 = arith.addf %722, %723 : vector<8x128xf32>
    %725 = arith.mulf %714, %647 : vector<8x128xf32>
    %726 = arith.mulf %706, %716 : vector<8x128xf32>
    %727 = arith.addf %725, %726 : vector<8x128xf32>
    %728 = math.tanh %727 : vector<8x128xf32>
    %729 = arith.mulf %724, %728 : vector<8x128xf32>
    %730 = arith.truncf %729 : vector<8x128xf32> to vector<8x128xbf16>
    %c0_325 = arith.constant 0 : index
    %c128_326 = arith.constant 128 : index
    %731 = vector.load %arg14[%c0_325, %c128_326] : memref<8x256xbf16, #tpu.memory_space<vmem>>, vector<8x128xbf16>
    tpu.vector_store %arg14[%c0_325, %c128_326], %730 {strides = array<i32>} : memref<8x256xbf16, #tpu.memory_space<vmem>>, vector<8x128xbf16>,
    %732 = arith.index_cast %655 : i32 to index
    %c0_327 = arith.constant 0 : index
    %733 = vector.load %arg13[%732, %c0_327] : memref<96x128xf32, #tpu.memory_space<vmem>>, vector<8x128xf32>
    tpu.vector_store %arg13[%732, %c0_327], %729 {strides = array<i32>} : memref<96x128xf32, #tpu.memory_space<vmem>>, vector<8x128xf32>,
    %c9_i32 = arith.constant 9 : i32
    %c8_i32_328 = arith.constant 8 : i32
    %734 = arith.muli %c9_i32, %c8_i32_328 : i32
    %735 = tpu.assume_multiple %734, 8 : i32
    %736 = arith.index_cast %735 : i32 to index
    %c0_329 = arith.constant 0 : index
    %737 = vector.load %arg12[%736, %c0_329] : memref<96x512xf32, #tpu.memory_space<vmem>>, vector<8x512xf32>
    %c0_330 = arith.constant 0 : index
    %c0_331 = arith.constant 0 : index
    %738 = vector.load %arg14[%c0_330, %c0_331] : memref<8x256xbf16, #tpu.memory_space<vmem>>, vector<8x128xbf16>
    %c0_332 = arith.constant 0 : index
    %c0_333 = arith.constant 0 : index
    %739 = vector.load %arg4[%c0_332, %c0_333] : memref<128x512xbf16, #tpu.memory_space<vmem>>, vector<128x512xbf16>
    %cst_334 = arith.constant dense<0.000000e+00> : vector<8x512xf32>
    %740 = tpu.matmul %738, %739, %cst_334 {dimension_numbers = #tpu.dot_dimension_numbers<[1], [0], [0], [1], [0, 0, 1, 1], [], []>} : vector<8x128xbf16>, vector<128x512xbf16>, vector<8x512xf32> -> vector<8x512xf32>
    %741 = arith.addf %737, %740 : vector<8x512xf32>
    %742 = vector.extract_strided_slice %741 {offsets = [0, 0], sizes = [8, 128], strides = [1, 1]} : vector<8x512xf32> to vector<8x128xf32>
    %cst_335 = arith.constant 5.000000e-01 : f32
    %743 = vector.broadcast %cst_335 : f32 to vector<8x128xf32>
    %744 = arith.mulf %743, %742 : vector<8x128xf32>
    %745 = math.tanh %744 : vector<8x128xf32>
    %cst_336 = arith.constant 5.000000e-01 : f32
    %746 = vector.broadcast %cst_336 : f32 to vector<8x128xf32>
    %747 = arith.mulf %746, %745 : vector<8x128xf32>
    %cst_337 = arith.constant 5.000000e-01 : f32
    %748 = vector.broadcast %cst_337 : f32 to vector<8x128xf32>
    %749 = arith.addf %747, %748 : vector<8x128xf32>
    %750 = vector.extract_strided_slice %741 {offsets = [0, 128], sizes = [8, 128], strides = [1, 1]} : vector<8x512xf32> to vector<8x128xf32>
    %cst_338 = arith.constant 5.000000e-01 : f32
    %751 = vector.broadcast %cst_338 : f32 to vector<8x128xf32>
    %752 = arith.mulf %751, %750 : vector<8x128xf32>
    %753 = math.tanh %752 : vector<8x128xf32>
    %cst_339 = arith.constant 5.000000e-01 : f32
    %754 = vector.broadcast %cst_339 : f32 to vector<8x128xf32>
    %755 = arith.mulf %754, %753 : vector<8x128xf32>
    %cst_340 = arith.constant 5.000000e-01 : f32
    %756 = vector.broadcast %cst_340 : f32 to vector<8x128xf32>
    %757 = arith.addf %755, %756 : vector<8x128xf32>
    %758 = vector.extract_strided_slice %741 {offsets = [0, 256], sizes = [8, 128], strides = [1, 1]} : vector<8x512xf32> to vector<8x128xf32>
    %759 = math.tanh %758 : vector<8x128xf32>
    %760 = vector.extract_strided_slice %741 {offsets = [0, 384], sizes = [8, 128], strides = [1, 1]} : vector<8x512xf32> to vector<8x128xf32>
    %cst_341 = arith.constant 5.000000e-01 : f32
    %761 = vector.broadcast %cst_341 : f32 to vector<8x128xf32>
    %762 = arith.mulf %761, %760 : vector<8x128xf32>
    %763 = math.tanh %762 : vector<8x128xf32>
    %cst_342 = arith.constant 5.000000e-01 : f32
    %764 = vector.broadcast %cst_342 : f32 to vector<8x128xf32>
    %765 = arith.mulf %764, %763 : vector<8x128xf32>
    %cst_343 = arith.constant 5.000000e-01 : f32
    %766 = vector.broadcast %cst_343 : f32 to vector<8x128xf32>
    %767 = arith.addf %765, %766 : vector<8x128xf32>
    %768 = arith.mulf %757, %690 : vector<8x128xf32>
    %769 = arith.mulf %749, %759 : vector<8x128xf32>
    %770 = arith.addf %768, %769 : vector<8x128xf32>
    %771 = math.tanh %770 : vector<8x128xf32>
    %772 = arith.mulf %767, %771 : vector<8x128xf32>
    %773 = arith.truncf %772 : vector<8x128xf32> to vector<8x128xbf16>
    %c0_344 = arith.constant 0 : index
    %c0_345 = arith.constant 0 : index
    %774 = vector.load %arg14[%c0_344, %c0_345] : memref<8x256xbf16, #tpu.memory_space<vmem>>, vector<8x128xbf16>
    tpu.vector_store %arg14[%c0_344, %c0_345], %773 {strides = array<i32>} : memref<8x256xbf16, #tpu.memory_space<vmem>>, vector<8x128xbf16>,
    %c0_346 = arith.constant 0 : index
    %c0_347 = arith.constant 0 : index
    %775 = vector.load %arg14[%c0_346, %c0_347] : memref<8x256xbf16, #tpu.memory_space<vmem>>, vector<8x256xbf16>
    %c0_348 = arith.constant 0 : index
    %c0_349 = arith.constant 0 : index
    %776 = vector.load %arg5[%c0_348, %c0_349] : memref<256x512xbf16, #tpu.memory_space<vmem>>, vector<256x512xbf16>
    %cst_350 = arith.constant dense<0.000000e+00> : vector<8x512xf32>
    %777 = tpu.matmul %775, %776, %cst_350 {dimension_numbers = #tpu.dot_dimension_numbers<[1], [0], [0], [1], [0, 0, 1, 1], [], []>} : vector<8x256xbf16>, vector<256x512xbf16>, vector<8x512xf32> -> vector<8x512xf32>
    %778 = arith.addf %777, %12 : vector<8x512xf32>
    %779 = vector.extract_strided_slice %778 {offsets = [0, 0], sizes = [8, 128], strides = [1, 1]} : vector<8x512xf32> to vector<8x128xf32>
    %cst_351 = arith.constant 5.000000e-01 : f32
    %780 = vector.broadcast %cst_351 : f32 to vector<8x128xf32>
    %781 = arith.mulf %780, %779 : vector<8x128xf32>
    %782 = math.tanh %781 : vector<8x128xf32>
    %cst_352 = arith.constant 5.000000e-01 : f32
    %783 = vector.broadcast %cst_352 : f32 to vector<8x128xf32>
    %784 = arith.mulf %783, %782 : vector<8x128xf32>
    %cst_353 = arith.constant 5.000000e-01 : f32
    %785 = vector.broadcast %cst_353 : f32 to vector<8x128xf32>
    %786 = arith.addf %784, %785 : vector<8x128xf32>
    %787 = vector.extract_strided_slice %778 {offsets = [0, 128], sizes = [8, 128], strides = [1, 1]} : vector<8x512xf32> to vector<8x128xf32>
    %cst_354 = arith.constant 5.000000e-01 : f32
    %788 = vector.broadcast %cst_354 : f32 to vector<8x128xf32>
    %789 = arith.mulf %788, %787 : vector<8x128xf32>
    %790 = math.tanh %789 : vector<8x128xf32>
    %cst_355 = arith.constant 5.000000e-01 : f32
    %791 = vector.broadcast %cst_355 : f32 to vector<8x128xf32>
    %792 = arith.mulf %791, %790 : vector<8x128xf32>
    %cst_356 = arith.constant 5.000000e-01 : f32
    %793 = vector.broadcast %cst_356 : f32 to vector<8x128xf32>
    %794 = arith.addf %792, %793 : vector<8x128xf32>
    %795 = vector.extract_strided_slice %778 {offsets = [0, 256], sizes = [8, 128], strides = [1, 1]} : vector<8x512xf32> to vector<8x128xf32>
    %796 = math.tanh %795 : vector<8x128xf32>
    %797 = vector.extract_strided_slice %778 {offsets = [0, 384], sizes = [8, 128], strides = [1, 1]} : vector<8x512xf32> to vector<8x128xf32>
    %cst_357 = arith.constant 5.000000e-01 : f32
    %798 = vector.broadcast %cst_357 : f32 to vector<8x128xf32>
    %799 = arith.mulf %798, %797 : vector<8x128xf32>
    %800 = math.tanh %799 : vector<8x128xf32>
    %cst_358 = arith.constant 5.000000e-01 : f32
    %801 = vector.broadcast %cst_358 : f32 to vector<8x128xf32>
    %802 = arith.mulf %801, %800 : vector<8x128xf32>
    %cst_359 = arith.constant 5.000000e-01 : f32
    %803 = vector.broadcast %cst_359 : f32 to vector<8x128xf32>
    %804 = arith.addf %802, %803 : vector<8x128xf32>
    %805 = arith.mulf %794, %727 : vector<8x128xf32>
    %806 = arith.mulf %786, %796 : vector<8x128xf32>
    %807 = arith.addf %805, %806 : vector<8x128xf32>
    %808 = math.tanh %807 : vector<8x128xf32>
    %809 = arith.mulf %804, %808 : vector<8x128xf32>
    %810 = arith.truncf %809 : vector<8x128xf32> to vector<8x128xbf16>
    %c0_360 = arith.constant 0 : index
    %c128_361 = arith.constant 128 : index
    %811 = vector.load %arg14[%c0_360, %c128_361] : memref<8x256xbf16, #tpu.memory_space<vmem>>, vector<8x128xbf16>
    tpu.vector_store %arg14[%c0_360, %c128_361], %810 {strides = array<i32>} : memref<8x256xbf16, #tpu.memory_space<vmem>>, vector<8x128xbf16>,
    %812 = arith.index_cast %735 : i32 to index
    %c0_362 = arith.constant 0 : index
    %813 = vector.load %arg13[%812, %c0_362] : memref<96x128xf32, #tpu.memory_space<vmem>>, vector<8x128xf32>
    tpu.vector_store %arg13[%812, %c0_362], %809 {strides = array<i32>} : memref<96x128xf32, #tpu.memory_space<vmem>>, vector<8x128xf32>,
    %c10_i32 = arith.constant 10 : i32
    %c8_i32_363 = arith.constant 8 : i32
    %814 = arith.muli %c10_i32, %c8_i32_363 : i32
    %815 = tpu.assume_multiple %814, 8 : i32
    %816 = arith.index_cast %815 : i32 to index
    %c0_364 = arith.constant 0 : index
    %817 = vector.load %arg12[%816, %c0_364] : memref<96x512xf32, #tpu.memory_space<vmem>>, vector<8x512xf32>
    %c0_365 = arith.constant 0 : index
    %c0_366 = arith.constant 0 : index
    %818 = vector.load %arg14[%c0_365, %c0_366] : memref<8x256xbf16, #tpu.memory_space<vmem>>, vector<8x128xbf16>
    %c0_367 = arith.constant 0 : index
    %c0_368 = arith.constant 0 : index
    %819 = vector.load %arg4[%c0_367, %c0_368] : memref<128x512xbf16, #tpu.memory_space<vmem>>, vector<128x512xbf16>
    %cst_369 = arith.constant dense<0.000000e+00> : vector<8x512xf32>
    %820 = tpu.matmul %818, %819, %cst_369 {dimension_numbers = #tpu.dot_dimension_numbers<[1], [0], [0], [1], [0, 0, 1, 1], [], []>} : vector<8x128xbf16>, vector<128x512xbf16>, vector<8x512xf32> -> vector<8x512xf32>
    %821 = arith.addf %817, %820 : vector<8x512xf32>
    %822 = vector.extract_strided_slice %821 {offsets = [0, 0], sizes = [8, 128], strides = [1, 1]} : vector<8x512xf32> to vector<8x128xf32>
    %cst_370 = arith.constant 5.000000e-01 : f32
    %823 = vector.broadcast %cst_370 : f32 to vector<8x128xf32>
    %824 = arith.mulf %823, %822 : vector<8x128xf32>
    %825 = math.tanh %824 : vector<8x128xf32>
    %cst_371 = arith.constant 5.000000e-01 : f32
    %826 = vector.broadcast %cst_371 : f32 to vector<8x128xf32>
    %827 = arith.mulf %826, %825 : vector<8x128xf32>
    %cst_372 = arith.constant 5.000000e-01 : f32
    %828 = vector.broadcast %cst_372 : f32 to vector<8x128xf32>
    %829 = arith.addf %827, %828 : vector<8x128xf32>
    %830 = vector.extract_strided_slice %821 {offsets = [0, 128], sizes = [8, 128], strides = [1, 1]} : vector<8x512xf32> to vector<8x128xf32>
    %cst_373 = arith.constant 5.000000e-01 : f32
    %831 = vector.broadcast %cst_373 : f32 to vector<8x128xf32>
    %832 = arith.mulf %831, %830 : vector<8x128xf32>
    %833 = math.tanh %832 : vector<8x128xf32>
    %cst_374 = arith.constant 5.000000e-01 : f32
    %834 = vector.broadcast %cst_374 : f32 to vector<8x128xf32>
    %835 = arith.mulf %834, %833 : vector<8x128xf32>
    %cst_375 = arith.constant 5.000000e-01 : f32
    %836 = vector.broadcast %cst_375 : f32 to vector<8x128xf32>
    %837 = arith.addf %835, %836 : vector<8x128xf32>
    %838 = vector.extract_strided_slice %821 {offsets = [0, 256], sizes = [8, 128], strides = [1, 1]} : vector<8x512xf32> to vector<8x128xf32>
    %839 = math.tanh %838 : vector<8x128xf32>
    %840 = vector.extract_strided_slice %821 {offsets = [0, 384], sizes = [8, 128], strides = [1, 1]} : vector<8x512xf32> to vector<8x128xf32>
    %cst_376 = arith.constant 5.000000e-01 : f32
    %841 = vector.broadcast %cst_376 : f32 to vector<8x128xf32>
    %842 = arith.mulf %841, %840 : vector<8x128xf32>
    %843 = math.tanh %842 : vector<8x128xf32>
    %cst_377 = arith.constant 5.000000e-01 : f32
    %844 = vector.broadcast %cst_377 : f32 to vector<8x128xf32>
    %845 = arith.mulf %844, %843 : vector<8x128xf32>
    %cst_378 = arith.constant 5.000000e-01 : f32
    %846 = vector.broadcast %cst_378 : f32 to vector<8x128xf32>
    %847 = arith.addf %845, %846 : vector<8x128xf32>
    %848 = arith.mulf %837, %770 : vector<8x128xf32>
    %849 = arith.mulf %829, %839 : vector<8x128xf32>
    %850 = arith.addf %848, %849 : vector<8x128xf32>
    %851 = math.tanh %850 : vector<8x128xf32>
    %852 = arith.mulf %847, %851 : vector<8x128xf32>
    %853 = arith.truncf %852 : vector<8x128xf32> to vector<8x128xbf16>
    %c0_379 = arith.constant 0 : index
    %c0_380 = arith.constant 0 : index
    %854 = vector.load %arg14[%c0_379, %c0_380] : memref<8x256xbf16, #tpu.memory_space<vmem>>, vector<8x128xbf16>
    tpu.vector_store %arg14[%c0_379, %c0_380], %853 {strides = array<i32>} : memref<8x256xbf16, #tpu.memory_space<vmem>>, vector<8x128xbf16>,
    %c0_381 = arith.constant 0 : index
    %c0_382 = arith.constant 0 : index
    %855 = vector.load %arg14[%c0_381, %c0_382] : memref<8x256xbf16, #tpu.memory_space<vmem>>, vector<8x256xbf16>
    %c0_383 = arith.constant 0 : index
    %c0_384 = arith.constant 0 : index
    %856 = vector.load %arg5[%c0_383, %c0_384] : memref<256x512xbf16, #tpu.memory_space<vmem>>, vector<256x512xbf16>
    %cst_385 = arith.constant dense<0.000000e+00> : vector<8x512xf32>
    %857 = tpu.matmul %855, %856, %cst_385 {dimension_numbers = #tpu.dot_dimension_numbers<[1], [0], [0], [1], [0, 0, 1, 1], [], []>} : vector<8x256xbf16>, vector<256x512xbf16>, vector<8x512xf32> -> vector<8x512xf32>
    %858 = arith.addf %857, %12 : vector<8x512xf32>
    %859 = vector.extract_strided_slice %858 {offsets = [0, 0], sizes = [8, 128], strides = [1, 1]} : vector<8x512xf32> to vector<8x128xf32>
    %cst_386 = arith.constant 5.000000e-01 : f32
    %860 = vector.broadcast %cst_386 : f32 to vector<8x128xf32>
    %861 = arith.mulf %860, %859 : vector<8x128xf32>
    %862 = math.tanh %861 : vector<8x128xf32>
    %cst_387 = arith.constant 5.000000e-01 : f32
    %863 = vector.broadcast %cst_387 : f32 to vector<8x128xf32>
    %864 = arith.mulf %863, %862 : vector<8x128xf32>
    %cst_388 = arith.constant 5.000000e-01 : f32
    %865 = vector.broadcast %cst_388 : f32 to vector<8x128xf32>
    %866 = arith.addf %864, %865 : vector<8x128xf32>
    %867 = vector.extract_strided_slice %858 {offsets = [0, 128], sizes = [8, 128], strides = [1, 1]} : vector<8x512xf32> to vector<8x128xf32>
    %cst_389 = arith.constant 5.000000e-01 : f32
    %868 = vector.broadcast %cst_389 : f32 to vector<8x128xf32>
    %869 = arith.mulf %868, %867 : vector<8x128xf32>
    %870 = math.tanh %869 : vector<8x128xf32>
    %cst_390 = arith.constant 5.000000e-01 : f32
    %871 = vector.broadcast %cst_390 : f32 to vector<8x128xf32>
    %872 = arith.mulf %871, %870 : vector<8x128xf32>
    %cst_391 = arith.constant 5.000000e-01 : f32
    %873 = vector.broadcast %cst_391 : f32 to vector<8x128xf32>
    %874 = arith.addf %872, %873 : vector<8x128xf32>
    %875 = vector.extract_strided_slice %858 {offsets = [0, 256], sizes = [8, 128], strides = [1, 1]} : vector<8x512xf32> to vector<8x128xf32>
    %876 = math.tanh %875 : vector<8x128xf32>
    %877 = vector.extract_strided_slice %858 {offsets = [0, 384], sizes = [8, 128], strides = [1, 1]} : vector<8x512xf32> to vector<8x128xf32>
    %cst_392 = arith.constant 5.000000e-01 : f32
    %878 = vector.broadcast %cst_392 : f32 to vector<8x128xf32>
    %879 = arith.mulf %878, %877 : vector<8x128xf32>
    %880 = math.tanh %879 : vector<8x128xf32>
    %cst_393 = arith.constant 5.000000e-01 : f32
    %881 = vector.broadcast %cst_393 : f32 to vector<8x128xf32>
    %882 = arith.mulf %881, %880 : vector<8x128xf32>
    %cst_394 = arith.constant 5.000000e-01 : f32
    %883 = vector.broadcast %cst_394 : f32 to vector<8x128xf32>
    %884 = arith.addf %882, %883 : vector<8x128xf32>
    %885 = arith.mulf %874, %807 : vector<8x128xf32>
    %886 = arith.mulf %866, %876 : vector<8x128xf32>
    %887 = arith.addf %885, %886 : vector<8x128xf32>
    %888 = math.tanh %887 : vector<8x128xf32>
    %889 = arith.mulf %884, %888 : vector<8x128xf32>
    %890 = arith.truncf %889 : vector<8x128xf32> to vector<8x128xbf16>
    %c0_395 = arith.constant 0 : index
    %c128_396 = arith.constant 128 : index
    %891 = vector.load %arg14[%c0_395, %c128_396] : memref<8x256xbf16, #tpu.memory_space<vmem>>, vector<8x128xbf16>
    tpu.vector_store %arg14[%c0_395, %c128_396], %890 {strides = array<i32>} : memref<8x256xbf16, #tpu.memory_space<vmem>>, vector<8x128xbf16>,
    %892 = arith.index_cast %815 : i32 to index
    %c0_397 = arith.constant 0 : index
    %893 = vector.load %arg13[%892, %c0_397] : memref<96x128xf32, #tpu.memory_space<vmem>>, vector<8x128xf32>
    tpu.vector_store %arg13[%892, %c0_397], %889 {strides = array<i32>} : memref<96x128xf32, #tpu.memory_space<vmem>>, vector<8x128xf32>,
    %c11_i32 = arith.constant 11 : i32
    %c8_i32_398 = arith.constant 8 : i32
    %894 = arith.muli %c11_i32, %c8_i32_398 : i32
    %895 = tpu.assume_multiple %894, 8 : i32
    %896 = arith.index_cast %895 : i32 to index
    %c0_399 = arith.constant 0 : index
    %897 = vector.load %arg12[%896, %c0_399] : memref<96x512xf32, #tpu.memory_space<vmem>>, vector<8x512xf32>
    %c0_400 = arith.constant 0 : index
    %c0_401 = arith.constant 0 : index
    %898 = vector.load %arg14[%c0_400, %c0_401] : memref<8x256xbf16, #tpu.memory_space<vmem>>, vector<8x128xbf16>
    %c0_402 = arith.constant 0 : index
    %c0_403 = arith.constant 0 : index
    %899 = vector.load %arg4[%c0_402, %c0_403] : memref<128x512xbf16, #tpu.memory_space<vmem>>, vector<128x512xbf16>
    %cst_404 = arith.constant dense<0.000000e+00> : vector<8x512xf32>
    %900 = tpu.matmul %898, %899, %cst_404 {dimension_numbers = #tpu.dot_dimension_numbers<[1], [0], [0], [1], [0, 0, 1, 1], [], []>} : vector<8x128xbf16>, vector<128x512xbf16>, vector<8x512xf32> -> vector<8x512xf32>
    %901 = arith.addf %897, %900 : vector<8x512xf32>
    %902 = vector.extract_strided_slice %901 {offsets = [0, 0], sizes = [8, 128], strides = [1, 1]} : vector<8x512xf32> to vector<8x128xf32>
    %cst_405 = arith.constant 5.000000e-01 : f32
    %903 = vector.broadcast %cst_405 : f32 to vector<8x128xf32>
    %904 = arith.mulf %903, %902 : vector<8x128xf32>
    %905 = math.tanh %904 : vector<8x128xf32>
    %cst_406 = arith.constant 5.000000e-01 : f32
    %906 = vector.broadcast %cst_406 : f32 to vector<8x128xf32>
    %907 = arith.mulf %906, %905 : vector<8x128xf32>
    %cst_407 = arith.constant 5.000000e-01 : f32
    %908 = vector.broadcast %cst_407 : f32 to vector<8x128xf32>
    %909 = arith.addf %907, %908 : vector<8x128xf32>
    %910 = vector.extract_strided_slice %901 {offsets = [0, 128], sizes = [8, 128], strides = [1, 1]} : vector<8x512xf32> to vector<8x128xf32>
    %cst_408 = arith.constant 5.000000e-01 : f32
    %911 = vector.broadcast %cst_408 : f32 to vector<8x128xf32>
    %912 = arith.mulf %911, %910 : vector<8x128xf32>
    %913 = math.tanh %912 : vector<8x128xf32>
    %cst_409 = arith.constant 5.000000e-01 : f32
    %914 = vector.broadcast %cst_409 : f32 to vector<8x128xf32>
    %915 = arith.mulf %914, %913 : vector<8x128xf32>
    %cst_410 = arith.constant 5.000000e-01 : f32
    %916 = vector.broadcast %cst_410 : f32 to vector<8x128xf32>
    %917 = arith.addf %915, %916 : vector<8x128xf32>
    %918 = vector.extract_strided_slice %901 {offsets = [0, 256], sizes = [8, 128], strides = [1, 1]} : vector<8x512xf32> to vector<8x128xf32>
    %919 = math.tanh %918 : vector<8x128xf32>
    %920 = vector.extract_strided_slice %901 {offsets = [0, 384], sizes = [8, 128], strides = [1, 1]} : vector<8x512xf32> to vector<8x128xf32>
    %cst_411 = arith.constant 5.000000e-01 : f32
    %921 = vector.broadcast %cst_411 : f32 to vector<8x128xf32>
    %922 = arith.mulf %921, %920 : vector<8x128xf32>
    %923 = math.tanh %922 : vector<8x128xf32>
    %cst_412 = arith.constant 5.000000e-01 : f32
    %924 = vector.broadcast %cst_412 : f32 to vector<8x128xf32>
    %925 = arith.mulf %924, %923 : vector<8x128xf32>
    %cst_413 = arith.constant 5.000000e-01 : f32
    %926 = vector.broadcast %cst_413 : f32 to vector<8x128xf32>
    %927 = arith.addf %925, %926 : vector<8x128xf32>
    %928 = arith.mulf %917, %850 : vector<8x128xf32>
    %929 = arith.mulf %909, %919 : vector<8x128xf32>
    %930 = arith.addf %928, %929 : vector<8x128xf32>
    %931 = math.tanh %930 : vector<8x128xf32>
    %932 = arith.mulf %927, %931 : vector<8x128xf32>
    %933 = arith.truncf %932 : vector<8x128xf32> to vector<8x128xbf16>
    %c0_414 = arith.constant 0 : index
    %c0_415 = arith.constant 0 : index
    %934 = vector.load %arg14[%c0_414, %c0_415] : memref<8x256xbf16, #tpu.memory_space<vmem>>, vector<8x128xbf16>
    tpu.vector_store %arg14[%c0_414, %c0_415], %933 {strides = array<i32>} : memref<8x256xbf16, #tpu.memory_space<vmem>>, vector<8x128xbf16>,
    %c0_416 = arith.constant 0 : index
    %c0_417 = arith.constant 0 : index
    %935 = vector.load %arg14[%c0_416, %c0_417] : memref<8x256xbf16, #tpu.memory_space<vmem>>, vector<8x256xbf16>
    %c0_418 = arith.constant 0 : index
    %c0_419 = arith.constant 0 : index
    %936 = vector.load %arg5[%c0_418, %c0_419] : memref<256x512xbf16, #tpu.memory_space<vmem>>, vector<256x512xbf16>
    %cst_420 = arith.constant dense<0.000000e+00> : vector<8x512xf32>
    %937 = tpu.matmul %935, %936, %cst_420 {dimension_numbers = #tpu.dot_dimension_numbers<[1], [0], [0], [1], [0, 0, 1, 1], [], []>} : vector<8x256xbf16>, vector<256x512xbf16>, vector<8x512xf32> -> vector<8x512xf32>
    %938 = arith.addf %937, %12 : vector<8x512xf32>
    %939 = vector.extract_strided_slice %938 {offsets = [0, 0], sizes = [8, 128], strides = [1, 1]} : vector<8x512xf32> to vector<8x128xf32>
    %cst_421 = arith.constant 5.000000e-01 : f32
    %940 = vector.broadcast %cst_421 : f32 to vector<8x128xf32>
    %941 = arith.mulf %940, %939 : vector<8x128xf32>
    %942 = math.tanh %941 : vector<8x128xf32>
    %cst_422 = arith.constant 5.000000e-01 : f32
    %943 = vector.broadcast %cst_422 : f32 to vector<8x128xf32>
    %944 = arith.mulf %943, %942 : vector<8x128xf32>
    %cst_423 = arith.constant 5.000000e-01 : f32
    %945 = vector.broadcast %cst_423 : f32 to vector<8x128xf32>
    %946 = arith.addf %944, %945 : vector<8x128xf32>
    %947 = vector.extract_strided_slice %938 {offsets = [0, 128], sizes = [8, 128], strides = [1, 1]} : vector<8x512xf32> to vector<8x128xf32>
    %cst_424 = arith.constant 5.000000e-01 : f32
    %948 = vector.broadcast %cst_424 : f32 to vector<8x128xf32>
    %949 = arith.mulf %948, %947 : vector<8x128xf32>
    %950 = math.tanh %949 : vector<8x128xf32>
    %cst_425 = arith.constant 5.000000e-01 : f32
    %951 = vector.broadcast %cst_425 : f32 to vector<8x128xf32>
    %952 = arith.mulf %951, %950 : vector<8x128xf32>
    %cst_426 = arith.constant 5.000000e-01 : f32
    %953 = vector.broadcast %cst_426 : f32 to vector<8x128xf32>
    %954 = arith.addf %952, %953 : vector<8x128xf32>
    %955 = vector.extract_strided_slice %938 {offsets = [0, 256], sizes = [8, 128], strides = [1, 1]} : vector<8x512xf32> to vector<8x128xf32>
    %956 = math.tanh %955 : vector<8x128xf32>
    %957 = vector.extract_strided_slice %938 {offsets = [0, 384], sizes = [8, 128], strides = [1, 1]} : vector<8x512xf32> to vector<8x128xf32>
    %cst_427 = arith.constant 5.000000e-01 : f32
    %958 = vector.broadcast %cst_427 : f32 to vector<8x128xf32>
    %959 = arith.mulf %958, %957 : vector<8x128xf32>
    %960 = math.tanh %959 : vector<8x128xf32>
    %cst_428 = arith.constant 5.000000e-01 : f32
    %961 = vector.broadcast %cst_428 : f32 to vector<8x128xf32>
    %962 = arith.mulf %961, %960 : vector<8x128xf32>
    %cst_429 = arith.constant 5.000000e-01 : f32
    %963 = vector.broadcast %cst_429 : f32 to vector<8x128xf32>
    %964 = arith.addf %962, %963 : vector<8x128xf32>
    %965 = arith.mulf %954, %887 : vector<8x128xf32>
    %966 = arith.mulf %946, %956 : vector<8x128xf32>
    %967 = arith.addf %965, %966 : vector<8x128xf32>
    %968 = math.tanh %967 : vector<8x128xf32>
    %969 = arith.mulf %964, %968 : vector<8x128xf32>
    %970 = arith.truncf %969 : vector<8x128xf32> to vector<8x128xbf16>
    %c0_430 = arith.constant 0 : index
    %c128_431 = arith.constant 128 : index
    %971 = vector.load %arg14[%c0_430, %c128_431] : memref<8x256xbf16, #tpu.memory_space<vmem>>, vector<8x128xbf16>
    tpu.vector_store %arg14[%c0_430, %c128_431], %970 {strides = array<i32>} : memref<8x256xbf16, #tpu.memory_space<vmem>>, vector<8x128xbf16>,
    %972 = arith.index_cast %895 : i32 to index
    %c0_432 = arith.constant 0 : index
    %973 = vector.load %arg13[%972, %c0_432] : memref<96x128xf32, #tpu.memory_space<vmem>>, vector<8x128xf32>
    tpu.vector_store %arg13[%972, %c0_432], %969 {strides = array<i32>} : memref<96x128xf32, #tpu.memory_space<vmem>>, vector<8x128xf32>,
    %c12_i32 = arith.constant 12 : i32
    %c0_433 = arith.constant 0 : index
    %c0_434 = arith.constant 0 : index
    %974 = vector.load %arg13[%c0_433, %c0_434] : memref<96x128xf32, #tpu.memory_space<vmem>>, vector<96x128xf32>
    %975 = arith.truncf %974 : vector<96x128xf32> to vector<96x128xbf16>
    %c0_435 = arith.constant 0 : index
    %c0_436 = arith.constant 0 : index
    %976 = vector.load %arg7[%c0_435, %c0_436] : memref<128x128xbf16, #tpu.memory_space<vmem>>, vector<128x128xbf16>
    %cst_437 = arith.constant dense<0.000000e+00> : vector<96x128xf32>
    %977 = tpu.matmul %975, %976, %cst_437 {dimension_numbers = #tpu.dot_dimension_numbers<[1], [0], [0], [1], [0, 0, 1, 1], [], []>} : vector<96x128xbf16>, vector<128x128xbf16>, vector<96x128xf32> -> vector<96x128xf32>
    %c0_438 = arith.constant 0 : index
    %c0_439 = arith.constant 0 : index
    %978 = vector.load %arg8[%c0_438, %c0_439] : memref<1x128xf32, #tpu.memory_space<vmem>>, vector<1x128xf32>
    %979 = vector.broadcast %978 : vector<1x128xf32> to vector<96x128xf32>
    %980 = arith.addf %977, %979 : vector<96x128xf32>
    %981 = tpu.iota {dimensions = array<i32: 1>} : vector<96x128xi32>
    %c2_i32_440 = arith.constant 2 : i32
    %982 = vector.broadcast %c2_i32_440 : i32 to vector<96x128xi32>
    %983 = arith.cmpi slt, %981, %982 : vector<96x128xi32>
    %cst_441 = arith.constant 0.000000e+00 : f32
    %984 = vector.broadcast %cst_441 : f32 to vector<96x128xf32>
    %985 = arith.maximumf %980, %984 : vector<96x128xf32>
    %986 = vector.broadcast %cst_441 : f32 to vector<96x128xf32>
    %987 = arith.subf %980, %986 : vector<96x128xf32>
    %988 = arith.cmpf one, %987, %987 : vector<96x128xf32>
    %989 = vector.broadcast %cst_441 : f32 to vector<96x128xf32>
    %990 = arith.addf %980, %989 : vector<96x128xf32>
    %991 = math.absf %987 : vector<96x128xf32>
    %cst_442 = arith.constant 0.000000e+00 : f32
    %992 = vector.broadcast %cst_442 : f32 to vector<96x128xf32>
    %993 = arith.subf %992, %991 : vector<96x128xf32>
    %994 = math.exp %993 : vector<96x128xf32>
    %995 = math.log1p %994 : vector<96x128xf32>
    %996 = arith.addf %985, %995 : vector<96x128xf32>
    %997 = arith.select %988, %990, %996 : vector<96x128xi1>, vector<96x128xf32>
    %998 = arith.select %983, %980, %997 : vector<96x128xi1>, vector<96x128xf32>
    %999 = vector.shape_cast %998 : vector<96x128xf32> to vector<12x8x128xf32>
    %c0_443 = arith.constant 0 : index
    %c0_444 = arith.constant 0 : index
    %c0_445 = arith.constant 0 : index
    %1000 = vector.load %arg9[%c0_443, %c0_444, %c0_445] : memref<1x8x128xf32, #tpu.memory_space<vmem>>, vector<1x8x128xf32>
    %1001 = vector.shape_cast %1000 : vector<1x8x128xf32> to vector<8x128xf32>
    %1002 = vector.shape_cast %1001 : vector<8x128xf32> to vector<1x8x128xf32>
    %1003 = vector.broadcast %1002 : vector<1x8x128xf32> to vector<12x8x128xf32>
    %1004 = arith.mulf %999, %1003 : vector<12x8x128xf32>
    %c0_446 = arith.constant 0 : index
    %c0_447 = arith.constant 0 : index
    %c0_448 = arith.constant 0 : index
    %1005 = vector.load %arg10[%c0_446, %c0_447, %c0_448] : memref<1x8x128xf32, #tpu.memory_space<vmem>>, vector<1x8x128xf32>
    %1006 = vector.shape_cast %1005 : vector<1x8x128xf32> to vector<8x128xf32>
    %1007 = vector.shape_cast %1006 : vector<8x128xf32> to vector<1x8x128xf32>
    %1008 = vector.broadcast %1007 : vector<1x8x128xf32> to vector<12x8x128xf32>
    %1009 = arith.addf %1004, %1008 : vector<12x8x128xf32>
    %c0_449 = arith.constant 0 : index
    %c0_450 = arith.constant 0 : index
    %c0_451 = arith.constant 0 : index
    %c0_452 = arith.constant 0 : index
    %1010 = vector.load %arg11[%c0_449, %c0_450, %c0_451, %c0_452] : memref<1x12x8x128xf32, #tpu.memory_space<vmem>>, vector<1x12x8x128xf32>
    %1011 = vector.shape_cast %1010 : vector<1x12x8x128xf32> to vector<12x8x128xf32>
    %1012 = vector.shape_cast %1009 : vector<12x8x128xf32> to vector<1x12x8x128xf32>
    tpu.vector_store %arg11[%c0_449, %c0_450, %c0_451, %c0_452], %1012 {strides = array<i32>} : memref<1x12x8x128xf32, #tpu.memory_space<vmem>>, vector<1x12x8x128xf32>,
    return
  }
  func.func @transform_0(%arg0: i32) -> (i32, i32, i32) {
    %c0_i32 = arith.constant 0 : i32
    %c0_i32_0 = arith.constant 0 : i32
    %c0_i32_1 = arith.constant 0 : i32
    return %arg0, %c0_i32, %c0_i32_0 : i32, i32, i32
  }
  func.func @transform_1(%arg0: i32) -> (i32, i32) {
    %c0_i32 = arith.constant 0 : i32
    %c0_i32_0 = arith.constant 0 : i32
    %c0_i32_1 = arith.constant 0 : i32
    return %c0_i32, %c0_i32_0 : i32, i32
  }
  func.func @transform_2(%arg0: i32) -> (i32, i32) {
    %c0_i32 = arith.constant 0 : i32
    %c0_i32_0 = arith.constant 0 : i32
    %c0_i32_1 = arith.constant 0 : i32
    return %c0_i32, %c0_i32_0 : i32, i32
  }
  func.func @transform_3(%arg0: i32) -> (i32, i32) {
    %c0_i32 = arith.constant 0 : i32
    %c0_i32_0 = arith.constant 0 : i32
    %c0_i32_1 = arith.constant 0 : i32
    return %c0_i32, %c0_i32_0 : i32, i32
  }
  func.func @transform_4(%arg0: i32) -> (i32, i32) {
    %c0_i32 = arith.constant 0 : i32
    %c0_i32_0 = arith.constant 0 : i32
    %c0_i32_1 = arith.constant 0 : i32
    return %c0_i32, %c0_i32_0 : i32, i32
  }
  func.func @transform_5(%arg0: i32) -> (i32, i32) {
    %c0_i32 = arith.constant 0 : i32
    %c0_i32_0 = arith.constant 0 : i32
    %c0_i32_1 = arith.constant 0 : i32
    return %c0_i32, %c0_i32_0 : i32, i32
  }
  func.func @transform_6(%arg0: i32) -> (i32, i32) {
    %c0_i32 = arith.constant 0 : i32
    %c0_i32_0 = arith.constant 0 : i32
    %c0_i32_1 = arith.constant 0 : i32
    return %c0_i32, %c0_i32_0 : i32, i32
  }
  func.func @transform_7(%arg0: i32) -> (i32, i32) {
    %c0_i32 = arith.constant 0 : i32
    %c0_i32_0 = arith.constant 0 : i32
    %c0_i32_1 = arith.constant 0 : i32
    return %c0_i32, %c0_i32_0 : i32, i32
  }
  func.func @transform_8(%arg0: i32) -> (i32, i32, i32) {
    %c0_i32 = arith.constant 0 : i32
    %c0_i32_0 = arith.constant 0 : i32
    %c0_i32_1 = arith.constant 0 : i32
    return %arg0, %c0_i32, %c0_i32_0 : i32, i32, i32
  }
  func.func @transform_9(%arg0: i32) -> (i32, i32, i32) {
    %c0_i32 = arith.constant 0 : i32
    %c0_i32_0 = arith.constant 0 : i32
    %c0_i32_1 = arith.constant 0 : i32
    return %arg0, %c0_i32, %c0_i32_0 : i32, i32, i32
  }
  func.func @transform_10(%arg0: i32) -> (i32, i32, i32, i32) {
    %c0_i32 = arith.constant 0 : i32
    %c0_i32_0 = arith.constant 0 : i32
    %c0_i32_1 = arith.constant 0 : i32
    %c0_i32_2 = arith.constant 0 : i32
    return %arg0, %c0_i32, %c0_i32_0, %c0_i32_1 : i32, i32, i32, i32
  }
}

</mosaic_0001>

<llo_original>
// kernel: tpu_custom_call.1
$region0: #{tpu_custom_call.1}
  #allocation0 [shape = 'u32[]', space=smem, size = 0x4, offset = 0x4, fixed_abs, tag = 'smem constant byte address 0x4 - core index']
  #allocation1 [shape = 'u32[72,128]{1,0:T(1,128)}', space=vmem, size = 0x9000, scoped, tag = 'internal scratch']
  #allocation2 [shape = 'f32[96,512]{1,0:T(8,128)}', space=vmem, size = 0x30000, scoped, tag = 'scratch operand']
  #allocation3 [shape = 'f32[96,128]{1,0:T(8,128)}', space=vmem, size = 0xc000, scoped, tag = 'scratch operand']
  #allocation4 [shape = 'bf16[8,256]{1,0:T(8,128)(2,1)}', space=vmem, size = 0x1000, scoped, tag = 'scratch operand']
  %s0 = inlined_call_operand.vmem [shape: bf16[1,96,17], index: 0, kind: input, shape index: {}]
  %s1 = inlined_call_operand.hbm [shape: bf16[17,512], index: 1, kind: input, shape index: {}]
  %s2 = inlined_call_operand.hbm [shape: f32[1,512], index: 2, kind: input, shape index: {}]
  %s3 = inlined_call_operand.hbm [shape: bf16[128,512], index: 3, kind: input, shape index: {}]
  %s4 = inlined_call_operand.hbm [shape: bf16[256,512], index: 4, kind: input, shape index: {}]
  %s5 = inlined_call_operand.hbm [shape: f32[1,512], index: 5, kind: input, shape index: {}]
  %s6 = inlined_call_operand.vmem [shape: bf16[128,128], index: 6, kind: input, shape index: {}]
  %s7 = inlined_call_operand.vmem [shape: f32[1,128], index: 7, kind: input, shape index: {}]
  %s8 = inlined_call_operand.hbm [shape: f32[1,8,128], index: 8, kind: input, shape index: {}]
  %s9 = inlined_call_operand.hbm [shape: f32[1,8,128], index: 9, kind: input, shape index: {}]
  %s10 = inlined_call_operand.hbm [shape: f32[1,12,8,128], index: 10, kind: output, shape index: {}]
  %s11 = sld [smem:[#allocation0]]
  $region78: #{tpu_custom_call.1} parent=0
    _
  %s13 = ssub.s32 1, %s11
  %s14 = scalar_select 0, %s13, %s11
  $region1: #{tpu_custom_call.1} parent=0
    #allocation5 [shape = 'u8[24576]{0}', space=vmem, size = 0x6000, scoped, tag = 'input window, operand 1, single buffered']
    #allocation6 [shape = 's32[1]{0}', space=sflag, size = 0x4, scoped, tag = 'scoped memory for tpu_custom_call.1']
    #allocation7 [shape = 's32[1]{0}', space=sflag, size = 0x4, scoped, tag = 'scoped memory for tpu_custom_call.1']
    #allocation8 [shape = 'u8[2048]{0}', space=vmem, size = 0x800, scoped, tag = 'input window, operand 2, single buffered']
    #allocation9 [shape = 's32[1]{0}', space=sflag, size = 0x4, scoped, tag = 'scoped memory for tpu_custom_call.1']
    #allocation10 [shape = 'u8[131072]{0}', space=vmem, size = 0x20000, scoped, tag = 'input window, operand 3, single buffered']
    #allocation11 [shape = 'u8[262144]{0}', space=vmem, size = 0x40000, scoped, tag = 'input window, operand 4, single buffered']
    #allocation12 [shape = 's32[1]{0}', space=sflag, size = 0x4, scoped, tag = 'scoped memory for tpu_custom_call.1']
    #allocation13 [shape = 'u8[2048]{0}', space=vmem, size = 0x800, scoped, tag = 'input window, operand 5, single buffered']
    #allocation14 [shape = 'u8[4096]{0}', space=vmem, size = 0x1000, scoped, tag = 'input window, operand 8, single buffered']
    #allocation15 [shape = 's32[1]{0}', space=sflag, size = 0x4, scoped, tag = 'scoped memory for tpu_custom_call.1']
    #allocation16 [shape = 'u8[4096]{0}', space=vmem, size = 0x1000, scoped, tag = 'input window, operand 9, single buffered']
    #allocation17 [shape = 'u8[49152]{0}', space=vmem, size = 0xc000, scoped, tag = 'output window, operand 0, single buffered']
    %15 = vsyncpa [#allocation6], 0
    %16 = vsyncpa [#allocation9], 0
    %17 = vsyncpa [#allocation12], 0
    %18 = vsyncpa [#allocation15], 0
    %19 = vsyncpa [#allocation7], 0
    // Predicated region
    $region2: #{tpu_custom_call.1} parent=1 // pred_check
      _
    $region3: #{tpu_custom_call.1} parent=1 // pred_check_branch
      %21 = sbr.rel (0) target = $region5
    $region4: #{tpu_custom_call.1} parent=1 // pred_region
      _
    $region5: #{tpu_custom_call.1} parent=1 // pred_fallthru
      _
    // Predicated region
    $region6: #{tpu_custom_call.1} parent=1 // pred_check
      _
    $region7: #{tpu_custom_call.1} parent=1 // pred_check_branch
      %23 = sbr.rel (0) target = $region9
    $region8: #{tpu_custom_call.1} parent=1 // pred_region
      %25 = vsyncadd [#allocation6], 0
      %s26 = sshll.u32 %s1, 4
      %s27 = int_to_ptr.hbm [resolvable:$true] %s26
      %s28 = sshll.u32 [#allocation5], 4
      %s29 = int_to_ptr.vmem [resolvable:$true] %s28
      %34 = dma.hbm_to_vmem [thread:$0]  %s27, 768, %s29, [#allocation6], 256, 256, 16
    $region9: #{tpu_custom_call.1} parent=1 // pred_fallthru
      _
    // Predicated region
    $region10: #{tpu_custom_call.1} parent=1 // pred_check
      _
    $region11: #{tpu_custom_call.1} parent=1 // pred_check_branch
      %36 = sbr.rel (0) target = $region13
    $region12: #{tpu_custom_call.1} parent=1 // pred_region
      %38 = vsyncadd [#allocation9], 0
      %s40 = sshll.u32 %s2, 4
      %s41 = int_to_ptr.hbm [resolvable:$true] %s40
      %s42 = sshll.u32 [#allocation8], 4
      %s43 = int_to_ptr.vmem [resolvable:$true] %s42
      %45 = dma.hbm_to_vmem [thread:$0]  %s41, 64, %s43, [#allocation9]
    $region13: #{tpu_custom_call.1} parent=1 // pred_fallthru
      _
    // Predicated region
    $region14: #{tpu_custom_call.1} parent=1 // pred_check
      _
    $region15: #{tpu_custom_call.1} parent=1 // pred_check_branch
      %47 = sbr.rel (0) target = $region17
    $region16: #{tpu_custom_call.1} parent=1 // pred_region
      %49 = vsyncadd [#allocation9], 0
      %s50 = sshll.u32 %s3, 4
      %s51 = int_to_ptr.hbm [resolvable:$true] %s50
      %s52 = sshll.u32 [#allocation10], 4
      %s53 = int_to_ptr.vmem [resolvable:$true] %s52
      %58 = dma.hbm_to_vmem [thread:$0]  %s51, 4096, %s53, [#allocation9], 256, 256, 16
    $region17: #{tpu_custom_call.1} parent=1 // pred_fallthru
      _
    // Predicated region
    $region18: #{tpu_custom_call.1} parent=1 // pred_check
      _
    $region19: #{tpu_custom_call.1} parent=1 // pred_check_branch
      %60 = sbr.rel (0) target = $region21
    $region20: #{tpu_custom_call.1} parent=1 // pred_region
      %62 = vsyncadd [#allocation12], 0
      %s63 = sshll.u32 %s4, 4
      %s64 = int_to_ptr.hbm [resolvable:$true] %s63
      %s65 = sshll.u32 [#allocation11], 4
      %s66 = int_to_ptr.vmem [resolvable:$true] %s65
      %71 = dma.hbm_to_vmem [thread:$0]  %s64, 8192, %s66, [#allocation12], 256, 256, 16
    $region21: #{tpu_custom_call.1} parent=1 // pred_fallthru
      _
    // Predicated region
    $region22: #{tpu_custom_call.1} parent=1 // pred_check
      _
    $region23: #{tpu_custom_call.1} parent=1 // pred_check_branch
      %73 = sbr.rel (0) target = $region25
    $region24: #{tpu_custom_call.1} parent=1 // pred_region
      %75 = vsyncadd [#allocation12], 0
      %s77 = sshll.u32 %s5, 4
      %s78 = int_to_ptr.hbm [resolvable:$true] %s77
      %s79 = sshll.u32 [#allocation13], 4
      %s80 = int_to_ptr.vmem [resolvable:$true] %s79
      %82 = dma.hbm_to_vmem [thread:$0]  %s78, 64, %s80, [#allocation12]
    $region25: #{tpu_custom_call.1} parent=1 // pred_fallthru
      _
    // Predicated region
    $region26: #{tpu_custom_call.1} parent=1 // pred_check
      _
    $region27: #{tpu_custom_call.1} parent=1 // pred_check_branch
      %84 = sbr.rel (0) target = $region29
    $region28: #{tpu_custom_call.1} parent=1 // pred_region
      _
    $region29: #{tpu_custom_call.1} parent=1 // pred_fallthru
      _
    // Predicated region
    $region30: #{tpu_custom_call.1} parent=1 // pred_check
      _
    $region31: #{tpu_custom_call.1} parent=1 // pred_check_branch
      %86 = sbr.rel (0) target = $region33
    $region32: #{tpu_custom_call.1} parent=1 // pred_region
      _
    $region33: #{tpu_custom_call.1} parent=1 // pred_fallthru
      _
    // Predicated region
    $region34: #{tpu_custom_call.1} parent=1 // pred_check
      _
    $region35: #{tpu_custom_call.1} parent=1 // pred_check_branch
      %88 = sbr.rel (0) target = $region37
    $region36: #{tpu_custom_call.1} parent=1 // pred_region
      %90 = vsyncadd [#allocation15], 0
      %s92 = sshll.u32 %s8, 4
      %s93 = int_to_ptr.hbm [resolvable:$true] %s92
      %s94 = sshll.u32 [#allocation14], 4
      %s95 = int_to_ptr.vmem [resolvable:$true] %s94
      %97 = dma.hbm_to_vmem [thread:$0]  %s93, 128, %s95, [#allocation15]
    $region37: #{tpu_custom_call.1} parent=1 // pred_fallthru
      _
    // Predicated region
    $region38: #{tpu_custom_call.1} parent=1 // pred_check
      _
    $region39: #{tpu_custom_call.1} parent=1 // pred_check_branch
      %99 = sbr.rel (0) target = $region41
    $region40: #{tpu_custom_call.1} parent=1 // pred_region
      %101 = vsyncadd [#allocation15], 0
      %s103 = sshll.u32 %s9, 4
      %s104 = int_to_ptr.hbm [resolvable:$true] %s103
      %s105 = sshll.u32 [#allocation16], 4
      %s106 = int_to_ptr.vmem [resolvable:$true] %s105
      %108 = dma.hbm_to_vmem [thread:$0]  %s104, 128, %s106, [#allocation15]
    $region41: #{tpu_custom_call.1} parent=1 // pred_fallthru
      _
    // Predicated region
    $region42: #{tpu_custom_call.1} parent=1 // pred_check
      _
    $region43: #{tpu_custom_call.1} parent=1 // pred_check_branch
      %110 = sbr.rel (0) target = $region45
    $region44: #{tpu_custom_call.1} parent=1 // pred_region
      %112 = dma.done [#allocation6], 768
    $region45: #{tpu_custom_call.1} parent=1 // pred_fallthru
      _
    // Predicated region
    $region46: #{tpu_custom_call.1} parent=1 // pred_check
      _
    $region47: #{tpu_custom_call.1} parent=1 // pred_check_branch
      %114 = sbr.rel (0) target = $region49
    $region48: #{tpu_custom_call.1} parent=1 // pred_region
      %116 = dma.done [#allocation9], 64
    $region49: #{tpu_custom_call.1} parent=1 // pred_fallthru
      _
    // Predicated region
    $region50: #{tpu_custom_call.1} parent=1 // pred_check
      _
    $region51: #{tpu_custom_call.1} parent=1 // pred_check_branch
      %118 = sbr.rel (0) target = $region53
    $region52: #{tpu_custom_call.1} parent=1 // pred_region
      %120 = dma.done [#allocation9], 4096
    $region53: #{tpu_custom_call.1} parent=1 // pred_fallthru
      _
    // Predicated region
    $region54: #{tpu_custom_call.1} parent=1 // pred_check
      _
    $region55: #{tpu_custom_call.1} parent=1 // pred_check_branch
      %122 = sbr.rel (0) target = $region57
    $region56: #{tpu_custom_call.1} parent=1 // pred_region
      %124 = dma.done [#allocation12], 8192
    $region57: #{tpu_custom_call.1} parent=1 // pred_fallthru
      _
    // Predicated region
    $region58: #{tpu_custom_call.1} parent=1 // pred_check
      _
    $region59: #{tpu_custom_call.1} parent=1 // pred_check_branch
      %126 = sbr.rel (0) target = $region61
    $region60: #{tpu_custom_call.1} parent=1 // pred_region
      %128 = dma.done [#allocation12], 64
    $region61: #{tpu_custom_call.1} parent=1 // pred_fallthru
      _
    // Predicated region
    $region62: #{tpu_custom_call.1} parent=1 // pred_check
      _
    $region63: #{tpu_custom_call.1} parent=1 // pred_check_branch
      %130 = sbr.rel (0) target = $region65
    $region64: #{tpu_custom_call.1} parent=1 // pred_region
      %132 = dma.done [#allocation15], 128
    $region65: #{tpu_custom_call.1} parent=1 // pred_fallthru
      _
    // Predicated region
    $region66: #{tpu_custom_call.1} parent=1 // pred_check
      _
    $region67: #{tpu_custom_call.1} parent=1 // pred_check_branch
      %134 = sbr.rel (0) target = $region69
    $region68: #{tpu_custom_call.1} parent=1 // pred_region
      %136 = dma.done [#allocation15], 128
    $region69: #{tpu_custom_call.1} parent=1 // pred_fallthru
      _
    %v138 = vld [vmem:[%s0] sm:$0xf]
    %v139 = vld [vmem:[%s0 + $0x4] sm:$0xf]
    %v140 = vld [vmem:[%s0 + $0x8] sm:$0xf]
    %v141 = vld [vmem:[%s0 + $0xc] sm:$0xf]
    %v142 = vld [vmem:[%s0 + $0x10] sm:$0xf]
    %v143 = vld [vmem:[%s0 + $0x14] sm:$0xf]
    %v144 = vld [vmem:[%s0 + $0x18] sm:$0xf]
    %v145 = vld [vmem:[%s0 + $0x1c] sm:$0xf]
    %v146 = vld [vmem:[%s0 + $0x20] sm:$0xf]
    %v147 = vld [vmem:[%s0 + $0x24] sm:$0xf]
    %v148 = vld [vmem:[%s0 + $0x28] sm:$0xf]
    %v149 = vld [vmem:[%s0 + $0x2c] sm:$0xf]
    %v150 = vld [vmem:[#allocation5] sm:$0xff]
    %v151 = vld [vmem:[#allocation5 + $0x8] sm:$0xff]
    %v152 = vld [vmem:[#allocation5 + $0x10] sm:$0xff]
    %v153 = vld [vmem:[#allocation5 + $0x18] sm:$0xff]
    %v154 = vld [vmem:[#allocation5 + $0x20] sm:$0x11]
    %v155 = vld [vmem:[#allocation5 + $0x28] sm:$0x11]
    %v156 = vld [vmem:[#allocation8] sm:$0xf]
    %v158 = vperm.slane %v156, 0
    %v159 = vperm.slane %v156, 1
    %v160 = vperm.slane %v156, 2
    %v161 = vperm.slane %v156, 3
    %v178 = vunpack.c.l.b16 %v138
    %v179 = vunpack.c.l.b16 %v139
    %v180 = vunpack.c.l.b16 %v140
    %v181 = vunpack.c.l.b16 %v141
    %v182 = vunpack.c.l.b16 %v142
    %v183 = vunpack.c.l.b16 %v143
    %v184 = vunpack.c.l.b16 %v144
    %v185 = vunpack.c.l.b16 %v145
    %v186 = vunpack.c.l.b16 %v146
    %v187 = vunpack.c.l.b16 %v147
    %v188 = vunpack.c.l.b16 %v148
    %v189 = vunpack.c.l.b16 %v149
    %v190 = vpack.c.b16 %v179, %v178
    %v191 = vpack.c.b16 %v181, %v180
    %v192 = vpack.c.b16 %v183, %v182
    %v193 = vpack.c.b16 %v185, %v184
    %v194 = vpack.c.b16 %v187, %v186
    %v195 = vpack.c.b16 %v189, %v188
    %v202 = vunpack.c.l.b16 %v150
    %v203 = vunpack.c.h.b16 %v150
    %v204 = vunpack.c.l.b16 %v151
    %v205 = vunpack.c.h.b16 %v151
    %v206 = vunpack.c.l.b16 %v152
    %v207 = vunpack.c.h.b16 %v152
    %v208 = vunpack.c.l.b16 %v153
    %v209 = vunpack.c.h.b16 %v153
    %v210 = vunpack.c.l.b16 %v154
    %v211 = vunpack.c.h.b16 %v154
    %v212 = vunpack.c.l.b16 %v155
    %v213 = vunpack.c.h.b16 %v155
    %v214 = vpack.c.b16 %v206, %v202
    %v215 = vpack.c.b16 %v207, %v203
    %v216 = vpack.c.b16 %v208, %v204
    %v217 = vpack.c.b16 %v209, %v205
    %v218 = vpack.c.b16 %v210, %v210
    %v219 = vpack.c.b16 %v211, %v211
    %v220 = vpack.c.b16 %v212, %v212
    %v221 = vpack.c.b16 %v213, %v213
    %vm226 = vcmask 138240
    %v228 = vsel %vm226, %v190, 0
    %v231 = vsel %vm226, %v191, 0
    %v234 = vsel %vm226, %v192, 0
    %v237 = vsel %vm226, %v193, 0
    %v240 = vsel %vm226, %v194, 0
    %v243 = vsel %vm226, %v195, 0
    %vm245 = vcmask 1040384
    %v246 = vsel 0, 4294967295, 65535
    %v247 = vsel %vm245, %v246, 0
    %v249 = vand.u32 %v218, %v247
    %v252 = vand.u32 %v219, %v247
    %v255 = vand.u32 %v220, %v247
    %v258 = vand.u32 %v221, %v247
    %260 = vmatpush.bf16.msra.mxu0 0
    %261 = vmatpush.bf16.msra.mxu0 0
    %262 = vmatpush.bf16.msra.mxu0 0
    %263 = vmatpush.bf16.msra.mxu0 0
    %264 = vmatpush.bf16.msra.mxu0 0
    %265 = vmatpush.bf16.msra.mxu0 0
    %266 = vmatpush.bf16.msra.mxu0 %v249
    %267 = vmatpush.bf16.msra.mxu0 %v214
    %268 = vmatmul.bf16.gmra.mxu0 %v228
    %v269 = vpop.f32.mrf.mxu0
    %v270 = vadd.f32 %v158, %v269
    %v271 = vpop.f32.mrf.mxu0
    %v272 = vadd.f32 %v158, %v271
    %273 = vmatmul.bf16.gmra.mxu0 %v231
    %v274 = vpop.f32.mrf.mxu0
    %v275 = vadd.f32 %v158, %v274
    %v276 = vpop.f32.mrf.mxu0
    %v277 = vadd.f32 %v158, %v276
    %278 = vmatmul.bf16.gmra.mxu0 %v234
    %v279 = vpop.f32.mrf.mxu0
    %v280 = vadd.f32 %v158, %v279
    %v281 = vpop.f32.mrf.mxu0
    %v282 = vadd.f32 %v158, %v281
    %283 = vmatmul.bf16.gmra.mxu0 %v237
    %v284 = vpop.f32.mrf.mxu0
    %v285 = vadd.f32 %v158, %v284
    %v286 = vpop.f32.mrf.mxu0
    %v287 = vadd.f32 %v158, %v286
    %288 = vmatmul.bf16.gmra.mxu0 %v240
    %v289 = vpop.f32.mrf.mxu0
    %v290 = vadd.f32 %v158, %v289
    %v291 = vpop.f32.mrf.mxu0
    %v292 = vadd.f32 %v158, %v291
    %293 = vmatmul.bf16.gmra.mxu0 %v243
    %v294 = vpop.f32.mrf.mxu0
    %v295 = vadd.f32 %v158, %v294
    %v296 = vpop.f32.mrf.mxu0
    %v297 = vadd.f32 %v158, %v296
    %298 = vdwg.mxu0
    %299 = vmatpush.bf16.msra.mxu0 0
    %300 = vmatpush.bf16.msra.mxu0 0
    %301 = vmatpush.bf16.msra.mxu0 0
    %302 = vmatpush.bf16.msra.mxu0 0
    %303 = vmatpush.bf16.msra.mxu0 0
    %304 = vmatpush.bf16.msra.mxu0 0
    %305 = vmatpush.bf16.msra.mxu0 %v252
    %306 = vmatpush.bf16.msra.mxu0 %v215
    %307 = vmatmul.bf16.gmra.mxu0 %v228
    %v308 = vpop.f32.mrf.mxu0
    %v309 = vadd.f32 %v159, %v308
    %v310 = vpop.f32.mrf.mxu0
    %v311 = vadd.f32 %v159, %v310
    %312 = vmatmul.bf16.gmra.mxu0 %v231
    %v313 = vpop.f32.mrf.mxu0
    %v314 = vadd.f32 %v159, %v313
    %v315 = vpop.f32.mrf.mxu0
    %v316 = vadd.f32 %v159, %v315
    %317 = vmatmul.bf16.gmra.mxu0 %v234
    %v318 = vpop.f32.mrf.mxu0
    %v319 = vadd.f32 %v159, %v318
    %v320 = vpop.f32.mrf.mxu0
    %v321 = vadd.f32 %v159, %v320
    %322 = vmatmul.bf16.gmra.mxu0 %v237
    %v323 = vpop.f32.mrf.mxu0
    %v324 = vadd.f32 %v159, %v323
    %v325 = vpop.f32.mrf.mxu0
    %v326 = vadd.f32 %v159, %v325
    %327 = vmatmul.bf16.gmra.mxu0 %v240
    %v328 = vpop.f32.mrf.mxu0
    %v329 = vadd.f32 %v159, %v328
    %v330 = vpop.f32.mrf.mxu0
    %v331 = vadd.f32 %v159, %v330
    %332 = vmatmul.bf16.gmra.mxu0 %v243
    %v333 = vpop.f32.mrf.mxu0
    %v334 = vadd.f32 %v159, %v333
    %v335 = vpop.f32.mrf.mxu0
    %v336 = vadd.f32 %v159, %v335
    %337 = vdwg.mxu0
    %338 = vmatpush.bf16.msra.mxu0 0
    %339 = vmatpush.bf16.msra.mxu0 0
    %340 = vmatpush.bf16.msra.mxu0 0
    %341 = vmatpush.bf16.msra.mxu0 0
    %342 = vmatpush.bf16.msra.mxu0 0
    %343 = vmatpush.bf16.msra.mxu0 0
    %344 = vmatpush.bf16.msra.mxu0 %v255
    %345 = vmatpush.bf16.msra.mxu0 %v216
    %346 = vmatmul.bf16.gmra.mxu0 %v228
    %v347 = vpop.f32.mrf.mxu0
    %v348 = vadd.f32 %v160, %v347
    %v349 = vpop.f32.mrf.mxu0
    %v350 = vadd.f32 %v160, %v349
    %351 = vmatmul.bf16.gmra.mxu0 %v231
    %v352 = vpop.f32.mrf.mxu0
    %v353 = vadd.f32 %v160, %v352
    %v354 = vpop.f32.mrf.mxu0
    %v355 = vadd.f32 %v160, %v354
    %356 = vmatmul.bf16.gmra.mxu0 %v234
    %v357 = vpop.f32.mrf.mxu0
    %v358 = vadd.f32 %v160, %v357
    %v359 = vpop.f32.mrf.mxu0
    %v360 = vadd.f32 %v160, %v359
    %361 = vmatmul.bf16.gmra.mxu0 %v237
    %v362 = vpop.f32.mrf.mxu0
    %v363 = vadd.f32 %v160, %v362
    %v364 = vpop.f32.mrf.mxu0
    %v365 = vadd.f32 %v160, %v364
    %366 = vmatmul.bf16.gmra.mxu0 %v240
    %v367 = vpop.f32.mrf.mxu0
    %v368 = vadd.f32 %v160, %v367
    %v369 = vpop.f32.mrf.mxu0
    %v370 = vadd.f32 %v160, %v369
    %371 = vmatmul.bf16.gmra.mxu0 %v243
    %v372 = vpop.f32.mrf.mxu0
    %v373 = vadd.f32 %v160, %v372
    %v374 = vpop.f32.mrf.mxu0
    %v375 = vadd.f32 %v160, %v374
    %376 = vdwg.mxu0
    %377 = vmatpush.bf16.msra.mxu0 0
    %378 = vmatpush.bf16.msra.mxu0 0
    %379 = vmatpush.bf16.msra.mxu0 0
    %380 = vmatpush.bf16.msra.mxu0 0
    %381 = vmatpush.bf16.msra.mxu0 0
    %382 = vmatpush.bf16.msra.mxu0 0
    %383 = vmatpush.bf16.msra.mxu0 %v258
    %384 = vmatpush.bf16.msra.mxu0 %v217
    %385 = vmatmul.bf16.gmra.mxu0 %v228
    %v386 = vpop.f32.mrf.mxu0
    %v387 = vadd.f32 %v161, %v386
    %v388 = vpop.f32.mrf.mxu0
    %v389 = vadd.f32 %v161, %v388
    %390 = vmatmul.bf16.gmra.mxu0 %v231
    %v391 = vpop.f32.mrf.mxu0
    %v392 = vadd.f32 %v161, %v391
    %v393 = vpop.f32.mrf.mxu0
    %v394 = vadd.f32 %v161, %v393
    %395 = vmatmul.bf16.gmra.mxu0 %v234
    %v396 = vpop.f32.mrf.mxu0
    %v397 = vadd.f32 %v161, %v396
    %v398 = vpop.f32.mrf.mxu0
    %v399 = vadd.f32 %v161, %v398
    %400 = vmatmul.bf16.gmra.mxu0 %v237
    %v401 = vpop.f32.mrf.mxu0
    %v402 = vadd.f32 %v161, %v401
    %v403 = vpop.f32.mrf.mxu0
    %v404 = vadd.f32 %v161, %v403
    %405 = vmatmul.bf16.gmra.mxu0 %v240
    %v406 = vpop.f32.mrf.mxu0
    %v407 = vadd.f32 %v161, %v406
    %v408 = vpop.f32.mrf.mxu0
    %v409 = vadd.f32 %v161, %v408
    %410 = vmatmul.bf16.gmra.mxu0 %v243
    %v411 = vpop.f32.mrf.mxu0
    %v412 = vadd.f32 %v161, %v411
    %v413 = vpop.f32.mrf.mxu0
    %v414 = vadd.f32 %v161, %v413
    %415 = vdwg.mxu0
    %416 = vst [vmem:[#allocation2] sm:$0xff] %v270
    %417 = vst [vmem:[#allocation2 + $0x8] sm:$0xff] %v309
    %418 = vst [vmem:[#allocation2 + $0x10] sm:$0xff] %v348
    %419 = vst [vmem:[#allocation2 + $0x18] sm:$0xff] %v387
    %420 = vst [vmem:[#allocation2 + $0x20] sm:$0xff] %v272
    %421 = vst [vmem:[#allocation2 + $0x28] sm:$0xff] %v311
    %422 = vst [vmem:[#allocation2 + $0x30] sm:$0xff] %v350
    %423 = vst [vmem:[#allocation2 + $0x38] sm:$0xff] %v389
    %424 = vst [vmem:[#allocation2 + $0x40] sm:$0xff] %v275
    %425 = vst [vmem:[#allocation2 + $0x48] sm:$0xff] %v314
    %426 = vst [vmem:[#allocation2 + $0x50] sm:$0xff] %v353
    %427 = vst [vmem:[#allocation2 + $0x58] sm:$0xff] %v392
    %428 = vst [vmem:[#allocation2 + $0x60] sm:$0xff] %v277
    %429 = vst [vmem:[#allocation2 + $0x68] sm:$0xff] %v316
    %430 = vst [vmem:[#allocation2 + $0x70] sm:$0xff] %v355
    %431 = vst [vmem:[#allocation2 + $0x78] sm:$0xff] %v394
    %432 = vst [vmem:[#allocation2 + $0x80] sm:$0xff] %v280
    %433 = vst [vmem:[#allocation2 + $0x88] sm:$0xff] %v319
    %434 = vst [vmem:[#allocation2 + $0x90] sm:$0xff] %v358
    %435 = vst [vmem:[#allocation2 + $0x98] sm:$0xff] %v397
    %436 = vst [vmem:[#allocation2 + $0xa0] sm:$0xff] %v282
    %437 = vst [vmem:[#allocation2 + $0xa8] sm:$0xff] %v321
    %438 = vst [vmem:[#allocation2 + $0xb0] sm:$0xff] %v360
    %439 = vst [vmem:[#allocation2 + $0xb8] sm:$0xff] %v399
    %440 = vst [vmem:[#allocation2 + $0xc0] sm:$0xff] %v285
    %441 = vst [vmem:[#allocation2 + $0xc8] sm:$0xff] %v324
    %442 = vst [vmem:[#allocation2 + $0xd0] sm:$0xff] %v363
    %443 = vst [vmem:[#allocation2 + $0xd8] sm:$0xff] %v402
    %444 = vst [vmem:[#allocation2 + $0xe0] sm:$0xff] %v287
    %445 = vst [vmem:[#allocation2 + $0xe8] sm:$0xff] %v326
    %446 = vst [vmem:[#allocation2 + $0xf0] sm:$0xff] %v365
    %447 = vst [vmem:[#allocation2 + $0xf8] sm:$0xff] %v404
    %448 = vst [vmem:[#allocation2 + $0x100] sm:$0xff] %v290
    %449 = vst [vmem:[#allocation2 + $0x108] sm:$0xff] %v329
    %450 = vst [vmem:[#allocation2 + $0x110] sm:$0xff] %v368
    %451 = vst [vmem:[#allocation2 + $0x118] sm:$0xff] %v407
    %452 = vst [vmem:[#allocation2 + $0x120] sm:$0xff] %v292
    %453 = vst [vmem:[#allocation2 + $0x128] sm:$0xff] %v331
    %454 = vst [vmem:[#allocation2 + $0x130] sm:$0xff] %v370
    %455 = vst [vmem:[#allocation2 + $0x138] sm:$0xff] %v409
    %456 = vst [vmem:[#allocation2 + $0x140] sm:$0xff] %v295
    %457 = vst [vmem:[#allocation2 + $0x148] sm:$0xff] %v334
    %458 = vst [vmem:[#allocation2 + $0x150] sm:$0xff] %v373
    %459 = vst [vmem:[#allocation2 + $0x158] sm:$0xff] %v412
    %460 = vst [vmem:[#allocation2 + $0x160] sm:$0xff] %v297
    %461 = vst [vmem:[#allocation2 + $0x168] sm:$0xff] %v336
    %462 = vst [vmem:[#allocation2 + $0x170] sm:$0xff] %v375
    %463 = vst [vmem:[#allocation2 + $0x178] sm:$0xff] %v414
    %464 = vst [vmem:[#allocation4] sm:$0xff] 0
    %v465 = vld [vmem:[#allocation13] sm:$0xf]
    %v467 = vperm.slane %v465, 0
    %v468 = vperm.slane %v465, 1
    %v469 = vperm.slane %v465, 2
    %v470 = vperm.slane %v465, 3
    %s475 = smul.u32 0, 4
    %s476 = smul.addr %s475, 8
    %s477 = scalar_lea.vmem [#allocation2], %s476
    %v478 = vld [vmem:[%s477] sm:$0xff]
    %v479 = vld [vmem:[%s477 + $0x8] sm:$0xff]
    %v480 = vld [vmem:[%s477 + $0x10] sm:$0xff]
    %v481 = vld [vmem:[%s477 + $0x18] sm:$0xff]
    %v482 = vld [vmem:[#allocation4] sm:$0xf]
    %v483 = vld [vmem:[#allocation10] sm:$0xff]
    %v484 = vld [vmem:[#allocation10 + $0x8] sm:$0xff]
    %v485 = vld [vmem:[#allocation10 + $0x10] sm:$0xff]
    %v486 = vld [vmem:[#allocation10 + $0x18] sm:$0xff]
    %v487 = vld [vmem:[#allocation10 + $0x20] sm:$0xff]
    %v488 = vld [vmem:[#allocation10 + $0x28] sm:$0xff]
    %v489 = vld [vmem:[#allocation10 + $0x30] sm:$0xff]
    %v490 = vld [vmem:[#allocation10 + $0x38] sm:$0xff]
    %v491 = vld [vmem:[#allocation10 + $0x40] sm:$0xff]
    %v492 = vld [vmem:[#allocation10 + $0x48] sm:$0xff]
    %v493 = vld [vmem:[#allocation10 + $0x50] sm:$0xff]
    %v494 = vld [vmem:[#allocation10 + $0x58] sm:$0xff]
    %v495 = vld [vmem:[#allocation10 + $0x60] sm:$0xff]
    %v496 = vld [vmem:[#allocation10 + $0x68] sm:$0xff]
    %v497 = vld [vmem:[#allocation10 + $0x70] sm:$0xff]
    %v498 = vld [vmem:[#allocation10 + $0x78] sm:$0xff]
    %v499 = vld [vmem:[#allocation10 + $0x80] sm:$0xff]
    %v500 = vld [vmem:[#allocation10 + $0x88] sm:$0xff]
    %v501 = vld [vmem:[#allocation10 + $0x90] sm:$0xff]
    %v502 = vld [vmem:[#allocation10 + $0x98] sm:$0xff]
    %v503 = vld [vmem:[#allocation10 + $0xa0] sm:$0xff]
    %v504 = vld [vmem:[#allocation10 + $0xa8] sm:$0xff]
    %v505 = vld [vmem:[#allocation10 + $0xb0] sm:$0xff]
    %v506 = vld [vmem:[#allocation10 + $0xb8] sm:$0xff]
    %v507 = vld [vmem:[#allocation10 + $0xc0] sm:$0xff]
    %v508 = vld [vmem:[#allocation10 + $0xc8] sm:$0xff]
    %v509 = vld [vmem:[#allocation10 + $0xd0] sm:$0xff]
    %v510 = vld [vmem:[#allocation10 + $0xd8] sm:$0xff]
    %v511 = vld [vmem:[#allocation10 + $0xe0] sm:$0xff]
    %v512 = vld [vmem:[#allocation10 + $0xe8] sm:$0xff]
    %v513 = vld [vmem:[#allocation10 + $0xf0] sm:$0xff]
    %v514 = vld [vmem:[#allocation10 + $0xf8] sm:$0xff]
    %v547 = vunpack.c.l.b16 %v483
    %v548 = vunpack.c.h.b16 %v483
    %v549 = vunpack.c.l.b16 %v484
    %v550 = vunpack.c.h.b16 %v484
    %v551 = vunpack.c.l.b16 %v485
    %v552 = vunpack.c.h.b16 %v485
    %v553 = vunpack.c.l.b16 %v486
    %v554 = vunpack.c.h.b16 %v486
    %v555 = vunpack.c.l.b16 %v487
    %v556 = vunpack.c.h.b16 %v487
    %v557 = vunpack.c.l.b16 %v488
    %v558 = vunpack.c.h.b16 %v488
    %v559 = vunpack.c.l.b16 %v489
    %v560 = vunpack.c.h.b16 %v489
    %v561 = vunpack.c.l.b16 %v490
    %v562 = vunpack.c.h.b16 %v490
    %v563 = vunpack.c.l.b16 %v491
    %v564 = vunpack.c.h.b16 %v491
    %v565 = vunpack.c.l.b16 %v492
    %v566 = vunpack.c.h.b16 %v492
    %v567 = vunpack.c.l.b16 %v493
    %v568 = vunpack.c.h.b16 %v493
    %v569 = vunpack.c.l.b16 %v494
    %v570 = vunpack.c.h.b16 %v494
    %v571 = vunpack.c.l.b16 %v495
    %v572 = vunpack.c.h.b16 %v495
    %v573 = vunpack.c.l.b16 %v496
    %v574 = vunpack.c.h.b16 %v496
    %v575 = vunpack.c.l.b16 %v497
    %v576 = vunpack.c.h.b16 %v497
    %v577 = vunpack.c.l.b16 %v498
    %v578 = vunpack.c.h.b16 %v498
    %v579 = vunpack.c.l.b16 %v499
    %v580 = vunpack.c.h.b16 %v499
    %v581 = vunpack.c.l.b16 %v500
    %v582 = vunpack.c.h.b16 %v500
    %v583 = vunpack.c.l.b16 %v501
    %v584 = vunpack.c.h.b16 %v501
    %v585 = vunpack.c.l.b16 %v502
    %v586 = vunpack.c.h.b16 %v502
    %v587 = vunpack.c.l.b16 %v503
    %v588 = vunpack.c.h.b16 %v503
    %v589 = vunpack.c.l.b16 %v504
    %v590 = vunpack.c.h.b16 %v504
    %v591 = vunpack.c.l.b16 %v505
    %v592 = vunpack.c.h.b16 %v505
    %v593 = vunpack.c.l.b16 %v506
    %v594 = vunpack.c.h.b16 %v506
    %v595 = vunpack.c.l.b16 %v507
    %v596 = vunpack.c.h.b16 %v507
    %v597 = vunpack.c.l.b16 %v508
    %v598 = vunpack.c.h.b16 %v508
    %v599 = vunpack.c.l.b16 %v509
    %v600 = vunpack.c.h.b16 %v509
    %v601 = vunpack.c.l.b16 %v510
    %v602 = vunpack.c.h.b16 %v510
    %v603 = vunpack.c.l.b16 %v511
    %v604 = vunpack.c.h.b16 %v511
    %v605 = vunpack.c.l.b16 %v512
    %v606 = vunpack.c.h.b16 %v512
    %v607 = vunpack.c.l.b16 %v513
    %v608 = vunpack.c.h.b16 %v513
    %v609 = vunpack.c.l.b16 %v514
    %v610 = vunpack.c.h.b16 %v514
    %v611 = vpack.c.b16 %v551, %v547
    %v612 = vpack.c.b16 %v552, %v548
    %v613 = vpack.c.b16 %v553, %v549
    %v614 = vpack.c.b16 %v554, %v550
    %v615 = vpack.c.b16 %v559, %v555
    %v616 = vpack.c.b16 %v560, %v556
    %v617 = vpack.c.b16 %v561, %v557
    %v618 = vpack.c.b16 %v562, %v558
    %v619 = vpack.c.b16 %v567, %v563
    %v620 = vpack.c.b16 %v568, %v564
    %v621 = vpack.c.b16 %v569, %v565
    %v622 = vpack.c.b16 %v570, %v566
    %v623 = vpack.c.b16 %v575, %v571
    %v624 = vpack.c.b16 %v576, %v572
    %v625 = vpack.c.b16 %v577, %v573
    %v626 = vpack.c.b16 %v578, %v574
    %v627 = vpack.c.b16 %v583, %v579
    %v628 = vpack.c.b16 %v584, %v580
    %v629 = vpack.c.b16 %v585, %v581
    %v630 = vpack.c.b16 %v586, %v582
    %v631 = vpack.c.b16 %v591, %v587
    %v632 = vpack.c.b16 %v592, %v588
    %v633 = vpack.c.b16 %v593, %v589
    %v634 = vpack.c.b16 %v594, %v590
    %v635 = vpack.c.b16 %v599, %v595
    %v636 = vpack.c.b16 %v600, %v596
    %v637 = vpack.c.b16 %v601, %v597
    %v638 = vpack.c.b16 %v602, %v598
    %v639 = vpack.c.b16 %v607, %v603
    %v640 = vpack.c.b16 %v608, %v604
    %v641 = vpack.c.b16 %v609, %v605
    %v642 = vpack.c.b16 %v610, %v606
    %675 = vmatpush.bf16.msra.mxu0 %v639
    %676 = vmatpush.bf16.msra.mxu0 %v635
    %677 = vmatpush.bf16.msra.mxu0 %v631
    %678 = vmatpush.bf16.msra.mxu0 %v627
    %679 = vmatpush.bf16.msra.mxu0 %v623
    %680 = vmatpush.bf16.msra.mxu0 %v619
    %681 = vmatpush.bf16.msra.mxu0 %v615
    %682 = vmatpush.bf16.msra.mxu0 %v611
    %683 = vmatmul.bf16.gmra.mxu0 %v482
    %v684 = vpop.f32.mrf.mxu0
    %v685 = vadd.f32 0.0, %v684
    %v686 = vpop.f32.mrf.mxu0
    %687 = vdwg.mxu0
    %688 = vmatpush.bf16.msra.mxu0 %v640
    %689 = vmatpush.bf16.msra.mxu0 %v636
    %690 = vmatpush.bf16.msra.mxu0 %v632
    %691 = vmatpush.bf16.msra.mxu0 %v628
    %692 = vmatpush.bf16.msra.mxu0 %v624
    %693 = vmatpush.bf16.msra.mxu0 %v620
    %694 = vmatpush.bf16.msra.mxu0 %v616
    %695 = vmatpush.bf16.msra.mxu0 %v612
    %696 = vmatmul.bf16.gmra.mxu0 %v482
    %v697 = vpop.f32.mrf.mxu0
    %v698 = vadd.f32 0.0, %v697
    %v699 = vpop.f32.mrf.mxu0
    %700 = vdwg.mxu0
    %701 = vmatpush.bf16.msra.mxu0 %v641
    %702 = vmatpush.bf16.msra.mxu0 %v637
    %703 = vmatpush.bf16.msra.mxu0 %v633
    %704 = vmatpush.bf16.msra.mxu0 %v629
    %705 = vmatpush.bf16.msra.mxu0 %v625
    %706 = vmatpush.bf16.msra.mxu0 %v621
    %707 = vmatpush.bf16.msra.mxu0 %v617
    %708 = vmatpush.bf16.msra.mxu0 %v613
    %709 = vmatmul.bf16.gmra.mxu0 %v482
    %v710 = vpop.f32.mrf.mxu0
    %v711 = vadd.f32 0.0, %v710
    %v712 = vpop.f32.mrf.mxu0
    %713 = vdwg.mxu0
    %714 = vmatpush.bf16.msra.mxu0 %v642
    %715 = vmatpush.bf16.msra.mxu0 %v638
    %716 = vmatpush.bf16.msra.mxu0 %v634
    %717 = vmatpush.bf16.msra.mxu0 %v630
    %718 = vmatpush.bf16.msra.mxu0 %v626
    %719 = vmatpush.bf16.msra.mxu0 %v622
    %720 = vmatpush.bf16.msra.mxu0 %v618
    %721 = vmatpush.bf16.msra.mxu0 %v614
    %722 = vmatmul.bf16.gmra.mxu0 %v482
    %v723 = vpop.f32.mrf.mxu0
    %v724 = vadd.f32 0.0, %v723
    %v725 = vpop.f32.mrf.mxu0
    %726 = vdwg.mxu0
    %v727 = vadd.f32 %v478, %v685
    %v728 = vadd.f32 %v479, %v698
    %v729 = vadd.f32 %v480, %v711
    %v730 = vadd.f32 %v481, %v724
    %v731 = vmul.f32 %v727, 0.5
    %v732 = vtanh.pop %v731
    %v733 = vmul.f32 %v732, 0.5
    %v734 = vadd.f32 %v733, 0.5
    %v735 = vmul.f32 %v728, 0.5
    %v736 = vtanh.pop %v735
    %v737 = vmul.f32 %v736, 0.5
    %v738 = vadd.f32 %v737, 0.5
    %v739 = vtanh.pop %v729
    %v740 = vmul.f32 %v730, 0.5
    %v741 = vtanh.pop %v740
    %v742 = vmul.f32 %v741, 0.5
    %v743 = vadd.f32 %v742, 0.5
    %v744 = vmul.f32 %v738, 0.0
    %v745 = vmul.f32 %v734, %v739
    %v746 = vadd.f32 %v744, %v745
    %v747 = vtanh.pop %v746
    %v748 = vmul.f32 %v743, %v747
    %v749 = vpack.c.bf16 %v748, %v748
    %750 = vst [vmem:[#allocation4] sm:$0xf] %v749
    %v751 = vld [vmem:[#allocation4] sm:$0xff]
    %v752 = vld [vmem:[#allocation11] sm:$0xff]
    %v753 = vld [vmem:[#allocation11 + $0x8] sm:$0xff]
    %v754 = vld [vmem:[#allocation11 + $0x10] sm:$0xff]
    %v755 = vld [vmem:[#allocation11 + $0x18] sm:$0xff]
    %v756 = vld [vmem:[#allocation11 + $0x20] sm:$0xff]
    %v757 = vld [vmem:[#allocation11 + $0x28] sm:$0xff]
    %v758 = vld [vmem:[#allocation11 + $0x30] sm:$0xff]
    %v759 = vld [vmem:[#allocation11 + $0x38] sm:$0xff]
    %v760 = vld [vmem:[#allocation11 + $0x40] sm:$0xff]
    %v761 = vld [vmem:[#allocation11 + $0x48] sm:$0xff]
    %v762 = vld [vmem:[#allocation11 + $0x50] sm:$0xff]
    %v763 = vld [vmem:[#allocation11 + $0x58] sm:$0xff]
    %v764 = vld [vmem:[#allocation11 + $0x60] sm:$0xff]
    %v765 = vld [vmem:[#allocation11 + $0x68] sm:$0xff]
    %v766 = vld [vmem:[#allocation11 + $0x70] sm:$0xff]
    %v767 = vld [vmem:[#allocation11 + $0x78] sm:$0xff]
    %v768 = vld [vmem:[#allocation11 + $0x80] sm:$0xff]
    %v769 = vld [vmem:[#allocation11 + $0x88] sm:$0xff]
    %v770 = vld [vmem:[#allocation11 + $0x90] sm:$0xff]
    %v771 = vld [vmem:[#allocation11 + $0x98] sm:$0xff]
    %v772 = vld [vmem:[#allocation11 + $0xa0] sm:$0xff]
    %v773 = vld [vmem:[#allocation11 + $0xa8] sm:$0xff]
    %v774 = vld [vmem:[#allocation11 + $0xb0] sm:$0xff]
    %v775 = vld [vmem:[#allocation11 + $0xb8] sm:$0xff]
    %v776 = vld [vmem:[#allocation11 + $0xc0] sm:$0xff]
    %v777 = vld [vmem:[#allocation11 + $0xc8] sm:$0xff]
    %v778 = vld [vmem:[#allocation11 + $0xd0] sm:$0xff]
    %v779 = vld [vmem:[#allocation11 + $0xd8] sm:$0xff]
    %v780 = vld [vmem:[#allocation11 + $0xe0] sm:$0xff]
    %v781 = vld [vmem:[#allocation11 + $0xe8] sm:$0xff]
    %v782 = vld [vmem:[#allocation11 + $0xf0] sm:$0xff]
    %v783 = vld [vmem:[#allocation11 + $0xf8] sm:$0xff]
    %v784 = vld [vmem:[#allocation11 + $0x100] sm:$0xff]
    %v785 = vld [vmem:[#allocation11 + $0x108] sm:$0xff]
    %v786 = vld [vmem:[#allocation11 + $0x110] sm:$0xff]
    %v787 = vld [vmem:[#allocation11 + $0x118] sm:$0xff]
    %v788 = vld [vmem:[#allocation11 + $0x120] sm:$0xff]
    %v789 = vld [vmem:[#allocation11 + $0x128] sm:$0xff]
    %v790 = vld [vmem:[#allocation11 + $0x130] sm:$0xff]
    %v791 = vld [vmem:[#allocation11 + $0x138] sm:$0xff]
    %v792 = vld [vmem:[#allocation11 + $0x140] sm:$0xff]
    %v793 = vld [vmem:[#allocation11 + $0x148] sm:$0xff]
    %v794 = vld [vmem:[#allocation11 + $0x150] sm:$0xff]
    %v795 = vld [vmem:[#allocation11 + $0x158] sm:$0xff]
    %v796 = vld [vmem:[#allocation11 + $0x160] sm:$0xff]
    %v797 = vld [vmem:[#allocation11 + $0x168] sm:$0xff]
    %v798 = vld [vmem:[#allocation11 + $0x170] sm:$0xff]
    %v799 = vld [vmem:[#allocation11 + $0x178] sm:$0xff]
    %v800 = vld [vmem:[#allocation11 + $0x180] sm:$0xff]
    %v801 = vld [vmem:[#allocation11 + $0x188] sm:$0xff]
    %v802 = vld [vmem:[#allocation11 + $0x190] sm:$0xff]
    %v803 = vld [vmem:[#allocation11 + $0x198] sm:$0xff]
    %v804 = vld [vmem:[#allocation11 + $0x1a0] sm:$0xff]
    %v805 = vld [vmem:[#allocation11 + $0x1a8] sm:$0xff]
    %v806 = vld [vmem:[#allocation11 + $0x1b0] sm:$0xff]
    %v807 = vld [vmem:[#allocation11 + $0x1b8] sm:$0xff]
    %v808 = vld [vmem:[#allocation11 + $0x1c0] sm:$0xff]
    %v809 = vld [vmem:[#allocation11 + $0x1c8] sm:$0xff]
    %v810 = vld [vmem:[#allocation11 + $0x1d0] sm:$0xff]
    %v811 = vld [vmem:[#allocation11 + $0x1d8] sm:$0xff]
    %v812 = vld [vmem:[#allocation11 + $0x1e0] sm:$0xff]
    %v813 = vld [vmem:[#allocation11 + $0x1e8] sm:$0xff]
    %v814 = vld [vmem:[#allocation11 + $0x1f0] sm:$0xff]
    %v815 = vld [vmem:[#allocation11 + $0x1f8] sm:$0xff]
    %v817 = vunpack.c.l.b16 %v751
    %v818 = vunpack.c.h.b16 %v751
    %v819 = vpack.c.b16 %v817, %v817
    %v820 = vpack.c.b16 %v818, %v818
    %v887 = vunpack.c.l.b16 %v752
    %v888 = vunpack.c.h.b16 %v752
    %v889 = vunpack.c.l.b16 %v753
    %v890 = vunpack.c.h.b16 %v753
    %v891 = vunpack.c.l.b16 %v754
    %v892 = vunpack.c.h.b16 %v754
    %v893 = vunpack.c.l.b16 %v755
    %v894 = vunpack.c.h.b16 %v755
    %v895 = vunpack.c.l.b16 %v756
    %v896 = vunpack.c.h.b16 %v756
    %v897 = vunpack.c.l.b16 %v757
    %v898 = vunpack.c.h.b16 %v757
    %v899 = vunpack.c.l.b16 %v758
    %v900 = vunpack.c.h.b16 %v758
    %v901 = vunpack.c.l.b16 %v759
    %v902 = vunpack.c.h.b16 %v759
    %v903 = vunpack.c.l.b16 %v760
    %v904 = vunpack.c.h.b16 %v760
    %v905 = vunpack.c.l.b16 %v761
    %v906 = vunpack.c.h.b16 %v761
    %v907 = vunpack.c.l.b16 %v762
    %v908 = vunpack.c.h.b16 %v762
    %v909 = vunpack.c.l.b16 %v763
    %v910 = vunpack.c.h.b16 %v763
    %v911 = vunpack.c.l.b16 %v764
    %v912 = vunpack.c.h.b16 %v764
    %v913 = vunpack.c.l.b16 %v765
    %v914 = vunpack.c.h.b16 %v765
    %v915 = vunpack.c.l.b16 %v766
    %v916 = vunpack.c.h.b16 %v766
    %v917 = vunpack.c.l.b16 %v767
    %v918 = vunpack.c.h.b16 %v767
    %v919 = vunpack.c.l.b16 %v768
    %v920 = vunpack.c.h.b16 %v768
    %v921 = vunpack.c.l.b16 %v769
    %v922 = vunpack.c.h.b16 %v769
    %v923 = vunpack.c.l.b16 %v770
    %v924 = vunpack.c.h.b16 %v770
    %v925 = vunpack.c.l.b16 %v771
    %v926 = vunpack.c.h.b16 %v771
    %v927 = vunpack.c.l.b16 %v772
    %v928 = vunpack.c.h.b16 %v772
    %v929 = vunpack.c.l.b16 %v773
    %v930 = vunpack.c.h.b16 %v773
    %v931 = vunpack.c.l.b16 %v774
    %v932 = vunpack.c.h.b16 %v774
    %v933 = vunpack.c.l.b16 %v775
    %v934 = vunpack.c.h.b16 %v775
    %v935 = vunpack.c.l.b16 %v776
    %v936 = vunpack.c.h.b16 %v776
    %v937 = vunpack.c.l.b16 %v777
    %v938 = vunpack.c.h.b16 %v777
    %v939 = vunpack.c.l.b16 %v778
    %v940 = vunpack.c.h.b16 %v778
    %v941 = vunpack.c.l.b16 %v779
    %v942 = vunpack.c.h.b16 %v779
    %v943 = vunpack.c.l.b16 %v780
    %v944 = vunpack.c.h.b16 %v780
    %v945 = vunpack.c.l.b16 %v781
    %v946 = vunpack.c.h.b16 %v781
    %v947 = vunpack.c.l.b16 %v782
    %v948 = vunpack.c.h.b16 %v782
    %v949 = vunpack.c.l.b16 %v783
    %v950 = vunpack.c.h.b16 %v783
    %v951 = vunpack.c.l.b16 %v784
    %v952 = vunpack.c.h.b16 %v784
    %v953 = vunpack.c.l.b16 %v785
    %v954 = vunpack.c.h.b16 %v785
    %v955 = vunpack.c.l.b16 %v786
    %v956 = vunpack.c.h.b16 %v786
    %v957 = vunpack.c.l.b16 %v787
    %v958 = vunpack.c.h.b16 %v787
    %v959 = vunpack.c.l.b16 %v788
    %v960 = vunpack.c.h.b16 %v788
    %v961 = vunpack.c.l.b16 %v789
    %v962 = vunpack.c.h.b16 %v789
    %v963 = vunpack.c.l.b16 %v790
    %v964 = vunpack.c.h.b16 %v790
    %v965 = vunpack.c.l.b16 %v791
    %v966 = vunpack.c.h.b16 %v791
    %v967 = vunpack.c.l.b16 %v792
    %v968 = vunpack.c.h.b16 %v792
    %v969 = vunpack.c.l.b16 %v793
    %v970 = vunpack.c.h.b16 %v793
    %v971 = vunpack.c.l.b16 %v794
    %v972 = vunpack.c.h.b16 %v794
    %v973 = vunpack.c.l.b16 %v795
    %v974 = vunpack.c.h.b16 %v795
    %v975 = vunpack.c.l.b16 %v796
    %v976 = vunpack.c.h.b16 %v796
    %v977 = vunpack.c.l.b16 %v797
    %v978 = vunpack.c.h.b16 %v797
    %v979 = vunpack.c.l.b16 %v798
    %v980 = vunpack.c.h.b16 %v798
    %v981 = vunpack.c.l.b16 %v799
    %v982 = vunpack.c.h.b16 %v799
    %v983 = vunpack.c.l.b16 %v800
    %v984 = vunpack.c.h.b16 %v800
    %v985 = vunpack.c.l.b16 %v801
    %v986 = vunpack.c.h.b16 %v801
    %v987 = vunpack.c.l.b16 %v802
    %v988 = vunpack.c.h.b16 %v802
    %v989 = vunpack.c.l.b16 %v803
    %v990 = vunpack.c.h.b16 %v803
    %v991 = vunpack.c.l.b16 %v804
    %v992 = vunpack.c.h.b16 %v804
    %v993 = vunpack.c.l.b16 %v805
    %v994 = vunpack.c.h.b16 %v805
    %v995 = vunpack.c.l.b16 %v806
    %v996 = vunpack.c.h.b16 %v806
    %v997 = vunpack.c.l.b16 %v807
    %v998 = vunpack.c.h.b16 %v807
    %v999 = vunpack.c.l.b16 %v808
    %v1000 = vunpack.c.h.b16 %v808
    %v1001 = vunpack.c.l.b16 %v809
    %v1002 = vunpack.c.h.b16 %v809
    %v1003 = vunpack.c.l.b16 %v810
    %v1004 = vunpack.c.h.b16 %v810
    %v1005 = vunpack.c.l.b16 %v811
    %v1006 = vunpack.c.h.b16 %v811
    %v1007 = vunpack.c.l.b16 %v812
    %v1008 = vunpack.c.h.b16 %v812
    %v1009 = vunpack.c.l.b16 %v813
    %v1010 = vunpack.c.h.b16 %v813
    %v1011 = vunpack.c.l.b16 %v814
    %v1012 = vunpack.c.h.b16 %v814
    %v1013 = vunpack.c.l.b16 %v815
    %v1014 = vunpack.c.h.b16 %v815
    %v1015 = vpack.c.b16 %v891, %v887
    %v1016 = vpack.c.b16 %v892, %v888
    %v1017 = vpack.c.b16 %v893, %v889
    %v1018 = vpack.c.b16 %v894, %v890
    %v1019 = vpack.c.b16 %v899, %v895
    %v1020 = vpack.c.b16 %v900, %v896
    %v1021 = vpack.c.b16 %v901, %v897
    %v1022 = vpack.c.b16 %v902, %v898
    %v1023 = vpack.c.b16 %v907, %v903
    %v1024 = vpack.c.b16 %v908, %v904
    %v1025 = vpack.c.b16 %v909, %v905
    %v1026 = vpack.c.b16 %v910, %v906
    %v1027 = vpack.c.b16 %v915, %v911
    %v1028 = vpack.c.b16 %v916, %v912
    %v1029 = vpack.c.b16 %v917, %v913
    %v1030 = vpack.c.b16 %v918, %v914
    %v1031 = vpack.c.b16 %v923, %v919
    %v1032 = vpack.c.b16 %v924, %v920
    %v1033 = vpack.c.b16 %v925, %v921
    %v1034 = vpack.c.b16 %v926, %v922
    %v1035 = vpack.c.b16 %v931, %v927
    %v1036 = vpack.c.b16 %v932, %v928
    %v1037 = vpack.c.b16 %v933, %v929
    %v1038 = vpack.c.b16 %v934, %v930
    %v1039 = vpack.c.b16 %v939, %v935
    %v1040 = vpack.c.b16 %v940, %v936
    %v1041 = vpack.c.b16 %v941, %v937
    %v1042 = vpack.c.b16 %v942, %v938
    %v1043 = vpack.c.b16 %v947, %v943
    %v1044 = vpack.c.b16 %v948, %v944
    %v1045 = vpack.c.b16 %v949, %v945
    %v1046 = vpack.c.b16 %v950, %v946
    %v1047 = vpack.c.b16 %v955, %v951
    %v1048 = vpack.c.b16 %v956, %v952
    %v1049 = vpack.c.b16 %v957, %v953
    %v1050 = vpack.c.b16 %v958, %v954
    %v1051 = vpack.c.b16 %v963, %v959
    %v1052 = vpack.c.b16 %v964, %v960
    %v1053 = vpack.c.b16 %v965, %v961
    %v1054 = vpack.c.b16 %v966, %v962
    %v1055 = vpack.c.b16 %v971, %v967
    %v1056 = vpack.c.b16 %v972, %v968
    %v1057 = vpack.c.b16 %v973, %v969
    %v1058 = vpack.c.b16 %v974, %v970
    %v1059 = vpack.c.b16 %v979, %v975
    %v1060 = vpack.c.b16 %v980, %v976
    %v1061 = vpack.c.b16 %v981, %v977
    %v1062 = vpack.c.b16 %v982, %v978
    %v1063 = vpack.c.b16 %v987, %v983
    %v1064 = vpack.c.b16 %v988, %v984
    %v1065 = vpack.c.b16 %v989, %v985
    %v1066 = vpack.c.b16 %v990, %v986
    %v1067 = vpack.c.b16 %v995, %v991
    %v1068 = vpack.c.b16 %v996, %v992
    %v1069 = vpack.c.b16 %v997, %v993
    %v1070 = vpack.c.b16 %v998, %v994
    %v1071 = vpack.c.b16 %v1003, %v999
    %v1072 = vpack.c.b16 %v1004, %v1000
    %v1073 = vpack.c.b16 %v1005, %v1001
    %v1074 = vpack.c.b16 %v1006, %v1002
    %v1075 = vpack.c.b16 %v1011, %v1007
    %v1076 = vpack.c.b16 %v1012, %v1008
    %v1077 = vpack.c.b16 %v1013, %v1009
    %v1078 = vpack.c.b16 %v1014, %v1010
    %1143 = vmatpush.bf16.msra.mxu0 %v1043
    %1144 = vmatpush.bf16.msra.mxu0 %v1039
    %1145 = vmatpush.bf16.msra.mxu0 %v1035
    %1146 = vmatpush.bf16.msra.mxu0 %v1031
    %1147 = vmatpush.bf16.msra.mxu0 %v1027
    %1148 = vmatpush.bf16.msra.mxu0 %v1023
    %1149 = vmatpush.bf16.msra.mxu0 %v1019
    %1150 = vmatpush.bf16.msra.mxu0 %v1015
    %1151 = vmatmul.bf16.gmra.mxu0 %v819
    %v1152 = vpop.f32.mrf.mxu0
    %v1153 = vadd.f32 %v467, %v1152
    %v1154 = vpop.f32.mrf.mxu0
    %1155 = vdwg.mxu0
    %1156 = vmatpush.bf16.msra.mxu0 %v1075
    %1157 = vmatpush.bf16.msra.mxu0 %v1071
    %1158 = vmatpush.bf16.msra.mxu0 %v1067
    %1159 = vmatpush.bf16.msra.mxu0 %v1063
    %1160 = vmatpush.bf16.msra.mxu0 %v1059
    %1161 = vmatpush.bf16.msra.mxu0 %v1055
    %1162 = vmatpush.bf16.msra.mxu0 %v1051
    %1163 = vmatpush.bf16.msra.mxu0 %v1047
    %1164 = vmatmul.bf16.gmra.mxu0 %v820
    %v1165 = vpop.f32.mrf.mxu0
    %v1166 = vadd.f32 %v1153, %v1165
    %v1167 = vpop.f32.mrf.mxu0
    %1168 = vdwg.mxu0
    %1169 = vmatpush.bf16.msra.mxu0 %v1044
    %1170 = vmatpush.bf16.msra.mxu0 %v1040
    %1171 = vmatpush.bf16.msra.mxu0 %v1036
    %1172 = vmatpush.bf16.msra.mxu0 %v1032
    %1173 = vmatpush.bf16.msra.mxu0 %v1028
    %1174 = vmatpush.bf16.msra.mxu0 %v1024
    %1175 = vmatpush.bf16.msra.mxu0 %v1020
    %1176 = vmatpush.bf16.msra.mxu0 %v1016
    %1177 = vmatmul.bf16.gmra.mxu0 %v819
    %v1178 = vpop.f32.mrf.mxu0
    %v1179 = vadd.f32 %v468, %v1178
    %v1180 = vpop.f32.mrf.mxu0
    %1181 = vdwg.mxu0
    %1182 = vmatpush.bf16.msra.mxu0 %v1076
    %1183 = vmatpush.bf16.msra.mxu0 %v1072
    %1184 = vmatpush.bf16.msra.mxu0 %v1068
    %1185 = vmatpush.bf16.msra.mxu0 %v1064
    %1186 = vmatpush.bf16.msra.mxu0 %v1060
    %1187 = vmatpush.bf16.msra.mxu0 %v1056
    %1188 = vmatpush.bf16.msra.mxu0 %v1052
    %1189 = vmatpush.bf16.msra.mxu0 %v1048
    %1190 = vmatmul.bf16.gmra.mxu0 %v820
    %v1191 = vpop.f32.mrf.mxu0
    %v1192 = vadd.f32 %v1179, %v1191
    %v1193 = vpop.f32.mrf.mxu0
    %1194 = vdwg.mxu0
    %1195 = vmatpush.bf16.msra.mxu0 %v1045
    %1196 = vmatpush.bf16.msra.mxu0 %v1041
    %1197 = vmatpush.bf16.msra.mxu0 %v1037
    %1198 = vmatpush.bf16.msra.mxu0 %v1033
    %1199 = vmatpush.bf16.msra.mxu0 %v1029
    %1200 = vmatpush.bf16.msra.mxu0 %v1025
    %1201 = vmatpush.bf16.msra.mxu0 %v1021
    %1202 = vmatpush.bf16.msra.mxu0 %v1017
    %1203 = vmatmul.bf16.gmra.mxu0 %v819
    %v1204 = vpop.f32.mrf.mxu0
    %v1205 = vadd.f32 %v469, %v1204
    %v1206 = vpop.f32.mrf.mxu0
    %1207 = vdwg.mxu0
    %1208 = vmatpush.bf16.msra.mxu0 %v1077
    %1209 = vmatpush.bf16.msra.mxu0 %v1073
    %1210 = vmatpush.bf16.msra.mxu0 %v1069
    %1211 = vmatpush.bf16.msra.mxu0 %v1065
    %1212 = vmatpush.bf16.msra.mxu0 %v1061
    %1213 = vmatpush.bf16.msra.mxu0 %v1057
    %1214 = vmatpush.bf16.msra.mxu0 %v1053
    %1215 = vmatpush.bf16.msra.mxu0 %v1049
    %1216 = vmatmul.bf16.gmra.mxu0 %v820
    %v1217 = vpop.f32.mrf.mxu0
    %v1218 = vadd.f32 %v1205, %v1217
    %v1219 = vpop.f32.mrf.mxu0
    %1220 = vdwg.mxu0
    %1221 = vmatpush.bf16.msra.mxu0 %v1046
    %1222 = vmatpush.bf16.msra.mxu0 %v1042
    %1223 = vmatpush.bf16.msra.mxu0 %v1038
    %1224 = vmatpush.bf16.msra.mxu0 %v1034
    %1225 = vmatpush.bf16.msra.mxu0 %v1030
    %1226 = vmatpush.bf16.msra.mxu0 %v1026
    %1227 = vmatpush.bf16.msra.mxu0 %v1022
    %1228 = vmatpush.bf16.msra.mxu0 %v1018
    %1229 = vmatmul.bf16.gmra.mxu0 %v819
    %v1230 = vpop.f32.mrf.mxu0
    %v1231 = vadd.f32 %v470, %v1230
    %v1232 = vpop.f32.mrf.mxu0
    %1233 = vdwg.mxu0
    %1234 = vmatpush.bf16.msra.mxu0 %v1078
    %1235 = vmatpush.bf16.msra.mxu0 %v1074
    %1236 = vmatpush.bf16.msra.mxu0 %v1070
    %1237 = vmatpush.bf16.msra.mxu0 %v1066
    %1238 = vmatpush.bf16.msra.mxu0 %v1062
    %1239 = vmatpush.bf16.msra.mxu0 %v1058
    %1240 = vmatpush.bf16.msra.mxu0 %v1054
    %1241 = vmatpush.bf16.msra.mxu0 %v1050
    %1242 = vmatmul.bf16.gmra.mxu0 %v820
    %v1243 = vpop.f32.mrf.mxu0
    %v1244 = vadd.f32 %v1231, %v1243
    %v1245 = vpop.f32.mrf.mxu0
    %1246 = vdwg.mxu0
    %v1247 = vmul.f32 %v1166, 0.5
    %v1248 = vtanh.pop %v1247
    %v1249 = vmul.f32 %v1248, 0.5
    %v1250 = vadd.f32 %v1249, 0.5
    %v1251 = vmul.f32 %v1192, 0.5
    %v1252 = vtanh.pop %v1251
    %v1253 = vmul.f32 %v1252, 0.5
    %v1254 = vadd.f32 %v1253, 0.5
    %v1255 = vtanh.pop %v1218
    %v1256 = vmul.f32 %v1244, 0.5
    %v1257 = vtanh.pop %v1256
    %v1258 = vmul.f32 %v1257, 0.5
    %v1259 = vadd.f32 %v1258, 0.5
    %v1260 = vmul.f32 %v1254, 0.0
    %v1261 = vmul.f32 %v1250, %v1255
    %v1262 = vadd.f32 %v1260, %v1261
    %v1263 = vtanh.pop %v1262
    %v1264 = vmul.f32 %v1259, %v1263
    %v1265 = vpack.c.bf16 %v1264, %v1264
    %1266 = vst [vmem:[#allocation4 + $0x4] sm:$0xf] %v1265
    %1267 = vst [vmem:[#allocation3] sm:$0xff] %v1264
    %s1268 = smul.u32 1, 4
    %s1269 = smul.addr %s1268, 8
    %s1270 = scalar_lea.vmem [#allocation2], %s1269
    %v1271 = vld [vmem:[%s1270] sm:$0xff]
    %v1272 = vld [vmem:[%s1270 + $0x8] sm:$0xff]
    %v1273 = vld [vmem:[%s1270 + $0x10] sm:$0xff]
    %v1274 = vld [vmem:[%s1270 + $0x18] sm:$0xff]
    %v1275 = vld [vmem:[#allocation4] sm:$0xf]
    %v1276 = vld [vmem:[#allocation10] sm:$0xff]
    %v1277 = vld [vmem:[#allocation10 + $0x8] sm:$0xff]
    %v1278 = vld [vmem:[#allocation10 + $0x10] sm:$0xff]
    %v1279 = vld [vmem:[#allocation10 + $0x18] sm:$0xff]
    %v1280 = vld [vmem:[#allocation10 + $0x20] sm:$0xff]
    %v1281 = vld [vmem:[#allocation10 + $0x28] sm:$0xff]
    %v1282 = vld [vmem:[#allocation10 + $0x30] sm:$0xff]
    %v1283 = vld [vmem:[#allocation10 + $0x38] sm:$0xff]
    %v1284 = vld [vmem:[#allocation10 + $0x40] sm:$0xff]
    %v1285 = vld [vmem:[#allocation10 + $0x48] sm:$0xff]
    %v1286 = vld [vmem:[#allocation10 + $0x50] sm:$0xff]
    %v1287 = vld [vmem:[#allocation10 + $0x58] sm:$0xff]
    %v1288 = vld [vmem:[#allocation10 + $0x60] sm:$0xff]
    %v1289 = vld [vmem:[#allocation10 + $0x68] sm:$0xff]
    %v1290 = vld [vmem:[#allocation10 + $0x70] sm:$0xff]
    %v1291 = vld [vmem:[#allocation10 + $0x78] sm:$0xff]
    %v1292 = vld [vmem:[#allocation10 + $0x80] sm:$0xff]
    %v1293 = vld [vmem:[#allocation10 + $0x88] sm:$0xff]
    %v1294 = vld [vmem:[#allocation10 + $0x90] sm:$0xff]
    %v1295 = vld [vmem:[#allocation10 + $0x98] sm:$0xff]
    %v1296 = vld [vmem:[#allocation10 + $0xa0] sm:$0xff]
    %v1297 = vld [vmem:[#allocation10 + $0xa8] sm:$0xff]
    %v1298 = vld [vmem:[#allocation10 + $0xb0] sm:$0xff]
    %v1299 = vld [vmem:[#allocation10 + $0xb8] sm:$0xff]
    %v1300 = vld [vmem:[#allocation10 + $0xc0] sm:$0xff]
    %v1301 = vld [vmem:[#allocation10 + $0xc8] sm:$0xff]
    %v1302 = vld [vmem:[#allocation10 + $0xd0] sm:$0xff]
    %v1303 = vld [vmem:[#allocation10 + $0xd8] sm:$0xff]
    %v1304 = vld [vmem:[#allocation10 + $0xe0] sm:$0xff]
    %v1305 = vld [vmem:[#allocation10 + $0xe8] sm:$0xff]
    %v1306 = vld [vmem:[#allocation10 + $0xf0] sm:$0xff]
    %v1307 = vld [vmem:[#allocation10 + $0xf8] sm:$0xff]
    %v1340 = vunpack.c.l.b16 %v1276
    %v1341 = vunpack.c.h.b16 %v1276
    %v1342 = vunpack.c.l.b16 %v1277
    %v1343 = vunpack.c.h.b16 %v1277
    %v1344 = vunpack.c.l.b16 %v1278
    %v1345 = vunpack.c.h.b16 %v1278
    %v1346 = vunpack.c.l.b16 %v1279
    %v1347 = vunpack.c.h.b16 %v1279
    %v1348 = vunpack.c.l.b16 %v1280
    %v1349 = vunpack.c.h.b16 %v1280
    %v1350 = vunpack.c.l.b16 %v1281
    %v1351 = vunpack.c.h.b16 %v1281
    %v1352 = vunpack.c.l.b16 %v1282
    %v1353 = vunpack.c.h.b16 %v1282
    %v1354 = vunpack.c.l.b16 %v1283
    %v1355 = vunpack.c.h.b16 %v1283
    %v1356 = vunpack.c.l.b16 %v1284
    %v1357 = vunpack.c.h.b16 %v1284
    %v1358 = vunpack.c.l.b16 %v1285
    %v1359 = vunpack.c.h.b16 %v1285
    %v1360 = vunpack.c.l.b16 %v1286
    %v1361 = vunpack.c.h.b16 %v1286
    %v1362 = vunpack.c.l.b16 %v1287
    %v1363 = vunpack.c.h.b16 %v1287
    %v1364 = vunpack.c.l.b16 %v1288
    %v1365 = vunpack.c.h.b16 %v1288
    %v1366 = vunpack.c.l.b16 %v1289
    %v1367 = vunpack.c.h.b16 %v1289
    %v1368 = vunpack.c.l.b16 %v1290
    %v1369 = vunpack.c.h.b16 %v1290
    %v1370 = vunpack.c.l.b16 %v1291
    %v1371 = vunpack.c.h.b16 %v1291
    %v1372 = vunpack.c.l.b16 %v1292
    %v1373 = vunpack.c.h.b16 %v1292
    %v1374 = vunpack.c.l.b16 %v1293
    %v1375 = vunpack.c.h.b16 %v1293
    %v1376 = vunpack.c.l.b16 %v1294
    %v1377 = vunpack.c.h.b16 %v1294
    %v1378 = vunpack.c.l.b16 %v1295
    %v1379 = vunpack.c.h.b16 %v1295
    %v1380 = vunpack.c.l.b16 %v1296
    %v1381 = vunpack.c.h.b16 %v1296
    %v1382 = vunpack.c.l.b16 %v1297
    %v1383 = vunpack.c.h.b16 %v1297
    %v1384 = vunpack.c.l.b16 %v1298
    %v1385 = vunpack.c.h.b16 %v1298
    %v1386 = vunpack.c.l.b16 %v1299
    %v1387 = vunpack.c.h.b16 %v1299
    %v1388 = vunpack.c.l.b16 %v1300
    %v1389 = vunpack.c.h.b16 %v1300
    %v1390 = vunpack.c.l.b16 %v1301
    %v1391 = vunpack.c.h.b16 %v1301
    %v1392 = vunpack.c.l.b16 %v1302
    %v1393 = vunpack.c.h.b16 %v1302
    %v1394 = vunpack.c.l.b16 %v1303
    %v1395 = vunpack.c.h.b16 %v1303
    %v1396 = vunpack.c.l.b16 %v1304
    %v1397 = vunpack.c.h.b16 %v1304
    %v1398 = vunpack.c.l.b16 %v1305
    %v1399 = vunpack.c.h.b16 %v1305
    %v1400 = vunpack.c.l.b16 %v1306
    %v1401 = vunpack.c.h.b16 %v1306
    %v1402 = vunpack.c.l.b16 %v1307
    %v1403 = vunpack.c.h.b16 %v1307
    %v1404 = vpack.c.b16 %v1344, %v1340
    %v1405 = vpack.c.b16 %v1345, %v1341
    %v1406 = vpack.c.b16 %v1346, %v1342
    %v1407 = vpack.c.b16 %v1347, %v1343
    %v1408 = vpack.c.b16 %v1352, %v1348
    %v1409 = vpack.c.b16 %v1353, %v1349
    %v1410 = vpack.c.b16 %v1354, %v1350
    %v1411 = vpack.c.b16 %v1355, %v1351
    %v1412 = vpack.c.b16 %v1360, %v1356
    %v1413 = vpack.c.b16 %v1361, %v1357
    %v1414 = vpack.c.b16 %v1362, %v1358
    %v1415 = vpack.c.b16 %v1363, %v1359
    %v1416 = vpack.c.b16 %v1368, %v1364
    %v1417 = vpack.c.b16 %v1369, %v1365
    %v1418 = vpack.c.b16 %v1370, %v1366
    %v1419 = vpack.c.b16 %v1371, %v1367
    %v1420 = vpack.c.b16 %v1376, %v1372
    %v1421 = vpack.c.b16 %v1377, %v1373
    %v1422 = vpack.c.b16 %v1378, %v1374
    %v1423 = vpack.c.b16 %v1379, %v1375
    %v1424 = vpack.c.b16 %v1384, %v1380
    %v1425 = vpack.c.b16 %v1385, %v1381
    %v1426 = vpack.c.b16 %v1386, %v1382
    %v1427 = vpack.c.b16 %v1387, %v1383
    %v1428 = vpack.c.b16 %v1392, %v1388
    %v1429 = vpack.c.b16 %v1393, %v1389
    %v1430 = vpack.c.b16 %v1394, %v1390
    %v1431 = vpack.c.b16 %v1395, %v1391
    %v1432 = vpack.c.b16 %v1400, %v1396
    %v1433 = vpack.c.b16 %v1401, %v1397
    %v1434 = vpack.c.b16 %v1402, %v1398
    %v1435 = vpack.c.b16 %v1403, %v1399
    %1468 = vmatpush.bf16.msra.mxu0 %v1432
    %1469 = vmatpush.bf16.msra.mxu0 %v1428
    %1470 = vmatpush.bf16.msra.mxu0 %v1424
    %1471 = vmatpush.bf16.msra.mxu0 %v1420
    %1472 = vmatpush.bf16.msra.mxu0 %v1416
    %1473 = vmatpush.bf16.msra.mxu0 %v1412
    %1474 = vmatpush.bf16.msra.mxu0 %v1408
    %1475 = vmatpush.bf16.msra.mxu0 %v1404
    %1476 = vmatmul.bf16.gmra.mxu0 %v1275
    %v1477 = vpop.f32.mrf.mxu0
    %v1478 = vadd.f32 0.0, %v1477
    %v1479 = vpop.f32.mrf.mxu0
    %1480 = vdwg.mxu0
    %1481 = vmatpush.bf16.msra.mxu0 %v1433
    %1482 = vmatpush.bf16.msra.mxu0 %v1429
    %1483 = vmatpush.bf16.msra.mxu0 %v1425
    %1484 = vmatpush.bf16.msra.mxu0 %v1421
    %1485 = vmatpush.bf16.msra.mxu0 %v1417
    %1486 = vmatpush.bf16.msra.mxu0 %v1413
    %1487 = vmatpush.bf16.msra.mxu0 %v1409
    %1488 = vmatpush.bf16.msra.mxu0 %v1405
    %1489 = vmatmul.bf16.gmra.mxu0 %v1275
    %v1490 = vpop.f32.mrf.mxu0
    %v1491 = vadd.f32 0.0, %v1490
    %v1492 = vpop.f32.mrf.mxu0
    %1493 = vdwg.mxu0
    %1494 = vmatpush.bf16.msra.mxu0 %v1434
    %1495 = vmatpush.bf16.msra.mxu0 %v1430
    %1496 = vmatpush.bf16.msra.mxu0 %v1426
    %1497 = vmatpush.bf16.msra.mxu0 %v1422
    %1498 = vmatpush.bf16.msra.mxu0 %v1418
    %1499 = vmatpush.bf16.msra.mxu0 %v1414
    %1500 = vmatpush.bf16.msra.mxu0 %v1410
    %1501 = vmatpush.bf16.msra.mxu0 %v1406
    %1502 = vmatmul.bf16.gmra.mxu0 %v1275
    %v1503 = vpop.f32.mrf.mxu0
    %v1504 = vadd.f32 0.0, %v1503
    %v1505 = vpop.f32.mrf.mxu0
    %1506 = vdwg.mxu0
    %1507 = vmatpush.bf16.msra.mxu0 %v1435
    %1508 = vmatpush.bf16.msra.mxu0 %v1431
    %1509 = vmatpush.bf16.msra.mxu0 %v1427
    %1510 = vmatpush.bf16.msra.mxu0 %v1423
    %1511 = vmatpush.bf16.msra.mxu0 %v1419
    %1512 = vmatpush.bf16.msra.mxu0 %v1415
    %1513 = vmatpush.bf16.msra.mxu0 %v1411
    %1514 = vmatpush.bf16.msra.mxu0 %v1407
    %1515 = vmatmul.bf16.gmra.mxu0 %v1275
    %v1516 = vpop.f32.mrf.mxu0
    %v1517 = vadd.f32 0.0, %v1516
    %v1518 = vpop.f32.mrf.mxu0
    %1519 = vdwg.mxu0
    %v1520 = vadd.f32 %v1271, %v1478
    %v1521 = vadd.f32 %v1272, %v1491
    %v1522 = vadd.f32 %v1273, %v1504
    %v1523 = vadd.f32 %v1274, %v1517
    %v1524 = vmul.f32 %v1520, 0.5
    %v1525 = vtanh.pop %v1524
    %v1526 = vmul.f32 %v1525, 0.5
    %v1527 = vadd.f32 %v1526, 0.5
    %v1528 = vmul.f32 %v1521, 0.5
    %v1529 = vtanh.pop %v1528
    %v1530 = vmul.f32 %v1529, 0.5
    %v1531 = vadd.f32 %v1530, 0.5
    %v1532 = vtanh.pop %v1522
    %v1533 = vmul.f32 %v1523, 0.5
    %v1534 = vtanh.pop %v1533
    %v1535 = vmul.f32 %v1534, 0.5
    %v1536 = vadd.f32 %v1535, 0.5
    %v1537 = vmul.f32 %v1531, %v746
    %v1538 = vmul.f32 %v1527, %v1532
    %v1539 = vadd.f32 %v1537, %v1538
    %v1540 = vtanh.pop %v1539
    %v1541 = vmul.f32 %v1536, %v1540
    %v1542 = vpack.c.bf16 %v1541, %v1541
    %1543 = vst [vmem:[#allocation4] sm:$0xf] %v1542
    %v1544 = vld [vmem:[#allocation4] sm:$0xff]
    %v1545 = vld [vmem:[#allocation11] sm:$0xff]
    %v1546 = vld [vmem:[#allocation11 + $0x8] sm:$0xff]
    %v1547 = vld [vmem:[#allocation11 + $0x10] sm:$0xff]
    %v1548 = vld [vmem:[#allocation11 + $0x18] sm:$0xff]
    %v1549 = vld [vmem:[#allocation11 + $0x20] sm:$0xff]
    %v1550 = vld [vmem:[#allocation11 + $0x28] sm:$0xff]
    %v1551 = vld [vmem:[#allocation11 + $0x30] sm:$0xff]
    %v1552 = vld [vmem:[#allocation11 + $0x38] sm:$0xff]
    %v1553 = vld [vmem:[#allocation11 + $0x40] sm:$0xff]
    %v1554 = vld [vmem:[#allocation11 + $0x48] sm:$0xff]
    %v1555 = vld [vmem:[#allocation11 + $0x50] sm:$0xff]
    %v1556 = vld [vmem:[#allocation11 + $0x58] sm:$0xff]
    %v1557 = vld [vmem:[#allocation11 + $0x60] sm:$0xff]
    %v1558 = vld [vmem:[#allocation11 + $0x68] sm:$0xff]
    %v1559 = vld [vmem:[#allocation11 + $0x70] sm:$0xff]
    %v1560 = vld [vmem:[#allocation11 + $0x78] sm:$0xff]
    %v1561 = vld [vmem:[#allocation11 + $0x80] sm:$0xff]
    %v1562 = vld [vmem:[#allocation11 + $0x88] sm:$0xff]
    %v1563 = vld [vmem:[#allocation11 + $0x90] sm:$0xff]
    %v1564 = vld [vmem:[#allocation11 + $0x98] sm:$0xff]
    %v1565 = vld [vmem:[#allocation11 + $0xa0] sm:$0xff]
    %v1566 = vld [vmem:[#allocation11 + $0xa8] sm:$0xff]
    %v1567 = vld [vmem:[#allocation11 + $0xb0] sm:$0xff]
    %v1568 = vld [vmem:[#allocation11 + $0xb8] sm:$0xff]
    %v1569 = vld [vmem:[#allocation11 + $0xc0] sm:$0xff]
    %v1570 = vld [vmem:[#allocation11 + $0xc8] sm:$0xff]
    %v1571 = vld [vmem:[#allocation11 + $0xd0] sm:$0xff]
    %v1572 = vld [vmem:[#allocation11 + $0xd8] sm:$0xff]
    %v1573 = vld [vmem:[#allocation11 + $0xe0] sm:$0xff]
    %v1574 = vld [vmem:[#allocation11 + $0xe8] sm:$0xff]
    %v1575 = vld [vmem:[#allocation11 + $0xf0] sm:$0xff]
    %v1576 = vld [vmem:[#allocation11 + $0xf8] sm:$0xff]
    %v1577 = vld [vmem:[#allocation11 + $0x100] sm:$0xff]
    %v1578 = vld [vmem:[#allocation11 + $0x108] sm:$0xff]
    %v1579 = vld [vmem:[#allocation11 + $0x110] sm:$0xff]
    %v1580 = vld [vmem:[#allocation11 + $0x118] sm:$0xff]
    %v1581 = vld [vmem:[#allocation11 + $0x120] sm:$0xff]
    %v1582 = vld [vmem:[#allocation11 + $0x128] sm:$0xff]
    %v1583 = vld [vmem:[#allocation11 + $0x130] sm:$0xff]
    %v1584 = vld [vmem:[#allocation11 + $0x138] sm:$0xff]
    %v1585 = vld [vmem:[#allocation11 + $0x140] sm:$0xff]
    %v1586 = vld [vmem:[#allocation11 + $0x148] sm:$0xff]
    %v1587 = vld [vmem:[#allocation11 + $0x150] sm:$0xff]
    %v1588 = vld [vmem:[#allocation11 + $0x158] sm:$0xff]
    %v1589 = vld [vmem:[#allocation11 + $0x160] sm:$0xff]
    %v1590 = vld [vmem:[#allocation11 + $0x168] sm:$0xff]
    %v1591 = vld [vmem:[#allocation11 + $0x170] sm:$0xff]
    %v1592 = vld [vmem:[#allocation11 + $0x178] sm:$0xff]
    %v1593 = vld [vmem:[#allocation11 + $0x180] sm:$0xff]
    %v1594 = vld [vmem:[#allocation11 + $0x188] sm:$0xff]
    %v1595 = vld [vmem:[#allocation11 + $0x190] sm:$0xff]
    %v1596 = vld [vmem:[#allocation11 + $0x198] sm:$0xff]
    %v1597 = vld [vmem:[#allocation11 + $0x1a0] sm:$0xff]
    %v1598 = vld [vmem:[#allocation11 + $0x1a8] sm:$0xff]
    %v1599 = vld [vmem:[#allocation11 + $0x1b0] sm:$0xff]
    %v1600 = vld [vmem:[#allocation11 + $0x1b8] sm:$0xff]
    %v1601 = vld [vmem:[#allocation11 + $0x1c0] sm:$0xff]
    %v1602 = vld [vmem:[#allocation11 + $0x1c8] sm:$0xff]
    %v1603 = vld [vmem:[#allocation11 + $0x1d0] sm:$0xff]
    %v1604 = vld [vmem:[#allocation11 + $0x1d8] sm:$0xff]
    %v1605 = vld [vmem:[#allocation11 + $0x1e0] sm:$0xff]
    %v1606 = vld [vmem:[#allocation11 + $0x1e8] sm:$0xff]
    %v1607 = vld [vmem:[#allocation11 + $0x1f0] sm:$0xff]
    %v1608 = vld [vmem:[#allocation11 + $0x1f8] sm:$0xff]
    %v1610 = vunpack.c.l.b16 %v1544
    %v1611 = vunpack.c.h.b16 %v1544
    %v1612 = vpack.c.b16 %v1610, %v1610
    %v1613 = vpack.c.b16 %v1611, %v1611
    %v1680 = vunpack.c.l.b16 %v1545
    %v1681 = vunpack.c.h.b16 %v1545
    %v1682 = vunpack.c.l.b16 %v1546
    %v1683 = vunpack.c.h.b16 %v1546
    %v1684 = vunpack.c.l.b16 %v1547
    %v1685 = vunpack.c.h.b16 %v1547
    %v1686 = vunpack.c.l.b16 %v1548
    %v1687 = vunpack.c.h.b16 %v1548
    %v1688 = vunpack.c.l.b16 %v1549
    %v1689 = vunpack.c.h.b16 %v1549
    %v1690 = vunpack.c.l.b16 %v1550
    %v1691 = vunpack.c.h.b16 %v1550
    %v1692 = vunpack.c.l.b16 %v1551
    %v1693 = vunpack.c.h.b16 %v1551
    %v1694 = vunpack.c.l.b16 %v1552
    %v1695 = vunpack.c.h.b16 %v1552
    %v1696 = vunpack.c.l.b16 %v1553
    %v1697 = vunpack.c.h.b16 %v1553
    %v1698 = vunpack.c.l.b16 %v1554
    %v1699 = vunpack.c.h.b16 %v1554
    %v1700 = vunpack.c.l.b16 %v1555
    %v1701 = vunpack.c.h.b16 %v1555
    %v1702 = vunpack.c.l.b16 %v1556
    %v1703 = vunpack.c.h.b16 %v1556
    %v1704 = vunpack.c.l.b16 %v1557
    %v1705 = vunpack.c.h.b16 %v1557
    %v1706 = vunpack.c.l.b16 %v1558
    %v1707 = vunpack.c.h.b16 %v1558
    %v1708 = vunpack.c.l.b16 %v1559
    %v1709 = vunpack.c.h.b16 %v1559
    %v1710 = vunpack.c.l.b16 %v1560
    %v1711 = vunpack.c.h.b16 %v1560
    %v1712 = vunpack.c.l.b16 %v1561
    %v1713 = vunpack.c.h.b16 %v1561
    %v1714 = vunpack.c.l.b16 %v1562
    %v1715 = vunpack.c.h.b16 %v1562
    %v1716 = vunpack.c.l.b16 %v1563
    %v1717 = vunpack.c.h.b16 %v1563
    %v1718 = vunpack.c.l.b16 %v1564
    %v1719 = vunpack.c.h.b16 %v1564
    %v1720 = vunpack.c.l.b16 %v1565
    %v1721 = vunpack.c.h.b16 %v1565
    %v1722 = vunpack.c.l.b16 %v1566
    %v1723 = vunpack.c.h.b16 %v1566
    %v1724 = vunpack.c.l.b16 %v1567
    %v1725 = vunpack.c.h.b16 %v1567
    %v1726 = vunpack.c.l.b16 %v1568
    %v1727 = vunpack.c.h.b16 %v1568
    %v1728 = vunpack.c.l.b16 %v1569
    %v1729 = vunpack.c.h.b16 %v1569
    %v1730 = vunpack.c.l.b16 %v1570
    %v1731 = vunpack.c.h.b16 %v1570
    %v1732 = vunpack.c.l.b16 %v1571
    %v1733 = vunpack.c.h.b16 %v1571
    %v1734 = vunpack.c.l.b16 %v1572
    %v1735 = vunpack.c.h.b16 %v1572
    %v1736 = vunpack.c.l.b16 %v1573
    %v1737 = vunpack.c.h.b16 %v1573
    %v1738 = vunpack.c.l.b16 %v1574
    %v1739 = vunpack.c.h.b16 %v1574
    %v1740 = vunpack.c.l.b16 %v1575
    %v1741 = vunpack.c.h.b16 %v1575
    %v1742 = vunpack.c.l.b16 %v1576
    %v1743 = vunpack.c.h.b16 %v1576
    %v1744 = vunpack.c.l.b16 %v1577
    %v1745 = vunpack.c.h.b16 %v1577
    %v1746 = vunpack.c.l.b16 %v1578
    %v1747 = vunpack.c.h.b16 %v1578
    %v1748 = vunpack.c.l.b16 %v1579
    %v1749 = vunpack.c.h.b16 %v1579
    %v1750 = vunpack.c.l.b16 %v1580
    %v1751 = vunpack.c.h.b16 %v1580
    %v1752 = vunpack.c.l.b16 %v1581
    %v1753 = vunpack.c.h.b16 %v1581
    %v1754 = vunpack.c.l.b16 %v1582
    %v1755 = vunpack.c.h.b16 %v1582
    %v1756 = vunpack.c.l.b16 %v1583
    %v1757 = vunpack.c.h.b16 %v1583
    %v1758 = vunpack.c.l.b16 %v1584
    %v1759 = vunpack.c.h.b16 %v1584
    %v1760 = vunpack.c.l.b16 %v1585
    %v1761 = vunpack.c.h.b16 %v1585
    %v1762 = vunpack.c.l.b16 %v1586
    %v1763 = vunpack.c.h.b16 %v1586
    %v1764 = vunpack.c.l.b16 %v1587
    %v1765 = vunpack.c.h.b16 %v1587
    %v1766 = vunpack.c.l.b16 %v1588
    %v1767 = vunpack.c.h.b16 %v1588
    %v1768 = vunpack.c.l.b16 %v1589
    %v1769 = vunpack.c.h.b16 %v1589
    %v1770 = vunpack.c.l.b16 %v1590
    %v1771 = vunpack.c.h.b16 %v1590
    %v1772 = vunpack.c.l.b16 %v1591
    %v1773 = vunpack.c.h.b16 %v1591
    %v1774 = vunpack.c.l.b16 %v1592
    %v1775 = vunpack.c.h.b16 %v1592
    %v1776 = vunpack.c.l.b16 %v1593
    %v1777 = vunpack.c.h.b16 %v1593
    %v1778 = vunpack.c.l.b16 %v1594
    %v1779 = vunpack.c.h.b16 %v1594
    %v1780 = vunpack.c.l.b16 %v1595
    %v1781 = vunpack.c.h.b16 %v1595
    %v1782 = vunpack.c.l.b16 %v1596
    %v1783 = vunpack.c.h.b16 %v1596
    %v1784 = vunpack.c.l.b16 %v1597
    %v1785 = vunpack.c.h.b16 %v1597
    %v1786 = vunpack.c.l.b16 %v1598
    %v1787 = vunpack.c.h.b16 %v1598
    %v1788 = vunpack.c.l.b16 %v1599
    %v1789 = vunpack.c.h.b16 %v1599
    %v1790 = vunpack.c.l.b16 %v1600
    %v1791 = vunpack.c.h.b16 %v1600
    %v1792 = vunpack.c.l.b16 %v1601
    %v1793 = vunpack.c.h.b16 %v1601
    %v1794 = vunpack.c.l.b16 %v1602
    %v1795 = vunpack.c.h.b16 %v1602
    %v1796 = vunpack.c.l.b16 %v1603
    %v1797 = vunpack.c.h.b16 %v1603
    %v1798 = vunpack.c.l.b16 %v1604
    %v1799 = vunpack.c.h.b16 %v1604
    %v1800 = vunpack.c.l.b16 %v1605
    %v1801 = vunpack.c.h.b16 %v1605
    %v1802 = vunpack.c.l.b16 %v1606
    %v1803 = vunpack.c.h.b16 %v1606
    %v1804 = vunpack.c.l.b16 %v1607
    %v1805 = vunpack.c.h.b16 %v1607
    %v1806 = vunpack.c.l.b16 %v1608
    %v1807 = vunpack.c.h.b16 %v1608
    %v1808 = vpack.c.b16 %v1684, %v1680
    %v1809 = vpack.c.b16 %v1685, %v1681
    %v1810 = vpack.c.b16 %v1686, %v1682
    %v1811 = vpack.c.b16 %v1687, %v1683
    %v1812 = vpack.c.b16 %v1692, %v1688
    %v1813 = vpack.c.b16 %v1693, %v1689
    %v1814 = vpack.c.b16 %v1694, %v1690
    %v1815 = vpack.c.b16 %v1695, %v1691
    %v1816 = vpack.c.b16 %v1700, %v1696
    %v1817 = vpack.c.b16 %v1701, %v1697
    %v1818 = vpack.c.b16 %v1702, %v1698
    %v1819 = vpack.c.b16 %v1703, %v1699
    %v1820 = vpack.c.b16 %v1708, %v1704
    %v1821 = vpack.c.b16 %v1709, %v1705
    %v1822 = vpack.c.b16 %v1710, %v1706
    %v1823 = vpack.c.b16 %v1711, %v1707
    %v1824 = vpack.c.b16 %v1716, %v1712
    %v1825 = vpack.c.b16 %v1717, %v1713
    %v1826 = vpack.c.b16 %v1718, %v1714
    %v1827 = vpack.c.b16 %v1719, %v1715
    %v1828 = vpack.c.b16 %v1724, %v1720
    %v1829 = vpack.c.b16 %v1725, %v1721
    %v1830 = vpack.c.b16 %v1726, %v1722
    %v1831 = vpack.c.b16 %v1727, %v1723
    %v1832 = vpack.c.b16 %v1732, %v1728
    %v1833 = vpack.c.b16 %v1733, %v1729
    %v1834 = vpack.c.b16 %v1734, %v1730
    %v1835 = vpack.c.b16 %v1735, %v1731
    %v1836 = vpack.c.b16 %v1740, %v1736
    %v1837 = vpack.c.b16 %v1741, %v1737
    %v1838 = vpack.c.b16 %v1742, %v1738
    %v1839 = vpack.c.b16 %v1743, %v1739
    %v1840 = vpack.c.b16 %v1748, %v1744
    %v1841 = vpack.c.b16 %v1749, %v1745
    %v1842 = vpack.c.b16 %v1750, %v1746
    %v1843 = vpack.c.b16 %v1751, %v1747
    %v1844 = vpack.c.b16 %v1756, %v1752
    %v1845 = vpack.c.b16 %v1757, %v1753
    %v1846 = vpack.c.b16 %v1758, %v1754
    %v1847 = vpack.c.b16 %v1759, %v1755
    %v1848 = vpack.c.b16 %v1764, %v1760
    %v1849 = vpack.c.b16 %v1765, %v1761
    %v1850 = vpack.c.b16 %v1766, %v1762
    %v1851 = vpack.c.b16 %v1767, %v1763
    %v1852 = vpack.c.b16 %v1772, %v1768
    %v1853 = vpack.c.b16 %v1773, %v1769
    %v1854 = vpack.c.b16 %v1774, %v1770
    %v1855 = vpack.c.b16 %v1775, %v1771
    %v1856 = vpack.c.b16 %v1780, %v1776
    %v1857 = vpack.c.b16 %v1781, %v1777
    %v1858 = vpack.c.b16 %v1782, %v1778
    %v1859 = vpack.c.b16 %v1783, %v1779
    %v1860 = vpack.c.b16 %v1788, %v1784
    %v1861 = vpack.c.b16 %v1789, %v1785
    %v1862 = vpack.c.b16 %v1790, %v1786
    %v1863 = vpack.c.b16 %v1791, %v1787
    %v1864 = vpack.c.b16 %v1796, %v1792
    %v1865 = vpack.c.b16 %v1797, %v1793
    %v1866 = vpack.c.b16 %v1798, %v1794
    %v1867 = vpack.c.b16 %v1799, %v1795
    %v1868 = vpack.c.b16 %v1804, %v1800
    %v1869 = vpack.c.b16 %v1805, %v1801
    %v1870 = vpack.c.b16 %v1806, %v1802
    %v1871 = vpack.c.b16 %v1807, %v1803
    %1936 = vmatpush.bf16.msra.mxu0 %v1836
    %1937 = vmatpush.bf16.msra.mxu0 %v1832
    %1938 = vmatpush.bf16.msra.mxu0 %v1828
    %1939 = vmatpush.bf16.msra.mxu0 %v1824
    %1940 = vmatpush.bf16.msra.mxu0 %v1820
    %1941 = vmatpush.bf16.msra.mxu0 %v1816
    %1942 = vmatpush.bf16.msra.mxu0 %v1812
    %1943 = vmatpush.bf16.msra.mxu0 %v1808
    %1944 = vmatmul.bf16.gmra.mxu0 %v1612
    %v1945 = vpop.f32.mrf.mxu0
    %v1946 = vadd.f32 %v467, %v1945
    %v1947 = vpop.f32.mrf.mxu0
    %1948 = vdwg.mxu0
    %1949 = vmatpush.bf16.msra.mxu0 %v1868
    %1950 = vmatpush.bf16.msra.mxu0 %v1864
    %1951 = vmatpush.bf16.msra.mxu0 %v1860
    %1952 = vmatpush.bf16.msra.mxu0 %v1856
    %1953 = vmatpush.bf16.msra.mxu0 %v1852
    %1954 = vmatpush.bf16.msra.mxu0 %v1848
    %1955 = vmatpush.bf16.msra.mxu0 %v1844
    %1956 = vmatpush.bf16.msra.mxu0 %v1840
    %1957 = vmatmul.bf16.gmra.mxu0 %v1613
    %v1958 = vpop.f32.mrf.mxu0
    %v1959 = vadd.f32 %v1946, %v1958
    %v1960 = vpop.f32.mrf.mxu0
    %1961 = vdwg.mxu0
    %1962 = vmatpush.bf16.msra.mxu0 %v1837
    %1963 = vmatpush.bf16.msra.mxu0 %v1833
    %1964 = vmatpush.bf16.msra.mxu0 %v1829
    %1965 = vmatpush.bf16.msra.mxu0 %v1825
    %1966 = vmatpush.bf16.msra.mxu0 %v1821
    %1967 = vmatpush.bf16.msra.mxu0 %v1817
    %1968 = vmatpush.bf16.msra.mxu0 %v1813
    %1969 = vmatpush.bf16.msra.mxu0 %v1809
    %1970 = vmatmul.bf16.gmra.mxu0 %v1612
    %v1971 = vpop.f32.mrf.mxu0
    %v1972 = vadd.f32 %v468, %v1971
    %v1973 = vpop.f32.mrf.mxu0
    %1974 = vdwg.mxu0
    %1975 = vmatpush.bf16.msra.mxu0 %v1869
    %1976 = vmatpush.bf16.msra.mxu0 %v1865
    %1977 = vmatpush.bf16.msra.mxu0 %v1861
    %1978 = vmatpush.bf16.msra.mxu0 %v1857
    %1979 = vmatpush.bf16.msra.mxu0 %v1853
    %1980 = vmatpush.bf16.msra.mxu0 %v1849
    %1981 = vmatpush.bf16.msra.mxu0 %v1845
    %1982 = vmatpush.bf16.msra.mxu0 %v1841
    %1983 = vmatmul.bf16.gmra.mxu0 %v1613
    %v1984 = vpop.f32.mrf.mxu0
    %v1985 = vadd.f32 %v1972, %v1984
    %v1986 = vpop.f32.mrf.mxu0
    %1987 = vdwg.mxu0
    %1988 = vmatpush.bf16.msra.mxu0 %v1838
    %1989 = vmatpush.bf16.msra.mxu0 %v1834
    %1990 = vmatpush.bf16.msra.mxu0 %v1830
    %1991 = vmatpush.bf16.msra.mxu0 %v1826
    %1992 = vmatpush.bf16.msra.mxu0 %v1822
    %1993 = vmatpush.bf16.msra.mxu0 %v1818
    %1994 = vmatpush.bf16.msra.mxu0 %v1814
    %1995 = vmatpush.bf16.msra.mxu0 %v1810
    %1996 = vmatmul.bf16.gmra.mxu0 %v1612
    %v1997 = vpop.f32.mrf.mxu0
    %v1998 = vadd.f32 %v469, %v1997
    %v1999 = vpop.f32.mrf.mxu0
    %2000 = vdwg.mxu0
    %2001 = vmatpush.bf16.msra.mxu0 %v1870
    %2002 = vmatpush.bf16.msra.mxu0 %v1866
    %2003 = vmatpush.bf16.msra.mxu0 %v1862
    %2004 = vmatpush.bf16.msra.mxu0 %v1858
    %2005 = vmatpush.bf16.msra.mxu0 %v1854
    %2006 = vmatpush.bf16.msra.mxu0 %v1850
    %2007 = vmatpush.bf16.msra.mxu0 %v1846
    %2008 = vmatpush.bf16.msra.mxu0 %v1842
    %2009 = vmatmul.bf16.gmra.mxu0 %v1613
    %v2010 = vpop.f32.mrf.mxu0
    %v2011 = vadd.f32 %v1998, %v2010
    %v2012 = vpop.f32.mrf.mxu0
    %2013 = vdwg.mxu0
    %2014 = vmatpush.bf16.msra.mxu0 %v1839
    %2015 = vmatpush.bf16.msra.mxu0 %v1835
    %2016 = vmatpush.bf16.msra.mxu0 %v1831
    %2017 = vmatpush.bf16.msra.mxu0 %v1827
    %2018 = vmatpush.bf16.msra.mxu0 %v1823
    %2019 = vmatpush.bf16.msra.mxu0 %v1819
    %2020 = vmatpush.bf16.msra.mxu0 %v1815
    %2021 = vmatpush.bf16.msra.mxu0 %v1811
    %2022 = vmatmul.bf16.gmra.mxu0 %v1612
    %v2023 = vpop.f32.mrf.mxu0
    %v2024 = vadd.f32 %v470, %v2023
    %v2025 = vpop.f32.mrf.mxu0
    %2026 = vdwg.mxu0
    %2027 = vmatpush.bf16.msra.mxu0 %v1871
    %2028 = vmatpush.bf16.msra.mxu0 %v1867
    %2029 = vmatpush.bf16.msra.mxu0 %v1863
    %2030 = vmatpush.bf16.msra.mxu0 %v1859
    %2031 = vmatpush.bf16.msra.mxu0 %v1855
    %2032 = vmatpush.bf16.msra.mxu0 %v1851
    %2033 = vmatpush.bf16.msra.mxu0 %v1847
    %2034 = vmatpush.bf16.msra.mxu0 %v1843
    %2035 = vmatmul.bf16.gmra.mxu0 %v1613
    %v2036 = vpop.f32.mrf.mxu0
    %v2037 = vadd.f32 %v2024, %v2036
    %v2038 = vpop.f32.mrf.mxu0
    %2039 = vdwg.mxu0
    %v2040 = vmul.f32 %v1959, 0.5
    %v2041 = vtanh.pop %v2040
    %v2042 = vmul.f32 %v2041, 0.5
    %v2043 = vadd.f32 %v2042, 0.5
    %v2044 = vmul.f32 %v1985, 0.5
    %v2045 = vtanh.pop %v2044
    %v2046 = vmul.f32 %v2045, 0.5
    %v2047 = vadd.f32 %v2046, 0.5
    %v2048 = vtanh.pop %v2011
    %v2049 = vmul.f32 %v2037, 0.5
    %v2050 = vtanh.pop %v2049
    %v2051 = vmul.f32 %v2050, 0.5
    %v2052 = vadd.f32 %v2051, 0.5
    %v2053 = vmul.f32 %v2047, %v1262
    %v2054 = vmul.f32 %v2043, %v2048
    %v2055 = vadd.f32 %v2053, %v2054
    %v2056 = vtanh.pop %v2055
    %v2057 = vmul.f32 %v2052, %v2056
    %v2058 = vpack.c.bf16 %v2057, %v2057
    %2059 = vst [vmem:[#allocation4 + $0x4] sm:$0xf] %v2058
    %s2060 = scalar_lea.vmem [#allocation3], 8
    %2061 = vst [vmem:[%s2060] sm:$0xff] %v2057
    %s2062 = smul.u32 2, 4
    %s2063 = smul.addr %s2062, 8
    %s2064 = scalar_lea.vmem [#allocation2], %s2063
    %v2065 = vld [vmem:[%s2064] sm:$0xff]
    %v2066 = vld [vmem:[%s2064 + $0x8] sm:$0xff]
    %v2067 = vld [vmem:[%s2064 + $0x10] sm:$0xff]
    %v2068 = vld [vmem:[%s2064 + $0x18] sm:$0xff]
    %v2069 = vld [vmem:[#allocation4] sm:$0xf]
    %v2070 = vld [vmem:[#allocation10] sm:$0xff]
    %v2071 = vld [vmem:[#allocation10 + $0x8] sm:$0xff]
    %v2072 = vld [vmem:[#allocation10 + $0x10] sm:$0xff]
    %v2073 = vld [vmem:[#allocation10 + $0x18] sm:$0xff]
    %v2074 = vld [vmem:[#allocation10 + $0x20] sm:$0xff]
    %v2075 = vld [vmem:[#allocation10 + $0x28] sm:$0xff]
    %v2076 = vld [vmem:[#allocation10 + $0x30] sm:$0xff]
    %v2077 = vld [vmem:[#allocation10 + $0x38] sm:$0xff]
    %v2078 = vld [vmem:[#allocation10 + $0x40] sm:$0xff]
    %v2079 = vld [vmem:[#allocation10 + $0x48] sm:$0xff]
    %v2080 = vld [vmem:[#allocation10 + $0x50] sm:$0xff]
    %v2081 = vld [vmem:[#allocation10 + $0x58] sm:$0xff]
    %v2082 = vld [vmem:[#allocation10 + $0x60] sm:$0xff]
    %v2083 = vld [vmem:[#allocation10 + $0x68] sm:$0xff]
    %v2084 = vld [vmem:[#allocation10 + $0x70] sm:$0xff]
    %v2085 = vld [vmem:[#allocation10 + $0x78] sm:$0xff]
    %v2086 = vld [vmem:[#allocation10 + $0x80] sm:$0xff]
    %v2087 = vld [vmem:[#allocation10 + $0x88] sm:$0xff]
    %v2088 = vld [vmem:[#allocation10 + $0x90] sm:$0xff]
    %v2089 = vld [vmem:[#allocation10 + $0x98] sm:$0xff]
    %v2090 = vld [vmem:[#allocation10 + $0xa0] sm:$0xff]
    %v2091 = vld [vmem:[#allocation10 + $0xa8] sm:$0xff]
    %v2092 = vld [vmem:[#allocation10 + $0xb0] sm:$0xff]
    %v2093 = vld [vmem:[#allocation10 + $0xb8] sm:$0xff]
    %v2094 = vld [vmem:[#allocation10 + $0xc0] sm:$0xff]
    %v2095 = vld [vmem:[#allocation10 + $0xc8] sm:$0xff]
    %v2096 = vld [vmem:[#allocation10 + $0xd0] sm:$0xff]
    %v2097 = vld [vmem:[#allocation10 + $0xd8] sm:$0xff]
    %v2098 = vld [vmem:[#allocation10 + $0xe0] sm:$0xff]
    %v2099 = vld [vmem:[#allocation10 + $0xe8] sm:$0xff]
    %v2100 = vld [vmem:[#allocation10 + $0xf0] sm:$0xff]
    %v2101 = vld [vmem:[#allocation10 + $0xf8] sm:$0xff]
    %v2134 = vunpack.c.l.b16 %v2070
    %v2135 = vunpack.c.h.b16 %v2070
    %v2136 = vunpack.c.l.b16 %v2071
    %v2137 = vunpack.c.h.b16 %v2071
    %v2138 = vunpack.c.l.b16 %v2072
    %v2139 = vunpack.c.h.b16 %v2072
    %v2140 = vunpack.c.l.b16 %v2073
    %v2141 = vunpack.c.h.b16 %v2073
    %v2142 = vunpack.c.l.b16 %v2074
    %v2143 = vunpack.c.h.b16 %v2074
    %v2144 = vunpack.c.l.b16 %v2075
    %v2145 = vunpack.c.h.b16 %v2075
    %v2146 = vunpack.c.l.b16 %v2076
    %v2147 = vunpack.c.h.b16 %v2076
    %v2148 = vunpack.c.l.b16 %v2077
    %v2149 = vunpack.c.h.b16 %v2077
    %v2150 = vunpack.c.l.b16 %v2078
    %v2151 = vunpack.c.h.b16 %v2078
    %v2152 = vunpack.c.l.b16 %v2079
    %v2153 = vunpack.c.h.b16 %v2079
    %v2154 = vunpack.c.l.b16 %v2080
    %v2155 = vunpack.c.h.b16 %v2080
    %v2156 = vunpack.c.l.b16 %v2081
    %v2157 = vunpack.c.h.b16 %v2081
    %v2158 = vunpack.c.l.b16 %v2082
    %v2159 = vunpack.c.h.b16 %v2082
    %v2160 = vunpack.c.l.b16 %v2083
    %v2161 = vunpack.c.h.b16 %v2083
    %v2162 = vunpack.c.l.b16 %v2084
    %v2163 = vunpack.c.h.b16 %v2084
    %v2164 = vunpack.c.l.b16 %v2085
    %v2165 = vunpack.c.h.b16 %v2085
    %v2166 = vunpack.c.l.b16 %v2086
    %v2167 = vunpack.c.h.b16 %v2086
    %v2168 = vunpack.c.l.b16 %v2087
    %v2169 = vunpack.c.h.b16 %v2087
    %v2170 = vunpack.c.l.b16 %v2088
    %v2171 = vunpack.c.h.b16 %v2088
    %v2172 = vunpack.c.l.b16 %v2089
    %v2173 = vunpack.c.h.b16 %v2089
    %v2174 = vunpack.c.l.b16 %v2090
    %v2175 = vunpack.c.h.b16 %v2090
    %v2176 = vunpack.c.l.b16 %v2091
    %v2177 = vunpack.c.h.b16 %v2091
    %v2178 = vunpack.c.l.b16 %v2092
    %v2179 = vunpack.c.h.b16 %v2092
    %v2180 = vunpack.c.l.b16 %v2093
    %v2181 = vunpack.c.h.b16 %v2093
    %v2182 = vunpack.c.l.b16 %v2094
    %v2183 = vunpack.c.h.b16 %v2094
    %v2184 = vunpack.c.l.b16 %v2095
    %v2185 = vunpack.c.h.b16 %v2095
    %v2186 = vunpack.c.l.b16 %v2096
    %v2187 = vunpack.c.h.b16 %v2096
    %v2188 = vunpack.c.l.b16 %v2097
    %v2189 = vunpack.c.h.b16 %v2097
    %v2190 = vunpack.c.l.b16 %v2098
    %v2191 = vunpack.c.h.b16 %v2098
    %v2192 = vunpack.c.l.b16 %v2099
    %v2193 = vunpack.c.h.b16 %v2099
    %v2194 = vunpack.c.l.b16 %v2100
    %v2195 = vunpack.c.h.b16 %v2100
    %v2196 = vunpack.c.l.b16 %v2101
    %v2197 = vunpack.c.h.b16 %v2101
    %v2198 = vpack.c.b16 %v2138, %v2134
    %v2199 = vpack.c.b16 %v2139, %v2135
    %v2200 = vpack.c.b16 %v2140, %v2136
    %v2201 = vpack.c.b16 %v2141, %v2137
    %v2202 = vpack.c.b16 %v2146, %v2142
    %v2203 = vpack.c.b16 %v2147, %v2143
    %v2204 = vpack.c.b16 %v2148, %v2144
    %v2205 = vpack.c.b16 %v2149, %v2145
    %v2206 = vpack.c.b16 %v2154, %v2150
    %v2207 = vpack.c.b16 %v2155, %v2151
    %v2208 = vpack.c.b16 %v2156, %v2152
    %v2209 = vpack.c.b16 %v2157, %v2153
    %v2210 = vpack.c.b16 %v2162, %v2158
    %v2211 = vpack.c.b16 %v2163, %v2159
    %v2212 = vpack.c.b16 %v2164, %v2160
    %v2213 = vpack.c.b16 %v2165, %v2161
    %v2214 = vpack.c.b16 %v2170, %v2166
    %v2215 = vpack.c.b16 %v2171, %v2167
    %v2216 = vpack.c.b16 %v2172, %v2168
    %v2217 = vpack.c.b16 %v2173, %v2169
    %v2218 = vpack.c.b16 %v2178, %v2174
    %v2219 = vpack.c.b16 %v2179, %v2175
    %v2220 = vpack.c.b16 %v2180, %v2176
    %v2221 = vpack.c.b16 %v2181, %v2177
    %v2222 = vpack.c.b16 %v2186, %v2182
    %v2223 = vpack.c.b16 %v2187, %v2183
    %v2224 = vpack.c.b16 %v2188, %v2184
    %v2225 = vpack.c.b16 %v2189, %v2185
    %v2226 = vpack.c.b16 %v2194, %v2190
    %v2227 = vpack.c.b16 %v2195, %v2191
    %v2228 = vpack.c.b16 %v2196, %v2192
    %v2229 = vpack.c.b16 %v2197, %v2193
    %2262 = vmatpush.bf16.msra.mxu0 %v2226
    %2263 = vmatpush.bf16.msra.mxu0 %v2222
    %2264 = vmatpush.bf16.msra.mxu0 %v2218
    %2265 = vmatpush.bf16.msra.mxu0 %v2214
    %2266 = vmatpush.bf16.msra.mxu0 %v2210
    %2267 = vmatpush.bf16.msra.mxu0 %v2206
    %2268 = vmatpush.bf16.msra.mxu0 %v2202
    %2269 = vmatpush.bf16.msra.mxu0 %v2198
    %2270 = vmatmul.bf16.gmra.mxu0 %v2069
    %v2271 = vpop.f32.mrf.mxu0
    %v2272 = vadd.f32 0.0, %v2271
    %v2273 = vpop.f32.mrf.mxu0
    %2274 = vdwg.mxu0
    %2275 = vmatpush.bf16.msra.mxu0 %v2227
    %2276 = vmatpush.bf16.msra.mxu0 %v2223
    %2277 = vmatpush.bf16.msra.mxu0 %v2219
    %2278 = vmatpush.bf16.msra.mxu0 %v2215
    %2279 = vmatpush.bf16.msra.mxu0 %v2211
    %2280 = vmatpush.bf16.msra.mxu0 %v2207
    %2281 = vmatpush.bf16.msra.mxu0 %v2203
    %2282 = vmatpush.bf16.msra.mxu0 %v2199
    %2283 = vmatmul.bf16.gmra.mxu0 %v2069
    %v2284 = vpop.f32.mrf.mxu0
    %v2285 = vadd.f32 0.0, %v2284
    %v2286 = vpop.f32.mrf.mxu0
    %2287 = vdwg.mxu0
    %2288 = vmatpush.bf16.msra.mxu0 %v2228
    %2289 = vmatpush.bf16.msra.mxu0 %v2224
    %2290 = vmatpush.bf16.msra.mxu0 %v2220
    %2291 = vmatpush.bf16.msra.mxu0 %v2216
    %2292 = vmatpush.bf16.msra.mxu0 %v2212
    %2293 = vmatpush.bf16.msra.mxu0 %v2208
    %2294 = vmatpush.bf16.msra.mxu0 %v2204
    %2295 = vmatpush.bf16.msra.mxu0 %v2200
    %2296 = vmatmul.bf16.gmra.mxu0 %v2069
    %v2297 = vpop.f32.mrf.mxu0
    %v2298 = vadd.f32 0.0, %v2297
    %v2299 = vpop.f32.mrf.mxu0
    %2300 = vdwg.mxu0
    %2301 = vmatpush.bf16.msra.mxu0 %v2229
    %2302 = vmatpush.bf16.msra.mxu0 %v2225
    %2303 = vmatpush.bf16.msra.mxu0 %v2221
    %2304 = vmatpush.bf16.msra.mxu0 %v2217
    %2305 = vmatpush.bf16.msra.mxu0 %v2213
    %2306 = vmatpush.bf16.msra.mxu0 %v2209
    %2307 = vmatpush.bf16.msra.mxu0 %v2205
    %2308 = vmatpush.bf16.msra.mxu0 %v2201
    %2309 = vmatmul.bf16.gmra.mxu0 %v2069
    %v2310 = vpop.f32.mrf.mxu0
    %v2311 = vadd.f32 0.0, %v2310
    %v2312 = vpop.f32.mrf.mxu0
    %2313 = vdwg.mxu0
    %v2314 = vadd.f32 %v2065, %v2272
    %v2315 = vadd.f32 %v2066, %v2285
    %v2316 = vadd.f32 %v2067, %v2298
    %v2317 = vadd.f32 %v2068, %v2311
    %v2318 = vmul.f32 %v2314, 0.5
    %v2319 = vtanh.pop %v2318
    %v2320 = vmul.f32 %v2319, 0.5
    %v2321 = vadd.f32 %v2320, 0.5
    %v2322 = vmul.f32 %v2315, 0.5
    %v2323 = vtanh.pop %v2322
    %v2324 = vmul.f32 %v2323, 0.5
    %v2325 = vadd.f32 %v2324, 0.5
    %v2326 = vtanh.pop %v2316
    %v2327 = vmul.f32 %v2317, 0.5
    %v2328 = vtanh.pop %v2327
    %v2329 = vmul.f32 %v2328, 0.5
    %v2330 = vadd.f32 %v2329, 0.5
    %v2331 = vmul.f32 %v2325, %v1539
    %v2332 = vmul.f32 %v2321, %v2326
    %v2333 = vadd.f32 %v2331, %v2332
    %v2334 = vtanh.pop %v2333
    %v2335 = vmul.f32 %v2330, %v2334
    %v2336 = vpack.c.bf16 %v2335, %v2335
    %2337 = vst [vmem:[#allocation4] sm:$0xf] %v2336
    %v2338 = vld [vmem:[#allocation4] sm:$0xff]
    %v2339 = vld [vmem:[#allocation11] sm:$0xff]
    %v2340 = vld [vmem:[#allocation11 + $0x8] sm:$0xff]
    %v2341 = vld [vmem:[#allocation11 + $0x10] sm:$0xff]
    %v2342 = vld [vmem:[#allocation11 + $0x18] sm:$0xff]
    %v2343 = vld [vmem:[#allocation11 + $0x20] sm:$0xff]
    %v2344 = vld [vmem:[#allocation11 + $0x28] sm:$0xff]
    %v2345 = vld [vmem:[#allocation11 + $0x30] sm:$0xff]
    %v2346 = vld [vmem:[#allocation11 + $0x38] sm:$0xff]
    %v2347 = vld [vmem:[#allocation11 + $0x40] sm:$0xff]
    %v2348 = vld [vmem:[#allocation11 + $0x48] sm:$0xff]
    %v2349 = vld [vmem:[#allocation11 + $0x50] sm:$0xff]
    %v2350 = vld [vmem:[#allocation11 + $0x58] sm:$0xff]
    %v2351 = vld [vmem:[#allocation11 + $0x60] sm:$0xff]
    %v2352 = vld [vmem:[#allocation11 + $0x68] sm:$0xff]
    %v2353 = vld [vmem:[#allocation11 + $0x70] sm:$0xff]
    %v2354 = vld [vmem:[#allocation11 + $0x78] sm:$0xff]
    %v2355 = vld [vmem:[#allocation11 + $0x80] sm:$0xff]
    %v2356 = vld [vmem:[#allocation11 + $0x88] sm:$0xff]
    %v2357 = vld [vmem:[#allocation11 + $0x90] sm:$0xff]
    %v2358 = vld [vmem:[#allocation11 + $0x98] sm:$0xff]
    %v2359 = vld [vmem:[#allocation11 + $0xa0] sm:$0xff]
    %v2360 = vld [vmem:[#allocation11 + $0xa8] sm:$0xff]
    %v2361 = vld [vmem:[#allocation11 + $0xb0] sm:$0xff]
    %v2362 = vld [vmem:[#allocation11 + $0xb8] sm:$0xff]
    %v2363 = vld [vmem:[#allocation11 + $0xc0] sm:$0xff]
    %v2364 = vld [vmem:[#allocation11 + $0xc8] sm:$0xff]
    %v2365 = vld [vmem:[#allocation11 + $0xd0] sm:$0xff]
    %v2366 = vld [vmem:[#allocation11 + $0xd8] sm:$0xff]
    %v2367 = vld [vmem:[#allocation11 + $0xe0] sm:$0xff]
    %v2368 = vld [vmem:[#allocation11 + $0xe8] sm:$0xff]
    %v2369 = vld [vmem:[#allocation11 + $0xf0] sm:$0xff]
    %v2370 = vld [vmem:[#allocation11 + $0xf8] sm:$0xff]
    %v2371 = vld [vmem:[#allocation11 + $0x100] sm:$0xff]
    %v2372 = vld [vmem:[#allocation11 + $0x108] sm:$0xff]
    %v2373 = vld [vmem:[#allocation11 + $0x110] sm:$0xff]
    %v2374 = vld [vmem:[#allocation11 + $0x118] sm:$0xff]
    %v2375 = vld [vmem:[#allocation11 + $0x120] sm:$0xff]
    %v2376 = vld [vmem:[#allocation11 + $0x128] sm:$0xff]
    %v2377 = vld [vmem:[#allocation11 + $0x130] sm:$0xff]
    %v2378 = vld [vmem:[#allocation11 + $0x138] sm:$0xff]
    %v2379 = vld [vmem:[#allocation11 + $0x140] sm:$0xff]
    %v2380 = vld [vmem:[#allocation11 + $0x148] sm:$0xff]
    %v2381 = vld [vmem:[#allocation11 + $0x150] sm:$0xff]
    %v2382 = vld [vmem:[#allocation11 + $0x158] sm:$0xff]
    %v2383 = vld [vmem:[#allocation11 + $0x160] sm:$0xff]
    %v2384 = vld [vmem:[#allocation11 + $0x168] sm:$0xff]
    %v2385 = vld [vmem:[#allocation11 + $0x170] sm:$0xff]
    %v2386 = vld [vmem:[#allocation11 + $0x178] sm:$0xff]
    %v2387 = vld [vmem:[#allocation11 + $0x180] sm:$0xff]
    %v2388 = vld [vmem:[#allocation11 + $0x188] sm:$0xff]
    %v2389 = vld [vmem:[#allocation11 + $0x190] sm:$0xff]
    %v2390 = vld [vmem:[#allocation11 + $0x198] sm:$0xff]
    %v2391 = vld [vmem:[#allocation11 + $0x1a0] sm:$0xff]
    %v2392 = vld [vmem:[#allocation11 + $0x1a8] sm:$0xff]
    %v2393 = vld [vmem:[#allocation11 + $0x1b0] sm:$0xff]
    %v2394 = vld [vmem:[#allocation11 + $0x1b8] sm:$0xff]
    %v2395 = vld [vmem:[#allocation11 + $0x1c0] sm:$0xff]
    %v2396 = vld [vmem:[#allocation11 + $0x1c8] sm:$0xff]
    %v2397 = vld [vmem:[#allocation11 + $0x1d0] sm:$0xff]
    %v2398 = vld [vmem:[#allocation11 + $0x1d8] sm:$0xff]
    %v2399 = vld [vmem:[#allocation11 + $0x1e0] sm:$0xff]
    %v2400 = vld [vmem:[#allocation11 + $0x1e8] sm:$0xff]
    %v2401 = vld [vmem:[#allocation11 + $0x1f0] sm:$0xff]
    %v2402 = vld [vmem:[#allocation11 + $0x1f8] sm:$0xff]
    %v2404 = vunpack.c.l.b16 %v2338
    %v2405 = vunpack.c.h.b16 %v2338
    %v2406 = vpack.c.b16 %v2404, %v2404
    %v2407 = vpack.c.b16 %v2405, %v2405
    %v2474 = vunpack.c.l.b16 %v2339
    %v2475 = vunpack.c.h.b16 %v2339
    %v2476 = vunpack.c.l.b16 %v2340
    %v2477 = vunpack.c.h.b16 %v2340
    %v2478 = vunpack.c.l.b16 %v2341
    %v2479 = vunpack.c.h.b16 %v2341
    %v2480 = vunpack.c.l.b16 %v2342
    %v2481 = vunpack.c.h.b16 %v2342
    %v2482 = vunpack.c.l.b16 %v2343
    %v2483 = vunpack.c.h.b16 %v2343
    %v2484 = vunpack.c.l.b16 %v2344
    %v2485 = vunpack.c.h.b16 %v2344
    %v2486 = vunpack.c.l.b16 %v2345
    %v2487 = vunpack.c.h.b16 %v2345
    %v2488 = vunpack.c.l.b16 %v2346
    %v2489 = vunpack.c.h.b16 %v2346
    %v2490 = vunpack.c.l.b16 %v2347
    %v2491 = vunpack.c.h.b16 %v2347
    %v2492 = vunpack.c.l.b16 %v2348
    %v2493 = vunpack.c.h.b16 %v2348
    %v2494 = vunpack.c.l.b16 %v2349
    %v2495 = vunpack.c.h.b16 %v2349
    %v2496 = vunpack.c.l.b16 %v2350
    %v2497 = vunpack.c.h.b16 %v2350
    %v2498 = vunpack.c.l.b16 %v2351
    %v2499 = vunpack.c.h.b16 %v2351
    %v2500 = vunpack.c.l.b16 %v2352
    %v2501 = vunpack.c.h.b16 %v2352
    %v2502 = vunpack.c.l.b16 %v2353
    %v2503 = vunpack.c.h.b16 %v2353
    %v2504 = vunpack.c.l.b16 %v2354
    %v2505 = vunpack.c.h.b16 %v2354
    %v2506 = vunpack.c.l.b16 %v2355
    %v2507 = vunpack.c.h.b16 %v2355
    %v2508 = vunpack.c.l.b16 %v2356
    %v2509 = vunpack.c.h.b16 %v2356
    %v2510 = vunpack.c.l.b16 %v2357
    %v2511 = vunpack.c.h.b16 %v2357
    %v2512 = vunpack.c.l.b16 %v2358
    %v2513 = vunpack.c.h.b16 %v2358
    %v2514 = vunpack.c.l.b16 %v2359
    %v2515 = vunpack.c.h.b16 %v2359
    %v2516 = vunpack.c.l.b16 %v2360
    %v2517 = vunpack.c.h.b16 %v2360
    %v2518 = vunpack.c.l.b16 %v2361
    %v2519 = vunpack.c.h.b16 %v2361
    %v2520 = vunpack.c.l.b16 %v2362
    %v2521 = vunpack.c.h.b16 %v2362
    %v2522 = vunpack.c.l.b16 %v2363
    %v2523 = vunpack.c.h.b16 %v2363
    %v2524 = vunpack.c.l.b16 %v2364
    %v2525 = vunpack.c.h.b16 %v2364
    %v2526 = vunpack.c.l.b16 %v2365
    %v2527 = vunpack.c.h.b16 %v2365
    %v2528 = vunpack.c.l.b16 %v2366
    %v2529 = vunpack.c.h.b16 %v2366
    %v2530 = vunpack.c.l.b16 %v2367
    %v2531 = vunpack.c.h.b16 %v2367
    %v2532 = vunpack.c.l.b16 %v2368
    %v2533 = vunpack.c.h.b16 %v2368
    %v2534 = vunpack.c.l.b16 %v2369
    %v2535 = vunpack.c.h.b16 %v2369
    %v2536 = vunpack.c.l.b16 %v2370
    %v2537 = vunpack.c.h.b16 %v2370
    %v2538 = vunpack.c.l.b16 %v2371
    %v2539 = vunpack.c.h.b16 %v2371
    %v2540 = vunpack.c.l.b16 %v2372
    %v2541 = vunpack.c.h.b16 %v2372
    %v2542 = vunpack.c.l.b16 %v2373
    %v2543 = vunpack.c.h.b16 %v2373
    %v2544 = vunpack.c.l.b16 %v2374
    %v2545 = vunpack.c.h.b16 %v2374
    %v2546 = vunpack.c.l.b16 %v2375
    %v2547 = vunpack.c.h.b16 %v2375
    %v2548 = vunpack.c.l.b16 %v2376
    %v2549 = vunpack.c.h.b16 %v2376
    %v2550 = vunpack.c.l.b16 %v2377
    %v2551 = vunpack.c.h.b16 %v2377
    %v2552 = vunpack.c.l.b16 %v2378
    %v2553 = vunpack.c.h.b16 %v2378
    %v2554 = vunpack.c.l.b16 %v2379
    %v2555 = vunpack.c.h.b16 %v2379
    %v2556 = vunpack.c.l.b16 %v2380
    %v2557 = vunpack.c.h.b16 %v2380
    %v2558 = vunpack.c.l.b16 %v2381
    %v2559 = vunpack.c.h.b16 %v2381
    %v2560 = vunpack.c.l.b16 %v2382
    %v2561 = vunpack.c.h.b16 %v2382
    %v2562 = vunpack.c.l.b16 %v2383
    %v2563 = vunpack.c.h.b16 %v2383
    %v2564 = vunpack.c.l.b16 %v2384
    %v2565 = vunpack.c.h.b16 %v2384
    %v2566 = vunpack.c.l.b16 %v2385
    %v2567 = vunpack.c.h.b16 %v2385
    %v2568 = vunpack.c.l.b16 %v2386
    %v2569 = vunpack.c.h.b16 %v2386
    %v2570 = vunpack.c.l.b16 %v2387
    %v2571 = vunpack.c.h.b16 %v2387
    %v2572 = vunpack.c.l.b16 %v2388
    %v2573 = vunpack.c.h.b16 %v2388
    %v2574 = vunpack.c.l.b16 %v2389
    %v2575 = vunpack.c.h.b16 %v2389
    %v2576 = vunpack.c.l.b16 %v2390
    %v2577 = vunpack.c.h.b16 %v2390
    %v2578 = vunpack.c.l.b16 %v2391
    %v2579 = vunpack.c.h.b16 %v2391
    %v2580 = vunpack.c.l.b16 %v2392
    %v2581 = vunpack.c.h.b16 %v2392
    %v2582 = vunpack.c.l.b16 %v2393
    %v2583 = vunpack.c.h.b16 %v2393
    %v2584 = vunpack.c.l.b16 %v2394
    %v2585 = vunpack.c.h.b16 %v2394
    %v2586 = vunpack.c.l.b16 %v2395
    %v2587 = vunpack.c.h.b16 %v2395
    %v2588 = vunpack.c.l.b16 %v2396
    %v2589 = vunpack.c.h.b16 %v2396
    %v2590 = vunpack.c.l.b16 %v2397
    %v2591 = vunpack.c.h.b16 %v2397
    %v2592 = vunpack.c.l.b16 %v2398
    %v2593 = vunpack.c.h.b16 %v2398
    %v2594 = vunpack.c.l.b16 %v2399
    %v2595 = vunpack.c.h.b16 %v2399
    %v2596 = vunpack.c.l.b16 %v2400
    %v2597 = vunpack.c.h.b16 %v2400
    %v2598 = vunpack.c.l.b16 %v2401
    %v2599 = vunpack.c.h.b16 %v2401
    %v2600 = vunpack.c.l.b16 %v2402
    %v2601 = vunpack.c.h.b16 %v2402
    %v2602 = vpack.c.b16 %v2478, %v2474
    %v2603 = vpack.c.b16 %v2479, %v2475
    %v2604 = vpack.c.b16 %v2480, %v2476
    %v2605 = vpack.c.b16 %v2481, %v2477
    %v2606 = vpack.c.b16 %v2486, %v2482
    %v2607 = vpack.c.b16 %v2487, %v2483
    %v2608 = vpack.c.b16 %v2488, %v2484
    %v2609 = vpack.c.b16 %v2489, %v2485
    %v2610 = vpack.c.b16 %v2494, %v2490
    %v2611 = vpack.c.b16 %v2495, %v2491
    %v2612 = vpack.c.b16 %v2496, %v2492
    %v2613 = vpack.c.b16 %v2497, %v2493
    %v2614 = vpack.c.b16 %v2502, %v2498
    %v2615 = vpack.c.b16 %v2503, %v2499
    %v2616 = vpack.c.b16 %v2504, %v2500
    %v2617 = vpack.c.b16 %v2505, %v2501
    %v2618 = vpack.c.b16 %v2510, %v2506
    %v2619 = vpack.c.b16 %v2511, %v2507
    %v2620 = vpack.c.b16 %v2512, %v2508
    %v2621 = vpack.c.b16 %v2513, %v2509
    %v2622 = vpack.c.b16 %v2518, %v2514
    %v2623 = vpack.c.b16 %v2519, %v2515
    %v2624 = vpack.c.b16 %v2520, %v2516
    %v2625 = vpack.c.b16 %v2521, %v2517
    %v2626 = vpack.c.b16 %v2526, %v2522
    %v2627 = vpack.c.b16 %v2527, %v2523
    %v2628 = vpack.c.b16 %v2528, %v2524
    %v2629 = vpack.c.b16 %v2529, %v2525
    %v2630 = vpack.c.b16 %v2534, %v2530
    %v2631 = vpack.c.b16 %v2535, %v2531
    %v2632 = vpack.c.b16 %v2536, %v2532
    %v2633 = vpack.c.b16 %v2537, %v2533
    %v2634 = vpack.c.b16 %v2542, %v2538
    %v2635 = vpack.c.b16 %v2543, %v2539
    %v2636 = vpack.c.b16 %v2544, %v2540
    %v2637 = vpack.c.b16 %v2545, %v2541
    %v2638 = vpack.c.b16 %v2550, %v2546
    %v2639 = vpack.c.b16 %v2551, %v2547
    %v2640 = vpack.c.b16 %v2552, %v2548
    %v2641 = vpack.c.b16 %v2553, %v2549
    %v2642 = vpack.c.b16 %v2558, %v2554
    %v2643 = vpack.c.b16 %v2559, %v2555
    %v2644 = vpack.c.b16 %v2560, %v2556
    %v2645 = vpack.c.b16 %v2561, %v2557
    %v2646 = vpack.c.b16 %v2566, %v2562
    %v2647 = vpack.c.b16 %v2567, %v2563
    %v2648 = vpack.c.b16 %v2568, %v2564
    %v2649 = vpack.c.b16 %v2569, %v2565
    %v2650 = vpack.c.b16 %v2574, %v2570
    %v2651 = vpack.c.b16 %v2575, %v2571
    %v2652 = vpack.c.b16 %v2576, %v2572
    %v2653 = vpack.c.b16 %v2577, %v2573
    %v2654 = vpack.c.b16 %v2582, %v2578
    %v2655 = vpack.c.b16 %v2583, %v2579
    %v2656 = vpack.c.b16 %v2584, %v2580
    %v2657 = vpack.c.b16 %v2585, %v2581
    %v2658 = vpack.c.b16 %v2590, %v2586
    %v2659 = vpack.c.b16 %v2591, %v2587
    %v2660 = vpack.c.b16 %v2592, %v2588
    %v2661 = vpack.c.b16 %v2593, %v2589
    %v2662 = vpack.c.b16 %v2598, %v2594
    %v2663 = vpack.c.b16 %v2599, %v2595
    %v2664 = vpack.c.b16 %v2600, %v2596
    %v2665 = vpack.c.b16 %v2601, %v2597
    %2730 = vmatpush.bf16.msra.mxu0 %v2630
    %2731 = vmatpush.bf16.msra.mxu0 %v2626
    %2732 = vmatpush.bf16.msra.mxu0 %v2622
    %2733 = vmatpush.bf16.msra.mxu0 %v2618
    %2734 = vmatpush.bf16.msra.mxu0 %v2614
    %2735 = vmatpush.bf16.msra.mxu0 %v2610
    %2736 = vmatpush.bf16.msra.mxu0 %v2606
    %2737 = vmatpush.bf16.msra.mxu0 %v2602
    %2738 = vmatmul.bf16.gmra.mxu0 %v2406
    %v2739 = vpop.f32.mrf.mxu0
    %v2740 = vadd.f32 %v467, %v2739
    %v2741 = vpop.f32.mrf.mxu0
    %2742 = vdwg.mxu0
    %2743 = vmatpush.bf16.msra.mxu0 %v2662
    %2744 = vmatpush.bf16.msra.mxu0 %v2658
    %2745 = vmatpush.bf16.msra.mxu0 %v2654
    %2746 = vmatpush.bf16.msra.mxu0 %v2650
    %2747 = vmatpush.bf16.msra.mxu0 %v2646
    %2748 = vmatpush.bf16.msra.mxu0 %v2642
    %2749 = vmatpush.bf16.msra.mxu0 %v2638
    %2750 = vmatpush.bf16.msra.mxu0 %v2634
    %2751 = vmatmul.bf16.gmra.mxu0 %v2407
    %v2752 = vpop.f32.mrf.mxu0
    %v2753 = vadd.f32 %v2740, %v2752
    %v2754 = vpop.f32.mrf.mxu0
    %2755 = vdwg.mxu0
    %2756 = vmatpush.bf16.msra.mxu0 %v2631
    %2757 = vmatpush.bf16.msra.mxu0 %v2627
    %2758 = vmatpush.bf16.msra.mxu0 %v2623
    %2759 = vmatpush.bf16.msra.mxu0 %v2619
    %2760 = vmatpush.bf16.msra.mxu0 %v2615
    %2761 = vmatpush.bf16.msra.mxu0 %v2611
    %2762 = vmatpush.bf16.msra.mxu0 %v2607
    %2763 = vmatpush.bf16.msra.mxu0 %v2603
    %2764 = vmatmul.bf16.gmra.mxu0 %v2406
    %v2765 = vpop.f32.mrf.mxu0
    %v2766 = vadd.f32 %v468, %v2765
    %v2767 = vpop.f32.mrf.mxu0
    %2768 = vdwg.mxu0
    %2769 = vmatpush.bf16.msra.mxu0 %v2663
    %2770 = vmatpush.bf16.msra.mxu0 %v2659
    %2771 = vmatpush.bf16.msra.mxu0 %v2655
    %2772 = vmatpush.bf16.msra.mxu0 %v2651
    %2773 = vmatpush.bf16.msra.mxu0 %v2647
    %2774 = vmatpush.bf16.msra.mxu0 %v2643
    %2775 = vmatpush.bf16.msra.mxu0 %v2639
    %2776 = vmatpush.bf16.msra.mxu0 %v2635
    %2777 = vmatmul.bf16.gmra.mxu0 %v2407
    %v2778 = vpop.f32.mrf.mxu0
    %v2779 = vadd.f32 %v2766, %v2778
    %v2780 = vpop.f32.mrf.mxu0
    %2781 = vdwg.mxu0
    %2782 = vmatpush.bf16.msra.mxu0 %v2632
    %2783 = vmatpush.bf16.msra.mxu0 %v2628
    %2784 = vmatpush.bf16.msra.mxu0 %v2624
    %2785 = vmatpush.bf16.msra.mxu0 %v2620
    %2786 = vmatpush.bf16.msra.mxu0 %v2616
    %2787 = vmatpush.bf16.msra.mxu0 %v2612
    %2788 = vmatpush.bf16.msra.mxu0 %v2608
    %2789 = vmatpush.bf16.msra.mxu0 %v2604
    %2790 = vmatmul.bf16.gmra.mxu0 %v2406
    %v2791 = vpop.f32.mrf.mxu0
    %v2792 = vadd.f32 %v469, %v2791
    %v2793 = vpop.f32.mrf.mxu0
    %2794 = vdwg.mxu0
    %2795 = vmatpush.bf16.msra.mxu0 %v2664
    %2796 = vmatpush.bf16.msra.mxu0 %v2660
    %2797 = vmatpush.bf16.msra.mxu0 %v2656
    %2798 = vmatpush.bf16.msra.mxu0 %v2652
    %2799 = vmatpush.bf16.msra.mxu0 %v2648
    %2800 = vmatpush.bf16.msra.mxu0 %v2644
    %2801 = vmatpush.bf16.msra.mxu0 %v2640
    %2802 = vmatpush.bf16.msra.mxu0 %v2636
    %2803 = vmatmul.bf16.gmra.mxu0 %v2407
    %v2804 = vpop.f32.mrf.mxu0
    %v2805 = vadd.f32 %v2792, %v2804
    %v2806 = vpop.f32.mrf.mxu0
    %2807 = vdwg.mxu0
    %2808 = vmatpush.bf16.msra.mxu0 %v2633
    %2809 = vmatpush.bf16.msra.mxu0 %v2629
    %2810 = vmatpush.bf16.msra.mxu0 %v2625
    %2811 = vmatpush.bf16.msra.mxu0 %v2621
    %2812 = vmatpush.bf16.msra.mxu0 %v2617
    %2813 = vmatpush.bf16.msra.mxu0 %v2613
    %2814 = vmatpush.bf16.msra.mxu0 %v2609
    %2815 = vmatpush.bf16.msra.mxu0 %v2605
    %2816 = vmatmul.bf16.gmra.mxu0 %v2406
    %v2817 = vpop.f32.mrf.mxu0
    %v2818 = vadd.f32 %v470, %v2817
    %v2819 = vpop.f32.mrf.mxu0
    %2820 = vdwg.mxu0
    %2821 = vmatpush.bf16.msra.mxu0 %v2665
    %2822 = vmatpush.bf16.msra.mxu0 %v2661
    %2823 = vmatpush.bf16.msra.mxu0 %v2657
    %2824 = vmatpush.bf16.msra.mxu0 %v2653
    %2825 = vmatpush.bf16.msra.mxu0 %v2649
    %2826 = vmatpush.bf16.msra.mxu0 %v2645
    %2827 = vmatpush.bf16.msra.mxu0 %v2641
    %2828 = vmatpush.bf16.msra.mxu0 %v2637
    %2829 = vmatmul.bf16.gmra.mxu0 %v2407
    %v2830 = vpop.f32.mrf.mxu0
    %v2831 = vadd.f32 %v2818, %v2830
    %v2832 = vpop.f32.mrf.mxu0
    %2833 = vdwg.mxu0
    %v2834 = vmul.f32 %v2753, 0.5
    %v2835 = vtanh.pop %v2834
    %v2836 = vmul.f32 %v2835, 0.5
    %v2837 = vadd.f32 %v2836, 0.5
    %v2838 = vmul.f32 %v2779, 0.5
    %v2839 = vtanh.pop %v2838
    %v2840 = vmul.f32 %v2839, 0.5
    %v2841 = vadd.f32 %v2840, 0.5
    %v2842 = vtanh.pop %v2805
    %v2843 = vmul.f32 %v2831, 0.5
    %v2844 = vtanh.pop %v2843
    %v2845 = vmul.f32 %v2844, 0.5
    %v2846 = vadd.f32 %v2845, 0.5
    %v2847 = vmul.f32 %v2841, %v2055
    %v2848 = vmul.f32 %v2837, %v2842
    %v2849 = vadd.f32 %v2847, %v2848
    %v2850 = vtanh.pop %v2849
    %v2851 = vmul.f32 %v2846, %v2850
    %v2852 = vpack.c.bf16 %v2851, %v2851
    %2853 = vst [vmem:[#allocation4 + $0x4] sm:$0xf] %v2852
    %s2854 = scalar_lea.vmem [#allocation3], 16
    %2855 = vst [vmem:[%s2854] sm:$0xff] %v2851
    %s2856 = smul.u32 3, 4
    %s2857 = smul.addr %s2856, 8
    %s2858 = scalar_lea.vmem [#allocation2], %s2857
    %v2859 = vld [vmem:[%s2858] sm:$0xff]
    %v2860 = vld [vmem:[%s2858 + $0x8] sm:$0xff]
    %v2861 = vld [vmem:[%s2858 + $0x10] sm:$0xff]
    %v2862 = vld [vmem:[%s2858 + $0x18] sm:$0xff]
    %v2863 = vld [vmem:[#allocation4] sm:$0xf]
    %v2864 = vld [vmem:[#allocation10] sm:$0xff]
    %v2865 = vld [vmem:[#allocation10 + $0x8] sm:$0xff]
    %v2866 = vld [vmem:[#allocation10 + $0x10] sm:$0xff]
    %v2867 = vld [vmem:[#allocation10 + $0x18] sm:$0xff]
    %v2868 = vld [vmem:[#allocation10 + $0x20] sm:$0xff]
    %v2869 = vld [vmem:[#allocation10 + $0x28] sm:$0xff]
    %v2870 = vld [vmem:[#allocation10 + $0x30] sm:$0xff]
    %v2871 = vld [vmem:[#allocation10 + $0x38] sm:$0xff]
    %v2872 = vld [vmem:[#allocation10 + $0x40] sm:$0xff]
    %v2873 = vld [vmem:[#allocation10 + $0x48] sm:$0xff]
    %v2874 = vld [vmem:[#allocation10 + $0x50] sm:$0xff]
    %v2875 = vld [vmem:[#allocation10 + $0x58] sm:$0xff]
    %v2876 = vld [vmem:[#allocation10 + $0x60] sm:$0xff]
    %v2877 = vld [vmem:[#allocation10 + $0x68] sm:$0xff]
    %v2878 = vld [vmem:[#allocation10 + $0x70] sm:$0xff]
    %v2879 = vld [vmem:[#allocation10 + $0x78] sm:$0xff]
    %v2880 = vld [vmem:[#allocation10 + $0x80] sm:$0xff]
    %v2881 = vld [vmem:[#allocation10 + $0x88] sm:$0xff]
    %v2882 = vld [vmem:[#allocation10 + $0x90] sm:$0xff]
    %v2883 = vld [vmem:[#allocation10 + $0x98] sm:$0xff]
    %v2884 = vld [vmem:[#allocation10 + $0xa0] sm:$0xff]
    %v2885 = vld [vmem:[#allocation10 + $0xa8] sm:$0xff]
    %v2886 = vld [vmem:[#allocation10 + $0xb0] sm:$0xff]
    %v2887 = vld [vmem:[#allocation10 + $0xb8] sm:$0xff]
    %v2888 = vld [vmem:[#allocation10 + $0xc0] sm:$0xff]
    %v2889 = vld [vmem:[#allocation10 + $0xc8] sm:$0xff]
    %v2890 = vld [vmem:[#allocation10 + $0xd0] sm:$0xff]
    %v2891 = vld [vmem:[#allocation10 + $0xd8] sm:$0xff]
    %v2892 = vld [vmem:[#allocation10 + $0xe0] sm:$0xff]
    %v2893 = vld [vmem:[#allocation10 + $0xe8] sm:$0xff]
    %v2894 = vld [vmem:[#allocation10 + $0xf0] sm:$0xff]
    %v2895 = vld [vmem:[#allocation10 + $0xf8] sm:$0xff]
    %v2928 = vunpack.c.l.b16 %v2864
    %v2929 = vunpack.c.h.b16 %v2864
    %v2930 = vunpack.c.l.b16 %v2865
    %v2931 = vunpack.c.h.b16 %v2865
    %v2932 = vunpack.c.l.b16 %v2866
    %v2933 = vunpack.c.h.b16 %v2866
    %v2934 = vunpack.c.l.b16 %v2867
    %v2935 = vunpack.c.h.b16 %v2867
    %v2936 = vunpack.c.l.b16 %v2868
    %v2937 = vunpack.c.h.b16 %v2868
    %v2938 = vunpack.c.l.b16 %v2869
    %v2939 = vunpack.c.h.b16 %v2869
    %v2940 = vunpack.c.l.b16 %v2870
    %v2941 = vunpack.c.h.b16 %v2870
    %v2942 = vunpack.c.l.b16 %v2871
    %v2943 = vunpack.c.h.b16 %v2871
    %v2944 = vunpack.c.l.b16 %v2872
    %v2945 = vunpack.c.h.b16 %v2872
    %v2946 = vunpack.c.l.b16 %v2873
    %v2947 = vunpack.c.h.b16 %v2873
    %v2948 = vunpack.c.l.b16 %v2874
    %v2949 = vunpack.c.h.b16 %v2874
    %v2950 = vunpack.c.l.b16 %v2875
    %v2951 = vunpack.c.h.b16 %v2875
    %v2952 = vunpack.c.l.b16 %v2876
    %v2953 = vunpack.c.h.b16 %v2876
    %v2954 = vunpack.c.l.b16 %v2877
    %v2955 = vunpack.c.h.b16 %v2877
    %v2956 = vunpack.c.l.b16 %v2878
    %v2957 = vunpack.c.h.b16 %v2878
    %v2958 = vunpack.c.l.b16 %v2879
    %v2959 = vunpack.c.h.b16 %v2879
    %v2960 = vunpack.c.l.b16 %v2880
    %v2961 = vunpack.c.h.b16 %v2880
    %v2962 = vunpack.c.l.b16 %v2881
    %v2963 = vunpack.c.h.b16 %v2881
    %v2964 = vunpack.c.l.b16 %v2882
    %v2965 = vunpack.c.h.b16 %v2882
    %v2966 = vunpack.c.l.b16 %v2883
    %v2967 = vunpack.c.h.b16 %v2883
    %v2968 = vunpack.c.l.b16 %v2884
    %v2969 = vunpack.c.h.b16 %v2884
    %v2970 = vunpack.c.l.b16 %v2885
    %v2971 = vunpack.c.h.b16 %v2885
    %v2972 = vunpack.c.l.b16 %v2886
    %v2973 = vunpack.c.h.b16 %v2886
    %v2974 = vunpack.c.l.b16 %v2887
    %v2975 = vunpack.c.h.b16 %v2887
    %v2976 = vunpack.c.l.b16 %v2888
    %v2977 = vunpack.c.h.b16 %v2888
    %v2978 = vunpack.c.l.b16 %v2889
    %v2979 = vunpack.c.h.b16 %v2889
    %v2980 = vunpack.c.l.b16 %v2890
    %v2981 = vunpack.c.h.b16 %v2890
    %v2982 = vunpack.c.l.b16 %v2891
    %v2983 = vunpack.c.h.b16 %v2891
    %v2984 = vunpack.c.l.b16 %v2892
    %v2985 = vunpack.c.h.b16 %v2892
    %v2986 = vunpack.c.l.b16 %v2893
    %v2987 = vunpack.c.h.b16 %v2893
    %v2988 = vunpack.c.l.b16 %v2894
    %v2989 = vunpack.c.h.b16 %v2894
    %v2990 = vunpack.c.l.b16 %v2895
    %v2991 = vunpack.c.h.b16 %v2895
    %v2992 = vpack.c.b16 %v2932, %v2928
    %v2993 = vpack.c.b16 %v2933, %v2929
    %v2994 = vpack.c.b16 %v2934, %v2930
    %v2995 = vpack.c.b16 %v2935, %v2931
    %v2996 = vpack.c.b16 %v2940, %v2936
    %v2997 = vpack.c.b16 %v2941, %v2937
    %v2998 = vpack.c.b16 %v2942, %v2938
    %v2999 = vpack.c.b16 %v2943, %v2939
    %v3000 = vpack.c.b16 %v2948, %v2944
    %v3001 = vpack.c.b16 %v2949, %v2945
    %v3002 = vpack.c.b16 %v2950, %v2946
    %v3003 = vpack.c.b16 %v2951, %v2947
    %v3004 = vpack.c.b16 %v2956, %v2952
    %v3005 = vpack.c.b16 %v2957, %v2953
    %v3006 = vpack.c.b16 %v2958, %v2954
    %v3007 = vpack.c.b16 %v2959, %v2955
    %v3008 = vpack.c.b16 %v2964, %v2960
    %v3009 = vpack.c.b16 %v2965, %v2961
    %v3010 = vpack.c.b16 %v2966, %v2962
    %v3011 = vpack.c.b16 %v2967, %v2963
    %v3012 = vpack.c.b16 %v2972, %v2968
    %v3013 = vpack.c.b16 %v2973, %v2969
    %v3014 = vpack.c.b16 %v2974, %v2970
    %v3015 = vpack.c.b16 %v2975, %v2971
    %v3016 = vpack.c.b16 %v2980, %v2976
    %v3017 = vpack.c.b16 %v2981, %v2977
    %v3018 = vpack.c.b16 %v2982, %v2978
    %v3019 = vpack.c.b16 %v2983, %v2979
    %v3020 = vpack.c.b16 %v2988, %v2984
    %v3021 = vpack.c.b16 %v2989, %v2985
    %v3022 = vpack.c.b16 %v2990, %v2986
    %v3023 = vpack.c.b16 %v2991, %v2987
    %3056 = vmatpush.bf16.msra.mxu0 %v3020
    %3057 = vmatpush.bf16.msra.mxu0 %v3016
    %3058 = vmatpush.bf16.msra.mxu0 %v3012
    %3059 = vmatpush.bf16.msra.mxu0 %v3008
    %3060 = vmatpush.bf16.msra.mxu0 %v3004
    %3061 = vmatpush.bf16.msra.mxu0 %v3000
    %3062 = vmatpush.bf16.msra.mxu0 %v2996
    %3063 = vmatpush.bf16.msra.mxu0 %v2992
    %3064 = vmatmul.bf16.gmra.mxu0 %v2863
    %v3065 = vpop.f32.mrf.mxu0
    %v3066 = vadd.f32 0.0, %v3065
    %v3067 = vpop.f32.mrf.mxu0
    %3068 = vdwg.mxu0
    %3069 = vmatpush.bf16.msra.mxu0 %v3021
    %3070 = vmatpush.bf16.msra.mxu0 %v3017
    %3071 = vmatpush.bf16.msra.mxu0 %v3013
    %3072 = vmatpush.bf16.msra.mxu0 %v3009
    %3073 = vmatpush.bf16.msra.mxu0 %v3005
    %3074 = vmatpush.bf16.msra.mxu0 %v3001
    %3075 = vmatpush.bf16.msra.mxu0 %v2997
    %3076 = vmatpush.bf16.msra.mxu0 %v2993
    %3077 = vmatmul.bf16.gmra.mxu0 %v2863
    %v3078 = vpop.f32.mrf.mxu0
    %v3079 = vadd.f32 0.0, %v3078
    %v3080 = vpop.f32.mrf.mxu0
    %3081 = vdwg.mxu0
    %3082 = vmatpush.bf16.msra.mxu0 %v3022
    %3083 = vmatpush.bf16.msra.mxu0 %v3018
    %3084 = vmatpush.bf16.msra.mxu0 %v3014
    %3085 = vmatpush.bf16.msra.mxu0 %v3010
    %3086 = vmatpush.bf16.msra.mxu0 %v3006
    %3087 = vmatpush.bf16.msra.mxu0 %v3002
    %3088 = vmatpush.bf16.msra.mxu0 %v2998
    %3089 = vmatpush.bf16.msra.mxu0 %v2994
    %3090 = vmatmul.bf16.gmra.mxu0 %v2863
    %v3091 = vpop.f32.mrf.mxu0
    %v3092 = vadd.f32 0.0, %v3091
    %v3093 = vpop.f32.mrf.mxu0
    %3094 = vdwg.mxu0
    %3095 = vmatpush.bf16.msra.mxu0 %v3023
    %3096 = vmatpush.bf16.msra.mxu0 %v3019
    %3097 = vmatpush.bf16.msra.mxu0 %v3015
    %3098 = vmatpush.bf16.msra.mxu0 %v3011
    %3099 = vmatpush.bf16.msra.mxu0 %v3007
    %3100 = vmatpush.bf16.msra.mxu0 %v3003
    %3101 = vmatpush.bf16.msra.mxu0 %v2999
    %3102 = vmatpush.bf16.msra.mxu0 %v2995
    %3103 = vmatmul.bf16.gmra.mxu0 %v2863
    %v3104 = vpop.f32.mrf.mxu0
    %v3105 = vadd.f32 0.0, %v3104
    %v3106 = vpop.f32.mrf.mxu0
    %3107 = vdwg.mxu0
    %v3108 = vadd.f32 %v2859, %v3066
    %v3109 = vadd.f32 %v2860, %v3079
    %v3110 = vadd.f32 %v2861, %v3092
    %v3111 = vadd.f32 %v2862, %v3105
    %v3112 = vmul.f32 %v3108, 0.5
    %v3113 = vtanh.pop %v3112
    %v3114 = vmul.f32 %v3113, 0.5
    %v3115 = vadd.f32 %v3114, 0.5
    %v3116 = vmul.f32 %v3109, 0.5
    %v3117 = vtanh.pop %v3116
    %v3118 = vmul.f32 %v3117, 0.5
    %v3119 = vadd.f32 %v3118, 0.5
    %v3120 = vtanh.pop %v3110
    %v3121 = vmul.f32 %v3111, 0.5
    %v3122 = vtanh.pop %v3121
    %v3123 = vmul.f32 %v3122, 0.5
    %v3124 = vadd.f32 %v3123, 0.5
    %v3125 = vmul.f32 %v3119, %v2333
    %v3126 = vmul.f32 %v3115, %v3120
    %v3127 = vadd.f32 %v3125, %v3126
    %v3128 = vtanh.pop %v3127
    %v3129 = vmul.f32 %v3124, %v3128
    %v3130 = vpack.c.bf16 %v3129, %v3129
    %3131 = vst [vmem:[#allocation4] sm:$0xf] %v3130
    %v3132 = vld [vmem:[#allocation4] sm:$0xff]
    %v3133 = vld [vmem:[#allocation11] sm:$0xff]
    %v3134 = vld [vmem:[#allocation11 + $0x8] sm:$0xff]
    %v3135 = vld [vmem:[#allocation11 + $0x10] sm:$0xff]
    %v3136 = vld [vmem:[#allocation11 + $0x18] sm:$0xff]
    %v3137 = vld [vmem:[#allocation11 + $0x20] sm:$0xff]
    %v3138 = vld [vmem:[#allocation11 + $0x28] sm:$0xff]
    %v3139 = vld [vmem:[#allocation11 + $0x30] sm:$0xff]
    %v3140 = vld [vmem:[#allocation11 + $0x38] sm:$0xff]
    %v3141 = vld [vmem:[#allocation11 + $0x40] sm:$0xff]
    %v3142 = vld [vmem:[#allocation11 + $0x48] sm:$0xff]
    %v3143 = vld [vmem:[#allocation11 + $0x50] sm:$0xff]
    %v3144 = vld [vmem:[#allocation11 + $0x58] sm:$0xff]
    %v3145 = vld [vmem:[#allocation11 + $0x60] sm:$0xff]
    %v3146 = vld [vmem:[#allocation11 + $0x68] sm:$0xff]
    %v3147 = vld [vmem:[#allocation11 + $0x70] sm:$0xff]
    %v3148 = vld [vmem:[#allocation11 + $0x78] sm:$0xff]
    %v3149 = vld [vmem:[#allocation11 + $0x80] sm:$0xff]
    %v3150 = vld [vmem:[#allocation11 + $0x88] sm:$0xff]
    %v3151 = vld [vmem:[#allocation11 + $0x90] sm:$0xff]
    %v3152 = vld [vmem:[#allocation11 + $0x98] sm:$0xff]
    %v3153 = vld [vmem:[#allocation11 + $0xa0] sm:$0xff]
    %v3154 = vld [vmem:[#allocation11 + $0xa8] sm:$0xff]
    %v3155 = vld [vmem:[#allocation11 + $0xb0] sm:$0xff]
    %v3156 = vld [vmem:[#allocation11 + $0xb8] sm:$0xff]
    %v3157 = vld [vmem:[#allocation11 + $0xc0] sm:$0xff]
    %v3158 = vld [vmem:[#allocation11 + $0xc8] sm:$0xff]
    %v3159 = vld [vmem:[#allocation11 + $0xd0] sm:$0xff]
    %v3160 = vld [vmem:[#allocation11 + $0xd8] sm:$0xff]
    %v3161 = vld [vmem:[#allocation11 + $0xe0] sm:$0xff]
    %v3162 = vld [vmem:[#allocation11 + $0xe8] sm:$0xff]
    %v3163 = vld [vmem:[#allocation11 + $0xf0] sm:$0xff]
    %v3164 = vld [vmem:[#allocation11 + $0xf8] sm:$0xff]
    %v3165 = vld [vmem:[#allocation11 + $0x100] sm:$0xff]
    %v3166 = vld [vmem:[#allocation11 + $0x108] sm:$0xff]
    %v3167 = vld [vmem:[#allocation11 + $0x110] sm:$0xff]
    %v3168 = vld [vmem:[#allocation11 + $0x118] sm:$0xff]
    %v3169 = vld [vmem:[#allocation11 + $0x120] sm:$0xff]
    %v3170 = vld [vmem:[#allocation11 + $0x128] sm:$0xff]
    %v3171 = vld [vmem:[#allocation11 + $0x130] sm:$0xff]
    %v3172 = vld [vmem:[#allocation11 + $0x138] sm:$0xff]
    %v3173 = vld [vmem:[#allocation11 + $0x140] sm:$0xff]
    %v3174 = vld [vmem:[#allocation11 + $0x148] sm:$0xff]
    %v3175 = vld [vmem:[#allocation11 + $0x150] sm:$0xff]
    %v3176 = vld [vmem:[#allocation11 + $0x158] sm:$0xff]
    %v3177 = vld [vmem:[#allocation11 + $0x160] sm:$0xff]
    %v3178 = vld [vmem:[#allocation11 + $0x168] sm:$0xff]
    %v3179 = vld [vmem:[#allocation11 + $0x170] sm:$0xff]
    %v3180 = vld [vmem:[#allocation11 + $0x178] sm:$0xff]
    %v3181 = vld [vmem:[#allocation11 + $0x180] sm:$0xff]
    %v3182 = vld [vmem:[#allocation11 + $0x188] sm:$0xff]
    %v3183 = vld [vmem:[#allocation11 + $0x190] sm:$0xff]
    %v3184 = vld [vmem:[#allocation11 + $0x198] sm:$0xff]
    %v3185 = vld [vmem:[#allocation11 + $0x1a0] sm:$0xff]
    %v3186 = vld [vmem:[#allocation11 + $0x1a8] sm:$0xff]
    %v3187 = vld [vmem:[#allocation11 + $0x1b0] sm:$0xff]
    %v3188 = vld [vmem:[#allocation11 + $0x1b8] sm:$0xff]
    %v3189 = vld [vmem:[#allocation11 + $0x1c0] sm:$0xff]
    %v3190 = vld [vmem:[#allocation11 + $0x1c8] sm:$0xff]
    %v3191 = vld [vmem:[#allocation11 + $0x1d0] sm:$0xff]
    %v3192 = vld [vmem:[#allocation11 + $0x1d8] sm:$0xff]
    %v3193 = vld [vmem:[#allocation11 + $0x1e0] sm:$0xff]
    %v3194 = vld [vmem:[#allocation11 + $0x1e8] sm:$0xff]
    %v3195 = vld [vmem:[#allocation11 + $0x1f0] sm:$0xff]
    %v3196 = vld [vmem:[#allocation11 + $0x1f8] sm:$0xff]
    %v3198 = vunpack.c.l.b16 %v3132
    %v3199 = vunpack.c.h.b16 %v3132
    %v3200 = vpack.c.b16 %v3198, %v3198
    %v3201 = vpack.c.b16 %v3199, %v3199
    %v3268 = vunpack.c.l.b16 %v3133
    %v3269 = vunpack.c.h.b16 %v3133
    %v3270 = vunpack.c.l.b16 %v3134
    %v3271 = vunpack.c.h.b16 %v3134
    %v3272 = vunpack.c.l.b16 %v3135
    %v3273 = vunpack.c.h.b16 %v3135
    %v3274 = vunpack.c.l.b16 %v3136
    %v3275 = vunpack.c.h.b16 %v3136
    %v3276 = vunpack.c.l.b16 %v3137
    %v3277 = vunpack.c.h.b16 %v3137
    %v3278 = vunpack.c.l.b16 %v3138
    %v3279 = vunpack.c.h.b16 %v3138
    %v3280 = vunpack.c.l.b16 %v3139
    %v3281 = vunpack.c.h.b16 %v3139
    %v3282 = vunpack.c.l.b16 %v3140
    %v3283 = vunpack.c.h.b16 %v3140
    %v3284 = vunpack.c.l.b16 %v3141
    %v3285 = vunpack.c.h.b16 %v3141
    %v3286 = vunpack.c.l.b16 %v3142
    %v3287 = vunpack.c.h.b16 %v3142
    %v3288 = vunpack.c.l.b16 %v3143
    %v3289 = vunpack.c.h.b16 %v3143
    %v3290 = vunpack.c.l.b16 %v3144
    %v3291 = vunpack.c.h.b16 %v3144
    %v3292 = vunpack.c.l.b16 %v3145
    %v3293 = vunpack.c.h.b16 %v3145
    %v3294 = vunpack.c.l.b16 %v3146
    %v3295 = vunpack.c.h.b16 %v3146
    %v3296 = vunpack.c.l.b16 %v3147
    %v3297 = vunpack.c.h.b16 %v3147
    %v3298 = vunpack.c.l.b16 %v3148
    %v3299 = vunpack.c.h.b16 %v3148
    %v3300 = vunpack.c.l.b16 %v3149
    %v3301 = vunpack.c.h.b16 %v3149
    %v3302 = vunpack.c.l.b16 %v3150
    %v3303 = vunpack.c.h.b16 %v3150
    %v3304 = vunpack.c.l.b16 %v3151
    %v3305 = vunpack.c.h.b16 %v3151
    %v3306 = vunpack.c.l.b16 %v3152
    %v3307 = vunpack.c.h.b16 %v3152
    %v3308 = vunpack.c.l.b16 %v3153
    %v3309 = vunpack.c.h.b16 %v3153
    %v3310 = vunpack.c.l.b16 %v3154
    %v3311 = vunpack.c.h.b16 %v3154
    %v3312 = vunpack.c.l.b16 %v3155
    %v3313 = vunpack.c.h.b16 %v3155
    %v3314 = vunpack.c.l.b16 %v3156
    %v3315 = vunpack.c.h.b16 %v3156
    %v3316 = vunpack.c.l.b16 %v3157
    %v3317 = vunpack.c.h.b16 %v3157
    %v3318 = vunpack.c.l.b16 %v3158
    %v3319 = vunpack.c.h.b16 %v3158
    %v3320 = vunpack.c.l.b16 %v3159
    %v3321 = vunpack.c.h.b16 %v3159
    %v3322 = vunpack.c.l.b16 %v3160
    %v3323 = vunpack.c.h.b16 %v3160
    %v3324 = vunpack.c.l.b16 %v3161
    %v3325 = vunpack.c.h.b16 %v3161
    %v3326 = vunpack.c.l.b16 %v3162
    %v3327 = vunpack.c.h.b16 %v3162
    %v3328 = vunpack.c.l.b16 %v3163
    %v3329 = vunpack.c.h.b16 %v3163
    %v3330 = vunpack.c.l.b16 %v3164
    %v3331 = vunpack.c.h.b16 %v3164
    %v3332 = vunpack.c.l.b16 %v3165
    %v3333 = vunpack.c.h.b16 %v3165
    %v3334 = vunpack.c.l.b16 %v3166
    %v3335 = vunpack.c.h.b16 %v3166
    %v3336 = vunpack.c.l.b16 %v3167
    %v3337 = vunpack.c.h.b16 %v3167
    %v3338 = vunpack.c.l.b16 %v3168
    %v3339 = vunpack.c.h.b16 %v3168
    %v3340 = vunpack.c.l.b16 %v3169
    %v3341 = vunpack.c.h.b16 %v3169
    %v3342 = vunpack.c.l.b16 %v3170
    %v3343 = vunpack.c.h.b16 %v3170
    %v3344 = vunpack.c.l.b16 %v3171
    %v3345 = vunpack.c.h.b16 %v3171
    %v3346 = vunpack.c.l.b16 %v3172
    %v3347 = vunpack.c.h.b16 %v3172
    %v3348 = vunpack.c.l.b16 %v3173
    %v3349 = vunpack.c.h.b16 %v3173
    %v3350 = vunpack.c.l.b16 %v3174
    %v3351 = vunpack.c.h.b16 %v3174
    %v3352 = vunpack.c.l.b16 %v3175
    %v3353 = vunpack.c.h.b16 %v3175
    %v3354 = vunpack.c.l.b16 %v3176
    %v3355 = vunpack.c.h.b16 %v3176
    %v3356 = vunpack.c.l.b16 %v3177
    %v3357 = vunpack.c.h.b16 %v3177
    %v3358 = vunpack.c.l.b16 %v3178
    %v3359 = vunpack.c.h.b16 %v3178
    %v3360 = vunpack.c.l.b16 %v3179
    %v3361 = vunpack.c.h.b16 %v3179
    %v3362 = vunpack.c.l.b16 %v3180
    %v3363 = vunpack.c.h.b16 %v3180
    %v3364 = vunpack.c.l.b16 %v3181
    %v3365 = vunpack.c.h.b16 %v3181
    %v3366 = vunpack.c.l.b16 %v3182
    %v3367 = vunpack.c.h.b16 %v3182
    %v3368 = vunpack.c.l.b16 %v3183
    %v3369 = vunpack.c.h.b16 %v3183
    %v3370 = vunpack.c.l.b16 %v3184
    %v3371 = vunpack.c.h.b16 %v3184
    %v3372 = vunpack.c.l.b16 %v3185
    %v3373 = vunpack.c.h.b16 %v3185
    %v3374 = vunpack.c.l.b16 %v3186
    %v3375 = vunpack.c.h.b16 %v3186
    %v3376 = vunpack.c.l.b16 %v3187
    %v3377 = vunpack.c.h.b16 %v3187
    %v3378 = vunpack.c.l.b16 %v3188
    %v3379 = vunpack.c.h.b16 %v3188
    %v3380 = vunpack.c.l.b16 %v3189
    %v3381 = vunpack.c.h.b16 %v3189
    %v3382 = vunpack.c.l.b16 %v3190
    %v3383 = vunpack.c.h.b16 %v3190
    %v3384 = vunpack.c.l.b16 %v3191
    %v3385 = vunpack.c.h.b16 %v3191
    %v3386 = vunpack.c.l.b16 %v3192
    %v3387 = vunpack.c.h.b16 %v3192
    %v3388 = vunpack.c.l.b16 %v3193
    %v3389 = vunpack.c.h.b16 %v3193
    %v3390 = vunpack.c.l.b16 %v3194
    %v3391 = vunpack.c.h.b16 %v3194
    %v3392 = vunpack.c.l.b16 %v3195
    %v3393 = vunpack.c.h.b16 %v3195
    %v3394 = vunpack.c.l.b16 %v3196
    %v3395 = vunpack.c.h.b16 %v3196
    %v3396 = vpack.c.b16 %v3272, %v3268
    %v3397 = vpack.c.b16 %v3273, %v3269
    %v3398 = vpack.c.b16 %v3274, %v3270
    %v3399 = vpack.c.b16 %v3275, %v3271
    %v3400 = vpack.c.b16 %v3280, %v3276
    %v3401 = vpack.c.b16 %v3281, %v3277
    %v3402 = vpack.c.b16 %v3282, %v3278
    %v3403 = vpack.c.b16 %v3283, %v3279
    %v3404 = vpack.c.b16 %v3288, %v3284
    %v3405 = vpack.c.b16 %v3289, %v3285
    %v3406 = vpack.c.b16 %v3290, %v3286
    %v3407 = vpack.c.b16 %v3291, %v3287
    %v3408 = vpack.c.b16 %v3296, %v3292
    %v3409 = vpack.c.b16 %v3297, %v3293
    %v3410 = vpack.c.b16 %v3298, %v3294
    %v3411 = vpack.c.b16 %v3299, %v3295
    %v3412 = vpack.c.b16 %v3304, %v3300
    %v3413 = vpack.c.b16 %v3305, %v3301
    %v3414 = vpack.c.b16 %v3306, %v3302
    %v3415 = vpack.c.b16 %v3307, %v3303
    %v3416 = vpack.c.b16 %v3312, %v3308
    %v3417 = vpack.c.b16 %v3313, %v3309
    %v3418 = vpack.c.b16 %v3314, %v3310
    %v3419 = vpack.c.b16 %v3315, %v3311
    %v3420 = vpack.c.b16 %v3320, %v3316
    %v3421 = vpack.c.b16 %v3321, %v3317
    %v3422 = vpack.c.b16 %v3322, %v3318
    %v3423 = vpack.c.b16 %v3323, %v3319
    %v3424 = vpack.c.b16 %v3328, %v3324
    %v3425 = vpack.c.b16 %v3329, %v3325
    %v3426 = vpack.c.b16 %v3330, %v3326
    %v3427 = vpack.c.b16 %v3331, %v3327
    %v3428 = vpack.c.b16 %v3336, %v3332
    %v3429 = vpack.c.b16 %v3337, %v3333
    %v3430 = vpack.c.b16 %v3338, %v3334
    %v3431 = vpack.c.b16 %v3339, %v3335
    %v3432 = vpack.c.b16 %v3344, %v3340
    %v3433 = vpack.c.b16 %v3345, %v3341
    %v3434 = vpack.c.b16 %v3346, %v3342
    %v3435 = vpack.c.b16 %v3347, %v3343
    %v3436 = vpack.c.b16 %v3352, %v3348
    %v3437 = vpack.c.b16 %v3353, %v3349
    %v3438 = vpack.c.b16 %v3354, %v3350
    %v3439 = vpack.c.b16 %v3355, %v3351
    %v3440 = vpack.c.b16 %v3360, %v3356
    %v3441 = vpack.c.b16 %v3361, %v3357
    %v3442 = vpack.c.b16 %v3362, %v3358
    %v3443 = vpack.c.b16 %v3363, %v3359
    %v3444 = vpack.c.b16 %v3368, %v3364
    %v3445 = vpack.c.b16 %v3369, %v3365
    %v3446 = vpack.c.b16 %v3370, %v3366
    %v3447 = vpack.c.b16 %v3371, %v3367
    %v3448 = vpack.c.b16 %v3376, %v3372
    %v3449 = vpack.c.b16 %v3377, %v3373
    %v3450 = vpack.c.b16 %v3378, %v3374
    %v3451 = vpack.c.b16 %v3379, %v3375
    %v3452 = vpack.c.b16 %v3384, %v3380
    %v3453 = vpack.c.b16 %v3385, %v3381
    %v3454 = vpack.c.b16 %v3386, %v3382
    %v3455 = vpack.c.b16 %v3387, %v3383
    %v3456 = vpack.c.b16 %v3392, %v3388
    %v3457 = vpack.c.b16 %v3393, %v3389
    %v3458 = vpack.c.b16 %v3394, %v3390
    %v3459 = vpack.c.b16 %v3395, %v3391
    %3524 = vmatpush.bf16.msra.mxu0 %v3424
    %3525 = vmatpush.bf16.msra.mxu0 %v3420
    %3526 = vmatpush.bf16.msra.mxu0 %v3416
    %3527 = vmatpush.bf16.msra.mxu0 %v3412
    %3528 = vmatpush.bf16.msra.mxu0 %v3408
    %3529 = vmatpush.bf16.msra.mxu0 %v3404
    %3530 = vmatpush.bf16.msra.mxu0 %v3400
    %3531 = vmatpush.bf16.msra.mxu0 %v3396
    %3532 = vmatmul.bf16.gmra.mxu0 %v3200
    %v3533 = vpop.f32.mrf.mxu0
    %v3534 = vadd.f32 %v467, %v3533
    %v3535 = vpop.f32.mrf.mxu0
    %3536 = vdwg.mxu0
    %3537 = vmatpush.bf16.msra.mxu0 %v3456
    %3538 = vmatpush.bf16.msra.mxu0 %v3452
    %3539 = vmatpush.bf16.msra.mxu0 %v3448
    %3540 = vmatpush.bf16.msra.mxu0 %v3444
    %3541 = vmatpush.bf16.msra.mxu0 %v3440
    %3542 = vmatpush.bf16.msra.mxu0 %v3436
    %3543 = vmatpush.bf16.msra.mxu0 %v3432
    %3544 = vmatpush.bf16.msra.mxu0 %v3428
    %3545 = vmatmul.bf16.gmra.mxu0 %v3201
    %v3546 = vpop.f32.mrf.mxu0
    %v3547 = vadd.f32 %v3534, %v3546
    %v3548 = vpop.f32.mrf.mxu0
    %3549 = vdwg.mxu0
    %3550 = vmatpush.bf16.msra.mxu0 %v3425
    %3551 = vmatpush.bf16.msra.mxu0 %v3421
    %3552 = vmatpush.bf16.msra.mxu0 %v3417
    %3553 = vmatpush.bf16.msra.mxu0 %v3413
    %3554 = vmatpush.bf16.msra.mxu0 %v3409
    %3555 = vmatpush.bf16.msra.mxu0 %v3405
    %3556 = vmatpush.bf16.msra.mxu0 %v3401
    %3557 = vmatpush.bf16.msra.mxu0 %v3397
    %3558 = vmatmul.bf16.gmra.mxu0 %v3200
    %v3559 = vpop.f32.mrf.mxu0
    %v3560 = vadd.f32 %v468, %v3559
    %v3561 = vpop.f32.mrf.mxu0
    %3562 = vdwg.mxu0
    %3563 = vmatpush.bf16.msra.mxu0 %v3457
    %3564 = vmatpush.bf16.msra.mxu0 %v3453
    %3565 = vmatpush.bf16.msra.mxu0 %v3449
    %3566 = vmatpush.bf16.msra.mxu0 %v3445
    %3567 = vmatpush.bf16.msra.mxu0 %v3441
    %3568 = vmatpush.bf16.msra.mxu0 %v3437
    %3569 = vmatpush.bf16.msra.mxu0 %v3433
    %3570 = vmatpush.bf16.msra.mxu0 %v3429
    %3571 = vmatmul.bf16.gmra.mxu0 %v3201
    %v3572 = vpop.f32.mrf.mxu0
    %v3573 = vadd.f32 %v3560, %v3572
    %v3574 = vpop.f32.mrf.mxu0
    %3575 = vdwg.mxu0
    %3576 = vmatpush.bf16.msra.mxu0 %v3426
    %3577 = vmatpush.bf16.msra.mxu0 %v3422
    %3578 = vmatpush.bf16.msra.mxu0 %v3418
    %3579 = vmatpush.bf16.msra.mxu0 %v3414
    %3580 = vmatpush.bf16.msra.mxu0 %v3410
    %3581 = vmatpush.bf16.msra.mxu0 %v3406
    %3582 = vmatpush.bf16.msra.mxu0 %v3402
    %3583 = vmatpush.bf16.msra.mxu0 %v3398
    %3584 = vmatmul.bf16.gmra.mxu0 %v3200
    %v3585 = vpop.f32.mrf.mxu0
    %v3586 = vadd.f32 %v469, %v3585
    %v3587 = vpop.f32.mrf.mxu0
    %3588 = vdwg.mxu0
    %3589 = vmatpush.bf16.msra.mxu0 %v3458
    %3590 = vmatpush.bf16.msra.mxu0 %v3454
    %3591 = vmatpush.bf16.msra.mxu0 %v3450
    %3592 = vmatpush.bf16.msra.mxu0 %v3446
    %3593 = vmatpush.bf16.msra.mxu0 %v3442
    %3594 = vmatpush.bf16.msra.mxu0 %v3438
    %3595 = vmatpush.bf16.msra.mxu0 %v3434
    %3596 = vmatpush.bf16.msra.mxu0 %v3430
    %3597 = vmatmul.bf16.gmra.mxu0 %v3201
    %v3598 = vpop.f32.mrf.mxu0
    %v3599 = vadd.f32 %v3586, %v3598
    %v3600 = vpop.f32.mrf.mxu0
    %3601 = vdwg.mxu0
    %3602 = vmatpush.bf16.msra.mxu0 %v3427
    %3603 = vmatpush.bf16.msra.mxu0 %v3423
    %3604 = vmatpush.bf16.msra.mxu0 %v3419
    %3605 = vmatpush.bf16.msra.mxu0 %v3415
    %3606 = vmatpush.bf16.msra.mxu0 %v3411
    %3607 = vmatpush.bf16.msra.mxu0 %v3407
    %3608 = vmatpush.bf16.msra.mxu0 %v3403
    %3609 = vmatpush.bf16.msra.mxu0 %v3399
    %3610 = vmatmul.bf16.gmra.mxu0 %v3200
    %v3611 = vpop.f32.mrf.mxu0
    %v3612 = vadd.f32 %v470, %v3611
    %v3613 = vpop.f32.mrf.mxu0
    %3614 = vdwg.mxu0
    %3615 = vmatpush.bf16.msra.mxu0 %v3459
    %3616 = vmatpush.bf16.msra.mxu0 %v3455
    %3617 = vmatpush.bf16.msra.mxu0 %v3451
    %3618 = vmatpush.bf16.msra.mxu0 %v3447
    %3619 = vmatpush.bf16.msra.mxu0 %v3443
    %3620 = vmatpush.bf16.msra.mxu0 %v3439
    %3621 = vmatpush.bf16.msra.mxu0 %v3435
    %3622 = vmatpush.bf16.msra.mxu0 %v3431
    %3623 = vmatmul.bf16.gmra.mxu0 %v3201
    %v3624 = vpop.f32.mrf.mxu0
    %v3625 = vadd.f32 %v3612, %v3624
    %v3626 = vpop.f32.mrf.mxu0
    %3627 = vdwg.mxu0
    %v3628 = vmul.f32 %v3547, 0.5
    %v3629 = vtanh.pop %v3628
    %v3630 = vmul.f32 %v3629, 0.5
    %v3631 = vadd.f32 %v3630, 0.5
    %v3632 = vmul.f32 %v3573, 0.5
    %v3633 = vtanh.pop %v3632
    %v3634 = vmul.f32 %v3633, 0.5
    %v3635 = vadd.f32 %v3634, 0.5
    %v3636 = vtanh.pop %v3599
    %v3637 = vmul.f32 %v3625, 0.5
    %v3638 = vtanh.pop %v3637
    %v3639 = vmul.f32 %v3638, 0.5
    %v3640 = vadd.f32 %v3639, 0.5
    %v3641 = vmul.f32 %v3635, %v2849
    %v3642 = vmul.f32 %v3631, %v3636
    %v3643 = vadd.f32 %v3641, %v3642
    %v3644 = vtanh.pop %v3643
    %v3645 = vmul.f32 %v3640, %v3644
    %v3646 = vpack.c.bf16 %v3645, %v3645
    %3647 = vst [vmem:[#allocation4 + $0x4] sm:$0xf] %v3646
    %s3648 = scalar_lea.vmem [#allocation3], 24
    %3649 = vst [vmem:[%s3648] sm:$0xff] %v3645
    %s3650 = smul.u32 4, 4
    %s3651 = smul.addr %s3650, 8
    %s3652 = scalar_lea.vmem [#allocation2], %s3651
    %v3653 = vld [vmem:[%s3652] sm:$0xff]
    %v3654 = vld [vmem:[%s3652 + $0x8] sm:$0xff]
    %v3655 = vld [vmem:[%s3652 + $0x10] sm:$0xff]
    %v3656 = vld [vmem:[%s3652 + $0x18] sm:$0xff]
    %v3657 = vld [vmem:[#allocation4] sm:$0xf]
    %v3658 = vld [vmem:[#allocation10] sm:$0xff]
    %v3659 = vld [vmem:[#allocation10 + $0x8] sm:$0xff]
    %v3660 = vld [vmem:[#allocation10 + $0x10] sm:$0xff]
    %v3661 = vld [vmem:[#allocation10 + $0x18] sm:$0xff]
    %v3662 = vld [vmem:[#allocation10 + $0x20] sm:$0xff]
    %v3663 = vld [vmem:[#allocation10 + $0x28] sm:$0xff]
    %v3664 = vld [vmem:[#allocation10 + $0x30] sm:$0xff]
    %v3665 = vld [vmem:[#allocation10 + $0x38] sm:$0xff]
    %v3666 = vld [vmem:[#allocation10 + $0x40] sm:$0xff]
    %v3667 = vld [vmem:[#allocation10 + $0x48] sm:$0xff]
    %v3668 = vld [vmem:[#allocation10 + $0x50] sm:$0xff]
    %v3669 = vld [vmem:[#allocation10 + $0x58] sm:$0xff]
    %v3670 = vld [vmem:[#allocation10 + $0x60] sm:$0xff]
    %v3671 = vld [vmem:[#allocation10 + $0x68] sm:$0xff]
    %v3672 = vld [vmem:[#allocation10 + $0x70] sm:$0xff]
    %v3673 = vld [vmem:[#allocation10 + $0x78] sm:$0xff]
    %v3674 = vld [vmem:[#allocation10 + $0x80] sm:$0xff]
    %v3675 = vld [vmem:[#allocation10 + $0x88] sm:$0xff]
    %v3676 = vld [vmem:[#allocation10 + $0x90] sm:$0xff]
    %v3677 = vld [vmem:[#allocation10 + $0x98] sm:$0xff]
    %v3678 = vld [vmem:[#allocation10 + $0xa0] sm:$0xff]
    %v3679 = vld [vmem:[#allocation10 + $0xa8] sm:$0xff]
    %v3680 = vld [vmem:[#allocation10 + $0xb0] sm:$0xff]
    %v3681 = vld [vmem:[#allocation10 + $0xb8] sm:$0xff]
    %v3682 = vld [vmem:[#allocation10 + $0xc0] sm:$0xff]
    %v3683 = vld [vmem:[#allocation10 + $0xc8] sm:$0xff]
    %v3684 = vld [vmem:[#allocation10 + $0xd0] sm:$0xff]
    %v3685 = vld [vmem:[#allocation10 + $0xd8] sm:$0xff]
    %v3686 = vld [vmem:[#allocation10 + $0xe0] sm:$0xff]
    %v3687 = vld [vmem:[#allocation10 + $0xe8] sm:$0xff]
    %v3688 = vld [vmem:[#allocation10 + $0xf0] sm:$0xff]
    %v3689 = vld [vmem:[#allocation10 + $0xf8] sm:$0xff]
    %v3722 = vunpack.c.l.b16 %v3658
    %v3723 = vunpack.c.h.b16 %v3658
    %v3724 = vunpack.c.l.b16 %v3659
    %v3725 = vunpack.c.h.b16 %v3659
    %v3726 = vunpack.c.l.b16 %v3660
    %v3727 = vunpack.c.h.b16 %v3660
    %v3728 = vunpack.c.l.b16 %v3661
    %v3729 = vunpack.c.h.b16 %v3661
    %v3730 = vunpack.c.l.b16 %v3662
    %v3731 = vunpack.c.h.b16 %v3662
    %v3732 = vunpack.c.l.b16 %v3663
    %v3733 = vunpack.c.h.b16 %v3663
    %v3734 = vunpack.c.l.b16 %v3664
    %v3735 = vunpack.c.h.b16 %v3664
    %v3736 = vunpack.c.l.b16 %v3665
    %v3737 = vunpack.c.h.b16 %v3665
    %v3738 = vunpack.c.l.b16 %v3666
    %v3739 = vunpack.c.h.b16 %v3666
    %v3740 = vunpack.c.l.b16 %v3667
    %v3741 = vunpack.c.h.b16 %v3667
    %v3742 = vunpack.c.l.b16 %v3668
    %v3743 = vunpack.c.h.b16 %v3668
    %v3744 = vunpack.c.l.b16 %v3669
    %v3745 = vunpack.c.h.b16 %v3669
    %v3746 = vunpack.c.l.b16 %v3670
    %v3747 = vunpack.c.h.b16 %v3670
    %v3748 = vunpack.c.l.b16 %v3671
    %v3749 = vunpack.c.h.b16 %v3671
    %v3750 = vunpack.c.l.b16 %v3672
    %v3751 = vunpack.c.h.b16 %v3672
    %v3752 = vunpack.c.l.b16 %v3673
    %v3753 = vunpack.c.h.b16 %v3673
    %v3754 = vunpack.c.l.b16 %v3674
    %v3755 = vunpack.c.h.b16 %v3674
    %v3756 = vunpack.c.l.b16 %v3675
    %v3757 = vunpack.c.h.b16 %v3675
    %v3758 = vunpack.c.l.b16 %v3676
    %v3759 = vunpack.c.h.b16 %v3676
    %v3760 = vunpack.c.l.b16 %v3677
    %v3761 = vunpack.c.h.b16 %v3677
    %v3762 = vunpack.c.l.b16 %v3678
    %v3763 = vunpack.c.h.b16 %v3678
    %v3764 = vunpack.c.l.b16 %v3679
    %v3765 = vunpack.c.h.b16 %v3679
    %v3766 = vunpack.c.l.b16 %v3680
    %v3767 = vunpack.c.h.b16 %v3680
    %v3768 = vunpack.c.l.b16 %v3681
    %v3769 = vunpack.c.h.b16 %v3681
    %v3770 = vunpack.c.l.b16 %v3682
    %v3771 = vunpack.c.h.b16 %v3682
    %v3772 = vunpack.c.l.b16 %v3683
    %v3773 = vunpack.c.h.b16 %v3683
    %v3774 = vunpack.c.l.b16 %v3684
    %v3775 = vunpack.c.h.b16 %v3684
    %v3776 = vunpack.c.l.b16 %v3685
    %v3777 = vunpack.c.h.b16 %v3685
    %v3778 = vunpack.c.l.b16 %v3686
    %v3779 = vunpack.c.h.b16 %v3686
    %v3780 = vunpack.c.l.b16 %v3687
    %v3781 = vunpack.c.h.b16 %v3687
    %v3782 = vunpack.c.l.b16 %v3688
    %v3783 = vunpack.c.h.b16 %v3688
    %v3784 = vunpack.c.l.b16 %v3689
    %v3785 = vunpack.c.h.b16 %v3689
    %v3786 = vpack.c.b16 %v3726, %v3722
    %v3787 = vpack.c.b16 %v3727, %v3723
    %v3788 = vpack.c.b16 %v3728, %v3724
    %v3789 = vpack.c.b16 %v3729, %v3725
    %v3790 = vpack.c.b16 %v3734, %v3730
    %v3791 = vpack.c.b16 %v3735, %v3731
    %v3792 = vpack.c.b16 %v3736, %v3732
    %v3793 = vpack.c.b16 %v3737, %v3733
    %v3794 = vpack.c.b16 %v3742, %v3738
    %v3795 = vpack.c.b16 %v3743, %v3739
    %v3796 = vpack.c.b16 %v3744, %v3740
    %v3797 = vpack.c.b16 %v3745, %v3741
    %v3798 = vpack.c.b16 %v3750, %v3746
    %v3799 = vpack.c.b16 %v3751, %v3747
    %v3800 = vpack.c.b16 %v3752, %v3748
    %v3801 = vpack.c.b16 %v3753, %v3749
    %v3802 = vpack.c.b16 %v3758, %v3754
    %v3803 = vpack.c.b16 %v3759, %v3755
    %v3804 = vpack.c.b16 %v3760, %v3756
    %v3805 = vpack.c.b16 %v3761, %v3757
    %v3806 = vpack.c.b16 %v3766, %v3762
    %v3807 = vpack.c.b16 %v3767, %v3763
    %v3808 = vpack.c.b16 %v3768, %v3764
    %v3809 = vpack.c.b16 %v3769, %v3765
    %v3810 = vpack.c.b16 %v3774, %v3770
    %v3811 = vpack.c.b16 %v3775, %v3771
    %v3812 = vpack.c.b16 %v3776, %v3772
    %v3813 = vpack.c.b16 %v3777, %v3773
    %v3814 = vpack.c.b16 %v3782, %v3778
    %v3815 = vpack.c.b16 %v3783, %v3779
    %v3816 = vpack.c.b16 %v3784, %v3780
    %v3817 = vpack.c.b16 %v3785, %v3781
    %3850 = vmatpush.bf16.msra.mxu0 %v3814
    %3851 = vmatpush.bf16.msra.mxu0 %v3810
    %3852 = vmatpush.bf16.msra.mxu0 %v3806
    %3853 = vmatpush.bf16.msra.mxu0 %v3802
    %3854 = vmatpush.bf16.msra.mxu0 %v3798
    %3855 = vmatpush.bf16.msra.mxu0 %v3794
    %3856 = vmatpush.bf16.msra.mxu0 %v3790
    %3857 = vmatpush.bf16.msra.mxu0 %v3786
    %3858 = vmatmul.bf16.gmra.mxu0 %v3657
    %v3859 = vpop.f32.mrf.mxu0
    %v3860 = vadd.f32 0.0, %v3859
    %v3861 = vpop.f32.mrf.mxu0
    %3862 = vdwg.mxu0
    %3863 = vmatpush.bf16.msra.mxu0 %v3815
    %3864 = vmatpush.bf16.msra.mxu0 %v3811
    %3865 = vmatpush.bf16.msra.mxu0 %v3807
    %3866 = vmatpush.bf16.msra.mxu0 %v3803
    %3867 = vmatpush.bf16.msra.mxu0 %v3799
    %3868 = vmatpush.bf16.msra.mxu0 %v3795
    %3869 = vmatpush.bf16.msra.mxu0 %v3791
    %3870 = vmatpush.bf16.msra.mxu0 %v3787
    %3871 = vmatmul.bf16.gmra.mxu0 %v3657
    %v3872 = vpop.f32.mrf.mxu0
    %v3873 = vadd.f32 0.0, %v3872
    %v3874 = vpop.f32.mrf.mxu0
    %3875 = vdwg.mxu0
    %3876 = vmatpush.bf16.msra.mxu0 %v3816
    %3877 = vmatpush.bf16.msra.mxu0 %v3812
    %3878 = vmatpush.bf16.msra.mxu0 %v3808
    %3879 = vmatpush.bf16.msra.mxu0 %v3804
    %3880 = vmatpush.bf16.msra.mxu0 %v3800
    %3881 = vmatpush.bf16.msra.mxu0 %v3796
    %3882 = vmatpush.bf16.msra.mxu0 %v3792
    %3883 = vmatpush.bf16.msra.mxu0 %v3788
    %3884 = vmatmul.bf16.gmra.mxu0 %v3657
    %v3885 = vpop.f32.mrf.mxu0
    %v3886 = vadd.f32 0.0, %v3885
    %v3887 = vpop.f32.mrf.mxu0
    %3888 = vdwg.mxu0
    %3889 = vmatpush.bf16.msra.mxu0 %v3817
    %3890 = vmatpush.bf16.msra.mxu0 %v3813
    %3891 = vmatpush.bf16.msra.mxu0 %v3809
    %3892 = vmatpush.bf16.msra.mxu0 %v3805
    %3893 = vmatpush.bf16.msra.mxu0 %v3801
    %3894 = vmatpush.bf16.msra.mxu0 %v3797
    %3895 = vmatpush.bf16.msra.mxu0 %v3793
    %3896 = vmatpush.bf16.msra.mxu0 %v3789
    %3897 = vmatmul.bf16.gmra.mxu0 %v3657
    %v3898 = vpop.f32.mrf.mxu0
    %v3899 = vadd.f32 0.0, %v3898
    %v3900 = vpop.f32.mrf.mxu0
    %3901 = vdwg.mxu0
    %v3902 = vadd.f32 %v3653, %v3860
    %v3903 = vadd.f32 %v3654, %v3873
    %v3904 = vadd.f32 %v3655, %v3886
    %v3905 = vadd.f32 %v3656, %v3899
    %v3906 = vmul.f32 %v3902, 0.5
    %v3907 = vtanh.pop %v3906
    %v3908 = vmul.f32 %v3907, 0.5
    %v3909 = vadd.f32 %v3908, 0.5
    %v3910 = vmul.f32 %v3903, 0.5
    %v3911 = vtanh.pop %v3910
    %v3912 = vmul.f32 %v3911, 0.5
    %v3913 = vadd.f32 %v3912, 0.5
    %v3914 = vtanh.pop %v3904
    %v3915 = vmul.f32 %v3905, 0.5
    %v3916 = vtanh.pop %v3915
    %v3917 = vmul.f32 %v3916, 0.5
    %v3918 = vadd.f32 %v3917, 0.5
    %v3919 = vmul.f32 %v3913, %v3127
    %v3920 = vmul.f32 %v3909, %v3914
    %v3921 = vadd.f32 %v3919, %v3920
    %v3922 = vtanh.pop %v3921
    %v3923 = vmul.f32 %v3918, %v3922
    %v3924 = vpack.c.bf16 %v3923, %v3923
    %3925 = vst [vmem:[#allocation4] sm:$0xf] %v3924
    %v3926 = vld [vmem:[#allocation4] sm:$0xff]
    %v3927 = vld [vmem:[#allocation11] sm:$0xff]
    %v3928 = vld [vmem:[#allocation11 + $0x8] sm:$0xff]
    %v3929 = vld [vmem:[#allocation11 + $0x10] sm:$0xff]
    %v3930 = vld [vmem:[#allocation11 + $0x18] sm:$0xff]
    %v3931 = vld [vmem:[#allocation11 + $0x20] sm:$0xff]
    %v3932 = vld [vmem:[#allocation11 + $0x28] sm:$0xff]
    %v3933 = vld [vmem:[#allocation11 + $0x30] sm:$0xff]
    %v3934 = vld [vmem:[#allocation11 + $0x38] sm:$0xff]
    %v3935 = vld [vmem:[#allocation11 + $0x40] sm:$0xff]
    %v3936 = vld [vmem:[#allocation11 + $0x48] sm:$0xff]
    %v3937 = vld [vmem:[#allocation11 + $0x50] sm:$0xff]
    %v3938 = vld [vmem:[#allocation11 + $0x58] sm:$0xff]
    %v3939 = vld [vmem:[#allocation11 + $0x60] sm:$0xff]
    %v3940 = vld [vmem:[#allocation11 + $0x68] sm:$0xff]
    %v3941 = vld [vmem:[#allocation11 + $0x70] sm:$0xff]
    %v3942 = vld [vmem:[#allocation11 + $0x78] sm:$0xff]
    %v3943 = vld [vmem:[#allocation11 + $0x80] sm:$0xff]
    %v3944 = vld [vmem:[#allocation11 + $0x88] sm:$0xff]
    %v3945 = vld [vmem:[#allocation11 + $0x90] sm:$0xff]
    %v3946 = vld [vmem:[#allocation11 + $0x98] sm:$0xff]
    %v3947 = vld [vmem:[#allocation11 + $0xa0] sm:$0xff]
    %v3948 = vld [vmem:[#allocation11 + $0xa8] sm:$0xff]
    %v3949 = vld [vmem:[#allocation11 + $0xb0] sm:$0xff]
    %v3950 = vld [vmem:[#allocation11 + $0xb8] sm:$0xff]
    %v3951 = vld [vmem:[#allocation11 + $0xc0] sm:$0xff]
    %v3952 = vld [vmem:[#allocation11 + $0xc8] sm:$0xff]
    %v3953 = vld [vmem:[#allocation11 + $0xd0] sm:$0xff]
    %v3954 = vld [vmem:[#allocation11 + $0xd8] sm:$0xff]
    %v3955 = vld [vmem:[#allocation11 + $0xe0] sm:$0xff]
    %v3956 = vld [vmem:[#allocation11 + $0xe8] sm:$0xff]
    %v3957 = vld [vmem:[#allocation11 + $0xf0] sm:$0xff]
    %v3958 = vld [vmem:[#allocation11 + $0xf8] sm:$0xff]
    %v3959 = vld [vmem:[#allocation11 + $0x100] sm:$0xff]
    %v3960 = vld [vmem:[#allocation11 + $0x108] sm:$0xff]
    %v3961 = vld [vmem:[#allocation11 + $0x110] sm:$0xff]
    %v3962 = vld [vmem:[#allocation11 + $0x118] sm:$0xff]
    %v3963 = vld [vmem:[#allocation11 + $0x120] sm:$0xff]
    %v3964 = vld [vmem:[#allocation11 + $0x128] sm:$0xff]
    %v3965 = vld [vmem:[#allocation11 + $0x130] sm:$0xff]
    %v3966 = vld [vmem:[#allocation11 + $0x138] sm:$0xff]
    %v3967 = vld [vmem:[#allocation11 + $0x140] sm:$0xff]
    %v3968 = vld [vmem:[#allocation11 + $0x148] sm:$0xff]
    %v3969 = vld [vmem:[#allocation11 + $0x150] sm:$0xff]
    %v3970 = vld [vmem:[#allocation11 + $0x158] sm:$0xff]
    %v3971 = vld [vmem:[#allocation11 + $0x160] sm:$0xff]
    %v3972 = vld [vmem:[#allocation11 + $0x168] sm:$0xff]
    %v3973 = vld [vmem:[#allocation11 + $0x170] sm:$0xff]
    %v3974 = vld [vmem:[#allocation11 + $0x178] sm:$0xff]
    %v3975 = vld [vmem:[#allocation11 + $0x180] sm:$0xff]
    %v3976 = vld [vmem:[#allocation11 + $0x188] sm:$0xff]
    %v3977 = vld [vmem:[#allocation11 + $0x190] sm:$0xff]
    %v3978 = vld [vmem:[#allocation11 + $0x198] sm:$0xff]
    %v3979 = vld [vmem:[#allocation11 + $0x1a0] sm:$0xff]
    %v3980 = vld [vmem:[#allocation11 + $0x1a8] sm:$0xff]
    %v3981 = vld [vmem:[#allocation11 + $0x1b0] sm:$0xff]
    %v3982 = vld [vmem:[#allocation11 + $0x1b8] sm:$0xff]
    %v3983 = vld [vmem:[#allocation11 + $0x1c0] sm:$0xff]
    %v3984 = vld [vmem:[#allocation11 + $0x1c8] sm:$0xff]
    %v3985 = vld [vmem:[#allocation11 + $0x1d0] sm:$0xff]
    %v3986 = vld [vmem:[#allocation11 + $0x1d8] sm:$0xff]
    %v3987 = vld [vmem:[#allocation11 + $0x1e0] sm:$0xff]
    %v3988 = vld [vmem:[#allocation11 + $0x1e8] sm:$0xff]
    %v3989 = vld [vmem:[#allocation11 + $0x1f0] sm:$0xff]
    %v3990 = vld [vmem:[#allocation11 + $0x1f8] sm:$0xff]
    %v3992 = vunpack.c.l.b16 %v3926
    %v3993 = vunpack.c.h.b16 %v3926
    %v3994 = vpack.c.b16 %v3992, %v3992
    %v3995 = vpack.c.b16 %v3993, %v3993
    %v4062 = vunpack.c.l.b16 %v3927
    %v4063 = vunpack.c.h.b16 %v3927
    %v4064 = vunpack.c.l.b16 %v3928
    %v4065 = vunpack.c.h.b16 %v3928
    %v4066 = vunpack.c.l.b16 %v3929
    %v4067 = vunpack.c.h.b16 %v3929
    %v4068 = vunpack.c.l.b16 %v3930
    %v4069 = vunpack.c.h.b16 %v3930
    %v4070 = vunpack.c.l.b16 %v3931
    %v4071 = vunpack.c.h.b16 %v3931
    %v4072 = vunpack.c.l.b16 %v3932
    %v4073 = vunpack.c.h.b16 %v3932
    %v4074 = vunpack.c.l.b16 %v3933
    %v4075 = vunpack.c.h.b16 %v3933
    %v4076 = vunpack.c.l.b16 %v3934
    %v4077 = vunpack.c.h.b16 %v3934
    %v4078 = vunpack.c.l.b16 %v3935
    %v4079 = vunpack.c.h.b16 %v3935
    %v4080 = vunpack.c.l.b16 %v3936
    %v4081 = vunpack.c.h.b16 %v3936
    %v4082 = vunpack.c.l.b16 %v3937
    %v4083 = vunpack.c.h.b16 %v3937
    %v4084 = vunpack.c.l.b16 %v3938
    %v4085 = vunpack.c.h.b16 %v3938
    %v4086 = vunpack.c.l.b16 %v3939
    %v4087 = vunpack.c.h.b16 %v3939
    %v4088 = vunpack.c.l.b16 %v3940
    %v4089 = vunpack.c.h.b16 %v3940
    %v4090 = vunpack.c.l.b16 %v3941
    %v4091 = vunpack.c.h.b16 %v3941
    %v4092 = vunpack.c.l.b16 %v3942
    %v4093 = vunpack.c.h.b16 %v3942
    %v4094 = vunpack.c.l.b16 %v3943
    %v4095 = vunpack.c.h.b16 %v3943
    %v4096 = vunpack.c.l.b16 %v3944
    %v4097 = vunpack.c.h.b16 %v3944
    %v4098 = vunpack.c.l.b16 %v3945
    %v4099 = vunpack.c.h.b16 %v3945
    %v4100 = vunpack.c.l.b16 %v3946
    %v4101 = vunpack.c.h.b16 %v3946
    %v4102 = vunpack.c.l.b16 %v3947
    %v4103 = vunpack.c.h.b16 %v3947
    %v4104 = vunpack.c.l.b16 %v3948
    %v4105 = vunpack.c.h.b16 %v3948
    %v4106 = vunpack.c.l.b16 %v3949
    %v4107 = vunpack.c.h.b16 %v3949
    %v4108 = vunpack.c.l.b16 %v3950
    %v4109 = vunpack.c.h.b16 %v3950
    %v4110 = vunpack.c.l.b16 %v3951
    %v4111 = vunpack.c.h.b16 %v3951
    %v4112 = vunpack.c.l.b16 %v3952
    %v4113 = vunpack.c.h.b16 %v3952
    %v4114 = vunpack.c.l.b16 %v3953
    %v4115 = vunpack.c.h.b16 %v3953
    %v4116 = vunpack.c.l.b16 %v3954
    %v4117 = vunpack.c.h.b16 %v3954
    %v4118 = vunpack.c.l.b16 %v3955
    %v4119 = vunpack.c.h.b16 %v3955
    %v4120 = vunpack.c.l.b16 %v3956
    %v4121 = vunpack.c.h.b16 %v3956
    %v4122 = vunpack.c.l.b16 %v3957
    %v4123 = vunpack.c.h.b16 %v3957
    %v4124 = vunpack.c.l.b16 %v3958
    %v4125 = vunpack.c.h.b16 %v3958
    %v4126 = vunpack.c.l.b16 %v3959
    %v4127 = vunpack.c.h.b16 %v3959
    %v4128 = vunpack.c.l.b16 %v3960
    %v4129 = vunpack.c.h.b16 %v3960
    %v4130 = vunpack.c.l.b16 %v3961
    %v4131 = vunpack.c.h.b16 %v3961
    %v4132 = vunpack.c.l.b16 %v3962
    %v4133 = vunpack.c.h.b16 %v3962
    %v4134 = vunpack.c.l.b16 %v3963
    %v4135 = vunpack.c.h.b16 %v3963
    %v4136 = vunpack.c.l.b16 %v3964
    %v4137 = vunpack.c.h.b16 %v3964
    %v4138 = vunpack.c.l.b16 %v3965
    %v4139 = vunpack.c.h.b16 %v3965
    %v4140 = vunpack.c.l.b16 %v3966
    %v4141 = vunpack.c.h.b16 %v3966
    %v4142 = vunpack.c.l.b16 %v3967
    %v4143 = vunpack.c.h.b16 %v3967
    %v4144 = vunpack.c.l.b16 %v3968
    %v4145 = vunpack.c.h.b16 %v3968
    %v4146 = vunpack.c.l.b16 %v3969
    %v4147 = vunpack.c.h.b16 %v3969
    %v4148 = vunpack.c.l.b16 %v3970
    %v4149 = vunpack.c.h.b16 %v3970
    %v4150 = vunpack.c.l.b16 %v3971
    %v4151 = vunpack.c.h.b16 %v3971
    %v4152 = vunpack.c.l.b16 %v3972
    %v4153 = vunpack.c.h.b16 %v3972
    %v4154 = vunpack.c.l.b16 %v3973
    %v4155 = vunpack.c.h.b16 %v3973
    %v4156 = vunpack.c.l.b16 %v3974
    %v4157 = vunpack.c.h.b16 %v3974
    %v4158 = vunpack.c.l.b16 %v3975
    %v4159 = vunpack.c.h.b16 %v3975
    %v4160 = vunpack.c.l.b16 %v3976
    %v4161 = vunpack.c.h.b16 %v3976
    %v4162 = vunpack.c.l.b16 %v3977
    %v4163 = vunpack.c.h.b16 %v3977
    %v4164 = vunpack.c.l.b16 %v3978
    %v4165 = vunpack.c.h.b16 %v3978
    %v4166 = vunpack.c.l.b16 %v3979
    %v4167 = vunpack.c.h.b16 %v3979
    %v4168 = vunpack.c.l.b16 %v3980
    %v4169 = vunpack.c.h.b16 %v3980
    %v4170 = vunpack.c.l.b16 %v3981
    %v4171 = vunpack.c.h.b16 %v3981
    %v4172 = vunpack.c.l.b16 %v3982
    %v4173 = vunpack.c.h.b16 %v3982
    %v4174 = vunpack.c.l.b16 %v3983
    %v4175 = vunpack.c.h.b16 %v3983
    %v4176 = vunpack.c.l.b16 %v3984
    %v4177 = vunpack.c.h.b16 %v3984
    %v4178 = vunpack.c.l.b16 %v3985
    %v4179 = vunpack.c.h.b16 %v3985
    %v4180 = vunpack.c.l.b16 %v3986
    %v4181 = vunpack.c.h.b16 %v3986
    %v4182 = vunpack.c.l.b16 %v3987
    %v4183 = vunpack.c.h.b16 %v3987
    %v4184 = vunpack.c.l.b16 %v3988
    %v4185 = vunpack.c.h.b16 %v3988
    %v4186 = vunpack.c.l.b16 %v3989
    %v4187 = vunpack.c.h.b16 %v3989
    %v4188 = vunpack.c.l.b16 %v3990
    %v4189 = vunpack.c.h.b16 %v3990
    %v4190 = vpack.c.b16 %v4066, %v4062
    %v4191 = vpack.c.b16 %v4067, %v4063
    %v4192 = vpack.c.b16 %v4068, %v4064
    %v4193 = vpack.c.b16 %v4069, %v4065
    %v4194 = vpack.c.b16 %v4074, %v4070
    %v4195 = vpack.c.b16 %v4075, %v4071
    %v4196 = vpack.c.b16 %v4076, %v4072
    %v4197 = vpack.c.b16 %v4077, %v4073
    %v4198 = vpack.c.b16 %v4082, %v4078
    %v4199 = vpack.c.b16 %v4083, %v4079
    %v4200 = vpack.c.b16 %v4084, %v4080
    %v4201 = vpack.c.b16 %v4085, %v4081
    %v4202 = vpack.c.b16 %v4090, %v4086
    %v4203 = vpack.c.b16 %v4091, %v4087
    %v4204 = vpack.c.b16 %v4092, %v4088
    %v4205 = vpack.c.b16 %v4093, %v4089
    %v4206 = vpack.c.b16 %v4098, %v4094
    %v4207 = vpack.c.b16 %v4099, %v4095
    %v4208 = vpack.c.b16 %v4100, %v4096
    %v4209 = vpack.c.b16 %v4101, %v4097
    %v4210 = vpack.c.b16 %v4106, %v4102
    %v4211 = vpack.c.b16 %v4107, %v4103
    %v4212 = vpack.c.b16 %v4108, %v4104
    %v4213 = vpack.c.b16 %v4109, %v4105
    %v4214 = vpack.c.b16 %v4114, %v4110
    %v4215 = vpack.c.b16 %v4115, %v4111
    %v4216 = vpack.c.b16 %v4116, %v4112
    %v4217 = vpack.c.b16 %v4117, %v4113
    %v4218 = vpack.c.b16 %v4122, %v4118
    %v4219 = vpack.c.b16 %v4123, %v4119
    %v4220 = vpack.c.b16 %v4124, %v4120
    %v4221 = vpack.c.b16 %v4125, %v4121
    %v4222 = vpack.c.b16 %v4130, %v4126
    %v4223 = vpack.c.b16 %v4131, %v4127
    %v4224 = vpack.c.b16 %v4132, %v4128
    %v4225 = vpack.c.b16 %v4133, %v4129
    %v4226 = vpack.c.b16 %v4138, %v4134
    %v4227 = vpack.c.b16 %v4139, %v4135
    %v4228 = vpack.c.b16 %v4140, %v4136
    %v4229 = vpack.c.b16 %v4141, %v4137
    %v4230 = vpack.c.b16 %v4146, %v4142
    %v4231 = vpack.c.b16 %v4147, %v4143
    %v4232 = vpack.c.b16 %v4148, %v4144
    %v4233 = vpack.c.b16 %v4149, %v4145
    %v4234 = vpack.c.b16 %v4154, %v4150
    %v4235 = vpack.c.b16 %v4155, %v4151
    %v4236 = vpack.c.b16 %v4156, %v4152
    %v4237 = vpack.c.b16 %v4157, %v4153
    %v4238 = vpack.c.b16 %v4162, %v4158
    %v4239 = vpack.c.b16 %v4163, %v4159
    %v4240 = vpack.c.b16 %v4164, %v4160
    %v4241 = vpack.c.b16 %v4165, %v4161
    %v4242 = vpack.c.b16 %v4170, %v4166
    %v4243 = vpack.c.b16 %v4171, %v4167
    %v4244 = vpack.c.b16 %v4172, %v4168
    %v4245 = vpack.c.b16 %v4173, %v4169
    %v4246 = vpack.c.b16 %v4178, %v4174
    %v4247 = vpack.c.b16 %v4179, %v4175
    %v4248 = vpack.c.b16 %v4180, %v4176
    %v4249 = vpack.c.b16 %v4181, %v4177
    %v4250 = vpack.c.b16 %v4186, %v4182
    %v4251 = vpack.c.b16 %v4187, %v4183
    %v4252 = vpack.c.b16 %v4188, %v4184
    %v4253 = vpack.c.b16 %v4189, %v4185
    %4318 = vmatpush.bf16.msra.mxu0 %v4218
    %4319 = vmatpush.bf16.msra.mxu0 %v4214
    %4320 = vmatpush.bf16.msra.mxu0 %v4210
    %4321 = vmatpush.bf16.msra.mxu0 %v4206
    %4322 = vmatpush.bf16.msra.mxu0 %v4202
    %4323 = vmatpush.bf16.msra.mxu0 %v4198
    %4324 = vmatpush.bf16.msra.mxu0 %v4194
    %4325 = vmatpush.bf16.msra.mxu0 %v4190
    %4326 = vmatmul.bf16.gmra.mxu0 %v3994
    %v4327 = vpop.f32.mrf.mxu0
    %v4328 = vadd.f32 %v467, %v4327
    %v4329 = vpop.f32.mrf.mxu0
    %4330 = vdwg.mxu0
    %4331 = vmatpush.bf16.msra.mxu0 %v4250
    %4332 = vmatpush.bf16.msra.mxu0 %v4246
    %4333 = vmatpush.bf16.msra.mxu0 %v4242
    %4334 = vmatpush.bf16.msra.mxu0 %v4238
    %4335 = vmatpush.bf16.msra.mxu0 %v4234
    %4336 = vmatpush.bf16.msra.mxu0 %v4230
    %4337 = vmatpush.bf16.msra.mxu0 %v4226
    %4338 = vmatpush.bf16.msra.mxu0 %v4222
    %4339 = vmatmul.bf16.gmra.mxu0 %v3995
    %v4340 = vpop.f32.mrf.mxu0
    %v4341 = vadd.f32 %v4328, %v4340
    %v4342 = vpop.f32.mrf.mxu0
    %4343 = vdwg.mxu0
    %4344 = vmatpush.bf16.msra.mxu0 %v4219
    %4345 = vmatpush.bf16.msra.mxu0 %v4215
    %4346 = vmatpush.bf16.msra.mxu0 %v4211
    %4347 = vmatpush.bf16.msra.mxu0 %v4207
    %4348 = vmatpush.bf16.msra.mxu0 %v4203
    %4349 = vmatpush.bf16.msra.mxu0 %v4199
    %4350 = vmatpush.bf16.msra.mxu0 %v4195
    %4351 = vmatpush.bf16.msra.mxu0 %v4191
    %4352 = vmatmul.bf16.gmra.mxu0 %v3994
    %v4353 = vpop.f32.mrf.mxu0
    %v4354 = vadd.f32 %v468, %v4353
    %v4355 = vpop.f32.mrf.mxu0
    %4356 = vdwg.mxu0
    %4357 = vmatpush.bf16.msra.mxu0 %v4251
    %4358 = vmatpush.bf16.msra.mxu0 %v4247
    %4359 = vmatpush.bf16.msra.mxu0 %v4243
    %4360 = vmatpush.bf16.msra.mxu0 %v4239
    %4361 = vmatpush.bf16.msra.mxu0 %v4235
    %4362 = vmatpush.bf16.msra.mxu0 %v4231
    %4363 = vmatpush.bf16.msra.mxu0 %v4227
    %4364 = vmatpush.bf16.msra.mxu0 %v4223
    %4365 = vmatmul.bf16.gmra.mxu0 %v3995
    %v4366 = vpop.f32.mrf.mxu0
    %v4367 = vadd.f32 %v4354, %v4366
    %v4368 = vpop.f32.mrf.mxu0
    %4369 = vdwg.mxu0
    %4370 = vmatpush.bf16.msra.mxu0 %v4220
    %4371 = vmatpush.bf16.msra.mxu0 %v4216
    %4372 = vmatpush.bf16.msra.mxu0 %v4212
    %4373 = vmatpush.bf16.msra.mxu0 %v4208
    %4374 = vmatpush.bf16.msra.mxu0 %v4204
    %4375 = vmatpush.bf16.msra.mxu0 %v4200
    %4376 = vmatpush.bf16.msra.mxu0 %v4196
    %4377 = vmatpush.bf16.msra.mxu0 %v4192
    %4378 = vmatmul.bf16.gmra.mxu0 %v3994
    %v4379 = vpop.f32.mrf.mxu0
    %v4380 = vadd.f32 %v469, %v4379
    %v4381 = vpop.f32.mrf.mxu0
    %4382 = vdwg.mxu0
    %4383 = vmatpush.bf16.msra.mxu0 %v4252
    %4384 = vmatpush.bf16.msra.mxu0 %v4248
    %4385 = vmatpush.bf16.msra.mxu0 %v4244
    %4386 = vmatpush.bf16.msra.mxu0 %v4240
    %4387 = vmatpush.bf16.msra.mxu0 %v4236
    %4388 = vmatpush.bf16.msra.mxu0 %v4232
    %4389 = vmatpush.bf16.msra.mxu0 %v4228
    %4390 = vmatpush.bf16.msra.mxu0 %v4224
    %4391 = vmatmul.bf16.gmra.mxu0 %v3995
    %v4392 = vpop.f32.mrf.mxu0
    %v4393 = vadd.f32 %v4380, %v4392
    %v4394 = vpop.f32.mrf.mxu0
    %4395 = vdwg.mxu0
    %4396 = vmatpush.bf16.msra.mxu0 %v4221
    %4397 = vmatpush.bf16.msra.mxu0 %v4217
    %4398 = vmatpush.bf16.msra.mxu0 %v4213
    %4399 = vmatpush.bf16.msra.mxu0 %v4209
    %4400 = vmatpush.bf16.msra.mxu0 %v4205
    %4401 = vmatpush.bf16.msra.mxu0 %v4201
    %4402 = vmatpush.bf16.msra.mxu0 %v4197
    %4403 = vmatpush.bf16.msra.mxu0 %v4193
    %4404 = vmatmul.bf16.gmra.mxu0 %v3994
    %v4405 = vpop.f32.mrf.mxu0
    %v4406 = vadd.f32 %v470, %v4405
    %v4407 = vpop.f32.mrf.mxu0
    %4408 = vdwg.mxu0
    %4409 = vmatpush.bf16.msra.mxu0 %v4253
    %4410 = vmatpush.bf16.msra.mxu0 %v4249
    %4411 = vmatpush.bf16.msra.mxu0 %v4245
    %4412 = vmatpush.bf16.msra.mxu0 %v4241
    %4413 = vmatpush.bf16.msra.mxu0 %v4237
    %4414 = vmatpush.bf16.msra.mxu0 %v4233
    %4415 = vmatpush.bf16.msra.mxu0 %v4229
    %4416 = vmatpush.bf16.msra.mxu0 %v4225
    %4417 = vmatmul.bf16.gmra.mxu0 %v3995
    %v4418 = vpop.f32.mrf.mxu0
    %v4419 = vadd.f32 %v4406, %v4418
    %v4420 = vpop.f32.mrf.mxu0
    %4421 = vdwg.mxu0
    %v4422 = vmul.f32 %v4341, 0.5
    %v4423 = vtanh.pop %v4422
    %v4424 = vmul.f32 %v4423, 0.5
    %v4425 = vadd.f32 %v4424, 0.5
    %v4426 = vmul.f32 %v4367, 0.5
    %v4427 = vtanh.pop %v4426
    %v4428 = vmul.f32 %v4427, 0.5
    %v4429 = vadd.f32 %v4428, 0.5
    %v4430 = vtanh.pop %v4393
    %v4431 = vmul.f32 %v4419, 0.5
    %v4432 = vtanh.pop %v4431
    %v4433 = vmul.f32 %v4432, 0.5
    %v4434 = vadd.f32 %v4433, 0.5
    %v4435 = vmul.f32 %v4429, %v3643
    %v4436 = vmul.f32 %v4425, %v4430
    %v4437 = vadd.f32 %v4435, %v4436
    %v4438 = vtanh.pop %v4437
    %v4439 = vmul.f32 %v4434, %v4438
    %v4440 = vpack.c.bf16 %v4439, %v4439
    %4441 = vst [vmem:[#allocation4 + $0x4] sm:$0xf] %v4440
    %s4442 = scalar_lea.vmem [#allocation3], 32
    %4443 = vst [vmem:[%s4442] sm:$0xff] %v4439
    %s4444 = smul.u32 5, 4
    %s4445 = smul.addr %s4444, 8
    %s4446 = scalar_lea.vmem [#allocation2], %s4445
    %v4447 = vld [vmem:[%s4446] sm:$0xff]
    %v4448 = vld [vmem:[%s4446 + $0x8] sm:$0xff]
    %v4449 = vld [vmem:[%s4446 + $0x10] sm:$0xff]
    %v4450 = vld [vmem:[%s4446 + $0x18] sm:$0xff]
    %v4451 = vld [vmem:[#allocation4] sm:$0xf]
    %v4452 = vld [vmem:[#allocation10] sm:$0xff]
    %v4453 = vld [vmem:[#allocation10 + $0x8] sm:$0xff]
    %v4454 = vld [vmem:[#allocation10 + $0x10] sm:$0xff]
    %v4455 = vld [vmem:[#allocation10 + $0x18] sm:$0xff]
    %v4456 = vld [vmem:[#allocation10 + $0x20] sm:$0xff]
    %v4457 = vld [vmem:[#allocation10 + $0x28] sm:$0xff]
    %v4458 = vld [vmem:[#allocation10 + $0x30] sm:$0xff]
    %v4459 = vld [vmem:[#allocation10 + $0x38] sm:$0xff]
    %v4460 = vld [vmem:[#allocation10 + $0x40] sm:$0xff]
    %v4461 = vld [vmem:[#allocation10 + $0x48] sm:$0xff]
    %v4462 = vld [vmem:[#allocation10 + $0x50] sm:$0xff]
    %v4463 = vld [vmem:[#allocation10 + $0x58] sm:$0xff]
    %v4464 = vld [vmem:[#allocation10 + $0x60] sm:$0xff]
    %v4465 = vld [vmem:[#allocation10 + $0x68] sm:$0xff]
    %v4466 = vld [vmem:[#allocation10 + $0x70] sm:$0xff]
    %v4467 = vld [vmem:[#allocation10 + $0x78] sm:$0xff]
    %v4468 = vld [vmem:[#allocation10 + $0x80] sm:$0xff]
    %v4469 = vld [vmem:[#allocation10 + $0x88] sm:$0xff]
    %v4470 = vld [vmem:[#allocation10 + $0x90] sm:$0xff]
    %v4471 = vld [vmem:[#allocation10 + $0x98] sm:$0xff]
    %v4472 = vld [vmem:[#allocation10 + $0xa0] sm:$0xff]
    %v4473 = vld [vmem:[#allocation10 + $0xa8] sm:$0xff]
    %v4474 = vld [vmem:[#allocation10 + $0xb0] sm:$0xff]
    %v4475 = vld [vmem:[#allocation10 + $0xb8] sm:$0xff]
    %v4476 = vld [vmem:[#allocation10 + $0xc0] sm:$0xff]
    %v4477 = vld [vmem:[#allocation10 + $0xc8] sm:$0xff]
    %v4478 = vld [vmem:[#allocation10 + $0xd0] sm:$0xff]
    %v4479 = vld [vmem:[#allocation10 + $0xd8] sm:$0xff]
    %v4480 = vld [vmem:[#allocation10 + $0xe0] sm:$0xff]
    %v4481 = vld [vmem:[#allocation10 + $0xe8] sm:$0xff]
    %v4482 = vld [vmem:[#allocation10 + $0xf0] sm:$0xff]
    %v4483 = vld [vmem:[#allocation10 + $0xf8] sm:$0xff]
    %v4516 = vunpack.c.l.b16 %v4452
    %v4517 = vunpack.c.h.b16 %v4452
    %v4518 = vunpack.c.l.b16 %v4453
    %v4519 = vunpack.c.h.b16 %v4453
    %v4520 = vunpack.c.l.b16 %v4454
    %v4521 = vunpack.c.h.b16 %v4454
    %v4522 = vunpack.c.l.b16 %v4455
    %v4523 = vunpack.c.h.b16 %v4455
    %v4524 = vunpack.c.l.b16 %v4456
    %v4525 = vunpack.c.h.b16 %v4456
    %v4526 = vunpack.c.l.b16 %v4457
    %v4527 = vunpack.c.h.b16 %v4457
    %v4528 = vunpack.c.l.b16 %v4458
    %v4529 = vunpack.c.h.b16 %v4458
    %v4530 = vunpack.c.l.b16 %v4459
    %v4531 = vunpack.c.h.b16 %v4459
    %v4532 = vunpack.c.l.b16 %v4460
    %v4533 = vunpack.c.h.b16 %v4460
    %v4534 = vunpack.c.l.b16 %v4461
    %v4535 = vunpack.c.h.b16 %v4461
    %v4536 = vunpack.c.l.b16 %v4462
    %v4537 = vunpack.c.h.b16 %v4462
    %v4538 = vunpack.c.l.b16 %v4463
    %v4539 = vunpack.c.h.b16 %v4463
    %v4540 = vunpack.c.l.b16 %v4464
    %v4541 = vunpack.c.h.b16 %v4464
    %v4542 = vunpack.c.l.b16 %v4465
    %v4543 = vunpack.c.h.b16 %v4465
    %v4544 = vunpack.c.l.b16 %v4466
    %v4545 = vunpack.c.h.b16 %v4466
    %v4546 = vunpack.c.l.b16 %v4467
    %v4547 = vunpack.c.h.b16 %v4467
    %v4548 = vunpack.c.l.b16 %v4468
    %v4549 = vunpack.c.h.b16 %v4468
    %v4550 = vunpack.c.l.b16 %v4469
    %v4551 = vunpack.c.h.b16 %v4469
    %v4552 = vunpack.c.l.b16 %v4470
    %v4553 = vunpack.c.h.b16 %v4470
    %v4554 = vunpack.c.l.b16 %v4471
    %v4555 = vunpack.c.h.b16 %v4471
    %v4556 = vunpack.c.l.b16 %v4472
    %v4557 = vunpack.c.h.b16 %v4472
    %v4558 = vunpack.c.l.b16 %v4473
    %v4559 = vunpack.c.h.b16 %v4473
    %v4560 = vunpack.c.l.b16 %v4474
    %v4561 = vunpack.c.h.b16 %v4474
    %v4562 = vunpack.c.l.b16 %v4475
    %v4563 = vunpack.c.h.b16 %v4475
    %v4564 = vunpack.c.l.b16 %v4476
    %v4565 = vunpack.c.h.b16 %v4476
    %v4566 = vunpack.c.l.b16 %v4477
    %v4567 = vunpack.c.h.b16 %v4477
    %v4568 = vunpack.c.l.b16 %v4478
    %v4569 = vunpack.c.h.b16 %v4478
    %v4570 = vunpack.c.l.b16 %v4479
    %v4571 = vunpack.c.h.b16 %v4479
    %v4572 = vunpack.c.l.b16 %v4480
    %v4573 = vunpack.c.h.b16 %v4480
    %v4574 = vunpack.c.l.b16 %v4481
    %v4575 = vunpack.c.h.b16 %v4481
    %v4576 = vunpack.c.l.b16 %v4482
    %v4577 = vunpack.c.h.b16 %v4482
    %v4578 = vunpack.c.l.b16 %v4483
    %v4579 = vunpack.c.h.b16 %v4483
    %v4580 = vpack.c.b16 %v4520, %v4516
    %v4581 = vpack.c.b16 %v4521, %v4517
    %v4582 = vpack.c.b16 %v4522, %v4518
    %v4583 = vpack.c.b16 %v4523, %v4519
    %v4584 = vpack.c.b16 %v4528, %v4524
    %v4585 = vpack.c.b16 %v4529, %v4525
    %v4586 = vpack.c.b16 %v4530, %v4526
    %v4587 = vpack.c.b16 %v4531, %v4527
    %v4588 = vpack.c.b16 %v4536, %v4532
    %v4589 = vpack.c.b16 %v4537, %v4533
    %v4590 = vpack.c.b16 %v4538, %v4534
    %v4591 = vpack.c.b16 %v4539, %v4535
    %v4592 = vpack.c.b16 %v4544, %v4540
    %v4593 = vpack.c.b16 %v4545, %v4541
    %v4594 = vpack.c.b16 %v4546, %v4542
    %v4595 = vpack.c.b16 %v4547, %v4543
    %v4596 = vpack.c.b16 %v4552, %v4548
    %v4597 = vpack.c.b16 %v4553, %v4549
    %v4598 = vpack.c.b16 %v4554, %v4550
    %v4599 = vpack.c.b16 %v4555, %v4551
    %v4600 = vpack.c.b16 %v4560, %v4556
    %v4601 = vpack.c.b16 %v4561, %v4557
    %v4602 = vpack.c.b16 %v4562, %v4558
    %v4603 = vpack.c.b16 %v4563, %v4559
    %v4604 = vpack.c.b16 %v4568, %v4564
    %v4605 = vpack.c.b16 %v4569, %v4565
    %v4606 = vpack.c.b16 %v4570, %v4566
    %v4607 = vpack.c.b16 %v4571, %v4567
    %v4608 = vpack.c.b16 %v4576, %v4572
    %v4609 = vpack.c.b16 %v4577, %v4573
    %v4610 = vpack.c.b16 %v4578, %v4574
    %v4611 = vpack.c.b16 %v4579, %v4575
    %4644 = vmatpush.bf16.msra.mxu0 %v4608
    %4645 = vmatpush.bf16.msra.mxu0 %v4604
    %4646 = vmatpush.bf16.msra.mxu0 %v4600
    %4647 = vmatpush.bf16.msra.mxu0 %v4596
    %4648 = vmatpush.bf16.msra.mxu0 %v4592
    %4649 = vmatpush.bf16.msra.mxu0 %v4588
    %4650 = vmatpush.bf16.msra.mxu0 %v4584
    %4651 = vmatpush.bf16.msra.mxu0 %v4580
    %4652 = vmatmul.bf16.gmra.mxu0 %v4451
    %v4653 = vpop.f32.mrf.mxu0
    %v4654 = vadd.f32 0.0, %v4653
    %v4655 = vpop.f32.mrf.mxu0
    %4656 = vdwg.mxu0
    %4657 = vmatpush.bf16.msra.mxu0 %v4609
    %4658 = vmatpush.bf16.msra.mxu0 %v4605
    %4659 = vmatpush.bf16.msra.mxu0 %v4601
    %4660 = vmatpush.bf16.msra.mxu0 %v4597
    %4661 = vmatpush.bf16.msra.mxu0 %v4593
    %4662 = vmatpush.bf16.msra.mxu0 %v4589
    %4663 = vmatpush.bf16.msra.mxu0 %v4585
    %4664 = vmatpush.bf16.msra.mxu0 %v4581
    %4665 = vmatmul.bf16.gmra.mxu0 %v4451
    %v4666 = vpop.f32.mrf.mxu0
    %v4667 = vadd.f32 0.0, %v4666
    %v4668 = vpop.f32.mrf.mxu0
    %4669 = vdwg.mxu0
    %4670 = vmatpush.bf16.msra.mxu0 %v4610
    %4671 = vmatpush.bf16.msra.mxu0 %v4606
    %4672 = vmatpush.bf16.msra.mxu0 %v4602
    %4673 = vmatpush.bf16.msra.mxu0 %v4598
    %4674 = vmatpush.bf16.msra.mxu0 %v4594
    %4675 = vmatpush.bf16.msra.mxu0 %v4590
    %4676 = vmatpush.bf16.msra.mxu0 %v4586
    %4677 = vmatpush.bf16.msra.mxu0 %v4582
    %4678 = vmatmul.bf16.gmra.mxu0 %v4451
    %v4679 = vpop.f32.mrf.mxu0
    %v4680 = vadd.f32 0.0, %v4679
    %v4681 = vpop.f32.mrf.mxu0
    %4682 = vdwg.mxu0
    %4683 = vmatpush.bf16.msra.mxu0 %v4611
    %4684 = vmatpush.bf16.msra.mxu0 %v4607
    %4685 = vmatpush.bf16.msra.mxu0 %v4603
    %4686 = vmatpush.bf16.msra.mxu0 %v4599
    %4687 = vmatpush.bf16.msra.mxu0 %v4595
    %4688 = vmatpush.bf16.msra.mxu0 %v4591
    %4689 = vmatpush.bf16.msra.mxu0 %v4587
    %4690 = vmatpush.bf16.msra.mxu0 %v4583
    %4691 = vmatmul.bf16.gmra.mxu0 %v4451
    %v4692 = vpop.f32.mrf.mxu0
    %v4693 = vadd.f32 0.0, %v4692
    %v4694 = vpop.f32.mrf.mxu0
    %4695 = vdwg.mxu0
    %v4696 = vadd.f32 %v4447, %v4654
    %v4697 = vadd.f32 %v4448, %v4667
    %v4698 = vadd.f32 %v4449, %v4680
    %v4699 = vadd.f32 %v4450, %v4693
    %v4700 = vmul.f32 %v4696, 0.5
    %v4701 = vtanh.pop %v4700
    %v4702 = vmul.f32 %v4701, 0.5
    %v4703 = vadd.f32 %v4702, 0.5
    %v4704 = vmul.f32 %v4697, 0.5
    %v4705 = vtanh.pop %v4704
    %v4706 = vmul.f32 %v4705, 0.5
    %v4707 = vadd.f32 %v4706, 0.5
    %v4708 = vtanh.pop %v4698
    %v4709 = vmul.f32 %v4699, 0.5
    %v4710 = vtanh.pop %v4709
    %v4711 = vmul.f32 %v4710, 0.5
    %v4712 = vadd.f32 %v4711, 0.5
    %v4713 = vmul.f32 %v4707, %v3921
    %v4714 = vmul.f32 %v4703, %v4708
    %v4715 = vadd.f32 %v4713, %v4714
    %v4716 = vtanh.pop %v4715
    %v4717 = vmul.f32 %v4712, %v4716
    %v4718 = vpack.c.bf16 %v4717, %v4717
    %4719 = vst [vmem:[#allocation4] sm:$0xf] %v4718
    %v4720 = vld [vmem:[#allocation4] sm:$0xff]
    %v4721 = vld [vmem:[#allocation11] sm:$0xff]
    %v4722 = vld [vmem:[#allocation11 + $0x8] sm:$0xff]
    %v4723 = vld [vmem:[#allocation11 + $0x10] sm:$0xff]
    %v4724 = vld [vmem:[#allocation11 + $0x18] sm:$0xff]
    %v4725 = vld [vmem:[#allocation11 + $0x20] sm:$0xff]
    %v4726 = vld [vmem:[#allocation11 + $0x28] sm:$0xff]
    %v4727 = vld [vmem:[#allocation11 + $0x30] sm:$0xff]
    %v4728 = vld [vmem:[#allocation11 + $0x38] sm:$0xff]
    %v4729 = vld [vmem:[#allocation11 + $0x40] sm:$0xff]
    %v4730 = vld [vmem:[#allocation11 + $0x48] sm:$0xff]
    %v4731 = vld [vmem:[#allocation11 + $0x50] sm:$0xff]
    %v4732 = vld [vmem:[#allocation11 + $0x58] sm:$0xff]
    %v4733 = vld [vmem:[#allocation11 + $0x60] sm:$0xff]
    %v4734 = vld [vmem:[#allocation11 + $0x68] sm:$0xff]
    %v4735 = vld [vmem:[#allocation11 + $0x70] sm:$0xff]
    %v4736 = vld [vmem:[#allocation11 + $0x78] sm:$0xff]
    %v4737 = vld [vmem:[#allocation11 + $0x80] sm:$0xff]
    %v4738 = vld [vmem:[#allocation11 + $0x88] sm:$0xff]
    %v4739 = vld [vmem:[#allocation11 + $0x90] sm:$0xff]
    %v4740 = vld [vmem:[#allocation11 + $0x98] sm:$0xff]
    %v4741 = vld [vmem:[#allocation11 + $0xa0] sm:$0xff]
    %v4742 = vld [vmem:[#allocation11 + $0xa8] sm:$0xff]
    %v4743 = vld [vmem:[#allocation11 + $0xb0] sm:$0xff]
    %v4744 = vld [vmem:[#allocation11 + $0xb8] sm:$0xff]
    %v4745 = vld [vmem:[#allocation11 + $0xc0] sm:$0xff]
    %v4746 = vld [vmem:[#allocation11 + $0xc8] sm:$0xff]
    %v4747 = vld [vmem:[#allocation11 + $0xd0] sm:$0xff]
    %v4748 = vld [vmem:[#allocation11 + $0xd8] sm:$0xff]
    %v4749 = vld [vmem:[#allocation11 + $0xe0] sm:$0xff]
    %v4750 = vld [vmem:[#allocation11 + $0xe8] sm:$0xff]
    %v4751 = vld [vmem:[#allocation11 + $0xf0] sm:$0xff]
    %v4752 = vld [vmem:[#allocation11 + $0xf8] sm:$0xff]
    %v4753 = vld [vmem:[#allocation11 + $0x100] sm:$0xff]
    %v4754 = vld [vmem:[#allocation11 + $0x108] sm:$0xff]
    %v4755 = vld [vmem:[#allocation11 + $0x110] sm:$0xff]
    %v4756 = vld [vmem:[#allocation11 + $0x118] sm:$0xff]
    %v4757 = vld [vmem:[#allocation11 + $0x120] sm:$0xff]
    %v4758 = vld [vmem:[#allocation11 + $0x128] sm:$0xff]
    %v4759 = vld [vmem:[#allocation11 + $0x130] sm:$0xff]
    %v4760 = vld [vmem:[#allocation11 + $0x138] sm:$0xff]
    %v4761 = vld [vmem:[#allocation11 + $0x140] sm:$0xff]
    %v4762 = vld [vmem:[#allocation11 + $0x148] sm:$0xff]
    %v4763 = vld [vmem:[#allocation11 + $0x150] sm:$0xff]
    %v4764 = vld [vmem:[#allocation11 + $0x158] sm:$0xff]
    %v4765 = vld [vmem:[#allocation11 + $0x160] sm:$0xff]
    %v4766 = vld [vmem:[#allocation11 + $0x168] sm:$0xff]
    %v4767 = vld [vmem:[#allocation11 + $0x170] sm:$0xff]
    %v4768 = vld [vmem:[#allocation11 + $0x178] sm:$0xff]
    %v4769 = vld [vmem:[#allocation11 + $0x180] sm:$0xff]
    %v4770 = vld [vmem:[#allocation11 + $0x188] sm:$0xff]
    %v4771 = vld [vmem:[#allocation11 + $0x190] sm:$0xff]
    %v4772 = vld [vmem:[#allocation11 + $0x198] sm:$0xff]
    %v4773 = vld [vmem:[#allocation11 + $0x1a0] sm:$0xff]
    %v4774 = vld [vmem:[#allocation11 + $0x1a8] sm:$0xff]
    %v4775 = vld [vmem:[#allocation11 + $0x1b0] sm:$0xff]
    %v4776 = vld [vmem:[#allocation11 + $0x1b8] sm:$0xff]
    %v4777 = vld [vmem:[#allocation11 + $0x1c0] sm:$0xff]
    %v4778 = vld [vmem:[#allocation11 + $0x1c8] sm:$0xff]
    %v4779 = vld [vmem:[#allocation11 + $0x1d0] sm:$0xff]
    %v4780 = vld [vmem:[#allocation11 + $0x1d8] sm:$0xff]
    %v4781 = vld [vmem:[#allocation11 + $0x1e0] sm:$0xff]
    %v4782 = vld [vmem:[#allocation11 + $0x1e8] sm:$0xff]
    %v4783 = vld [vmem:[#allocation11 + $0x1f0] sm:$0xff]
    %v4784 = vld [vmem:[#allocation11 + $0x1f8] sm:$0xff]
    %v4786 = vunpack.c.l.b16 %v4720
    %v4787 = vunpack.c.h.b16 %v4720
    %v4788 = vpack.c.b16 %v4786, %v4786
    %v4789 = vpack.c.b16 %v4787, %v4787
    %v4856 = vunpack.c.l.b16 %v4721
    %v4857 = vunpack.c.h.b16 %v4721
    %v4858 = vunpack.c.l.b16 %v4722
    %v4859 = vunpack.c.h.b16 %v4722
    %v4860 = vunpack.c.l.b16 %v4723
    %v4861 = vunpack.c.h.b16 %v4723
    %v4862 = vunpack.c.l.b16 %v4724
    %v4863 = vunpack.c.h.b16 %v4724
    %v4864 = vunpack.c.l.b16 %v4725
    %v4865 = vunpack.c.h.b16 %v4725
    %v4866 = vunpack.c.l.b16 %v4726
    %v4867 = vunpack.c.h.b16 %v4726
    %v4868 = vunpack.c.l.b16 %v4727
    %v4869 = vunpack.c.h.b16 %v4727
    %v4870 = vunpack.c.l.b16 %v4728
    %v4871 = vunpack.c.h.b16 %v4728
    %v4872 = vunpack.c.l.b16 %v4729
    %v4873 = vunpack.c.h.b16 %v4729
    %v4874 = vunpack.c.l.b16 %v4730
    %v4875 = vunpack.c.h.b16 %v4730
    %v4876 = vunpack.c.l.b16 %v4731
    %v4877 = vunpack.c.h.b16 %v4731
    %v4878 = vunpack.c.l.b16 %v4732
    %v4879 = vunpack.c.h.b16 %v4732
    %v4880 = vunpack.c.l.b16 %v4733
    %v4881 = vunpack.c.h.b16 %v4733
    %v4882 = vunpack.c.l.b16 %v4734
    %v4883 = vunpack.c.h.b16 %v4734
    %v4884 = vunpack.c.l.b16 %v4735
    %v4885 = vunpack.c.h.b16 %v4735
    %v4886 = vunpack.c.l.b16 %v4736
    %v4887 = vunpack.c.h.b16 %v4736
    %v4888 = vunpack.c.l.b16 %v4737
    %v4889 = vunpack.c.h.b16 %v4737
    %v4890 = vunpack.c.l.b16 %v4738
    %v4891 = vunpack.c.h.b16 %v4738
    %v4892 = vunpack.c.l.b16 %v4739
    %v4893 = vunpack.c.h.b16 %v4739
    %v4894 = vunpack.c.l.b16 %v4740
    %v4895 = vunpack.c.h.b16 %v4740
    %v4896 = vunpack.c.l.b16 %v4741
    %v4897 = vunpack.c.h.b16 %v4741
    %v4898 = vunpack.c.l.b16 %v4742
    %v4899 = vunpack.c.h.b16 %v4742
    %v4900 = vunpack.c.l.b16 %v4743
    %v4901 = vunpack.c.h.b16 %v4743
    %v4902 = vunpack.c.l.b16 %v4744
    %v4903 = vunpack.c.h.b16 %v4744
    %v4904 = vunpack.c.l.b16 %v4745
    %v4905 = vunpack.c.h.b16 %v4745
    %v4906 = vunpack.c.l.b16 %v4746
    %v4907 = vunpack.c.h.b16 %v4746
    %v4908 = vunpack.c.l.b16 %v4747
    %v4909 = vunpack.c.h.b16 %v4747
    %v4910 = vunpack.c.l.b16 %v4748
    %v4911 = vunpack.c.h.b16 %v4748
    %v4912 = vunpack.c.l.b16 %v4749
    %v4913 = vunpack.c.h.b16 %v4749
    %v4914 = vunpack.c.l.b16 %v4750
    %v4915 = vunpack.c.h.b16 %v4750
    %v4916 = vunpack.c.l.b16 %v4751
    %v4917 = vunpack.c.h.b16 %v4751
    %v4918 = vunpack.c.l.b16 %v4752
    %v4919 = vunpack.c.h.b16 %v4752
    %v4920 = vunpack.c.l.b16 %v4753
    %v4921 = vunpack.c.h.b16 %v4753
    %v4922 = vunpack.c.l.b16 %v4754
    %v4923 = vunpack.c.h.b16 %v4754
    %v4924 = vunpack.c.l.b16 %v4755
    %v4925 = vunpack.c.h.b16 %v4755
    %v4926 = vunpack.c.l.b16 %v4756
    %v4927 = vunpack.c.h.b16 %v4756
    %v4928 = vunpack.c.l.b16 %v4757
    %v4929 = vunpack.c.h.b16 %v4757
    %v4930 = vunpack.c.l.b16 %v4758
    %v4931 = vunpack.c.h.b16 %v4758
    %v4932 = vunpack.c.l.b16 %v4759
    %v4933 = vunpack.c.h.b16 %v4759
    %v4934 = vunpack.c.l.b16 %v4760
    %v4935 = vunpack.c.h.b16 %v4760
    %v4936 = vunpack.c.l.b16 %v4761
    %v4937 = vunpack.c.h.b16 %v4761
    %v4938 = vunpack.c.l.b16 %v4762
    %v4939 = vunpack.c.h.b16 %v4762
    %v4940 = vunpack.c.l.b16 %v4763
    %v4941 = vunpack.c.h.b16 %v4763
    %v4942 = vunpack.c.l.b16 %v4764
    %v4943 = vunpack.c.h.b16 %v4764
    %v4944 = vunpack.c.l.b16 %v4765
    %v4945 = vunpack.c.h.b16 %v4765
    %v4946 = vunpack.c.l.b16 %v4766
    %v4947 = vunpack.c.h.b16 %v4766
    %v4948 = vunpack.c.l.b16 %v4767
    %v4949 = vunpack.c.h.b16 %v4767
    %v4950 = vunpack.c.l.b16 %v4768
    %v4951 = vunpack.c.h.b16 %v4768
    %v4952 = vunpack.c.l.b16 %v4769
    %v4953 = vunpack.c.h.b16 %v4769
    %v4954 = vunpack.c.l.b16 %v4770
    %v4955 = vunpack.c.h.b16 %v4770
    %v4956 = vunpack.c.l.b16 %v4771
    %v4957 = vunpack.c.h.b16 %v4771
    %v4958 = vunpack.c.l.b16 %v4772
    %v4959 = vunpack.c.h.b16 %v4772
    %v4960 = vunpack.c.l.b16 %v4773
    %v4961 = vunpack.c.h.b16 %v4773
    %v4962 = vunpack.c.l.b16 %v4774
    %v4963 = vunpack.c.h.b16 %v4774
    %v4964 = vunpack.c.l.b16 %v4775
    %v4965 = vunpack.c.h.b16 %v4775
    %v4966 = vunpack.c.l.b16 %v4776
    %v4967 = vunpack.c.h.b16 %v4776
    %v4968 = vunpack.c.l.b16 %v4777
    %v4969 = vunpack.c.h.b16 %v4777
    %v4970 = vunpack.c.l.b16 %v4778
    %v4971 = vunpack.c.h.b16 %v4778
    %v4972 = vunpack.c.l.b16 %v4779
    %v4973 = vunpack.c.h.b16 %v4779
    %v4974 = vunpack.c.l.b16 %v4780
    %v4975 = vunpack.c.h.b16 %v4780
    %v4976 = vunpack.c.l.b16 %v4781
    %v4977 = vunpack.c.h.b16 %v4781
    %v4978 = vunpack.c.l.b16 %v4782
    %v4979 = vunpack.c.h.b16 %v4782
    %v4980 = vunpack.c.l.b16 %v4783
    %v4981 = vunpack.c.h.b16 %v4783
    %v4982 = vunpack.c.l.b16 %v4784
    %v4983 = vunpack.c.h.b16 %v4784
    %v4984 = vpack.c.b16 %v4860, %v4856
    %v4985 = vpack.c.b16 %v4861, %v4857
    %v4986 = vpack.c.b16 %v4862, %v4858
    %v4987 = vpack.c.b16 %v4863, %v4859
    %v4988 = vpack.c.b16 %v4868, %v4864
    %v4989 = vpack.c.b16 %v4869, %v4865
    %v4990 = vpack.c.b16 %v4870, %v4866
    %v4991 = vpack.c.b16 %v4871, %v4867
    %v4992 = vpack.c.b16 %v4876, %v4872
    %v4993 = vpack.c.b16 %v4877, %v4873
    %v4994 = vpack.c.b16 %v4878, %v4874
    %v4995 = vpack.c.b16 %v4879, %v4875
    %v4996 = vpack.c.b16 %v4884, %v4880
    %v4997 = vpack.c.b16 %v4885, %v4881
    %v4998 = vpack.c.b16 %v4886, %v4882
    %v4999 = vpack.c.b16 %v4887, %v4883
    %v5000 = vpack.c.b16 %v4892, %v4888
    %v5001 = vpack.c.b16 %v4893, %v4889
    %v5002 = vpack.c.b16 %v4894, %v4890
    %v5003 = vpack.c.b16 %v4895, %v4891
    %v5004 = vpack.c.b16 %v4900, %v4896
    %v5005 = vpack.c.b16 %v4901, %v4897
    %v5006 = vpack.c.b16 %v4902, %v4898
    %v5007 = vpack.c.b16 %v4903, %v4899
    %v5008 = vpack.c.b16 %v4908, %v4904
    %v5009 = vpack.c.b16 %v4909, %v4905
    %v5010 = vpack.c.b16 %v4910, %v4906
    %v5011 = vpack.c.b16 %v4911, %v4907
    %v5012 = vpack.c.b16 %v4916, %v4912
    %v5013 = vpack.c.b16 %v4917, %v4913
    %v5014 = vpack.c.b16 %v4918, %v4914
    %v5015 = vpack.c.b16 %v4919, %v4915
    %v5016 = vpack.c.b16 %v4924, %v4920
    %v5017 = vpack.c.b16 %v4925, %v4921
    %v5018 = vpack.c.b16 %v4926, %v4922
    %v5019 = vpack.c.b16 %v4927, %v4923
    %v5020 = vpack.c.b16 %v4932, %v4928
    %v5021 = vpack.c.b16 %v4933, %v4929
    %v5022 = vpack.c.b16 %v4934, %v4930
    %v5023 = vpack.c.b16 %v4935, %v4931
    %v5024 = vpack.c.b16 %v4940, %v4936
    %v5025 = vpack.c.b16 %v4941, %v4937
    %v5026 = vpack.c.b16 %v4942, %v4938
    %v5027 = vpack.c.b16 %v4943, %v4939
    %v5028 = vpack.c.b16 %v4948, %v4944
    %v5029 = vpack.c.b16 %v4949, %v4945
    %v5030 = vpack.c.b16 %v4950, %v4946
    %v5031 = vpack.c.b16 %v4951, %v4947
    %v5032 = vpack.c.b16 %v4956, %v4952
    %v5033 = vpack.c.b16 %v4957, %v4953
    %v5034 = vpack.c.b16 %v4958, %v4954
    %v5035 = vpack.c.b16 %v4959, %v4955
    %v5036 = vpack.c.b16 %v4964, %v4960
    %v5037 = vpack.c.b16 %v4965, %v4961
    %v5038 = vpack.c.b16 %v4966, %v4962
    %v5039 = vpack.c.b16 %v4967, %v4963
    %v5040 = vpack.c.b16 %v4972, %v4968
    %v5041 = vpack.c.b16 %v4973, %v4969
    %v5042 = vpack.c.b16 %v4974, %v4970
    %v5043 = vpack.c.b16 %v4975, %v4971
    %v5044 = vpack.c.b16 %v4980, %v4976
    %v5045 = vpack.c.b16 %v4981, %v4977
    %v5046 = vpack.c.b16 %v4982, %v4978
    %v5047 = vpack.c.b16 %v4983, %v4979
    %5112 = vmatpush.bf16.msra.mxu0 %v5012
    %5113 = vmatpush.bf16.msra.mxu0 %v5008
    %5114 = vmatpush.bf16.msra.mxu0 %v5004
    %5115 = vmatpush.bf16.msra.mxu0 %v5000
    %5116 = vmatpush.bf16.msra.mxu0 %v4996
    %5117 = vmatpush.bf16.msra.mxu0 %v4992
    %5118 = vmatpush.bf16.msra.mxu0 %v4988
    %5119 = vmatpush.bf16.msra.mxu0 %v4984
    %5120 = vmatmul.bf16.gmra.mxu0 %v4788
    %v5121 = vpop.f32.mrf.mxu0
    %v5122 = vadd.f32 %v467, %v5121
    %v5123 = vpop.f32.mrf.mxu0
    %5124 = vdwg.mxu0
    %5125 = vmatpush.bf16.msra.mxu0 %v5044
    %5126 = vmatpush.bf16.msra.mxu0 %v5040
    %5127 = vmatpush.bf16.msra.mxu0 %v5036
    %5128 = vmatpush.bf16.msra.mxu0 %v5032
    %5129 = vmatpush.bf16.msra.mxu0 %v5028
    %5130 = vmatpush.bf16.msra.mxu0 %v5024
    %5131 = vmatpush.bf16.msra.mxu0 %v5020
    %5132 = vmatpush.bf16.msra.mxu0 %v5016
    %5133 = vmatmul.bf16.gmra.mxu0 %v4789
    %v5134 = vpop.f32.mrf.mxu0
    %v5135 = vadd.f32 %v5122, %v5134
    %v5136 = vpop.f32.mrf.mxu0
    %5137 = vdwg.mxu0
    %5138 = vmatpush.bf16.msra.mxu0 %v5013
    %5139 = vmatpush.bf16.msra.mxu0 %v5009
    %5140 = vmatpush.bf16.msra.mxu0 %v5005
    %5141 = vmatpush.bf16.msra.mxu0 %v5001
    %5142 = vmatpush.bf16.msra.mxu0 %v4997
    %5143 = vmatpush.bf16.msra.mxu0 %v4993
    %5144 = vmatpush.bf16.msra.mxu0 %v4989
    %5145 = vmatpush.bf16.msra.mxu0 %v4985
    %5146 = vmatmul.bf16.gmra.mxu0 %v4788
    %v5147 = vpop.f32.mrf.mxu0
    %v5148 = vadd.f32 %v468, %v5147
    %v5149 = vpop.f32.mrf.mxu0
    %5150 = vdwg.mxu0
    %5151 = vmatpush.bf16.msra.mxu0 %v5045
    %5152 = vmatpush.bf16.msra.mxu0 %v5041
    %5153 = vmatpush.bf16.msra.mxu0 %v5037
    %5154 = vmatpush.bf16.msra.mxu0 %v5033
    %5155 = vmatpush.bf16.msra.mxu0 %v5029
    %5156 = vmatpush.bf16.msra.mxu0 %v5025
    %5157 = vmatpush.bf16.msra.mxu0 %v5021
    %5158 = vmatpush.bf16.msra.mxu0 %v5017
    %5159 = vmatmul.bf16.gmra.mxu0 %v4789
    %v5160 = vpop.f32.mrf.mxu0
    %v5161 = vadd.f32 %v5148, %v5160
    %v5162 = vpop.f32.mrf.mxu0
    %5163 = vdwg.mxu0
    %5164 = vmatpush.bf16.msra.mxu0 %v5014
    %5165 = vmatpush.bf16.msra.mxu0 %v5010
    %5166 = vmatpush.bf16.msra.mxu0 %v5006
    %5167 = vmatpush.bf16.msra.mxu0 %v5002
    %5168 = vmatpush.bf16.msra.mxu0 %v4998
    %5169 = vmatpush.bf16.msra.mxu0 %v4994
    %5170 = vmatpush.bf16.msra.mxu0 %v4990
    %5171 = vmatpush.bf16.msra.mxu0 %v4986
    %5172 = vmatmul.bf16.gmra.mxu0 %v4788
    %v5173 = vpop.f32.mrf.mxu0
    %v5174 = vadd.f32 %v469, %v5173
    %v5175 = vpop.f32.mrf.mxu0
    %5176 = vdwg.mxu0
    %5177 = vmatpush.bf16.msra.mxu0 %v5046
    %5178 = vmatpush.bf16.msra.mxu0 %v5042
    %5179 = vmatpush.bf16.msra.mxu0 %v5038
    %5180 = vmatpush.bf16.msra.mxu0 %v5034
    %5181 = vmatpush.bf16.msra.mxu0 %v5030
    %5182 = vmatpush.bf16.msra.mxu0 %v5026
    %5183 = vmatpush.bf16.msra.mxu0 %v5022
    %5184 = vmatpush.bf16.msra.mxu0 %v5018
    %5185 = vmatmul.bf16.gmra.mxu0 %v4789
    %v5186 = vpop.f32.mrf.mxu0
    %v5187 = vadd.f32 %v5174, %v5186
    %v5188 = vpop.f32.mrf.mxu0
    %5189 = vdwg.mxu0
    %5190 = vmatpush.bf16.msra.mxu0 %v5015
    %5191 = vmatpush.bf16.msra.mxu0 %v5011
    %5192 = vmatpush.bf16.msra.mxu0 %v5007
    %5193 = vmatpush.bf16.msra.mxu0 %v5003
    %5194 = vmatpush.bf16.msra.mxu0 %v4999
    %5195 = vmatpush.bf16.msra.mxu0 %v4995
    %5196 = vmatpush.bf16.msra.mxu0 %v4991
    %5197 = vmatpush.bf16.msra.mxu0 %v4987
    %5198 = vmatmul.bf16.gmra.mxu0 %v4788
    %v5199 = vpop.f32.mrf.mxu0
    %v5200 = vadd.f32 %v470, %v5199
    %v5201 = vpop.f32.mrf.mxu0
    %5202 = vdwg.mxu0
    %5203 = vmatpush.bf16.msra.mxu0 %v5047
    %5204 = vmatpush.bf16.msra.mxu0 %v5043
    %5205 = vmatpush.bf16.msra.mxu0 %v5039
    %5206 = vmatpush.bf16.msra.mxu0 %v5035
    %5207 = vmatpush.bf16.msra.mxu0 %v5031
    %5208 = vmatpush.bf16.msra.mxu0 %v5027
    %5209 = vmatpush.bf16.msra.mxu0 %v5023
    %5210 = vmatpush.bf16.msra.mxu0 %v5019
    %5211 = vmatmul.bf16.gmra.mxu0 %v4789
    %v5212 = vpop.f32.mrf.mxu0
    %v5213 = vadd.f32 %v5200, %v5212
    %v5214 = vpop.f32.mrf.mxu0
    %5215 = vdwg.mxu0
    %v5216 = vmul.f32 %v5135, 0.5
    %v5217 = vtanh.pop %v5216
    %v5218 = vmul.f32 %v5217, 0.5
    %v5219 = vadd.f32 %v5218, 0.5
    %v5220 = vmul.f32 %v5161, 0.5
    %v5221 = vtanh.pop %v5220
    %v5222 = vmul.f32 %v5221, 0.5
    %v5223 = vadd.f32 %v5222, 0.5
    %v5224 = vtanh.pop %v5187
    %v5225 = vmul.f32 %v5213, 0.5
    %v5226 = vtanh.pop %v5225
    %v5227 = vmul.f32 %v5226, 0.5
    %v5228 = vadd.f32 %v5227, 0.5
    %v5229 = vmul.f32 %v5223, %v4437
    %v5230 = vmul.f32 %v5219, %v5224
    %v5231 = vadd.f32 %v5229, %v5230
    %v5232 = vtanh.pop %v5231
    %v5233 = vmul.f32 %v5228, %v5232
    %v5234 = vpack.c.bf16 %v5233, %v5233
    %5235 = vst [vmem:[#allocation4 + $0x4] sm:$0xf] %v5234
    %s5236 = scalar_lea.vmem [#allocation3], 40
    %5237 = vst [vmem:[%s5236] sm:$0xff] %v5233
    %s5238 = smul.u32 6, 4
    %s5239 = smul.addr %s5238, 8
    %s5240 = scalar_lea.vmem [#allocation2], %s5239
    %v5241 = vld [vmem:[%s5240] sm:$0xff]
    %v5242 = vld [vmem:[%s5240 + $0x8] sm:$0xff]
    %v5243 = vld [vmem:[%s5240 + $0x10] sm:$0xff]
    %v5244 = vld [vmem:[%s5240 + $0x18] sm:$0xff]
    %v5245 = vld [vmem:[#allocation4] sm:$0xf]
    %v5246 = vld [vmem:[#allocation10] sm:$0xff]
    %v5247 = vld [vmem:[#allocation10 + $0x8] sm:$0xff]
    %v5248 = vld [vmem:[#allocation10 + $0x10] sm:$0xff]
    %v5249 = vld [vmem:[#allocation10 + $0x18] sm:$0xff]
    %v5250 = vld [vmem:[#allocation10 + $0x20] sm:$0xff]
    %v5251 = vld [vmem:[#allocation10 + $0x28] sm:$0xff]
    %v5252 = vld [vmem:[#allocation10 + $0x30] sm:$0xff]
    %v5253 = vld [vmem:[#allocation10 + $0x38] sm:$0xff]
    %v5254 = vld [vmem:[#allocation10 + $0x40] sm:$0xff]
    %v5255 = vld [vmem:[#allocation10 + $0x48] sm:$0xff]
    %v5256 = vld [vmem:[#allocation10 + $0x50] sm:$0xff]
    %v5257 = vld [vmem:[#allocation10 + $0x58] sm:$0xff]
    %v5258 = vld [vmem:[#allocation10 + $0x60] sm:$0xff]
    %v5259 = vld [vmem:[#allocation10 + $0x68] sm:$0xff]
    %v5260 = vld [vmem:[#allocation10 + $0x70] sm:$0xff]
    %v5261 = vld [vmem:[#allocation10 + $0x78] sm:$0xff]
    %v5262 = vld [vmem:[#allocation10 + $0x80] sm:$0xff]
    %v5263 = vld [vmem:[#allocation10 + $0x88] sm:$0xff]
    %v5264 = vld [vmem:[#allocation10 + $0x90] sm:$0xff]
    %v5265 = vld [vmem:[#allocation10 + $0x98] sm:$0xff]
    %v5266 = vld [vmem:[#allocation10 + $0xa0] sm:$0xff]
    %v5267 = vld [vmem:[#allocation10 + $0xa8] sm:$0xff]
    %v5268 = vld [vmem:[#allocation10 + $0xb0] sm:$0xff]
    %v5269 = vld [vmem:[#allocation10 + $0xb8] sm:$0xff]
    %v5270 = vld [vmem:[#allocation10 + $0xc0] sm:$0xff]
    %v5271 = vld [vmem:[#allocation10 + $0xc8] sm:$0xff]
    %v5272 = vld [vmem:[#allocation10 + $0xd0] sm:$0xff]
    %v5273 = vld [vmem:[#allocation10 + $0xd8] sm:$0xff]
    %v5274 = vld [vmem:[#allocation10 + $0xe0] sm:$0xff]
    %v5275 = vld [vmem:[#allocation10 + $0xe8] sm:$0xff]
    %v5276 = vld [vmem:[#allocation10 + $0xf0] sm:$0xff]
    %v5277 = vld [vmem:[#allocation10 + $0xf8] sm:$0xff]
    %v5310 = vunpack.c.l.b16 %v5246
    %v5311 = vunpack.c.h.b16 %v5246
    %v5312 = vunpack.c.l.b16 %v5247
    %v5313 = vunpack.c.h.b16 %v5247
    %v5314 = vunpack.c.l.b16 %v5248
    %v5315 = vunpack.c.h.b16 %v5248
    %v5316 = vunpack.c.l.b16 %v5249
    %v5317 = vunpack.c.h.b16 %v5249
    %v5318 = vunpack.c.l.b16 %v5250
    %v5319 = vunpack.c.h.b16 %v5250
    %v5320 = vunpack.c.l.b16 %v5251
    %v5321 = vunpack.c.h.b16 %v5251
    %v5322 = vunpack.c.l.b16 %v5252
    %v5323 = vunpack.c.h.b16 %v5252
    %v5324 = vunpack.c.l.b16 %v5253
    %v5325 = vunpack.c.h.b16 %v5253
    %v5326 = vunpack.c.l.b16 %v5254
    %v5327 = vunpack.c.h.b16 %v5254
    %v5328 = vunpack.c.l.b16 %v5255
    %v5329 = vunpack.c.h.b16 %v5255
    %v5330 = vunpack.c.l.b16 %v5256
    %v5331 = vunpack.c.h.b16 %v5256
    %v5332 = vunpack.c.l.b16 %v5257
    %v5333 = vunpack.c.h.b16 %v5257
    %v5334 = vunpack.c.l.b16 %v5258
    %v5335 = vunpack.c.h.b16 %v5258
    %v5336 = vunpack.c.l.b16 %v5259
    %v5337 = vunpack.c.h.b16 %v5259
    %v5338 = vunpack.c.l.b16 %v5260
    %v5339 = vunpack.c.h.b16 %v5260
    %v5340 = vunpack.c.l.b16 %v5261
    %v5341 = vunpack.c.h.b16 %v5261
    %v5342 = vunpack.c.l.b16 %v5262
    %v5343 = vunpack.c.h.b16 %v5262
    %v5344 = vunpack.c.l.b16 %v5263
    %v5345 = vunpack.c.h.b16 %v5263
    %v5346 = vunpack.c.l.b16 %v5264
    %v5347 = vunpack.c.h.b16 %v5264
    %v5348 = vunpack.c.l.b16 %v5265
    %v5349 = vunpack.c.h.b16 %v5265
    %v5350 = vunpack.c.l.b16 %v5266
    %v5351 = vunpack.c.h.b16 %v5266
    %v5352 = vunpack.c.l.b16 %v5267
    %v5353 = vunpack.c.h.b16 %v5267
    %v5354 = vunpack.c.l.b16 %v5268
    %v5355 = vunpack.c.h.b16 %v5268
    %v5356 = vunpack.c.l.b16 %v5269
    %v5357 = vunpack.c.h.b16 %v5269
    %v5358 = vunpack.c.l.b16 %v5270
    %v5359 = vunpack.c.h.b16 %v5270
    %v5360 = vunpack.c.l.b16 %v5271
    %v5361 = vunpack.c.h.b16 %v5271
    %v5362 = vunpack.c.l.b16 %v5272
    %v5363 = vunpack.c.h.b16 %v5272
    %v5364 = vunpack.c.l.b16 %v5273
    %v5365 = vunpack.c.h.b16 %v5273
    %v5366 = vunpack.c.l.b16 %v5274
    %v5367 = vunpack.c.h.b16 %v5274
    %v5368 = vunpack.c.l.b16 %v5275
    %v5369 = vunpack.c.h.b16 %v5275
    %v5370 = vunpack.c.l.b16 %v5276
    %v5371 = vunpack.c.h.b16 %v5276
    %v5372 = vunpack.c.l.b16 %v5277
    %v5373 = vunpack.c.h.b16 %v5277
    %v5374 = vpack.c.b16 %v5314, %v5310
    %v5375 = vpack.c.b16 %v5315, %v5311
    %v5376 = vpack.c.b16 %v5316, %v5312
    %v5377 = vpack.c.b16 %v5317, %v5313
    %v5378 = vpack.c.b16 %v5322, %v5318
    %v5379 = vpack.c.b16 %v5323, %v5319
    %v5380 = vpack.c.b16 %v5324, %v5320
    %v5381 = vpack.c.b16 %v5325, %v5321
    %v5382 = vpack.c.b16 %v5330, %v5326
    %v5383 = vpack.c.b16 %v5331, %v5327
    %v5384 = vpack.c.b16 %v5332, %v5328
    %v5385 = vpack.c.b16 %v5333, %v5329
    %v5386 = vpack.c.b16 %v5338, %v5334
    %v5387 = vpack.c.b16 %v5339, %v5335
    %v5388 = vpack.c.b16 %v5340, %v5336
    %v5389 = vpack.c.b16 %v5341, %v5337
    %v5390 = vpack.c.b16 %v5346, %v5342
    %v5391 = vpack.c.b16 %v5347, %v5343
    %v5392 = vpack.c.b16 %v5348, %v5344
    %v5393 = vpack.c.b16 %v5349, %v5345
    %v5394 = vpack.c.b16 %v5354, %v5350
    %v5395 = vpack.c.b16 %v5355, %v5351
    %v5396 = vpack.c.b16 %v5356, %v5352
    %v5397 = vpack.c.b16 %v5357, %v5353
    %v5398 = vpack.c.b16 %v5362, %v5358
    %v5399 = vpack.c.b16 %v5363, %v5359
    %v5400 = vpack.c.b16 %v5364, %v5360
    %v5401 = vpack.c.b16 %v5365, %v5361
    %v5402 = vpack.c.b16 %v5370, %v5366
    %v5403 = vpack.c.b16 %v5371, %v5367
    %v5404 = vpack.c.b16 %v5372, %v5368
    %v5405 = vpack.c.b16 %v5373, %v5369
    %5438 = vmatpush.bf16.msra.mxu0 %v5402
    %5439 = vmatpush.bf16.msra.mxu0 %v5398
    %5440 = vmatpush.bf16.msra.mxu0 %v5394
    %5441 = vmatpush.bf16.msra.mxu0 %v5390
    %5442 = vmatpush.bf16.msra.mxu0 %v5386
    %5443 = vmatpush.bf16.msra.mxu0 %v5382
    %5444 = vmatpush.bf16.msra.mxu0 %v5378
    %5445 = vmatpush.bf16.msra.mxu0 %v5374
    %5446 = vmatmul.bf16.gmra.mxu0 %v5245
    %v5447 = vpop.f32.mrf.mxu0
    %v5448 = vadd.f32 0.0, %v5447
    %v5449 = vpop.f32.mrf.mxu0
    %5450 = vdwg.mxu0
    %5451 = vmatpush.bf16.msra.mxu0 %v5403
    %5452 = vmatpush.bf16.msra.mxu0 %v5399
    %5453 = vmatpush.bf16.msra.mxu0 %v5395
    %5454 = vmatpush.bf16.msra.mxu0 %v5391
    %5455 = vmatpush.bf16.msra.mxu0 %v5387
    %5456 = vmatpush.bf16.msra.mxu0 %v5383
    %5457 = vmatpush.bf16.msra.mxu0 %v5379
    %5458 = vmatpush.bf16.msra.mxu0 %v5375
    %5459 = vmatmul.bf16.gmra.mxu0 %v5245
    %v5460 = vpop.f32.mrf.mxu0
    %v5461 = vadd.f32 0.0, %v5460
    %v5462 = vpop.f32.mrf.mxu0
    %5463 = vdwg.mxu0
    %5464 = vmatpush.bf16.msra.mxu0 %v5404
    %5465 = vmatpush.bf16.msra.mxu0 %v5400
    %5466 = vmatpush.bf16.msra.mxu0 %v5396
    %5467 = vmatpush.bf16.msra.mxu0 %v5392
    %5468 = vmatpush.bf16.msra.mxu0 %v5388
    %5469 = vmatpush.bf16.msra.mxu0 %v5384
    %5470 = vmatpush.bf16.msra.mxu0 %v5380
    %5471 = vmatpush.bf16.msra.mxu0 %v5376
    %5472 = vmatmul.bf16.gmra.mxu0 %v5245
    %v5473 = vpop.f32.mrf.mxu0
    %v5474 = vadd.f32 0.0, %v5473
    %v5475 = vpop.f32.mrf.mxu0
    %5476 = vdwg.mxu0
    %5477 = vmatpush.bf16.msra.mxu0 %v5405
    %5478 = vmatpush.bf16.msra.mxu0 %v5401
    %5479 = vmatpush.bf16.msra.mxu0 %v5397
    %5480 = vmatpush.bf16.msra.mxu0 %v5393
    %5481 = vmatpush.bf16.msra.mxu0 %v5389
    %5482 = vmatpush.bf16.msra.mxu0 %v5385
    %5483 = vmatpush.bf16.msra.mxu0 %v5381
    %5484 = vmatpush.bf16.msra.mxu0 %v5377
    %5485 = vmatmul.bf16.gmra.mxu0 %v5245
    %v5486 = vpop.f32.mrf.mxu0
    %v5487 = vadd.f32 0.0, %v5486
    %v5488 = vpop.f32.mrf.mxu0
    %5489 = vdwg.mxu0
    %v5490 = vadd.f32 %v5241, %v5448
    %v5491 = vadd.f32 %v5242, %v5461
    %v5492 = vadd.f32 %v5243, %v5474
    %v5493 = vadd.f32 %v5244, %v5487
    %v5494 = vmul.f32 %v5490, 0.5
    %v5495 = vtanh.pop %v5494
    %v5496 = vmul.f32 %v5495, 0.5
    %v5497 = vadd.f32 %v5496, 0.5
    %v5498 = vmul.f32 %v5491, 0.5
    %v5499 = vtanh.pop %v5498
    %v5500 = vmul.f32 %v5499, 0.5
    %v5501 = vadd.f32 %v5500, 0.5
    %v5502 = vtanh.pop %v5492
    %v5503 = vmul.f32 %v5493, 0.5
    %v5504 = vtanh.pop %v5503
    %v5505 = vmul.f32 %v5504, 0.5
    %v5506 = vadd.f32 %v5505, 0.5
    %v5507 = vmul.f32 %v5501, %v4715
    %v5508 = vmul.f32 %v5497, %v5502
    %v5509 = vadd.f32 %v5507, %v5508
    %v5510 = vtanh.pop %v5509
    %v5511 = vmul.f32 %v5506, %v5510
    %v5512 = vpack.c.bf16 %v5511, %v5511
    %5513 = vst [vmem:[#allocation4] sm:$0xf] %v5512
    %v5514 = vld [vmem:[#allocation4] sm:$0xff]
    %v5515 = vld [vmem:[#allocation11] sm:$0xff]
    %v5516 = vld [vmem:[#allocation11 + $0x8] sm:$0xff]
    %v5517 = vld [vmem:[#allocation11 + $0x10] sm:$0xff]
    %v5518 = vld [vmem:[#allocation11 + $0x18] sm:$0xff]
    %v5519 = vld [vmem:[#allocation11 + $0x20] sm:$0xff]
    %v5520 = vld [vmem:[#allocation11 + $0x28] sm:$0xff]
    %v5521 = vld [vmem:[#allocation11 + $0x30] sm:$0xff]
    %v5522 = vld [vmem:[#allocation11 + $0x38] sm:$0xff]
    %v5523 = vld [vmem:[#allocation11 + $0x40] sm:$0xff]
    %v5524 = vld [vmem:[#allocation11 + $0x48] sm:$0xff]
    %v5525 = vld [vmem:[#allocation11 + $0x50] sm:$0xff]
    %v5526 = vld [vmem:[#allocation11 + $0x58] sm:$0xff]
    %v5527 = vld [vmem:[#allocation11 + $0x60] sm:$0xff]
    %v5528 = vld [vmem:[#allocation11 + $0x68] sm:$0xff]
    %v5529 = vld [vmem:[#allocation11 + $0x70] sm:$0xff]
    %v5530 = vld [vmem:[#allocation11 + $0x78] sm:$0xff]
    %v5531 = vld [vmem:[#allocation11 + $0x80] sm:$0xff]
    %v5532 = vld [vmem:[#allocation11 + $0x88] sm:$0xff]
    %v5533 = vld [vmem:[#allocation11 + $0x90] sm:$0xff]
    %v5534 = vld [vmem:[#allocation11 + $0x98] sm:$0xff]
    %v5535 = vld [vmem:[#allocation11 + $0xa0] sm:$0xff]
    %v5536 = vld [vmem:[#allocation11 + $0xa8] sm:$0xff]
    %v5537 = vld [vmem:[#allocation11 + $0xb0] sm:$0xff]
    %v5538 = vld [vmem:[#allocation11 + $0xb8] sm:$0xff]
    %v5539 = vld [vmem:[#allocation11 + $0xc0] sm:$0xff]
    %v5540 = vld [vmem:[#allocation11 + $0xc8] sm:$0xff]
    %v5541 = vld [vmem:[#allocation11 + $0xd0] sm:$0xff]
    %v5542 = vld [vmem:[#allocation11 + $0xd8] sm:$0xff]
    %v5543 = vld [vmem:[#allocation11 + $0xe0] sm:$0xff]
    %v5544 = vld [vmem:[#allocation11 + $0xe8] sm:$0xff]
    %v5545 = vld [vmem:[#allocation11 + $0xf0] sm:$0xff]
    %v5546 = vld [vmem:[#allocation11 + $0xf8] sm:$0xff]
    %v5547 = vld [vmem:[#allocation11 + $0x100] sm:$0xff]
    %v5548 = vld [vmem:[#allocation11 + $0x108] sm:$0xff]
    %v5549 = vld [vmem:[#allocation11 + $0x110] sm:$0xff]
    %v5550 = vld [vmem:[#allocation11 + $0x118] sm:$0xff]
    %v5551 = vld [vmem:[#allocation11 + $0x120] sm:$0xff]
    %v5552 = vld [vmem:[#allocation11 + $0x128] sm:$0xff]
    %v5553 = vld [vmem:[#allocation11 + $0x130] sm:$0xff]
    %v5554 = vld [vmem:[#allocation11 + $0x138] sm:$0xff]
    %v5555 = vld [vmem:[#allocation11 + $0x140] sm:$0xff]
    %v5556 = vld [vmem:[#allocation11 + $0x148] sm:$0xff]
    %v5557 = vld [vmem:[#allocation11 + $0x150] sm:$0xff]
    %v5558 = vld [vmem:[#allocation11 + $0x158] sm:$0xff]
    %v5559 = vld [vmem:[#allocation11 + $0x160] sm:$0xff]
    %v5560 = vld [vmem:[#allocation11 + $0x168] sm:$0xff]
    %v5561 = vld [vmem:[#allocation11 + $0x170] sm:$0xff]
    %v5562 = vld [vmem:[#allocation11 + $0x178] sm:$0xff]
    %v5563 = vld [vmem:[#allocation11 + $0x180] sm:$0xff]
    %v5564 = vld [vmem:[#allocation11 + $0x188] sm:$0xff]
    %v5565 = vld [vmem:[#allocation11 + $0x190] sm:$0xff]
    %v5566 = vld [vmem:[#allocation11 + $0x198] sm:$0xff]
    %v5567 = vld [vmem:[#allocation11 + $0x1a0] sm:$0xff]
    %v5568 = vld [vmem:[#allocation11 + $0x1a8] sm:$0xff]
    %v5569 = vld [vmem:[#allocation11 + $0x1b0] sm:$0xff]
    %v5570 = vld [vmem:[#allocation11 + $0x1b8] sm:$0xff]
    %v5571 = vld [vmem:[#allocation11 + $0x1c0] sm:$0xff]
    %v5572 = vld [vmem:[#allocation11 + $0x1c8] sm:$0xff]
    %v5573 = vld [vmem:[#allocation11 + $0x1d0] sm:$0xff]
    %v5574 = vld [vmem:[#allocation11 + $0x1d8] sm:$0xff]
    %v5575 = vld [vmem:[#allocation11 + $0x1e0] sm:$0xff]
    %v5576 = vld [vmem:[#allocation11 + $0x1e8] sm:$0xff]
    %v5577 = vld [vmem:[#allocation11 + $0x1f0] sm:$0xff]
    %v5578 = vld [vmem:[#allocation11 + $0x1f8] sm:$0xff]
    %v5580 = vunpack.c.l.b16 %v5514
    %v5581 = vunpack.c.h.b16 %v5514
    %v5582 = vpack.c.b16 %v5580, %v5580
    %v5583 = vpack.c.b16 %v5581, %v5581
    %v5650 = vunpack.c.l.b16 %v5515
    %v5651 = vunpack.c.h.b16 %v5515
    %v5652 = vunpack.c.l.b16 %v5516
    %v5653 = vunpack.c.h.b16 %v5516
    %v5654 = vunpack.c.l.b16 %v5517
    %v5655 = vunpack.c.h.b16 %v5517
    %v5656 = vunpack.c.l.b16 %v5518
    %v5657 = vunpack.c.h.b16 %v5518
    %v5658 = vunpack.c.l.b16 %v5519
    %v5659 = vunpack.c.h.b16 %v5519
    %v5660 = vunpack.c.l.b16 %v5520
    %v5661 = vunpack.c.h.b16 %v5520
    %v5662 = vunpack.c.l.b16 %v5521
    %v5663 = vunpack.c.h.b16 %v5521
    %v5664 = vunpack.c.l.b16 %v5522
    %v5665 = vunpack.c.h.b16 %v5522
    %v5666 = vunpack.c.l.b16 %v5523
    %v5667 = vunpack.c.h.b16 %v5523
    %v5668 = vunpack.c.l.b16 %v5524
    %v5669 = vunpack.c.h.b16 %v5524
    %v5670 = vunpack.c.l.b16 %v5525
    %v5671 = vunpack.c.h.b16 %v5525
    %v5672 = vunpack.c.l.b16 %v5526
    %v5673 = vunpack.c.h.b16 %v5526
    %v5674 = vunpack.c.l.b16 %v5527
    %v5675 = vunpack.c.h.b16 %v5527
    %v5676 = vunpack.c.l.b16 %v5528
    %v5677 = vunpack.c.h.b16 %v5528
    %v5678 = vunpack.c.l.b16 %v5529
    %v5679 = vunpack.c.h.b16 %v5529
    %v5680 = vunpack.c.l.b16 %v5530
    %v5681 = vunpack.c.h.b16 %v5530
    %v5682 = vunpack.c.l.b16 %v5531
    %v5683 = vunpack.c.h.b16 %v5531
    %v5684 = vunpack.c.l.b16 %v5532
    %v5685 = vunpack.c.h.b16 %v5532
    %v5686 = vunpack.c.l.b16 %v5533
    %v5687 = vunpack.c.h.b16 %v5533
    %v5688 = vunpack.c.l.b16 %v5534
    %v5689 = vunpack.c.h.b16 %v5534
    %v5690 = vunpack.c.l.b16 %v5535
    %v5691 = vunpack.c.h.b16 %v5535
    %v5692 = vunpack.c.l.b16 %v5536
    %v5693 = vunpack.c.h.b16 %v5536
    %v5694 = vunpack.c.l.b16 %v5537
    %v5695 = vunpack.c.h.b16 %v5537
    %v5696 = vunpack.c.l.b16 %v5538
    %v5697 = vunpack.c.h.b16 %v5538
    %v5698 = vunpack.c.l.b16 %v5539
    %v5699 = vunpack.c.h.b16 %v5539
    %v5700 = vunpack.c.l.b16 %v5540
    %v5701 = vunpack.c.h.b16 %v5540
    %v5702 = vunpack.c.l.b16 %v5541
    %v5703 = vunpack.c.h.b16 %v5541
    %v5704 = vunpack.c.l.b16 %v5542
    %v5705 = vunpack.c.h.b16 %v5542
    %v5706 = vunpack.c.l.b16 %v5543
    %v5707 = vunpack.c.h.b16 %v5543
    %v5708 = vunpack.c.l.b16 %v5544
    %v5709 = vunpack.c.h.b16 %v5544
    %v5710 = vunpack.c.l.b16 %v5545
    %v5711 = vunpack.c.h.b16 %v5545
    %v5712 = vunpack.c.l.b16 %v5546
    %v5713 = vunpack.c.h.b16 %v5546
    %v5714 = vunpack.c.l.b16 %v5547
    %v5715 = vunpack.c.h.b16 %v5547
    %v5716 = vunpack.c.l.b16 %v5548
    %v5717 = vunpack.c.h.b16 %v5548
    %v5718 = vunpack.c.l.b16 %v5549
    %v5719 = vunpack.c.h.b16 %v5549
    %v5720 = vunpack.c.l.b16 %v5550
    %v5721 = vunpack.c.h.b16 %v5550
    %v5722 = vunpack.c.l.b16 %v5551
    %v5723 = vunpack.c.h.b16 %v5551
    %v5724 = vunpack.c.l.b16 %v5552
    %v5725 = vunpack.c.h.b16 %v5552
    %v5726 = vunpack.c.l.b16 %v5553
    %v5727 = vunpack.c.h.b16 %v5553
    %v5728 = vunpack.c.l.b16 %v5554
    %v5729 = vunpack.c.h.b16 %v5554
    %v5730 = vunpack.c.l.b16 %v5555
    %v5731 = vunpack.c.h.b16 %v5555
    %v5732 = vunpack.c.l.b16 %v5556
    %v5733 = vunpack.c.h.b16 %v5556
    %v5734 = vunpack.c.l.b16 %v5557
    %v5735 = vunpack.c.h.b16 %v5557
    %v5736 = vunpack.c.l.b16 %v5558
    %v5737 = vunpack.c.h.b16 %v5558
    %v5738 = vunpack.c.l.b16 %v5559
    %v5739 = vunpack.c.h.b16 %v5559
    %v5740 = vunpack.c.l.b16 %v5560
    %v5741 = vunpack.c.h.b16 %v5560
    %v5742 = vunpack.c.l.b16 %v5561
    %v5743 = vunpack.c.h.b16 %v5561
    %v5744 = vunpack.c.l.b16 %v5562
    %v5745 = vunpack.c.h.b16 %v5562
    %v5746 = vunpack.c.l.b16 %v5563
    %v5747 = vunpack.c.h.b16 %v5563
    %v5748 = vunpack.c.l.b16 %v5564
    %v5749 = vunpack.c.h.b16 %v5564
    %v5750 = vunpack.c.l.b16 %v5565
    %v5751 = vunpack.c.h.b16 %v5565
    %v5752 = vunpack.c.l.b16 %v5566
    %v5753 = vunpack.c.h.b16 %v5566
    %v5754 = vunpack.c.l.b16 %v5567
    %v5755 = vunpack.c.h.b16 %v5567
    %v5756 = vunpack.c.l.b16 %v5568
    %v5757 = vunpack.c.h.b16 %v5568
    %v5758 = vunpack.c.l.b16 %v5569
    %v5759 = vunpack.c.h.b16 %v5569
    %v5760 = vunpack.c.l.b16 %v5570
    %v5761 = vunpack.c.h.b16 %v5570
    %v5762 = vunpack.c.l.b16 %v5571
    %v5763 = vunpack.c.h.b16 %v5571
    %v5764 = vunpack.c.l.b16 %v5572
    %v5765 = vunpack.c.h.b16 %v5572
    %v5766 = vunpack.c.l.b16 %v5573
    %v5767 = vunpack.c.h.b16 %v5573
    %v5768 = vunpack.c.l.b16 %v5574
    %v5769 = vunpack.c.h.b16 %v5574
    %v5770 = vunpack.c.l.b16 %v5575
    %v5771 = vunpack.c.h.b16 %v5575
    %v5772 = vunpack.c.l.b16 %v5576
    %v5773 = vunpack.c.h.b16 %v5576
    %v5774 = vunpack.c.l.b16 %v5577
    %v5775 = vunpack.c.h.b16 %v5577
    %v5776 = vunpack.c.l.b16 %v5578
    %v5777 = vunpack.c.h.b16 %v5578
    %v5778 = vpack.c.b16 %v5654, %v5650
    %v5779 = vpack.c.b16 %v5655, %v5651
    %v5780 = vpack.c.b16 %v5656, %v5652
    %v5781 = vpack.c.b16 %v5657, %v5653
    %v5782 = vpack.c.b16 %v5662, %v5658
    %v5783 = vpack.c.b16 %v5663, %v5659
    %v5784 = vpack.c.b16 %v5664, %v5660
    %v5785 = vpack.c.b16 %v5665, %v5661
    %v5786 = vpack.c.b16 %v5670, %v5666
    %v5787 = vpack.c.b16 %v5671, %v5667
    %v5788 = vpack.c.b16 %v5672, %v5668
    %v5789 = vpack.c.b16 %v5673, %v5669
    %v5790 = vpack.c.b16 %v5678, %v5674
    %v5791 = vpack.c.b16 %v5679, %v5675
    %v5792 = vpack.c.b16 %v5680, %v5676
    %v5793 = vpack.c.b16 %v5681, %v5677
    %v5794 = vpack.c.b16 %v5686, %v5682
    %v5795 = vpack.c.b16 %v5687, %v5683
    %v5796 = vpack.c.b16 %v5688, %v5684
    %v5797 = vpack.c.b16 %v5689, %v5685
    %v5798 = vpack.c.b16 %v5694, %v5690
    %v5799 = vpack.c.b16 %v5695, %v5691
    %v5800 = vpack.c.b16 %v5696, %v5692
    %v5801 = vpack.c.b16 %v5697, %v5693
    %v5802 = vpack.c.b16 %v5702, %v5698
    %v5803 = vpack.c.b16 %v5703, %v5699
    %v5804 = vpack.c.b16 %v5704, %v5700
    %v5805 = vpack.c.b16 %v5705, %v5701
    %v5806 = vpack.c.b16 %v5710, %v5706
    %v5807 = vpack.c.b16 %v5711, %v5707
    %v5808 = vpack.c.b16 %v5712, %v5708
    %v5809 = vpack.c.b16 %v5713, %v5709
    %v5810 = vpack.c.b16 %v5718, %v5714
    %v5811 = vpack.c.b16 %v5719, %v5715
    %v5812 = vpack.c.b16 %v5720, %v5716
    %v5813 = vpack.c.b16 %v5721, %v5717
    %v5814 = vpack.c.b16 %v5726, %v5722
    %v5815 = vpack.c.b16 %v5727, %v5723
    %v5816 = vpack.c.b16 %v5728, %v5724
    %v5817 = vpack.c.b16 %v5729, %v5725
    %v5818 = vpack.c.b16 %v5734, %v5730
    %v5819 = vpack.c.b16 %v5735, %v5731
    %v5820 = vpack.c.b16 %v5736, %v5732
    %v5821 = vpack.c.b16 %v5737, %v5733
    %v5822 = vpack.c.b16 %v5742, %v5738
    %v5823 = vpack.c.b16 %v5743, %v5739
    %v5824 = vpack.c.b16 %v5744, %v5740
    %v5825 = vpack.c.b16 %v5745, %v5741
    %v5826 = vpack.c.b16 %v5750, %v5746
    %v5827 = vpack.c.b16 %v5751, %v5747
    %v5828 = vpack.c.b16 %v5752, %v5748
    %v5829 = vpack.c.b16 %v5753, %v5749
    %v5830 = vpack.c.b16 %v5758, %v5754
    %v5831 = vpack.c.b16 %v5759, %v5755
    %v5832 = vpack.c.b16 %v5760, %v5756
    %v5833 = vpack.c.b16 %v5761, %v5757
    %v5834 = vpack.c.b16 %v5766, %v5762
    %v5835 = vpack.c.b16 %v5767, %v5763
    %v5836 = vpack.c.b16 %v5768, %v5764
    %v5837 = vpack.c.b16 %v5769, %v5765
    %v5838 = vpack.c.b16 %v5774, %v5770
    %v5839 = vpack.c.b16 %v5775, %v5771
    %v5840 = vpack.c.b16 %v5776, %v5772
    %v5841 = vpack.c.b16 %v5777, %v5773
    %5906 = vmatpush.bf16.msra.mxu0 %v5806
    %5907 = vmatpush.bf16.msra.mxu0 %v5802
    %5908 = vmatpush.bf16.msra.mxu0 %v5798
    %5909 = vmatpush.bf16.msra.mxu0 %v5794
    %5910 = vmatpush.bf16.msra.mxu0 %v5790
    %5911 = vmatpush.bf16.msra.mxu0 %v5786
    %5912 = vmatpush.bf16.msra.mxu0 %v5782
    %5913 = vmatpush.bf16.msra.mxu0 %v5778
    %5914 = vmatmul.bf16.gmra.mxu0 %v5582
    %v5915 = vpop.f32.mrf.mxu0
    %v5916 = vadd.f32 %v467, %v5915
    %v5917 = vpop.f32.mrf.mxu0
    %5918 = vdwg.mxu0
    %5919 = vmatpush.bf16.msra.mxu0 %v5838
    %5920 = vmatpush.bf16.msra.mxu0 %v5834
    %5921 = vmatpush.bf16.msra.mxu0 %v5830
    %5922 = vmatpush.bf16.msra.mxu0 %v5826
    %5923 = vmatpush.bf16.msra.mxu0 %v5822
    %5924 = vmatpush.bf16.msra.mxu0 %v5818
    %5925 = vmatpush.bf16.msra.mxu0 %v5814
    %5926 = vmatpush.bf16.msra.mxu0 %v5810
    %5927 = vmatmul.bf16.gmra.mxu0 %v5583
    %v5928 = vpop.f32.mrf.mxu0
    %v5929 = vadd.f32 %v5916, %v5928
    %v5930 = vpop.f32.mrf.mxu0
    %5931 = vdwg.mxu0
    %5932 = vmatpush.bf16.msra.mxu0 %v5807
    %5933 = vmatpush.bf16.msra.mxu0 %v5803
    %5934 = vmatpush.bf16.msra.mxu0 %v5799
    %5935 = vmatpush.bf16.msra.mxu0 %v5795
    %5936 = vmatpush.bf16.msra.mxu0 %v5791
    %5937 = vmatpush.bf16.msra.mxu0 %v5787
    %5938 = vmatpush.bf16.msra.mxu0 %v5783
    %5939 = vmatpush.bf16.msra.mxu0 %v5779
    %5940 = vmatmul.bf16.gmra.mxu0 %v5582
    %v5941 = vpop.f32.mrf.mxu0
    %v5942 = vadd.f32 %v468, %v5941
    %v5943 = vpop.f32.mrf.mxu0
    %5944 = vdwg.mxu0
    %5945 = vmatpush.bf16.msra.mxu0 %v5839
    %5946 = vmatpush.bf16.msra.mxu0 %v5835
    %5947 = vmatpush.bf16.msra.mxu0 %v5831
    %5948 = vmatpush.bf16.msra.mxu0 %v5827
    %5949 = vmatpush.bf16.msra.mxu0 %v5823
    %5950 = vmatpush.bf16.msra.mxu0 %v5819
    %5951 = vmatpush.bf16.msra.mxu0 %v5815
    %5952 = vmatpush.bf16.msra.mxu0 %v5811
    %5953 = vmatmul.bf16.gmra.mxu0 %v5583
    %v5954 = vpop.f32.mrf.mxu0
    %v5955 = vadd.f32 %v5942, %v5954
    %v5956 = vpop.f32.mrf.mxu0
    %5957 = vdwg.mxu0
    %5958 = vmatpush.bf16.msra.mxu0 %v5808
    %5959 = vmatpush.bf16.msra.mxu0 %v5804
    %5960 = vmatpush.bf16.msra.mxu0 %v5800
    %5961 = vmatpush.bf16.msra.mxu0 %v5796
    %5962 = vmatpush.bf16.msra.mxu0 %v5792
    %5963 = vmatpush.bf16.msra.mxu0 %v5788
    %5964 = vmatpush.bf16.msra.mxu0 %v5784
    %5965 = vmatpush.bf16.msra.mxu0 %v5780
    %5966 = vmatmul.bf16.gmra.mxu0 %v5582
    %v5967 = vpop.f32.mrf.mxu0
    %v5968 = vadd.f32 %v469, %v5967
    %v5969 = vpop.f32.mrf.mxu0
    %5970 = vdwg.mxu0
    %5971 = vmatpush.bf16.msra.mxu0 %v5840
    %5972 = vmatpush.bf16.msra.mxu0 %v5836
    %5973 = vmatpush.bf16.msra.mxu0 %v5832
    %5974 = vmatpush.bf16.msra.mxu0 %v5828
    %5975 = vmatpush.bf16.msra.mxu0 %v5824
    %5976 = vmatpush.bf16.msra.mxu0 %v5820
    %5977 = vmatpush.bf16.msra.mxu0 %v5816
    %5978 = vmatpush.bf16.msra.mxu0 %v5812
    %5979 = vmatmul.bf16.gmra.mxu0 %v5583
    %v5980 = vpop.f32.mrf.mxu0
    %v5981 = vadd.f32 %v5968, %v5980
    %v5982 = vpop.f32.mrf.mxu0
    %5983 = vdwg.mxu0
    %5984 = vmatpush.bf16.msra.mxu0 %v5809
    %5985 = vmatpush.bf16.msra.mxu0 %v5805
    %5986 = vmatpush.bf16.msra.mxu0 %v5801
    %5987 = vmatpush.bf16.msra.mxu0 %v5797
    %5988 = vmatpush.bf16.msra.mxu0 %v5793
    %5989 = vmatpush.bf16.msra.mxu0 %v5789
    %5990 = vmatpush.bf16.msra.mxu0 %v5785
    %5991 = vmatpush.bf16.msra.mxu0 %v5781
    %5992 = vmatmul.bf16.gmra.mxu0 %v5582
    %v5993 = vpop.f32.mrf.mxu0
    %v5994 = vadd.f32 %v470, %v5993
    %v5995 = vpop.f32.mrf.mxu0
    %5996 = vdwg.mxu0
    %5997 = vmatpush.bf16.msra.mxu0 %v5841
    %5998 = vmatpush.bf16.msra.mxu0 %v5837
    %5999 = vmatpush.bf16.msra.mxu0 %v5833
    %6000 = vmatpush.bf16.msra.mxu0 %v5829
    %6001 = vmatpush.bf16.msra.mxu0 %v5825
    %6002 = vmatpush.bf16.msra.mxu0 %v5821
    %6003 = vmatpush.bf16.msra.mxu0 %v5817
    %6004 = vmatpush.bf16.msra.mxu0 %v5813
    %6005 = vmatmul.bf16.gmra.mxu0 %v5583
    %v6006 = vpop.f32.mrf.mxu0
    %v6007 = vadd.f32 %v5994, %v6006
    %v6008 = vpop.f32.mrf.mxu0
    %6009 = vdwg.mxu0
    %v6010 = vmul.f32 %v5929, 0.5
    %v6011 = vtanh.pop %v6010
    %v6012 = vmul.f32 %v6011, 0.5
    %v6013 = vadd.f32 %v6012, 0.5
    %v6014 = vmul.f32 %v5955, 0.5
    %v6015 = vtanh.pop %v6014
    %v6016 = vmul.f32 %v6015, 0.5
    %v6017 = vadd.f32 %v6016, 0.5
    %v6018 = vtanh.pop %v5981
    %v6019 = vmul.f32 %v6007, 0.5
    %v6020 = vtanh.pop %v6019
    %v6021 = vmul.f32 %v6020, 0.5
    %v6022 = vadd.f32 %v6021, 0.5
    %v6023 = vmul.f32 %v6017, %v5231
    %v6024 = vmul.f32 %v6013, %v6018
    %v6025 = vadd.f32 %v6023, %v6024
    %v6026 = vtanh.pop %v6025
    %v6027 = vmul.f32 %v6022, %v6026
    %v6028 = vpack.c.bf16 %v6027, %v6027
    %6029 = vst [vmem:[#allocation4 + $0x4] sm:$0xf] %v6028
    %s6030 = scalar_lea.vmem [#allocation3], 48
    %6031 = vst [vmem:[%s6030] sm:$0xff] %v6027
    %s6032 = smul.u32 7, 4
    %s6033 = smul.addr %s6032, 8
    %s6034 = scalar_lea.vmem [#allocation2], %s6033
    %v6035 = vld [vmem:[%s6034] sm:$0xff]
    %v6036 = vld [vmem:[%s6034 + $0x8] sm:$0xff]
    %v6037 = vld [vmem:[%s6034 + $0x10] sm:$0xff]
    %v6038 = vld [vmem:[%s6034 + $0x18] sm:$0xff]
    %v6039 = vld [vmem:[#allocation4] sm:$0xf]
    %v6040 = vld [vmem:[#allocation10] sm:$0xff]
    %v6041 = vld [vmem:[#allocation10 + $0x8] sm:$0xff]
    %v6042 = vld [vmem:[#allocation10 + $0x10] sm:$0xff]
    %v6043 = vld [vmem:[#allocation10 + $0x18] sm:$0xff]
    %v6044 = vld [vmem:[#allocation10 + $0x20] sm:$0xff]
    %v6045 = vld [vmem:[#allocation10 + $0x28] sm:$0xff]
    %v6046 = vld [vmem:[#allocation10 + $0x30] sm:$0xff]
    %v6047 = vld [vmem:[#allocation10 + $0x38] sm:$0xff]
    %v6048 = vld [vmem:[#allocation10 + $0x40] sm:$0xff]
    %v6049 = vld [vmem:[#allocation10 + $0x48] sm:$0xff]
    %v6050 = vld [vmem:[#allocation10 + $0x50] sm:$0xff]
    %v6051 = vld [vmem:[#allocation10 + $0x58] sm:$0xff]
    %v6052 = vld [vmem:[#allocation10 + $0x60] sm:$0xff]
    %v6053 = vld [vmem:[#allocation10 + $0x68] sm:$0xff]
    %v6054 = vld [vmem:[#allocation10 + $0x70] sm:$0xff]
    %v6055 = vld [vmem:[#allocation10 + $0x78] sm:$0xff]
    %v6056 = vld [vmem:[#allocation10 + $0x80] sm:$0xff]
    %v6057 = vld [vmem:[#allocation10 + $0x88] sm:$0xff]
    %v6058 = vld [vmem:[#allocation10 + $0x90] sm:$0xff]
    %v6059 = vld [vmem:[#allocation10 + $0x98] sm:$0xff]
    %v6060 = vld [vmem:[#allocation10 + $0xa0] sm:$0xff]
    %v6061 = vld [vmem:[#allocation10 + $0xa8] sm:$0xff]
    %v6062 = vld [vmem:[#allocation10 + $0xb0] sm:$0xff]
    %v6063 = vld [vmem:[#allocation10 + $0xb8] sm:$0xff]
    %v6064 = vld [vmem:[#allocation10 + $0xc0] sm:$0xff]
    %v6065 = vld [vmem:[#allocation10 + $0xc8] sm:$0xff]
    %v6066 = vld [vmem:[#allocation10 + $0xd0] sm:$0xff]
    %v6067 = vld [vmem:[#allocation10 + $0xd8] sm:$0xff]
    %v6068 = vld [vmem:[#allocation10 + $0xe0] sm:$0xff]
    %v6069 = vld [vmem:[#allocation10 + $0xe8] sm:$0xff]
    %v6070 = vld [vmem:[#allocation10 + $0xf0] sm:$0xff]
    %v6071 = vld [vmem:[#allocation10 + $0xf8] sm:$0xff]
    %v6104 = vunpack.c.l.b16 %v6040
    %v6105 = vunpack.c.h.b16 %v6040
    %v6106 = vunpack.c.l.b16 %v6041
    %v6107 = vunpack.c.h.b16 %v6041
    %v6108 = vunpack.c.l.b16 %v6042
    %v6109 = vunpack.c.h.b16 %v6042
    %v6110 = vunpack.c.l.b16 %v6043
    %v6111 = vunpack.c.h.b16 %v6043
    %v6112 = vunpack.c.l.b16 %v6044
    %v6113 = vunpack.c.h.b16 %v6044
    %v6114 = vunpack.c.l.b16 %v6045
    %v6115 = vunpack.c.h.b16 %v6045
    %v6116 = vunpack.c.l.b16 %v6046
    %v6117 = vunpack.c.h.b16 %v6046
    %v6118 = vunpack.c.l.b16 %v6047
    %v6119 = vunpack.c.h.b16 %v6047
    %v6120 = vunpack.c.l.b16 %v6048
    %v6121 = vunpack.c.h.b16 %v6048
    %v6122 = vunpack.c.l.b16 %v6049
    %v6123 = vunpack.c.h.b16 %v6049
    %v6124 = vunpack.c.l.b16 %v6050
    %v6125 = vunpack.c.h.b16 %v6050
    %v6126 = vunpack.c.l.b16 %v6051
    %v6127 = vunpack.c.h.b16 %v6051
    %v6128 = vunpack.c.l.b16 %v6052
    %v6129 = vunpack.c.h.b16 %v6052
    %v6130 = vunpack.c.l.b16 %v6053
    %v6131 = vunpack.c.h.b16 %v6053
    %v6132 = vunpack.c.l.b16 %v6054
    %v6133 = vunpack.c.h.b16 %v6054
    %v6134 = vunpack.c.l.b16 %v6055
    %v6135 = vunpack.c.h.b16 %v6055
    %v6136 = vunpack.c.l.b16 %v6056
    %v6137 = vunpack.c.h.b16 %v6056
    %v6138 = vunpack.c.l.b16 %v6057
    %v6139 = vunpack.c.h.b16 %v6057
    %v6140 = vunpack.c.l.b16 %v6058
    %v6141 = vunpack.c.h.b16 %v6058
    %v6142 = vunpack.c.l.b16 %v6059
    %v6143 = vunpack.c.h.b16 %v6059
    %v6144 = vunpack.c.l.b16 %v6060
    %v6145 = vunpack.c.h.b16 %v6060
    %v6146 = vunpack.c.l.b16 %v6061
    %v6147 = vunpack.c.h.b16 %v6061
    %v6148 = vunpack.c.l.b16 %v6062
    %v6149 = vunpack.c.h.b16 %v6062
    %v6150 = vunpack.c.l.b16 %v6063
    %v6151 = vunpack.c.h.b16 %v6063
    %v6152 = vunpack.c.l.b16 %v6064
    %v6153 = vunpack.c.h.b16 %v6064
    %v6154 = vunpack.c.l.b16 %v6065
    %v6155 = vunpack.c.h.b16 %v6065
    %v6156 = vunpack.c.l.b16 %v6066
    %v6157 = vunpack.c.h.b16 %v6066
    %v6158 = vunpack.c.l.b16 %v6067
    %v6159 = vunpack.c.h.b16 %v6067
    %v6160 = vunpack.c.l.b16 %v6068
    %v6161 = vunpack.c.h.b16 %v6068
    %v6162 = vunpack.c.l.b16 %v6069
    %v6163 = vunpack.c.h.b16 %v6069
    %v6164 = vunpack.c.l.b16 %v6070
    %v6165 = vunpack.c.h.b16 %v6070
    %v6166 = vunpack.c.l.b16 %v6071
    %v6167 = vunpack.c.h.b16 %v6071
    %v6168 = vpack.c.b16 %v6108, %v6104
    %v6169 = vpack.c.b16 %v6109, %v6105
    %v6170 = vpack.c.b16 %v6110, %v6106
    %v6171 = vpack.c.b16 %v6111, %v6107
    %v6172 = vpack.c.b16 %v6116, %v6112
    %v6173 = vpack.c.b16 %v6117, %v6113
    %v6174 = vpack.c.b16 %v6118, %v6114
    %v6175 = vpack.c.b16 %v6119, %v6115
    %v6176 = vpack.c.b16 %v6124, %v6120
    %v6177 = vpack.c.b16 %v6125, %v6121
    %v6178 = vpack.c.b16 %v6126, %v6122
    %v6179 = vpack.c.b16 %v6127, %v6123
    %v6180 = vpack.c.b16 %v6132, %v6128
    %v6181 = vpack.c.b16 %v6133, %v6129
    %v6182 = vpack.c.b16 %v6134, %v6130
    %v6183 = vpack.c.b16 %v6135, %v6131
    %v6184 = vpack.c.b16 %v6140, %v6136
    %v6185 = vpack.c.b16 %v6141, %v6137
    %v6186 = vpack.c.b16 %v6142, %v6138
    %v6187 = vpack.c.b16 %v6143, %v6139
    %v6188 = vpack.c.b16 %v6148, %v6144
    %v6189 = vpack.c.b16 %v6149, %v6145
    %v6190 = vpack.c.b16 %v6150, %v6146
    %v6191 = vpack.c.b16 %v6151, %v6147
    %v6192 = vpack.c.b16 %v6156, %v6152
    %v6193 = vpack.c.b16 %v6157, %v6153
    %v6194 = vpack.c.b16 %v6158, %v6154
    %v6195 = vpack.c.b16 %v6159, %v6155
    %v6196 = vpack.c.b16 %v6164, %v6160
    %v6197 = vpack.c.b16 %v6165, %v6161
    %v6198 = vpack.c.b16 %v6166, %v6162
    %v6199 = vpack.c.b16 %v6167, %v6163
    %6232 = vmatpush.bf16.msra.mxu0 %v6196
    %6233 = vmatpush.bf16.msra.mxu0 %v6192
    %6234 = vmatpush.bf16.msra.mxu0 %v6188
    %6235 = vmatpush.bf16.msra.mxu0 %v6184
    %6236 = vmatpush.bf16.msra.mxu0 %v6180
    %6237 = vmatpush.bf16.msra.mxu0 %v6176
    %6238 = vmatpush.bf16.msra.mxu0 %v6172
    %6239 = vmatpush.bf16.msra.mxu0 %v6168
    %6240 = vmatmul.bf16.gmra.mxu0 %v6039
    %v6241 = vpop.f32.mrf.mxu0
    %v6242 = vadd.f32 0.0, %v6241
    %v6243 = vpop.f32.mrf.mxu0
    %6244 = vdwg.mxu0
    %6245 = vmatpush.bf16.msra.mxu0 %v6197
    %6246 = vmatpush.bf16.msra.mxu0 %v6193
    %6247 = vmatpush.bf16.msra.mxu0 %v6189
    %6248 = vmatpush.bf16.msra.mxu0 %v6185
    %6249 = vmatpush.bf16.msra.mxu0 %v6181
    %6250 = vmatpush.bf16.msra.mxu0 %v6177
    %6251 = vmatpush.bf16.msra.mxu0 %v6173
    %6252 = vmatpush.bf16.msra.mxu0 %v6169
    %6253 = vmatmul.bf16.gmra.mxu0 %v6039
    %v6254 = vpop.f32.mrf.mxu0
    %v6255 = vadd.f32 0.0, %v6254
    %v6256 = vpop.f32.mrf.mxu0
    %6257 = vdwg.mxu0
    %6258 = vmatpush.bf16.msra.mxu0 %v6198
    %6259 = vmatpush.bf16.msra.mxu0 %v6194
    %6260 = vmatpush.bf16.msra.mxu0 %v6190
    %6261 = vmatpush.bf16.msra.mxu0 %v6186
    %6262 = vmatpush.bf16.msra.mxu0 %v6182
    %6263 = vmatpush.bf16.msra.mxu0 %v6178
    %6264 = vmatpush.bf16.msra.mxu0 %v6174
    %6265 = vmatpush.bf16.msra.mxu0 %v6170
    %6266 = vmatmul.bf16.gmra.mxu0 %v6039
    %v6267 = vpop.f32.mrf.mxu0
    %v6268 = vadd.f32 0.0, %v6267
    %v6269 = vpop.f32.mrf.mxu0
    %6270 = vdwg.mxu0
    %6271 = vmatpush.bf16.msra.mxu0 %v6199
    %6272 = vmatpush.bf16.msra.mxu0 %v6195
    %6273 = vmatpush.bf16.msra.mxu0 %v6191
    %6274 = vmatpush.bf16.msra.mxu0 %v6187
    %6275 = vmatpush.bf16.msra.mxu0 %v6183
    %6276 = vmatpush.bf16.msra.mxu0 %v6179
    %6277 = vmatpush.bf16.msra.mxu0 %v6175
    %6278 = vmatpush.bf16.msra.mxu0 %v6171
    %6279 = vmatmul.bf16.gmra.mxu0 %v6039
    %v6280 = vpop.f32.mrf.mxu0
    %v6281 = vadd.f32 0.0, %v6280
    %v6282 = vpop.f32.mrf.mxu0
    %6283 = vdwg.mxu0
    %v6284 = vadd.f32 %v6035, %v6242
    %v6285 = vadd.f32 %v6036, %v6255
    %v6286 = vadd.f32 %v6037, %v6268
    %v6287 = vadd.f32 %v6038, %v6281
    %v6288 = vmul.f32 %v6284, 0.5
    %v6289 = vtanh.pop %v6288
    %v6290 = vmul.f32 %v6289, 0.5
    %v6291 = vadd.f32 %v6290, 0.5
    %v6292 = vmul.f32 %v6285, 0.5
    %v6293 = vtanh.pop %v6292
    %v6294 = vmul.f32 %v6293, 0.5
    %v6295 = vadd.f32 %v6294, 0.5
    %v6296 = vtanh.pop %v6286
    %v6297 = vmul.f32 %v6287, 0.5
    %v6298 = vtanh.pop %v6297
    %v6299 = vmul.f32 %v6298, 0.5
    %v6300 = vadd.f32 %v6299, 0.5
    %v6301 = vmul.f32 %v6295, %v5509
    %v6302 = vmul.f32 %v6291, %v6296
    %v6303 = vadd.f32 %v6301, %v6302
    %v6304 = vtanh.pop %v6303
    %v6305 = vmul.f32 %v6300, %v6304
    %v6306 = vpack.c.bf16 %v6305, %v6305
    %6307 = vst [vmem:[#allocation4] sm:$0xf] %v6306
    %v6308 = vld [vmem:[#allocation4] sm:$0xff]
    %v6309 = vld [vmem:[#allocation11] sm:$0xff]
    %v6310 = vld [vmem:[#allocation11 + $0x8] sm:$0xff]
    %v6311 = vld [vmem:[#allocation11 + $0x10] sm:$0xff]
    %v6312 = vld [vmem:[#allocation11 + $0x18] sm:$0xff]
    %v6313 = vld [vmem:[#allocation11 + $0x20] sm:$0xff]
    %v6314 = vld [vmem:[#allocation11 + $0x28] sm:$0xff]
    %v6315 = vld [vmem:[#allocation11 + $0x30] sm:$0xff]
    %v6316 = vld [vmem:[#allocation11 + $0x38] sm:$0xff]
    %v6317 = vld [vmem:[#allocation11 + $0x40] sm:$0xff]
    %v6318 = vld [vmem:[#allocation11 + $0x48] sm:$0xff]
    %v6319 = vld [vmem:[#allocation11 + $0x50] sm:$0xff]
    %v6320 = vld [vmem:[#allocation11 + $0x58] sm:$0xff]
    %v6321 = vld [vmem:[#allocation11 + $0x60] sm:$0xff]
    %v6322 = vld [vmem:[#allocation11 + $0x68] sm:$0xff]
    %v6323 = vld [vmem:[#allocation11 + $0x70] sm:$0xff]
    %v6324 = vld [vmem:[#allocation11 + $0x78] sm:$0xff]
    %v6325 = vld [vmem:[#allocation11 + $0x80] sm:$0xff]
    %v6326 = vld [vmem:[#allocation11 + $0x88] sm:$0xff]
    %v6327 = vld [vmem:[#allocation11 + $0x90] sm:$0xff]
    %v6328 = vld [vmem:[#allocation11 + $0x98] sm:$0xff]
    %v6329 = vld [vmem:[#allocation11 + $0xa0] sm:$0xff]
    %v6330 = vld [vmem:[#allocation11 + $0xa8] sm:$0xff]
    %v6331 = vld [vmem:[#allocation11 + $0xb0] sm:$0xff]
    %v6332 = vld [vmem:[#allocation11 + $0xb8] sm:$0xff]
    %v6333 = vld [vmem:[#allocation11 + $0xc0] sm:$0xff]
    %v6334 = vld [vmem:[#allocation11 + $0xc8] sm:$0xff]
    %v6335 = vld [vmem:[#allocation11 + $0xd0] sm:$0xff]
    %v6336 = vld [vmem:[#allocation11 + $0xd8] sm:$0xff]
    %v6337 = vld [vmem:[#allocation11 + $0xe0] sm:$0xff]
    %v6338 = vld [vmem:[#allocation11 + $0xe8] sm:$0xff]
    %v6339 = vld [vmem:[#allocation11 + $0xf0] sm:$0xff]
    %v6340 = vld [vmem:[#allocation11 + $0xf8] sm:$0xff]
    %v6341 = vld [vmem:[#allocation11 + $0x100] sm:$0xff]
    %v6342 = vld [vmem:[#allocation11 + $0x108] sm:$0xff]
    %v6343 = vld [vmem:[#allocation11 + $0x110] sm:$0xff]
    %v6344 = vld [vmem:[#allocation11 + $0x118] sm:$0xff]
    %v6345 = vld [vmem:[#allocation11 + $0x120] sm:$0xff]
    %v6346 = vld [vmem:[#allocation11 + $0x128] sm:$0xff]
    %v6347 = vld [vmem:[#allocation11 + $0x130] sm:$0xff]
    %v6348 = vld [vmem:[#allocation11 + $0x138] sm:$0xff]
    %v6349 = vld [vmem:[#allocation11 + $0x140] sm:$0xff]
    %v6350 = vld [vmem:[#allocation11 + $0x148] sm:$0xff]
    %v6351 = vld [vmem:[#allocation11 + $0x150] sm:$0xff]
    %v6352 = vld [vmem:[#allocation11 + $0x158] sm:$0xff]
    %v6353 = vld [vmem:[#allocation11 + $0x160] sm:$0xff]
    %v6354 = vld [vmem:[#allocation11 + $0x168] sm:$0xff]
    %v6355 = vld [vmem:[#allocation11 + $0x170] sm:$0xff]
    %v6356 = vld [vmem:[#allocation11 + $0x178] sm:$0xff]
    %v6357 = vld [vmem:[#allocation11 + $0x180] sm:$0xff]
    %v6358 = vld [vmem:[#allocation11 + $0x188] sm:$0xff]
    %v6359 = vld [vmem:[#allocation11 + $0x190] sm:$0xff]
    %v6360 = vld [vmem:[#allocation11 + $0x198] sm:$0xff]
    %v6361 = vld [vmem:[#allocation11 + $0x1a0] sm:$0xff]
    %v6362 = vld [vmem:[#allocation11 + $0x1a8] sm:$0xff]
    %v6363 = vld [vmem:[#allocation11 + $0x1b0] sm:$0xff]
    %v6364 = vld [vmem:[#allocation11 + $0x1b8] sm:$0xff]
    %v6365 = vld [vmem:[#allocation11 + $0x1c0] sm:$0xff]
    %v6366 = vld [vmem:[#allocation11 + $0x1c8] sm:$0xff]
    %v6367 = vld [vmem:[#allocation11 + $0x1d0] sm:$0xff]
    %v6368 = vld [vmem:[#allocation11 + $0x1d8] sm:$0xff]
    %v6369 = vld [vmem:[#allocation11 + $0x1e0] sm:$0xff]
    %v6370 = vld [vmem:[#allocation11 + $0x1e8] sm:$0xff]
    %v6371 = vld [vmem:[#allocation11 + $0x1f0] sm:$0xff]
    %v6372 = vld [vmem:[#allocation11 + $0x1f8] sm:$0xff]
    %v6374 = vunpack.c.l.b16 %v6308
    %v6375 = vunpack.c.h.b16 %v6308
    %v6376 = vpack.c.b16 %v6374, %v6374
    %v6377 = vpack.c.b16 %v6375, %v6375
    %v6444 = vunpack.c.l.b16 %v6309
    %v6445 = vunpack.c.h.b16 %v6309
    %v6446 = vunpack.c.l.b16 %v6310
    %v6447 = vunpack.c.h.b16 %v6310
    %v6448 = vunpack.c.l.b16 %v6311
    %v6449 = vunpack.c.h.b16 %v6311
    %v6450 = vunpack.c.l.b16 %v6312
    %v6451 = vunpack.c.h.b16 %v6312
    %v6452 = vunpack.c.l.b16 %v6313
    %v6453 = vunpack.c.h.b16 %v6313
    %v6454 = vunpack.c.l.b16 %v6314
    %v6455 = vunpack.c.h.b16 %v6314
    %v6456 = vunpack.c.l.b16 %v6315
    %v6457 = vunpack.c.h.b16 %v6315
    %v6458 = vunpack.c.l.b16 %v6316
    %v6459 = vunpack.c.h.b16 %v6316
    %v6460 = vunpack.c.l.b16 %v6317
    %v6461 = vunpack.c.h.b16 %v6317
    %v6462 = vunpack.c.l.b16 %v6318
    %v6463 = vunpack.c.h.b16 %v6318
    %v6464 = vunpack.c.l.b16 %v6319
    %v6465 = vunpack.c.h.b16 %v6319
    %v6466 = vunpack.c.l.b16 %v6320
    %v6467 = vunpack.c.h.b16 %v6320
    %v6468 = vunpack.c.l.b16 %v6321
    %v6469 = vunpack.c.h.b16 %v6321
    %v6470 = vunpack.c.l.b16 %v6322
    %v6471 = vunpack.c.h.b16 %v6322
    %v6472 = vunpack.c.l.b16 %v6323
    %v6473 = vunpack.c.h.b16 %v6323
    %v6474 = vunpack.c.l.b16 %v6324
    %v6475 = vunpack.c.h.b16 %v6324
    %v6476 = vunpack.c.l.b16 %v6325
    %v6477 = vunpack.c.h.b16 %v6325
    %v6478 = vunpack.c.l.b16 %v6326
    %v6479 = vunpack.c.h.b16 %v6326
    %v6480 = vunpack.c.l.b16 %v6327
    %v6481 = vunpack.c.h.b16 %v6327
    %v6482 = vunpack.c.l.b16 %v6328
    %v6483 = vunpack.c.h.b16 %v6328
    %v6484 = vunpack.c.l.b16 %v6329
    %v6485 = vunpack.c.h.b16 %v6329
    %v6486 = vunpack.c.l.b16 %v6330
    %v6487 = vunpack.c.h.b16 %v6330
    %v6488 = vunpack.c.l.b16 %v6331
    %v6489 = vunpack.c.h.b16 %v6331
    %v6490 = vunpack.c.l.b16 %v6332
    %v6491 = vunpack.c.h.b16 %v6332
    %v6492 = vunpack.c.l.b16 %v6333
    %v6493 = vunpack.c.h.b16 %v6333
    %v6494 = vunpack.c.l.b16 %v6334
    %v6495 = vunpack.c.h.b16 %v6334
    %v6496 = vunpack.c.l.b16 %v6335
    %v6497 = vunpack.c.h.b16 %v6335
    %v6498 = vunpack.c.l.b16 %v6336
    %v6499 = vunpack.c.h.b16 %v6336
    %v6500 = vunpack.c.l.b16 %v6337
    %v6501 = vunpack.c.h.b16 %v6337
    %v6502 = vunpack.c.l.b16 %v6338
    %v6503 = vunpack.c.h.b16 %v6338
    %v6504 = vunpack.c.l.b16 %v6339
    %v6505 = vunpack.c.h.b16 %v6339
    %v6506 = vunpack.c.l.b16 %v6340
    %v6507 = vunpack.c.h.b16 %v6340
    %v6508 = vunpack.c.l.b16 %v6341
    %v6509 = vunpack.c.h.b16 %v6341
    %v6510 = vunpack.c.l.b16 %v6342
    %v6511 = vunpack.c.h.b16 %v6342
    %v6512 = vunpack.c.l.b16 %v6343
    %v6513 = vunpack.c.h.b16 %v6343
    %v6514 = vunpack.c.l.b16 %v6344
    %v6515 = vunpack.c.h.b16 %v6344
    %v6516 = vunpack.c.l.b16 %v6345
    %v6517 = vunpack.c.h.b16 %v6345
    %v6518 = vunpack.c.l.b16 %v6346
    %v6519 = vunpack.c.h.b16 %v6346
    %v6520 = vunpack.c.l.b16 %v6347
    %v6521 = vunpack.c.h.b16 %v6347
    %v6522 = vunpack.c.l.b16 %v6348
    %v6523 = vunpack.c.h.b16 %v6348
    %v6524 = vunpack.c.l.b16 %v6349
    %v6525 = vunpack.c.h.b16 %v6349
    %v6526 = vunpack.c.l.b16 %v6350
    %v6527 = vunpack.c.h.b16 %v6350
    %v6528 = vunpack.c.l.b16 %v6351
    %v6529 = vunpack.c.h.b16 %v6351
    %v6530 = vunpack.c.l.b16 %v6352
    %v6531 = vunpack.c.h.b16 %v6352
    %v6532 = vunpack.c.l.b16 %v6353
    %v6533 = vunpack.c.h.b16 %v6353
    %v6534 = vunpack.c.l.b16 %v6354
    %v6535 = vunpack.c.h.b16 %v6354
    %v6536 = vunpack.c.l.b16 %v6355
    %v6537 = vunpack.c.h.b16 %v6355
    %v6538 = vunpack.c.l.b16 %v6356
    %v6539 = vunpack.c.h.b16 %v6356
    %v6540 = vunpack.c.l.b16 %v6357
    %v6541 = vunpack.c.h.b16 %v6357
    %v6542 = vunpack.c.l.b16 %v6358
    %v6543 = vunpack.c.h.b16 %v6358
    %v6544 = vunpack.c.l.b16 %v6359
    %v6545 = vunpack.c.h.b16 %v6359
    %v6546 = vunpack.c.l.b16 %v6360
    %v6547 = vunpack.c.h.b16 %v6360
    %v6548 = vunpack.c.l.b16 %v6361
    %v6549 = vunpack.c.h.b16 %v6361
    %v6550 = vunpack.c.l.b16 %v6362
    %v6551 = vunpack.c.h.b16 %v6362
    %v6552 = vunpack.c.l.b16 %v6363
    %v6553 = vunpack.c.h.b16 %v6363
    %v6554 = vunpack.c.l.b16 %v6364
    %v6555 = vunpack.c.h.b16 %v6364
    %v6556 = vunpack.c.l.b16 %v6365
    %v6557 = vunpack.c.h.b16 %v6365
    %v6558 = vunpack.c.l.b16 %v6366
    %v6559 = vunpack.c.h.b16 %v6366
    %v6560 = vunpack.c.l.b16 %v6367
    %v6561 = vunpack.c.h.b16 %v6367
    %v6562 = vunpack.c.l.b16 %v6368
    %v6563 = vunpack.c.h.b16 %v6368
    %v6564 = vunpack.c.l.b16 %v6369
    %v6565 = vunpack.c.h.b16 %v6369
    %v6566 = vunpack.c.l.b16 %v6370
    %v6567 = vunpack.c.h.b16 %v6370
    %v6568 = vunpack.c.l.b16 %v6371
    %v6569 = vunpack.c.h.b16 %v6371
    %v6570 = vunpack.c.l.b16 %v6372
    %v6571 = vunpack.c.h.b16 %v6372
    %v6572 = vpack.c.b16 %v6448, %v6444
    %v6573 = vpack.c.b16 %v6449, %v6445
    %v6574 = vpack.c.b16 %v6450, %v6446
    %v6575 = vpack.c.b16 %v6451, %v6447
    %v6576 = vpack.c.b16 %v6456, %v6452
    %v6577 = vpack.c.b16 %v6457, %v6453
    %v6578 = vpack.c.b16 %v6458, %v6454
    %v6579 = vpack.c.b16 %v6459, %v6455
    %v6580 = vpack.c.b16 %v6464, %v6460
    %v6581 = vpack.c.b16 %v6465, %v6461
    %v6582 = vpack.c.b16 %v6466, %v6462
    %v6583 = vpack.c.b16 %v6467, %v6463
    %v6584 = vpack.c.b16 %v6472, %v6468
    %v6585 = vpack.c.b16 %v6473, %v6469
    %v6586 = vpack.c.b16 %v6474, %v6470
    %v6587 = vpack.c.b16 %v6475, %v6471
    %v6588 = vpack.c.b16 %v6480, %v6476
    %v6589 = vpack.c.b16 %v6481, %v6477
    %v6590 = vpack.c.b16 %v6482, %v6478
    %v6591 = vpack.c.b16 %v6483, %v6479
    %v6592 = vpack.c.b16 %v6488, %v6484
    %v6593 = vpack.c.b16 %v6489, %v6485
    %v6594 = vpack.c.b16 %v6490, %v6486
    %v6595 = vpack.c.b16 %v6491, %v6487
    %v6596 = vpack.c.b16 %v6496, %v6492
    %v6597 = vpack.c.b16 %v6497, %v6493
    %v6598 = vpack.c.b16 %v6498, %v6494
    %v6599 = vpack.c.b16 %v6499, %v6495
    %v6600 = vpack.c.b16 %v6504, %v6500
    %v6601 = vpack.c.b16 %v6505, %v6501
    %v6602 = vpack.c.b16 %v6506, %v6502
    %v6603 = vpack.c.b16 %v6507, %v6503
    %v6604 = vpack.c.b16 %v6512, %v6508
    %v6605 = vpack.c.b16 %v6513, %v6509
    %v6606 = vpack.c.b16 %v6514, %v6510
    %v6607 = vpack.c.b16 %v6515, %v6511
    %v6608 = vpack.c.b16 %v6520, %v6516
    %v6609 = vpack.c.b16 %v6521, %v6517
    %v6610 = vpack.c.b16 %v6522, %v6518
    %v6611 = vpack.c.b16 %v6523, %v6519
    %v6612 = vpack.c.b16 %v6528, %v6524
    %v6613 = vpack.c.b16 %v6529, %v6525
    %v6614 = vpack.c.b16 %v6530, %v6526
    %v6615 = vpack.c.b16 %v6531, %v6527
    %v6616 = vpack.c.b16 %v6536, %v6532
    %v6617 = vpack.c.b16 %v6537, %v6533
    %v6618 = vpack.c.b16 %v6538, %v6534
    %v6619 = vpack.c.b16 %v6539, %v6535
    %v6620 = vpack.c.b16 %v6544, %v6540
    %v6621 = vpack.c.b16 %v6545, %v6541
    %v6622 = vpack.c.b16 %v6546, %v6542
    %v6623 = vpack.c.b16 %v6547, %v6543
    %v6624 = vpack.c.b16 %v6552, %v6548
    %v6625 = vpack.c.b16 %v6553, %v6549
    %v6626 = vpack.c.b16 %v6554, %v6550
    %v6627 = vpack.c.b16 %v6555, %v6551
    %v6628 = vpack.c.b16 %v6560, %v6556
    %v6629 = vpack.c.b16 %v6561, %v6557
    %v6630 = vpack.c.b16 %v6562, %v6558
    %v6631 = vpack.c.b16 %v6563, %v6559
    %v6632 = vpack.c.b16 %v6568, %v6564
    %v6633 = vpack.c.b16 %v6569, %v6565
    %v6634 = vpack.c.b16 %v6570, %v6566
    %v6635 = vpack.c.b16 %v6571, %v6567
    %6700 = vmatpush.bf16.msra.mxu0 %v6600
    %6701 = vmatpush.bf16.msra.mxu0 %v6596
    %6702 = vmatpush.bf16.msra.mxu0 %v6592
    %6703 = vmatpush.bf16.msra.mxu0 %v6588
    %6704 = vmatpush.bf16.msra.mxu0 %v6584
    %6705 = vmatpush.bf16.msra.mxu0 %v6580
    %6706 = vmatpush.bf16.msra.mxu0 %v6576
    %6707 = vmatpush.bf16.msra.mxu0 %v6572
    %6708 = vmatmul.bf16.gmra.mxu0 %v6376
    %v6709 = vpop.f32.mrf.mxu0
    %v6710 = vadd.f32 %v467, %v6709
    %v6711 = vpop.f32.mrf.mxu0
    %6712 = vdwg.mxu0
    %6713 = vmatpush.bf16.msra.mxu0 %v6632
    %6714 = vmatpush.bf16.msra.mxu0 %v6628
    %6715 = vmatpush.bf16.msra.mxu0 %v6624
    %6716 = vmatpush.bf16.msra.mxu0 %v6620
    %6717 = vmatpush.bf16.msra.mxu0 %v6616
    %6718 = vmatpush.bf16.msra.mxu0 %v6612
    %6719 = vmatpush.bf16.msra.mxu0 %v6608
    %6720 = vmatpush.bf16.msra.mxu0 %v6604
    %6721 = vmatmul.bf16.gmra.mxu0 %v6377
    %v6722 = vpop.f32.mrf.mxu0
    %v6723 = vadd.f32 %v6710, %v6722
    %v6724 = vpop.f32.mrf.mxu0
    %6725 = vdwg.mxu0
    %6726 = vmatpush.bf16.msra.mxu0 %v6601
    %6727 = vmatpush.bf16.msra.mxu0 %v6597
    %6728 = vmatpush.bf16.msra.mxu0 %v6593
    %6729 = vmatpush.bf16.msra.mxu0 %v6589
    %6730 = vmatpush.bf16.msra.mxu0 %v6585
    %6731 = vmatpush.bf16.msra.mxu0 %v6581
    %6732 = vmatpush.bf16.msra.mxu0 %v6577
    %6733 = vmatpush.bf16.msra.mxu0 %v6573
    %6734 = vmatmul.bf16.gmra.mxu0 %v6376
    %v6735 = vpop.f32.mrf.mxu0
    %v6736 = vadd.f32 %v468, %v6735
    %v6737 = vpop.f32.mrf.mxu0
    %6738 = vdwg.mxu0
    %6739 = vmatpush.bf16.msra.mxu0 %v6633
    %6740 = vmatpush.bf16.msra.mxu0 %v6629
    %6741 = vmatpush.bf16.msra.mxu0 %v6625
    %6742 = vmatpush.bf16.msra.mxu0 %v6621
    %6743 = vmatpush.bf16.msra.mxu0 %v6617
    %6744 = vmatpush.bf16.msra.mxu0 %v6613
    %6745 = vmatpush.bf16.msra.mxu0 %v6609
    %6746 = vmatpush.bf16.msra.mxu0 %v6605
    %6747 = vmatmul.bf16.gmra.mxu0 %v6377
    %v6748 = vpop.f32.mrf.mxu0
    %v6749 = vadd.f32 %v6736, %v6748
    %v6750 = vpop.f32.mrf.mxu0
    %6751 = vdwg.mxu0
    %6752 = vmatpush.bf16.msra.mxu0 %v6602
    %6753 = vmatpush.bf16.msra.mxu0 %v6598
    %6754 = vmatpush.bf16.msra.mxu0 %v6594
    %6755 = vmatpush.bf16.msra.mxu0 %v6590
    %6756 = vmatpush.bf16.msra.mxu0 %v6586
    %6757 = vmatpush.bf16.msra.mxu0 %v6582
    %6758 = vmatpush.bf16.msra.mxu0 %v6578
    %6759 = vmatpush.bf16.msra.mxu0 %v6574
    %6760 = vmatmul.bf16.gmra.mxu0 %v6376
    %v6761 = vpop.f32.mrf.mxu0
    %v6762 = vadd.f32 %v469, %v6761
    %v6763 = vpop.f32.mrf.mxu0
    %6764 = vdwg.mxu0
    %6765 = vmatpush.bf16.msra.mxu0 %v6634
    %6766 = vmatpush.bf16.msra.mxu0 %v6630
    %6767 = vmatpush.bf16.msra.mxu0 %v6626
    %6768 = vmatpush.bf16.msra.mxu0 %v6622
    %6769 = vmatpush.bf16.msra.mxu0 %v6618
    %6770 = vmatpush.bf16.msra.mxu0 %v6614
    %6771 = vmatpush.bf16.msra.mxu0 %v6610
    %6772 = vmatpush.bf16.msra.mxu0 %v6606
    %6773 = vmatmul.bf16.gmra.mxu0 %v6377
    %v6774 = vpop.f32.mrf.mxu0
    %v6775 = vadd.f32 %v6762, %v6774
    %v6776 = vpop.f32.mrf.mxu0
    %6777 = vdwg.mxu0
    %6778 = vmatpush.bf16.msra.mxu0 %v6603
    %6779 = vmatpush.bf16.msra.mxu0 %v6599
    %6780 = vmatpush.bf16.msra.mxu0 %v6595
    %6781 = vmatpush.bf16.msra.mxu0 %v6591
    %6782 = vmatpush.bf16.msra.mxu0 %v6587
    %6783 = vmatpush.bf16.msra.mxu0 %v6583
    %6784 = vmatpush.bf16.msra.mxu0 %v6579
    %6785 = vmatpush.bf16.msra.mxu0 %v6575
    %6786 = vmatmul.bf16.gmra.mxu0 %v6376
    %v6787 = vpop.f32.mrf.mxu0
    %v6788 = vadd.f32 %v470, %v6787
    %v6789 = vpop.f32.mrf.mxu0
    %6790 = vdwg.mxu0
    %6791 = vmatpush.bf16.msra.mxu0 %v6635
    %6792 = vmatpush.bf16.msra.mxu0 %v6631
    %6793 = vmatpush.bf16.msra.mxu0 %v6627
    %6794 = vmatpush.bf16.msra.mxu0 %v6623
    %6795 = vmatpush.bf16.msra.mxu0 %v6619
    %6796 = vmatpush.bf16.msra.mxu0 %v6615
    %6797 = vmatpush.bf16.msra.mxu0 %v6611
    %6798 = vmatpush.bf16.msra.mxu0 %v6607
    %6799 = vmatmul.bf16.gmra.mxu0 %v6377
    %v6800 = vpop.f32.mrf.mxu0
    %v6801 = vadd.f32 %v6788, %v6800
    %v6802 = vpop.f32.mrf.mxu0
    %6803 = vdwg.mxu0
    %v6804 = vmul.f32 %v6723, 0.5
    %v6805 = vtanh.pop %v6804
    %v6806 = vmul.f32 %v6805, 0.5
    %v6807 = vadd.f32 %v6806, 0.5
    %v6808 = vmul.f32 %v6749, 0.5
    %v6809 = vtanh.pop %v6808
    %v6810 = vmul.f32 %v6809, 0.5
    %v6811 = vadd.f32 %v6810, 0.5
    %v6812 = vtanh.pop %v6775
    %v6813 = vmul.f32 %v6801, 0.5
    %v6814 = vtanh.pop %v6813
    %v6815 = vmul.f32 %v6814, 0.5
    %v6816 = vadd.f32 %v6815, 0.5
    %v6817 = vmul.f32 %v6811, %v6025
    %v6818 = vmul.f32 %v6807, %v6812
    %v6819 = vadd.f32 %v6817, %v6818
    %v6820 = vtanh.pop %v6819
    %v6821 = vmul.f32 %v6816, %v6820
    %v6822 = vpack.c.bf16 %v6821, %v6821
    %6823 = vst [vmem:[#allocation4 + $0x4] sm:$0xf] %v6822
    %s6824 = scalar_lea.vmem [#allocation3], 56
    %6825 = vst [vmem:[%s6824] sm:$0xff] %v6821
    %s6826 = smul.u32 8, 4
    %s6827 = smul.addr %s6826, 8
    %s6828 = scalar_lea.vmem [#allocation2], %s6827
    %v6829 = vld [vmem:[%s6828] sm:$0xff]
    %v6830 = vld [vmem:[%s6828 + $0x8] sm:$0xff]
    %v6831 = vld [vmem:[%s6828 + $0x10] sm:$0xff]
    %v6832 = vld [vmem:[%s6828 + $0x18] sm:$0xff]
    %v6833 = vld [vmem:[#allocation4] sm:$0xf]
    %v6834 = vld [vmem:[#allocation10] sm:$0xff]
    %v6835 = vld [vmem:[#allocation10 + $0x8] sm:$0xff]
    %v6836 = vld [vmem:[#allocation10 + $0x10] sm:$0xff]
    %v6837 = vld [vmem:[#allocation10 + $0x18] sm:$0xff]
    %v6838 = vld [vmem:[#allocation10 + $0x20] sm:$0xff]
    %v6839 = vld [vmem:[#allocation10 + $0x28] sm:$0xff]
    %v6840 = vld [vmem:[#allocation10 + $0x30] sm:$0xff]
    %v6841 = vld [vmem:[#allocation10 + $0x38] sm:$0xff]
    %v6842 = vld [vmem:[#allocation10 + $0x40] sm:$0xff]
    %v6843 = vld [vmem:[#allocation10 + $0x48] sm:$0xff]
    %v6844 = vld [vmem:[#allocation10 + $0x50] sm:$0xff]
    %v6845 = vld [vmem:[#allocation10 + $0x58] sm:$0xff]
    %v6846 = vld [vmem:[#allocation10 + $0x60] sm:$0xff]
    %v6847 = vld [vmem:[#allocation10 + $0x68] sm:$0xff]
    %v6848 = vld [vmem:[#allocation10 + $0x70] sm:$0xff]
    %v6849 = vld [vmem:[#allocation10 + $0x78] sm:$0xff]
    %v6850 = vld [vmem:[#allocation10 + $0x80] sm:$0xff]
    %v6851 = vld [vmem:[#allocation10 + $0x88] sm:$0xff]
    %v6852 = vld [vmem:[#allocation10 + $0x90] sm:$0xff]
    %v6853 = vld [vmem:[#allocation10 + $0x98] sm:$0xff]
    %v6854 = vld [vmem:[#allocation10 + $0xa0] sm:$0xff]
    %v6855 = vld [vmem:[#allocation10 + $0xa8] sm:$0xff]
    %v6856 = vld [vmem:[#allocation10 + $0xb0] sm:$0xff]
    %v6857 = vld [vmem:[#allocation10 + $0xb8] sm:$0xff]
    %v6858 = vld [vmem:[#allocation10 + $0xc0] sm:$0xff]
    %v6859 = vld [vmem:[#allocation10 + $0xc8] sm:$0xff]
    %v6860 = vld [vmem:[#allocation10 + $0xd0] sm:$0xff]
    %v6861 = vld [vmem:[#allocation10 + $0xd8] sm:$0xff]
    %v6862 = vld [vmem:[#allocation10 + $0xe0] sm:$0xff]
    %v6863 = vld [vmem:[#allocation10 + $0xe8] sm:$0xff]
    %v6864 = vld [vmem:[#allocation10 + $0xf0] sm:$0xff]
    %v6865 = vld [vmem:[#allocation10 + $0xf8] sm:$0xff]
    %v6898 = vunpack.c.l.b16 %v6834
    %v6899 = vunpack.c.h.b16 %v6834
    %v6900 = vunpack.c.l.b16 %v6835
    %v6901 = vunpack.c.h.b16 %v6835
    %v6902 = vunpack.c.l.b16 %v6836
    %v6903 = vunpack.c.h.b16 %v6836
    %v6904 = vunpack.c.l.b16 %v6837
    %v6905 = vunpack.c.h.b16 %v6837
    %v6906 = vunpack.c.l.b16 %v6838
    %v6907 = vunpack.c.h.b16 %v6838
    %v6908 = vunpack.c.l.b16 %v6839
    %v6909 = vunpack.c.h.b16 %v6839
    %v6910 = vunpack.c.l.b16 %v6840
    %v6911 = vunpack.c.h.b16 %v6840
    %v6912 = vunpack.c.l.b16 %v6841
    %v6913 = vunpack.c.h.b16 %v6841
    %v6914 = vunpack.c.l.b16 %v6842
    %v6915 = vunpack.c.h.b16 %v6842
    %v6916 = vunpack.c.l.b16 %v6843
    %v6917 = vunpack.c.h.b16 %v6843
    %v6918 = vunpack.c.l.b16 %v6844
    %v6919 = vunpack.c.h.b16 %v6844
    %v6920 = vunpack.c.l.b16 %v6845
    %v6921 = vunpack.c.h.b16 %v6845
    %v6922 = vunpack.c.l.b16 %v6846
    %v6923 = vunpack.c.h.b16 %v6846
    %v6924 = vunpack.c.l.b16 %v6847
    %v6925 = vunpack.c.h.b16 %v6847
    %v6926 = vunpack.c.l.b16 %v6848
    %v6927 = vunpack.c.h.b16 %v6848
    %v6928 = vunpack.c.l.b16 %v6849
    %v6929 = vunpack.c.h.b16 %v6849
    %v6930 = vunpack.c.l.b16 %v6850
    %v6931 = vunpack.c.h.b16 %v6850
    %v6932 = vunpack.c.l.b16 %v6851
    %v6933 = vunpack.c.h.b16 %v6851
    %v6934 = vunpack.c.l.b16 %v6852
    %v6935 = vunpack.c.h.b16 %v6852
    %v6936 = vunpack.c.l.b16 %v6853
    %v6937 = vunpack.c.h.b16 %v6853
    %v6938 = vunpack.c.l.b16 %v6854
    %v6939 = vunpack.c.h.b16 %v6854
    %v6940 = vunpack.c.l.b16 %v6855
    %v6941 = vunpack.c.h.b16 %v6855
    %v6942 = vunpack.c.l.b16 %v6856
    %v6943 = vunpack.c.h.b16 %v6856
    %v6944 = vunpack.c.l.b16 %v6857
    %v6945 = vunpack.c.h.b16 %v6857
    %v6946 = vunpack.c.l.b16 %v6858
    %v6947 = vunpack.c.h.b16 %v6858
    %v6948 = vunpack.c.l.b16 %v6859
    %v6949 = vunpack.c.h.b16 %v6859
    %v6950 = vunpack.c.l.b16 %v6860
    %v6951 = vunpack.c.h.b16 %v6860
    %v6952 = vunpack.c.l.b16 %v6861
    %v6953 = vunpack.c.h.b16 %v6861
    %v6954 = vunpack.c.l.b16 %v6862
    %v6955 = vunpack.c.h.b16 %v6862
    %v6956 = vunpack.c.l.b16 %v6863
    %v6957 = vunpack.c.h.b16 %v6863
    %v6958 = vunpack.c.l.b16 %v6864
    %v6959 = vunpack.c.h.b16 %v6864
    %v6960 = vunpack.c.l.b16 %v6865
    %v6961 = vunpack.c.h.b16 %v6865
    %v6962 = vpack.c.b16 %v6902, %v6898
    %v6963 = vpack.c.b16 %v6903, %v6899
    %v6964 = vpack.c.b16 %v6904, %v6900
    %v6965 = vpack.c.b16 %v6905, %v6901
    %v6966 = vpack.c.b16 %v6910, %v6906
    %v6967 = vpack.c.b16 %v6911, %v6907
    %v6968 = vpack.c.b16 %v6912, %v6908
    %v6969 = vpack.c.b16 %v6913, %v6909
    %v6970 = vpack.c.b16 %v6918, %v6914
    %v6971 = vpack.c.b16 %v6919, %v6915
    %v6972 = vpack.c.b16 %v6920, %v6916
    %v6973 = vpack.c.b16 %v6921, %v6917
    %v6974 = vpack.c.b16 %v6926, %v6922
    %v6975 = vpack.c.b16 %v6927, %v6923
    %v6976 = vpack.c.b16 %v6928, %v6924
    %v6977 = vpack.c.b16 %v6929, %v6925
    %v6978 = vpack.c.b16 %v6934, %v6930
    %v6979 = vpack.c.b16 %v6935, %v6931
    %v6980 = vpack.c.b16 %v6936, %v6932
    %v6981 = vpack.c.b16 %v6937, %v6933
    %v6982 = vpack.c.b16 %v6942, %v6938
    %v6983 = vpack.c.b16 %v6943, %v6939
    %v6984 = vpack.c.b16 %v6944, %v6940
    %v6985 = vpack.c.b16 %v6945, %v6941
    %v6986 = vpack.c.b16 %v6950, %v6946
    %v6987 = vpack.c.b16 %v6951, %v6947
    %v6988 = vpack.c.b16 %v6952, %v6948
    %v6989 = vpack.c.b16 %v6953, %v6949
    %v6990 = vpack.c.b16 %v6958, %v6954
    %v6991 = vpack.c.b16 %v6959, %v6955
    %v6992 = vpack.c.b16 %v6960, %v6956
    %v6993 = vpack.c.b16 %v6961, %v6957
    %7026 = vmatpush.bf16.msra.mxu0 %v6990
    %7027 = vmatpush.bf16.msra.mxu0 %v6986
    %7028 = vmatpush.bf16.msra.mxu0 %v6982
    %7029 = vmatpush.bf16.msra.mxu0 %v6978
    %7030 = vmatpush.bf16.msra.mxu0 %v6974
    %7031 = vmatpush.bf16.msra.mxu0 %v6970
    %7032 = vmatpush.bf16.msra.mxu0 %v6966
    %7033 = vmatpush.bf16.msra.mxu0 %v6962
    %7034 = vmatmul.bf16.gmra.mxu0 %v6833
    %v7035 = vpop.f32.mrf.mxu0
    %v7036 = vadd.f32 0.0, %v7035
    %v7037 = vpop.f32.mrf.mxu0
    %7038 = vdwg.mxu0
    %7039 = vmatpush.bf16.msra.mxu0 %v6991
    %7040 = vmatpush.bf16.msra.mxu0 %v6987
    %7041 = vmatpush.bf16.msra.mxu0 %v6983
    %7042 = vmatpush.bf16.msra.mxu0 %v6979
    %7043 = vmatpush.bf16.msra.mxu0 %v6975
    %7044 = vmatpush.bf16.msra.mxu0 %v6971
    %7045 = vmatpush.bf16.msra.mxu0 %v6967
    %7046 = vmatpush.bf16.msra.mxu0 %v6963
    %7047 = vmatmul.bf16.gmra.mxu0 %v6833
    %v7048 = vpop.f32.mrf.mxu0
    %v7049 = vadd.f32 0.0, %v7048
    %v7050 = vpop.f32.mrf.mxu0
    %7051 = vdwg.mxu0
    %7052 = vmatpush.bf16.msra.mxu0 %v6992
    %7053 = vmatpush.bf16.msra.mxu0 %v6988
    %7054 = vmatpush.bf16.msra.mxu0 %v6984
    %7055 = vmatpush.bf16.msra.mxu0 %v6980
    %7056 = vmatpush.bf16.msra.mxu0 %v6976
    %7057 = vmatpush.bf16.msra.mxu0 %v6972
    %7058 = vmatpush.bf16.msra.mxu0 %v6968
    %7059 = vmatpush.bf16.msra.mxu0 %v6964
    %7060 = vmatmul.bf16.gmra.mxu0 %v6833
    %v7061 = vpop.f32.mrf.mxu0
    %v7062 = vadd.f32 0.0, %v7061
    %v7063 = vpop.f32.mrf.mxu0
    %7064 = vdwg.mxu0
    %7065 = vmatpush.bf16.msra.mxu0 %v6993
    %7066 = vmatpush.bf16.msra.mxu0 %v6989
    %7067 = vmatpush.bf16.msra.mxu0 %v6985
    %7068 = vmatpush.bf16.msra.mxu0 %v6981
    %7069 = vmatpush.bf16.msra.mxu0 %v6977
    %7070 = vmatpush.bf16.msra.mxu0 %v6973
    %7071 = vmatpush.bf16.msra.mxu0 %v6969
    %7072 = vmatpush.bf16.msra.mxu0 %v6965
    %7073 = vmatmul.bf16.gmra.mxu0 %v6833
    %v7074 = vpop.f32.mrf.mxu0
    %v7075 = vadd.f32 0.0, %v7074
    %v7076 = vpop.f32.mrf.mxu0
    %7077 = vdwg.mxu0
    %v7078 = vadd.f32 %v6829, %v7036
    %v7079 = vadd.f32 %v6830, %v7049
    %v7080 = vadd.f32 %v6831, %v7062
    %v7081 = vadd.f32 %v6832, %v7075
    %v7082 = vmul.f32 %v7078, 0.5
    %v7083 = vtanh.pop %v7082
    %v7084 = vmul.f32 %v7083, 0.5
    %v7085 = vadd.f32 %v7084, 0.5
    %v7086 = vmul.f32 %v7079, 0.5
    %v7087 = vtanh.pop %v7086
    %v7088 = vmul.f32 %v7087, 0.5
    %v7089 = vadd.f32 %v7088, 0.5
    %v7090 = vtanh.pop %v7080
    %v7091 = vmul.f32 %v7081, 0.5
    %v7092 = vtanh.pop %v7091
    %v7093 = vmul.f32 %v7092, 0.5
    %v7094 = vadd.f32 %v7093, 0.5
    %v7095 = vmul.f32 %v7089, %v6303
    %v7096 = vmul.f32 %v7085, %v7090
    %v7097 = vadd.f32 %v7095, %v7096
    %v7098 = vtanh.pop %v7097
    %v7099 = vmul.f32 %v7094, %v7098
    %v7100 = vpack.c.bf16 %v7099, %v7099
    %7101 = vst [vmem:[#allocation4] sm:$0xf] %v7100
    %v7102 = vld [vmem:[#allocation4] sm:$0xff]
    %v7103 = vld [vmem:[#allocation11] sm:$0xff]
    %v7104 = vld [vmem:[#allocation11 + $0x8] sm:$0xff]
    %v7105 = vld [vmem:[#allocation11 + $0x10] sm:$0xff]
    %v7106 = vld [vmem:[#allocation11 + $0x18] sm:$0xff]
    %v7107 = vld [vmem:[#allocation11 + $0x20] sm:$0xff]
    %v7108 = vld [vmem:[#allocation11 + $0x28] sm:$0xff]
    %v7109 = vld [vmem:[#allocation11 + $0x30] sm:$0xff]
    %v7110 = vld [vmem:[#allocation11 + $0x38] sm:$0xff]
    %v7111 = vld [vmem:[#allocation11 + $0x40] sm:$0xff]
    %v7112 = vld [vmem:[#allocation11 + $0x48] sm:$0xff]
    %v7113 = vld [vmem:[#allocation11 + $0x50] sm:$0xff]
    %v7114 = vld [vmem:[#allocation11 + $0x58] sm:$0xff]
    %v7115 = vld [vmem:[#allocation11 + $0x60] sm:$0xff]
    %v7116 = vld [vmem:[#allocation11 + $0x68] sm:$0xff]
    %v7117 = vld [vmem:[#allocation11 + $0x70] sm:$0xff]
    %v7118 = vld [vmem:[#allocation11 + $0x78] sm:$0xff]
    %v7119 = vld [vmem:[#allocation11 + $0x80] sm:$0xff]
    %v7120 = vld [vmem:[#allocation11 + $0x88] sm:$0xff]
    %v7121 = vld [vmem:[#allocation11 + $0x90] sm:$0xff]
    %v7122 = vld [vmem:[#allocation11 + $0x98] sm:$0xff]
    %v7123 = vld [vmem:[#allocation11 + $0xa0] sm:$0xff]
    %v7124 = vld [vmem:[#allocation11 + $0xa8] sm:$0xff]
    %v7125 = vld [vmem:[#allocation11 + $0xb0] sm:$0xff]
    %v7126 = vld [vmem:[#allocation11 + $0xb8] sm:$0xff]
    %v7127 = vld [vmem:[#allocation11 + $0xc0] sm:$0xff]
    %v7128 = vld [vmem:[#allocation11 + $0xc8] sm:$0xff]
    %v7129 = vld [vmem:[#allocation11 + $0xd0] sm:$0xff]
    %v7130 = vld [vmem:[#allocation11 + $0xd8] sm:$0xff]
    %v7131 = vld [vmem:[#allocation11 + $0xe0] sm:$0xff]
    %v7132 = vld [vmem:[#allocation11 + $0xe8] sm:$0xff]
    %v7133 = vld [vmem:[#allocation11 + $0xf0] sm:$0xff]
    %v7134 = vld [vmem:[#allocation11 + $0xf8] sm:$0xff]
    %v7135 = vld [vmem:[#allocation11 + $0x100] sm:$0xff]
    %v7136 = vld [vmem:[#allocation11 + $0x108] sm:$0xff]
    %v7137 = vld [vmem:[#allocation11 + $0x110] sm:$0xff]
    %v7138 = vld [vmem:[#allocation11 + $0x118] sm:$0xff]
    %v7139 = vld [vmem:[#allocation11 + $0x120] sm:$0xff]
    %v7140 = vld [vmem:[#allocation11 + $0x128] sm:$0xff]
    %v7141 = vld [vmem:[#allocation11 + $0x130] sm:$0xff]
    %v7142 = vld [vmem:[#allocation11 + $0x138] sm:$0xff]
    %v7143 = vld [vmem:[#allocation11 + $0x140] sm:$0xff]
    %v7144 = vld [vmem:[#allocation11 + $0x148] sm:$0xff]
    %v7145 = vld [vmem:[#allocation11 + $0x150] sm:$0xff]
    %v7146 = vld [vmem:[#allocation11 + $0x158] sm:$0xff]
    %v7147 = vld [vmem:[#allocation11 + $0x160] sm:$0xff]
    %v7148 = vld [vmem:[#allocation11 + $0x168] sm:$0xff]
    %v7149 = vld [vmem:[#allocation11 + $0x170] sm:$0xff]
    %v7150 = vld [vmem:[#allocation11 + $0x178] sm:$0xff]
    %v7151 = vld [vmem:[#allocation11 + $0x180] sm:$0xff]
    %v7152 = vld [vmem:[#allocation11 + $0x188] sm:$0xff]
    %v7153 = vld [vmem:[#allocation11 + $0x190] sm:$0xff]
    %v7154 = vld [vmem:[#allocation11 + $0x198] sm:$0xff]
    %v7155 = vld [vmem:[#allocation11 + $0x1a0] sm:$0xff]
    %v7156 = vld [vmem:[#allocation11 + $0x1a8] sm:$0xff]
    %v7157 = vld [vmem:[#allocation11 + $0x1b0] sm:$0xff]
    %v7158 = vld [vmem:[#allocation11 + $0x1b8] sm:$0xff]
    %v7159 = vld [vmem:[#allocation11 + $0x1c0] sm:$0xff]
    %v7160 = vld [vmem:[#allocation11 + $0x1c8] sm:$0xff]
    %v7161 = vld [vmem:[#allocation11 + $0x1d0] sm:$0xff]
    %v7162 = vld [vmem:[#allocation11 + $0x1d8] sm:$0xff]
    %v7163 = vld [vmem:[#allocation11 + $0x1e0] sm:$0xff]
    %v7164 = vld [vmem:[#allocation11 + $0x1e8] sm:$0xff]
    %v7165 = vld [vmem:[#allocation11 + $0x1f0] sm:$0xff]
    %v7166 = vld [vmem:[#allocation11 + $0x1f8] sm:$0xff]
    %v7168 = vunpack.c.l.b16 %v7102
    %v7169 = vunpack.c.h.b16 %v7102
    %v7170 = vpack.c.b16 %v7168, %v7168
    %v7171 = vpack.c.b16 %v7169, %v7169
    %v7238 = vunpack.c.l.b16 %v7103
    %v7239 = vunpack.c.h.b16 %v7103
    %v7240 = vunpack.c.l.b16 %v7104
    %v7241 = vunpack.c.h.b16 %v7104
    %v7242 = vunpack.c.l.b16 %v7105
    %v7243 = vunpack.c.h.b16 %v7105
    %v7244 = vunpack.c.l.b16 %v7106
    %v7245 = vunpack.c.h.b16 %v7106
    %v7246 = vunpack.c.l.b16 %v7107
    %v7247 = vunpack.c.h.b16 %v7107
    %v7248 = vunpack.c.l.b16 %v7108
    %v7249 = vunpack.c.h.b16 %v7108
    %v7250 = vunpack.c.l.b16 %v7109
    %v7251 = vunpack.c.h.b16 %v7109
    %v7252 = vunpack.c.l.b16 %v7110
    %v7253 = vunpack.c.h.b16 %v7110
    %v7254 = vunpack.c.l.b16 %v7111
    %v7255 = vunpack.c.h.b16 %v7111
    %v7256 = vunpack.c.l.b16 %v7112
    %v7257 = vunpack.c.h.b16 %v7112
    %v7258 = vunpack.c.l.b16 %v7113
    %v7259 = vunpack.c.h.b16 %v7113
    %v7260 = vunpack.c.l.b16 %v7114
    %v7261 = vunpack.c.h.b16 %v7114
    %v7262 = vunpack.c.l.b16 %v7115
    %v7263 = vunpack.c.h.b16 %v7115
    %v7264 = vunpack.c.l.b16 %v7116
    %v7265 = vunpack.c.h.b16 %v7116
    %v7266 = vunpack.c.l.b16 %v7117
    %v7267 = vunpack.c.h.b16 %v7117
    %v7268 = vunpack.c.l.b16 %v7118
    %v7269 = vunpack.c.h.b16 %v7118
    %v7270 = vunpack.c.l.b16 %v7119
    %v7271 = vunpack.c.h.b16 %v7119
    %v7272 = vunpack.c.l.b16 %v7120
    %v7273 = vunpack.c.h.b16 %v7120
    %v7274 = vunpack.c.l.b16 %v7121
    %v7275 = vunpack.c.h.b16 %v7121
    %v7276 = vunpack.c.l.b16 %v7122
    %v7277 = vunpack.c.h.b16 %v7122
    %v7278 = vunpack.c.l.b16 %v7123
    %v7279 = vunpack.c.h.b16 %v7123
    %v7280 = vunpack.c.l.b16 %v7124
    %v7281 = vunpack.c.h.b16 %v7124
    %v7282 = vunpack.c.l.b16 %v7125
    %v7283 = vunpack.c.h.b16 %v7125
    %v7284 = vunpack.c.l.b16 %v7126
    %v7285 = vunpack.c.h.b16 %v7126
    %v7286 = vunpack.c.l.b16 %v7127
    %v7287 = vunpack.c.h.b16 %v7127
    %v7288 = vunpack.c.l.b16 %v7128
    %v7289 = vunpack.c.h.b16 %v7128
    %v7290 = vunpack.c.l.b16 %v7129
    %v7291 = vunpack.c.h.b16 %v7129
    %v7292 = vunpack.c.l.b16 %v7130
    %v7293 = vunpack.c.h.b16 %v7130
    %v7294 = vunpack.c.l.b16 %v7131
    %v7295 = vunpack.c.h.b16 %v7131
    %v7296 = vunpack.c.l.b16 %v7132
    %v7297 = vunpack.c.h.b16 %v7132
    %v7298 = vunpack.c.l.b16 %v7133
    %v7299 = vunpack.c.h.b16 %v7133
    %v7300 = vunpack.c.l.b16 %v7134
    %v7301 = vunpack.c.h.b16 %v7134
    %v7302 = vunpack.c.l.b16 %v7135
    %v7303 = vunpack.c.h.b16 %v7135
    %v7304 = vunpack.c.l.b16 %v7136
    %v7305 = vunpack.c.h.b16 %v7136
    %v7306 = vunpack.c.l.b16 %v7137
    %v7307 = vunpack.c.h.b16 %v7137
    %v7308 = vunpack.c.l.b16 %v7138
    %v7309 = vunpack.c.h.b16 %v7138
    %v7310 = vunpack.c.l.b16 %v7139
    %v7311 = vunpack.c.h.b16 %v7139
    %v7312 = vunpack.c.l.b16 %v7140
    %v7313 = vunpack.c.h.b16 %v7140
    %v7314 = vunpack.c.l.b16 %v7141
    %v7315 = vunpack.c.h.b16 %v7141
    %v7316 = vunpack.c.l.b16 %v7142
    %v7317 = vunpack.c.h.b16 %v7142
    %v7318 = vunpack.c.l.b16 %v7143
    %v7319 = vunpack.c.h.b16 %v7143
    %v7320 = vunpack.c.l.b16 %v7144
    %v7321 = vunpack.c.h.b16 %v7144
    %v7322 = vunpack.c.l.b16 %v7145
    %v7323 = vunpack.c.h.b16 %v7145
    %v7324 = vunpack.c.l.b16 %v7146
    %v7325 = vunpack.c.h.b16 %v7146
    %v7326 = vunpack.c.l.b16 %v7147
    %v7327 = vunpack.c.h.b16 %v7147
    %v7328 = vunpack.c.l.b16 %v7148
    %v7329 = vunpack.c.h.b16 %v7148
    %v7330 = vunpack.c.l.b16 %v7149
    %v7331 = vunpack.c.h.b16 %v7149
    %v7332 = vunpack.c.l.b16 %v7150
    %v7333 = vunpack.c.h.b16 %v7150
    %v7334 = vunpack.c.l.b16 %v7151
    %v7335 = vunpack.c.h.b16 %v7151
    %v7336 = vunpack.c.l.b16 %v7152
    %v7337 = vunpack.c.h.b16 %v7152
    %v7338 = vunpack.c.l.b16 %v7153
    %v7339 = vunpack.c.h.b16 %v7153
    %v7340 = vunpack.c.l.b16 %v7154
    %v7341 = vunpack.c.h.b16 %v7154
    %v7342 = vunpack.c.l.b16 %v7155
    %v7343 = vunpack.c.h.b16 %v7155
    %v7344 = vunpack.c.l.b16 %v7156
    %v7345 = vunpack.c.h.b16 %v7156
    %v7346 = vunpack.c.l.b16 %v7157
    %v7347 = vunpack.c.h.b16 %v7157
    %v7348 = vunpack.c.l.b16 %v7158
    %v7349 = vunpack.c.h.b16 %v7158
    %v7350 = vunpack.c.l.b16 %v7159
    %v7351 = vunpack.c.h.b16 %v7159
    %v7352 = vunpack.c.l.b16 %v7160
    %v7353 = vunpack.c.h.b16 %v7160
    %v7354 = vunpack.c.l.b16 %v7161
    %v7355 = vunpack.c.h.b16 %v7161
    %v7356 = vunpack.c.l.b16 %v7162
    %v7357 = vunpack.c.h.b16 %v7162
    %v7358 = vunpack.c.l.b16 %v7163
    %v7359 = vunpack.c.h.b16 %v7163
    %v7360 = vunpack.c.l.b16 %v7164
    %v7361 = vunpack.c.h.b16 %v7164
    %v7362 = vunpack.c.l.b16 %v7165
    %v7363 = vunpack.c.h.b16 %v7165
    %v7364 = vunpack.c.l.b16 %v7166
    %v7365 = vunpack.c.h.b16 %v7166
    %v7366 = vpack.c.b16 %v7242, %v7238
    %v7367 = vpack.c.b16 %v7243, %v7239
    %v7368 = vpack.c.b16 %v7244, %v7240
    %v7369 = vpack.c.b16 %v7245, %v7241
    %v7370 = vpack.c.b16 %v7250, %v7246
    %v7371 = vpack.c.b16 %v7251, %v7247
    %v7372 = vpack.c.b16 %v7252, %v7248
    %v7373 = vpack.c.b16 %v7253, %v7249
    %v7374 = vpack.c.b16 %v7258, %v7254
    %v7375 = vpack.c.b16 %v7259, %v7255
    %v7376 = vpack.c.b16 %v7260, %v7256
    %v7377 = vpack.c.b16 %v7261, %v7257
    %v7378 = vpack.c.b16 %v7266, %v7262
    %v7379 = vpack.c.b16 %v7267, %v7263
    %v7380 = vpack.c.b16 %v7268, %v7264
    %v7381 = vpack.c.b16 %v7269, %v7265
    %v7382 = vpack.c.b16 %v7274, %v7270
    %v7383 = vpack.c.b16 %v7275, %v7271
    %v7384 = vpack.c.b16 %v7276, %v7272
    %v7385 = vpack.c.b16 %v7277, %v7273
    %v7386 = vpack.c.b16 %v7282, %v7278
    %v7387 = vpack.c.b16 %v7283, %v7279
    %v7388 = vpack.c.b16 %v7284, %v7280
    %v7389 = vpack.c.b16 %v7285, %v7281
    %v7390 = vpack.c.b16 %v7290, %v7286
    %v7391 = vpack.c.b16 %v7291, %v7287
    %v7392 = vpack.c.b16 %v7292, %v7288
    %v7393 = vpack.c.b16 %v7293, %v7289
    %v7394 = vpack.c.b16 %v7298, %v7294
    %v7395 = vpack.c.b16 %v7299, %v7295
    %v7396 = vpack.c.b16 %v7300, %v7296
    %v7397 = vpack.c.b16 %v7301, %v7297
    %v7398 = vpack.c.b16 %v7306, %v7302
    %v7399 = vpack.c.b16 %v7307, %v7303
    %v7400 = vpack.c.b16 %v7308, %v7304
    %v7401 = vpack.c.b16 %v7309, %v7305
    %v7402 = vpack.c.b16 %v7314, %v7310
    %v7403 = vpack.c.b16 %v7315, %v7311
    %v7404 = vpack.c.b16 %v7316, %v7312
    %v7405 = vpack.c.b16 %v7317, %v7313
    %v7406 = vpack.c.b16 %v7322, %v7318
    %v7407 = vpack.c.b16 %v7323, %v7319
    %v7408 = vpack.c.b16 %v7324, %v7320
    %v7409 = vpack.c.b16 %v7325, %v7321
    %v7410 = vpack.c.b16 %v7330, %v7326
    %v7411 = vpack.c.b16 %v7331, %v7327
    %v7412 = vpack.c.b16 %v7332, %v7328
    %v7413 = vpack.c.b16 %v7333, %v7329
    %v7414 = vpack.c.b16 %v7338, %v7334
    %v7415 = vpack.c.b16 %v7339, %v7335
    %v7416 = vpack.c.b16 %v7340, %v7336
    %v7417 = vpack.c.b16 %v7341, %v7337
    %v7418 = vpack.c.b16 %v7346, %v7342
    %v7419 = vpack.c.b16 %v7347, %v7343
    %v7420 = vpack.c.b16 %v7348, %v7344
    %v7421 = vpack.c.b16 %v7349, %v7345
    %v7422 = vpack.c.b16 %v7354, %v7350
    %v7423 = vpack.c.b16 %v7355, %v7351
    %v7424 = vpack.c.b16 %v7356, %v7352
    %v7425 = vpack.c.b16 %v7357, %v7353
    %v7426 = vpack.c.b16 %v7362, %v7358
    %v7427 = vpack.c.b16 %v7363, %v7359
    %v7428 = vpack.c.b16 %v7364, %v7360
    %v7429 = vpack.c.b16 %v7365, %v7361
    %7494 = vmatpush.bf16.msra.mxu0 %v7394
    %7495 = vmatpush.bf16.msra.mxu0 %v7390
    %7496 = vmatpush.bf16.msra.mxu0 %v7386
    %7497 = vmatpush.bf16.msra.mxu0 %v7382
    %7498 = vmatpush.bf16.msra.mxu0 %v7378
    %7499 = vmatpush.bf16.msra.mxu0 %v7374
    %7500 = vmatpush.bf16.msra.mxu0 %v7370
    %7501 = vmatpush.bf16.msra.mxu0 %v7366
    %7502 = vmatmul.bf16.gmra.mxu0 %v7170
    %v7503 = vpop.f32.mrf.mxu0
    %v7504 = vadd.f32 %v467, %v7503
    %v7505 = vpop.f32.mrf.mxu0
    %7506 = vdwg.mxu0
    %7507 = vmatpush.bf16.msra.mxu0 %v7426
    %7508 = vmatpush.bf16.msra.mxu0 %v7422
    %7509 = vmatpush.bf16.msra.mxu0 %v7418
    %7510 = vmatpush.bf16.msra.mxu0 %v7414
    %7511 = vmatpush.bf16.msra.mxu0 %v7410
    %7512 = vmatpush.bf16.msra.mxu0 %v7406
    %7513 = vmatpush.bf16.msra.mxu0 %v7402
    %7514 = vmatpush.bf16.msra.mxu0 %v7398
    %7515 = vmatmul.bf16.gmra.mxu0 %v7171
    %v7516 = vpop.f32.mrf.mxu0
    %v7517 = vadd.f32 %v7504, %v7516
    %v7518 = vpop.f32.mrf.mxu0
    %7519 = vdwg.mxu0
    %7520 = vmatpush.bf16.msra.mxu0 %v7395
    %7521 = vmatpush.bf16.msra.mxu0 %v7391
    %7522 = vmatpush.bf16.msra.mxu0 %v7387
    %7523 = vmatpush.bf16.msra.mxu0 %v7383
    %7524 = vmatpush.bf16.msra.mxu0 %v7379
    %7525 = vmatpush.bf16.msra.mxu0 %v7375
    %7526 = vmatpush.bf16.msra.mxu0 %v7371
    %7527 = vmatpush.bf16.msra.mxu0 %v7367
    %7528 = vmatmul.bf16.gmra.mxu0 %v7170
    %v7529 = vpop.f32.mrf.mxu0
    %v7530 = vadd.f32 %v468, %v7529
    %v7531 = vpop.f32.mrf.mxu0
    %7532 = vdwg.mxu0
    %7533 = vmatpush.bf16.msra.mxu0 %v7427
    %7534 = vmatpush.bf16.msra.mxu0 %v7423
    %7535 = vmatpush.bf16.msra.mxu0 %v7419
    %7536 = vmatpush.bf16.msra.mxu0 %v7415
    %7537 = vmatpush.bf16.msra.mxu0 %v7411
    %7538 = vmatpush.bf16.msra.mxu0 %v7407
    %7539 = vmatpush.bf16.msra.mxu0 %v7403
    %7540 = vmatpush.bf16.msra.mxu0 %v7399
    %7541 = vmatmul.bf16.gmra.mxu0 %v7171
    %v7542 = vpop.f32.mrf.mxu0
    %v7543 = vadd.f32 %v7530, %v7542
    %v7544 = vpop.f32.mrf.mxu0
    %7545 = vdwg.mxu0
    %7546 = vmatpush.bf16.msra.mxu0 %v7396
    %7547 = vmatpush.bf16.msra.mxu0 %v7392
    %7548 = vmatpush.bf16.msra.mxu0 %v7388
    %7549 = vmatpush.bf16.msra.mxu0 %v7384
    %7550 = vmatpush.bf16.msra.mxu0 %v7380
    %7551 = vmatpush.bf16.msra.mxu0 %v7376
    %7552 = vmatpush.bf16.msra.mxu0 %v7372
    %7553 = vmatpush.bf16.msra.mxu0 %v7368
    %7554 = vmatmul.bf16.gmra.mxu0 %v7170
    %v7555 = vpop.f32.mrf.mxu0
    %v7556 = vadd.f32 %v469, %v7555
    %v7557 = vpop.f32.mrf.mxu0
    %7558 = vdwg.mxu0
    %7559 = vmatpush.bf16.msra.mxu0 %v7428
    %7560 = vmatpush.bf16.msra.mxu0 %v7424
    %7561 = vmatpush.bf16.msra.mxu0 %v7420
    %7562 = vmatpush.bf16.msra.mxu0 %v7416
    %7563 = vmatpush.bf16.msra.mxu0 %v7412
    %7564 = vmatpush.bf16.msra.mxu0 %v7408
    %7565 = vmatpush.bf16.msra.mxu0 %v7404
    %7566 = vmatpush.bf16.msra.mxu0 %v7400
    %7567 = vmatmul.bf16.gmra.mxu0 %v7171
    %v7568 = vpop.f32.mrf.mxu0
    %v7569 = vadd.f32 %v7556, %v7568
    %v7570 = vpop.f32.mrf.mxu0
    %7571 = vdwg.mxu0
    %7572 = vmatpush.bf16.msra.mxu0 %v7397
    %7573 = vmatpush.bf16.msra.mxu0 %v7393
    %7574 = vmatpush.bf16.msra.mxu0 %v7389
    %7575 = vmatpush.bf16.msra.mxu0 %v7385
    %7576 = vmatpush.bf16.msra.mxu0 %v7381
    %7577 = vmatpush.bf16.msra.mxu0 %v7377
    %7578 = vmatpush.bf16.msra.mxu0 %v7373
    %7579 = vmatpush.bf16.msra.mxu0 %v7369
    %7580 = vmatmul.bf16.gmra.mxu0 %v7170
    %v7581 = vpop.f32.mrf.mxu0
    %v7582 = vadd.f32 %v470, %v7581
    %v7583 = vpop.f32.mrf.mxu0
    %7584 = vdwg.mxu0
    %7585 = vmatpush.bf16.msra.mxu0 %v7429
    %7586 = vmatpush.bf16.msra.mxu0 %v7425
    %7587 = vmatpush.bf16.msra.mxu0 %v7421
    %7588 = vmatpush.bf16.msra.mxu0 %v7417
    %7589 = vmatpush.bf16.msra.mxu0 %v7413
    %7590 = vmatpush.bf16.msra.mxu0 %v7409
    %7591 = vmatpush.bf16.msra.mxu0 %v7405
    %7592 = vmatpush.bf16.msra.mxu0 %v7401
    %7593 = vmatmul.bf16.gmra.mxu0 %v7171
    %v7594 = vpop.f32.mrf.mxu0
    %v7595 = vadd.f32 %v7582, %v7594
    %v7596 = vpop.f32.mrf.mxu0
    %7597 = vdwg.mxu0
    %v7598 = vmul.f32 %v7517, 0.5
    %v7599 = vtanh.pop %v7598
    %v7600 = vmul.f32 %v7599, 0.5
    %v7601 = vadd.f32 %v7600, 0.5
    %v7602 = vmul.f32 %v7543, 0.5
    %v7603 = vtanh.pop %v7602
    %v7604 = vmul.f32 %v7603, 0.5
    %v7605 = vadd.f32 %v7604, 0.5
    %v7606 = vtanh.pop %v7569
    %v7607 = vmul.f32 %v7595, 0.5
    %v7608 = vtanh.pop %v7607
    %v7609 = vmul.f32 %v7608, 0.5
    %v7610 = vadd.f32 %v7609, 0.5
    %v7611 = vmul.f32 %v7605, %v6819
    %v7612 = vmul.f32 %v7601, %v7606
    %v7613 = vadd.f32 %v7611, %v7612
    %v7614 = vtanh.pop %v7613
    %v7615 = vmul.f32 %v7610, %v7614
    %v7616 = vpack.c.bf16 %v7615, %v7615
    %7617 = vst [vmem:[#allocation4 + $0x4] sm:$0xf] %v7616
    %s7618 = scalar_lea.vmem [#allocation3], 64
    %7619 = vst [vmem:[%s7618] sm:$0xff] %v7615
    %s7620 = smul.u32 9, 4
    %s7621 = smul.addr %s7620, 8
    %s7622 = scalar_lea.vmem [#allocation2], %s7621
    %v7623 = vld [vmem:[%s7622] sm:$0xff]
    %v7624 = vld [vmem:[%s7622 + $0x8] sm:$0xff]
    %v7625 = vld [vmem:[%s7622 + $0x10] sm:$0xff]
    %v7626 = vld [vmem:[%s7622 + $0x18] sm:$0xff]
    %v7627 = vld [vmem:[#allocation4] sm:$0xf]
    %v7628 = vld [vmem:[#allocation10] sm:$0xff]
    %v7629 = vld [vmem:[#allocation10 + $0x8] sm:$0xff]
    %v7630 = vld [vmem:[#allocation10 + $0x10] sm:$0xff]
    %v7631 = vld [vmem:[#allocation10 + $0x18] sm:$0xff]
    %v7632 = vld [vmem:[#allocation10 + $0x20] sm:$0xff]
    %v7633 = vld [vmem:[#allocation10 + $0x28] sm:$0xff]
    %v7634 = vld [vmem:[#allocation10 + $0x30] sm:$0xff]
    %v7635 = vld [vmem:[#allocation10 + $0x38] sm:$0xff]
    %v7636 = vld [vmem:[#allocation10 + $0x40] sm:$0xff]
    %v7637 = vld [vmem:[#allocation10 + $0x48] sm:$0xff]
    %v7638 = vld [vmem:[#allocation10 + $0x50] sm:$0xff]
    %v7639 = vld [vmem:[#allocation10 + $0x58] sm:$0xff]
    %v7640 = vld [vmem:[#allocation10 + $0x60] sm:$0xff]
    %v7641 = vld [vmem:[#allocation10 + $0x68] sm:$0xff]
    %v7642 = vld [vmem:[#allocation10 + $0x70] sm:$0xff]
    %v7643 = vld [vmem:[#allocation10 + $0x78] sm:$0xff]
    %v7644 = vld [vmem:[#allocation10 + $0x80] sm:$0xff]
    %v7645 = vld [vmem:[#allocation10 + $0x88] sm:$0xff]
    %v7646 = vld [vmem:[#allocation10 + $0x90] sm:$0xff]
    %v7647 = vld [vmem:[#allocation10 + $0x98] sm:$0xff]
    %v7648 = vld [vmem:[#allocation10 + $0xa0] sm:$0xff]
    %v7649 = vld [vmem:[#allocation10 + $0xa8] sm:$0xff]
    %v7650 = vld [vmem:[#allocation10 + $0xb0] sm:$0xff]
    %v7651 = vld [vmem:[#allocation10 + $0xb8] sm:$0xff]
    %v7652 = vld [vmem:[#allocation10 + $0xc0] sm:$0xff]
    %v7653 = vld [vmem:[#allocation10 + $0xc8] sm:$0xff]
    %v7654 = vld [vmem:[#allocation10 + $0xd0] sm:$0xff]
    %v7655 = vld [vmem:[#allocation10 + $0xd8] sm:$0xff]
    %v7656 = vld [vmem:[#allocation10 + $0xe0] sm:$0xff]
    %v7657 = vld [vmem:[#allocation10 + $0xe8] sm:$0xff]
    %v7658 = vld [vmem:[#allocation10 + $0xf0] sm:$0xff]
    %v7659 = vld [vmem:[#allocation10 + $0xf8] sm:$0xff]
    %v7692 = vunpack.c.l.b16 %v7628
    %v7693 = vunpack.c.h.b16 %v7628
    %v7694 = vunpack.c.l.b16 %v7629
    %v7695 = vunpack.c.h.b16 %v7629
    %v7696 = vunpack.c.l.b16 %v7630
    %v7697 = vunpack.c.h.b16 %v7630
    %v7698 = vunpack.c.l.b16 %v7631
    %v7699 = vunpack.c.h.b16 %v7631
    %v7700 = vunpack.c.l.b16 %v7632
    %v7701 = vunpack.c.h.b16 %v7632
    %v7702 = vunpack.c.l.b16 %v7633
    %v7703 = vunpack.c.h.b16 %v7633
    %v7704 = vunpack.c.l.b16 %v7634
    %v7705 = vunpack.c.h.b16 %v7634
    %v7706 = vunpack.c.l.b16 %v7635
    %v7707 = vunpack.c.h.b16 %v7635
    %v7708 = vunpack.c.l.b16 %v7636
    %v7709 = vunpack.c.h.b16 %v7636
    %v7710 = vunpack.c.l.b16 %v7637
    %v7711 = vunpack.c.h.b16 %v7637
    %v7712 = vunpack.c.l.b16 %v7638
    %v7713 = vunpack.c.h.b16 %v7638
    %v7714 = vunpack.c.l.b16 %v7639
    %v7715 = vunpack.c.h.b16 %v7639
    %v7716 = vunpack.c.l.b16 %v7640
    %v7717 = vunpack.c.h.b16 %v7640
    %v7718 = vunpack.c.l.b16 %v7641
    %v7719 = vunpack.c.h.b16 %v7641
    %v7720 = vunpack.c.l.b16 %v7642
    %v7721 = vunpack.c.h.b16 %v7642
    %v7722 = vunpack.c.l.b16 %v7643
    %v7723 = vunpack.c.h.b16 %v7643
    %v7724 = vunpack.c.l.b16 %v7644
    %v7725 = vunpack.c.h.b16 %v7644
    %v7726 = vunpack.c.l.b16 %v7645
    %v7727 = vunpack.c.h.b16 %v7645
    %v7728 = vunpack.c.l.b16 %v7646
    %v7729 = vunpack.c.h.b16 %v7646
    %v7730 = vunpack.c.l.b16 %v7647
    %v7731 = vunpack.c.h.b16 %v7647
    %v7732 = vunpack.c.l.b16 %v7648
    %v7733 = vunpack.c.h.b16 %v7648
    %v7734 = vunpack.c.l.b16 %v7649
    %v7735 = vunpack.c.h.b16 %v7649
    %v7736 = vunpack.c.l.b16 %v7650
    %v7737 = vunpack.c.h.b16 %v7650
    %v7738 = vunpack.c.l.b16 %v7651
    %v7739 = vunpack.c.h.b16 %v7651
    %v7740 = vunpack.c.l.b16 %v7652
    %v7741 = vunpack.c.h.b16 %v7652
    %v7742 = vunpack.c.l.b16 %v7653
    %v7743 = vunpack.c.h.b16 %v7653
    %v7744 = vunpack.c.l.b16 %v7654
    %v7745 = vunpack.c.h.b16 %v7654
    %v7746 = vunpack.c.l.b16 %v7655
    %v7747 = vunpack.c.h.b16 %v7655
    %v7748 = vunpack.c.l.b16 %v7656
    %v7749 = vunpack.c.h.b16 %v7656
    %v7750 = vunpack.c.l.b16 %v7657
    %v7751 = vunpack.c.h.b16 %v7657
    %v7752 = vunpack.c.l.b16 %v7658
    %v7753 = vunpack.c.h.b16 %v7658
    %v7754 = vunpack.c.l.b16 %v7659
    %v7755 = vunpack.c.h.b16 %v7659
    %v7756 = vpack.c.b16 %v7696, %v7692
    %v7757 = vpack.c.b16 %v7697, %v7693
    %v7758 = vpack.c.b16 %v7698, %v7694
    %v7759 = vpack.c.b16 %v7699, %v7695
    %v7760 = vpack.c.b16 %v7704, %v7700
    %v7761 = vpack.c.b16 %v7705, %v7701
    %v7762 = vpack.c.b16 %v7706, %v7702
    %v7763 = vpack.c.b16 %v7707, %v7703
    %v7764 = vpack.c.b16 %v7712, %v7708
    %v7765 = vpack.c.b16 %v7713, %v7709
    %v7766 = vpack.c.b16 %v7714, %v7710
    %v7767 = vpack.c.b16 %v7715, %v7711
    %v7768 = vpack.c.b16 %v7720, %v7716
    %v7769 = vpack.c.b16 %v7721, %v7717
    %v7770 = vpack.c.b16 %v7722, %v7718
    %v7771 = vpack.c.b16 %v7723, %v7719
    %v7772 = vpack.c.b16 %v7728, %v7724
    %v7773 = vpack.c.b16 %v7729, %v7725
    %v7774 = vpack.c.b16 %v7730, %v7726
    %v7775 = vpack.c.b16 %v7731, %v7727
    %v7776 = vpack.c.b16 %v7736, %v7732
    %v7777 = vpack.c.b16 %v7737, %v7733
    %v7778 = vpack.c.b16 %v7738, %v7734
    %v7779 = vpack.c.b16 %v7739, %v7735
    %v7780 = vpack.c.b16 %v7744, %v7740
    %v7781 = vpack.c.b16 %v7745, %v7741
    %v7782 = vpack.c.b16 %v7746, %v7742
    %v7783 = vpack.c.b16 %v7747, %v7743
    %v7784 = vpack.c.b16 %v7752, %v7748
    %v7785 = vpack.c.b16 %v7753, %v7749
    %v7786 = vpack.c.b16 %v7754, %v7750
    %v7787 = vpack.c.b16 %v7755, %v7751
    %7820 = vmatpush.bf16.msra.mxu0 %v7784
    %7821 = vmatpush.bf16.msra.mxu0 %v7780
    %7822 = vmatpush.bf16.msra.mxu0 %v7776
    %7823 = vmatpush.bf16.msra.mxu0 %v7772
    %7824 = vmatpush.bf16.msra.mxu0 %v7768
    %7825 = vmatpush.bf16.msra.mxu0 %v7764
    %7826 = vmatpush.bf16.msra.mxu0 %v7760
    %7827 = vmatpush.bf16.msra.mxu0 %v7756
    %7828 = vmatmul.bf16.gmra.mxu0 %v7627
    %v7829 = vpop.f32.mrf.mxu0
    %v7830 = vadd.f32 0.0, %v7829
    %v7831 = vpop.f32.mrf.mxu0
    %7832 = vdwg.mxu0
    %7833 = vmatpush.bf16.msra.mxu0 %v7785
    %7834 = vmatpush.bf16.msra.mxu0 %v7781
    %7835 = vmatpush.bf16.msra.mxu0 %v7777
    %7836 = vmatpush.bf16.msra.mxu0 %v7773
    %7837 = vmatpush.bf16.msra.mxu0 %v7769
    %7838 = vmatpush.bf16.msra.mxu0 %v7765
    %7839 = vmatpush.bf16.msra.mxu0 %v7761
    %7840 = vmatpush.bf16.msra.mxu0 %v7757
    %7841 = vmatmul.bf16.gmra.mxu0 %v7627
    %v7842 = vpop.f32.mrf.mxu0
    %v7843 = vadd.f32 0.0, %v7842
    %v7844 = vpop.f32.mrf.mxu0
    %7845 = vdwg.mxu0
    %7846 = vmatpush.bf16.msra.mxu0 %v7786
    %7847 = vmatpush.bf16.msra.mxu0 %v7782
    %7848 = vmatpush.bf16.msra.mxu0 %v7778
    %7849 = vmatpush.bf16.msra.mxu0 %v7774
    %7850 = vmatpush.bf16.msra.mxu0 %v7770
    %7851 = vmatpush.bf16.msra.mxu0 %v7766
    %7852 = vmatpush.bf16.msra.mxu0 %v7762
    %7853 = vmatpush.bf16.msra.mxu0 %v7758
    %7854 = vmatmul.bf16.gmra.mxu0 %v7627
    %v7855 = vpop.f32.mrf.mxu0
    %v7856 = vadd.f32 0.0, %v7855
    %v7857 = vpop.f32.mrf.mxu0
    %7858 = vdwg.mxu0
    %7859 = vmatpush.bf16.msra.mxu0 %v7787
    %7860 = vmatpush.bf16.msra.mxu0 %v7783
    %7861 = vmatpush.bf16.msra.mxu0 %v7779
    %7862 = vmatpush.bf16.msra.mxu0 %v7775
    %7863 = vmatpush.bf16.msra.mxu0 %v7771
    %7864 = vmatpush.bf16.msra.mxu0 %v7767
    %7865 = vmatpush.bf16.msra.mxu0 %v7763
    %7866 = vmatpush.bf16.msra.mxu0 %v7759
    %7867 = vmatmul.bf16.gmra.mxu0 %v7627
    %v7868 = vpop.f32.mrf.mxu0
    %v7869 = vadd.f32 0.0, %v7868
    %v7870 = vpop.f32.mrf.mxu0
    %7871 = vdwg.mxu0
    %v7872 = vadd.f32 %v7623, %v7830
    %v7873 = vadd.f32 %v7624, %v7843
    %v7874 = vadd.f32 %v7625, %v7856
    %v7875 = vadd.f32 %v7626, %v7869
    %v7876 = vmul.f32 %v7872, 0.5
    %v7877 = vtanh.pop %v7876
    %v7878 = vmul.f32 %v7877, 0.5
    %v7879 = vadd.f32 %v7878, 0.5
    %v7880 = vmul.f32 %v7873, 0.5
    %v7881 = vtanh.pop %v7880
    %v7882 = vmul.f32 %v7881, 0.5
    %v7883 = vadd.f32 %v7882, 0.5
    %v7884 = vtanh.pop %v7874
    %v7885 = vmul.f32 %v7875, 0.5
    %v7886 = vtanh.pop %v7885
    %v7887 = vmul.f32 %v7886, 0.5
    %v7888 = vadd.f32 %v7887, 0.5
    %v7889 = vmul.f32 %v7883, %v7097
    %v7890 = vmul.f32 %v7879, %v7884
    %v7891 = vadd.f32 %v7889, %v7890
    %v7892 = vtanh.pop %v7891
    %v7893 = vmul.f32 %v7888, %v7892
    %v7894 = vpack.c.bf16 %v7893, %v7893
    %7895 = vst [vmem:[#allocation4] sm:$0xf] %v7894
    %v7896 = vld [vmem:[#allocation4] sm:$0xff]
    %v7897 = vld [vmem:[#allocation11] sm:$0xff]
    %v7898 = vld [vmem:[#allocation11 + $0x8] sm:$0xff]
    %v7899 = vld [vmem:[#allocation11 + $0x10] sm:$0xff]
    %v7900 = vld [vmem:[#allocation11 + $0x18] sm:$0xff]
    %v7901 = vld [vmem:[#allocation11 + $0x20] sm:$0xff]
    %v7902 = vld [vmem:[#allocation11 + $0x28] sm:$0xff]
    %v7903 = vld [vmem:[#allocation11 + $0x30] sm:$0xff]
    %v7904 = vld [vmem:[#allocation11 + $0x38] sm:$0xff]
    %v7905 = vld [vmem:[#allocation11 + $0x40] sm:$0xff]
    %v7906 = vld [vmem:[#allocation11 + $0x48] sm:$0xff]
    %v7907 = vld [vmem:[#allocation11 + $0x50] sm:$0xff]
    %v7908 = vld [vmem:[#allocation11 + $0x58] sm:$0xff]
    %v7909 = vld [vmem:[#allocation11 + $0x60] sm:$0xff]
    %v7910 = vld [vmem:[#allocation11 + $0x68] sm:$0xff]
    %v7911 = vld [vmem:[#allocation11 + $0x70] sm:$0xff]
    %v7912 = vld [vmem:[#allocation11 + $0x78] sm:$0xff]
    %v7913 = vld [vmem:[#allocation11 + $0x80] sm:$0xff]
    %v7914 = vld [vmem:[#allocation11 + $0x88] sm:$0xff]
    %v7915 = vld [vmem:[#allocation11 + $0x90] sm:$0xff]
    %v7916 = vld [vmem:[#allocation11 + $0x98] sm:$0xff]
    %v7917 = vld [vmem:[#allocation11 + $0xa0] sm:$0xff]
    %v7918 = vld [vmem:[#allocation11 + $0xa8] sm:$0xff]
    %v7919 = vld [vmem:[#allocation11 + $0xb0] sm:$0xff]
    %v7920 = vld [vmem:[#allocation11 + $0xb8] sm:$0xff]
    %v7921 = vld [vmem:[#allocation11 + $0xc0] sm:$0xff]
    %v7922 = vld [vmem:[#allocation11 + $0xc8] sm:$0xff]
    %v7923 = vld [vmem:[#allocation11 + $0xd0] sm:$0xff]
    %v7924 = vld [vmem:[#allocation11 + $0xd8] sm:$0xff]
    %v7925 = vld [vmem:[#allocation11 + $0xe0] sm:$0xff]
    %v7926 = vld [vmem:[#allocation11 + $0xe8] sm:$0xff]
    %v7927 = vld [vmem:[#allocation11 + $0xf0] sm:$0xff]
    %v7928 = vld [vmem:[#allocation11 + $0xf8] sm:$0xff]
    %v7929 = vld [vmem:[#allocation11 + $0x100] sm:$0xff]
    %v7930 = vld [vmem:[#allocation11 + $0x108] sm:$0xff]
    %v7931 = vld [vmem:[#allocation11 + $0x110] sm:$0xff]
    %v7932 = vld [vmem:[#allocation11 + $0x118] sm:$0xff]
    %v7933 = vld [vmem:[#allocation11 + $0x120] sm:$0xff]
    %v7934 = vld [vmem:[#allocation11 + $0x128] sm:$0xff]
    %v7935 = vld [vmem:[#allocation11 + $0x130] sm:$0xff]
    %v7936 = vld [vmem:[#allocation11 + $0x138] sm:$0xff]
    %v7937 = vld [vmem:[#allocation11 + $0x140] sm:$0xff]
    %v7938 = vld [vmem:[#allocation11 + $0x148] sm:$0xff]
    %v7939 = vld [vmem:[#allocation11 + $0x150] sm:$0xff]
    %v7940 = vld [vmem:[#allocation11 + $0x158] sm:$0xff]
    %v7941 = vld [vmem:[#allocation11 + $0x160] sm:$0xff]
    %v7942 = vld [vmem:[#allocation11 + $0x168] sm:$0xff]
    %v7943 = vld [vmem:[#allocation11 + $0x170] sm:$0xff]
    %v7944 = vld [vmem:[#allocation11 + $0x178] sm:$0xff]
    %v7945 = vld [vmem:[#allocation11 + $0x180] sm:$0xff]
    %v7946 = vld [vmem:[#allocation11 + $0x188] sm:$0xff]
    %v7947 = vld [vmem:[#allocation11 + $0x190] sm:$0xff]
    %v7948 = vld [vmem:[#allocation11 + $0x198] sm:$0xff]
    %v7949 = vld [vmem:[#allocation11 + $0x1a0] sm:$0xff]
    %v7950 = vld [vmem:[#allocation11 + $0x1a8] sm:$0xff]
    %v7951 = vld [vmem:[#allocation11 + $0x1b0] sm:$0xff]
    %v7952 = vld [vmem:[#allocation11 + $0x1b8] sm:$0xff]
    %v7953 = vld [vmem:[#allocation11 + $0x1c0] sm:$0xff]
    %v7954 = vld [vmem:[#allocation11 + $0x1c8] sm:$0xff]
    %v7955 = vld [vmem:[#allocation11 + $0x1d0] sm:$0xff]
    %v7956 = vld [vmem:[#allocation11 + $0x1d8] sm:$0xff]
    %v7957 = vld [vmem:[#allocation11 + $0x1e0] sm:$0xff]
    %v7958 = vld [vmem:[#allocation11 + $0x1e8] sm:$0xff]
    %v7959 = vld [vmem:[#allocation11 + $0x1f0] sm:$0xff]
    %v7960 = vld [vmem:[#allocation11 + $0x1f8] sm:$0xff]
    %v7962 = vunpack.c.l.b16 %v7896
    %v7963 = vunpack.c.h.b16 %v7896
    %v7964 = vpack.c.b16 %v7962, %v7962
    %v7965 = vpack.c.b16 %v7963, %v7963
    %v8032 = vunpack.c.l.b16 %v7897
    %v8033 = vunpack.c.h.b16 %v7897
    %v8034 = vunpack.c.l.b16 %v7898
    %v8035 = vunpack.c.h.b16 %v7898
    %v8036 = vunpack.c.l.b16 %v7899
    %v8037 = vunpack.c.h.b16 %v7899
    %v8038 = vunpack.c.l.b16 %v7900
    %v8039 = vunpack.c.h.b16 %v7900
    %v8040 = vunpack.c.l.b16 %v7901
    %v8041 = vunpack.c.h.b16 %v7901
    %v8042 = vunpack.c.l.b16 %v7902
    %v8043 = vunpack.c.h.b16 %v7902
    %v8044 = vunpack.c.l.b16 %v7903
    %v8045 = vunpack.c.h.b16 %v7903
    %v8046 = vunpack.c.l.b16 %v7904
    %v8047 = vunpack.c.h.b16 %v7904
    %v8048 = vunpack.c.l.b16 %v7905
    %v8049 = vunpack.c.h.b16 %v7905
    %v8050 = vunpack.c.l.b16 %v7906
    %v8051 = vunpack.c.h.b16 %v7906
    %v8052 = vunpack.c.l.b16 %v7907
    %v8053 = vunpack.c.h.b16 %v7907
    %v8054 = vunpack.c.l.b16 %v7908
    %v8055 = vunpack.c.h.b16 %v7908
    %v8056 = vunpack.c.l.b16 %v7909
    %v8057 = vunpack.c.h.b16 %v7909
    %v8058 = vunpack.c.l.b16 %v7910
    %v8059 = vunpack.c.h.b16 %v7910
    %v8060 = vunpack.c.l.b16 %v7911
    %v8061 = vunpack.c.h.b16 %v7911
    %v8062 = vunpack.c.l.b16 %v7912
    %v8063 = vunpack.c.h.b16 %v7912
    %v8064 = vunpack.c.l.b16 %v7913
    %v8065 = vunpack.c.h.b16 %v7913
    %v8066 = vunpack.c.l.b16 %v7914
    %v8067 = vunpack.c.h.b16 %v7914
    %v8068 = vunpack.c.l.b16 %v7915
    %v8069 = vunpack.c.h.b16 %v7915
    %v8070 = vunpack.c.l.b16 %v7916
    %v8071 = vunpack.c.h.b16 %v7916
    %v8072 = vunpack.c.l.b16 %v7917
    %v8073 = vunpack.c.h.b16 %v7917
    %v8074 = vunpack.c.l.b16 %v7918
    %v8075 = vunpack.c.h.b16 %v7918
    %v8076 = vunpack.c.l.b16 %v7919
    %v8077 = vunpack.c.h.b16 %v7919
    %v8078 = vunpack.c.l.b16 %v7920
    %v8079 = vunpack.c.h.b16 %v7920
    %v8080 = vunpack.c.l.b16 %v7921
    %v8081 = vunpack.c.h.b16 %v7921
    %v8082 = vunpack.c.l.b16 %v7922
    %v8083 = vunpack.c.h.b16 %v7922
    %v8084 = vunpack.c.l.b16 %v7923
    %v8085 = vunpack.c.h.b16 %v7923
    %v8086 = vunpack.c.l.b16 %v7924
    %v8087 = vunpack.c.h.b16 %v7924
    %v8088 = vunpack.c.l.b16 %v7925
    %v8089 = vunpack.c.h.b16 %v7925
    %v8090 = vunpack.c.l.b16 %v7926
    %v8091 = vunpack.c.h.b16 %v7926
    %v8092 = vunpack.c.l.b16 %v7927
    %v8093 = vunpack.c.h.b16 %v7927
    %v8094 = vunpack.c.l.b16 %v7928
    %v8095 = vunpack.c.h.b16 %v7928
    %v8096 = vunpack.c.l.b16 %v7929
    %v8097 = vunpack.c.h.b16 %v7929
    %v8098 = vunpack.c.l.b16 %v7930
    %v8099 = vunpack.c.h.b16 %v7930
    %v8100 = vunpack.c.l.b16 %v7931
    %v8101 = vunpack.c.h.b16 %v7931
    %v8102 = vunpack.c.l.b16 %v7932
    %v8103 = vunpack.c.h.b16 %v7932
    %v8104 = vunpack.c.l.b16 %v7933
    %v8105 = vunpack.c.h.b16 %v7933
    %v8106 = vunpack.c.l.b16 %v7934
    %v8107 = vunpack.c.h.b16 %v7934
    %v8108 = vunpack.c.l.b16 %v7935
    %v8109 = vunpack.c.h.b16 %v7935
    %v8110 = vunpack.c.l.b16 %v7936
    %v8111 = vunpack.c.h.b16 %v7936
    %v8112 = vunpack.c.l.b16 %v7937
    %v8113 = vunpack.c.h.b16 %v7937
    %v8114 = vunpack.c.l.b16 %v7938
    %v8115 = vunpack.c.h.b16 %v7938
    %v8116 = vunpack.c.l.b16 %v7939
    %v8117 = vunpack.c.h.b16 %v7939
    %v8118 = vunpack.c.l.b16 %v7940
    %v8119 = vunpack.c.h.b16 %v7940
    %v8120 = vunpack.c.l.b16 %v7941
    %v8121 = vunpack.c.h.b16 %v7941
    %v8122 = vunpack.c.l.b16 %v7942
    %v8123 = vunpack.c.h.b16 %v7942
    %v8124 = vunpack.c.l.b16 %v7943
    %v8125 = vunpack.c.h.b16 %v7943
    %v8126 = vunpack.c.l.b16 %v7944
    %v8127 = vunpack.c.h.b16 %v7944
    %v8128 = vunpack.c.l.b16 %v7945
    %v8129 = vunpack.c.h.b16 %v7945
    %v8130 = vunpack.c.l.b16 %v7946
    %v8131 = vunpack.c.h.b16 %v7946
    %v8132 = vunpack.c.l.b16 %v7947
    %v8133 = vunpack.c.h.b16 %v7947
    %v8134 = vunpack.c.l.b16 %v7948
    %v8135 = vunpack.c.h.b16 %v7948
    %v8136 = vunpack.c.l.b16 %v7949
    %v8137 = vunpack.c.h.b16 %v7949
    %v8138 = vunpack.c.l.b16 %v7950
    %v8139 = vunpack.c.h.b16 %v7950
    %v8140 = vunpack.c.l.b16 %v7951
    %v8141 = vunpack.c.h.b16 %v7951
    %v8142 = vunpack.c.l.b16 %v7952
    %v8143 = vunpack.c.h.b16 %v7952
    %v8144 = vunpack.c.l.b16 %v7953
    %v8145 = vunpack.c.h.b16 %v7953
    %v8146 = vunpack.c.l.b16 %v7954
    %v8147 = vunpack.c.h.b16 %v7954
    %v8148 = vunpack.c.l.b16 %v7955
    %v8149 = vunpack.c.h.b16 %v7955
    %v8150 = vunpack.c.l.b16 %v7956
    %v8151 = vunpack.c.h.b16 %v7956
    %v8152 = vunpack.c.l.b16 %v7957
    %v8153 = vunpack.c.h.b16 %v7957
    %v8154 = vunpack.c.l.b16 %v7958
    %v8155 = vunpack.c.h.b16 %v7958
    %v8156 = vunpack.c.l.b16 %v7959
    %v8157 = vunpack.c.h.b16 %v7959
    %v8158 = vunpack.c.l.b16 %v7960
    %v8159 = vunpack.c.h.b16 %v7960
    %v8160 = vpack.c.b16 %v8036, %v8032
    %v8161 = vpack.c.b16 %v8037, %v8033
    %v8162 = vpack.c.b16 %v8038, %v8034
    %v8163 = vpack.c.b16 %v8039, %v8035
    %v8164 = vpack.c.b16 %v8044, %v8040
    %v8165 = vpack.c.b16 %v8045, %v8041
    %v8166 = vpack.c.b16 %v8046, %v8042
    %v8167 = vpack.c.b16 %v8047, %v8043
    %v8168 = vpack.c.b16 %v8052, %v8048
    %v8169 = vpack.c.b16 %v8053, %v8049
    %v8170 = vpack.c.b16 %v8054, %v8050
    %v8171 = vpack.c.b16 %v8055, %v8051
    %v8172 = vpack.c.b16 %v8060, %v8056
    %v8173 = vpack.c.b16 %v8061, %v8057
    %v8174 = vpack.c.b16 %v8062, %v8058
    %v8175 = vpack.c.b16 %v8063, %v8059
    %v8176 = vpack.c.b16 %v8068, %v8064
    %v8177 = vpack.c.b16 %v8069, %v8065
    %v8178 = vpack.c.b16 %v8070, %v8066
    %v8179 = vpack.c.b16 %v8071, %v8067
    %v8180 = vpack.c.b16 %v8076, %v8072
    %v8181 = vpack.c.b16 %v8077, %v8073
    %v8182 = vpack.c.b16 %v8078, %v8074
    %v8183 = vpack.c.b16 %v8079, %v8075
    %v8184 = vpack.c.b16 %v8084, %v8080
    %v8185 = vpack.c.b16 %v8085, %v8081
    %v8186 = vpack.c.b16 %v8086, %v8082
    %v8187 = vpack.c.b16 %v8087, %v8083
    %v8188 = vpack.c.b16 %v8092, %v8088
    %v8189 = vpack.c.b16 %v8093, %v8089
    %v8190 = vpack.c.b16 %v8094, %v8090
    %v8191 = vpack.c.b16 %v8095, %v8091
    %v8192 = vpack.c.b16 %v8100, %v8096
    %v8193 = vpack.c.b16 %v8101, %v8097
    %v8194 = vpack.c.b16 %v8102, %v8098
    %v8195 = vpack.c.b16 %v8103, %v8099
    %v8196 = vpack.c.b16 %v8108, %v8104
    %v8197 = vpack.c.b16 %v8109, %v8105
    %v8198 = vpack.c.b16 %v8110, %v8106
    %v8199 = vpack.c.b16 %v8111, %v8107
    %v8200 = vpack.c.b16 %v8116, %v8112
    %v8201 = vpack.c.b16 %v8117, %v8113
    %v8202 = vpack.c.b16 %v8118, %v8114
    %v8203 = vpack.c.b16 %v8119, %v8115
    %v8204 = vpack.c.b16 %v8124, %v8120
    %v8205 = vpack.c.b16 %v8125, %v8121
    %v8206 = vpack.c.b16 %v8126, %v8122
    %v8207 = vpack.c.b16 %v8127, %v8123
    %v8208 = vpack.c.b16 %v8132, %v8128
    %v8209 = vpack.c.b16 %v8133, %v8129
    %v8210 = vpack.c.b16 %v8134, %v8130
    %v8211 = vpack.c.b16 %v8135, %v8131
    %v8212 = vpack.c.b16 %v8140, %v8136
    %v8213 = vpack.c.b16 %v8141, %v8137
    %v8214 = vpack.c.b16 %v8142, %v8138
    %v8215 = vpack.c.b16 %v8143, %v8139
    %v8216 = vpack.c.b16 %v8148, %v8144
    %v8217 = vpack.c.b16 %v8149, %v8145
    %v8218 = vpack.c.b16 %v8150, %v8146
    %v8219 = vpack.c.b16 %v8151, %v8147
    %v8220 = vpack.c.b16 %v8156, %v8152
    %v8221 = vpack.c.b16 %v8157, %v8153
    %v8222 = vpack.c.b16 %v8158, %v8154
    %v8223 = vpack.c.b16 %v8159, %v8155
    %8288 = vmatpush.bf16.msra.mxu0 %v8188
    %8289 = vmatpush.bf16.msra.mxu0 %v8184
    %8290 = vmatpush.bf16.msra.mxu0 %v8180
    %8291 = vmatpush.bf16.msra.mxu0 %v8176
    %8292 = vmatpush.bf16.msra.mxu0 %v8172
    %8293 = vmatpush.bf16.msra.mxu0 %v8168
    %8294 = vmatpush.bf16.msra.mxu0 %v8164
    %8295 = vmatpush.bf16.msra.mxu0 %v8160
    %8296 = vmatmul.bf16.gmra.mxu0 %v7964
    %v8297 = vpop.f32.mrf.mxu0
    %v8298 = vadd.f32 %v467, %v8297
    %v8299 = vpop.f32.mrf.mxu0
    %8300 = vdwg.mxu0
    %8301 = vmatpush.bf16.msra.mxu0 %v8220
    %8302 = vmatpush.bf16.msra.mxu0 %v8216
    %8303 = vmatpush.bf16.msra.mxu0 %v8212
    %8304 = vmatpush.bf16.msra.mxu0 %v8208
    %8305 = vmatpush.bf16.msra.mxu0 %v8204
    %8306 = vmatpush.bf16.msra.mxu0 %v8200
    %8307 = vmatpush.bf16.msra.mxu0 %v8196
    %8308 = vmatpush.bf16.msra.mxu0 %v8192
    %8309 = vmatmul.bf16.gmra.mxu0 %v7965
    %v8310 = vpop.f32.mrf.mxu0
    %v8311 = vadd.f32 %v8298, %v8310
    %v8312 = vpop.f32.mrf.mxu0
    %8313 = vdwg.mxu0
    %8314 = vmatpush.bf16.msra.mxu0 %v8189
    %8315 = vmatpush.bf16.msra.mxu0 %v8185
    %8316 = vmatpush.bf16.msra.mxu0 %v8181
    %8317 = vmatpush.bf16.msra.mxu0 %v8177
    %8318 = vmatpush.bf16.msra.mxu0 %v8173
    %8319 = vmatpush.bf16.msra.mxu0 %v8169
    %8320 = vmatpush.bf16.msra.mxu0 %v8165
    %8321 = vmatpush.bf16.msra.mxu0 %v8161
    %8322 = vmatmul.bf16.gmra.mxu0 %v7964
    %v8323 = vpop.f32.mrf.mxu0
    %v8324 = vadd.f32 %v468, %v8323
    %v8325 = vpop.f32.mrf.mxu0
    %8326 = vdwg.mxu0
    %8327 = vmatpush.bf16.msra.mxu0 %v8221
    %8328 = vmatpush.bf16.msra.mxu0 %v8217
    %8329 = vmatpush.bf16.msra.mxu0 %v8213
    %8330 = vmatpush.bf16.msra.mxu0 %v8209
    %8331 = vmatpush.bf16.msra.mxu0 %v8205
    %8332 = vmatpush.bf16.msra.mxu0 %v8201
    %8333 = vmatpush.bf16.msra.mxu0 %v8197
    %8334 = vmatpush.bf16.msra.mxu0 %v8193
    %8335 = vmatmul.bf16.gmra.mxu0 %v7965
    %v8336 = vpop.f32.mrf.mxu0
    %v8337 = vadd.f32 %v8324, %v8336
    %v8338 = vpop.f32.mrf.mxu0
    %8339 = vdwg.mxu0
    %8340 = vmatpush.bf16.msra.mxu0 %v8190
    %8341 = vmatpush.bf16.msra.mxu0 %v8186
    %8342 = vmatpush.bf16.msra.mxu0 %v8182
    %8343 = vmatpush.bf16.msra.mxu0 %v8178
    %8344 = vmatpush.bf16.msra.mxu0 %v8174
    %8345 = vmatpush.bf16.msra.mxu0 %v8170
    %8346 = vmatpush.bf16.msra.mxu0 %v8166
    %8347 = vmatpush.bf16.msra.mxu0 %v8162
    %8348 = vmatmul.bf16.gmra.mxu0 %v7964
    %v8349 = vpop.f32.mrf.mxu0
    %v8350 = vadd.f32 %v469, %v8349
    %v8351 = vpop.f32.mrf.mxu0
    %8352 = vdwg.mxu0
    %8353 = vmatpush.bf16.msra.mxu0 %v8222
    %8354 = vmatpush.bf16.msra.mxu0 %v8218
    %8355 = vmatpush.bf16.msra.mxu0 %v8214
    %8356 = vmatpush.bf16.msra.mxu0 %v8210
    %8357 = vmatpush.bf16.msra.mxu0 %v8206
    %8358 = vmatpush.bf16.msra.mxu0 %v8202
    %8359 = vmatpush.bf16.msra.mxu0 %v8198
    %8360 = vmatpush.bf16.msra.mxu0 %v8194
    %8361 = vmatmul.bf16.gmra.mxu0 %v7965
    %v8362 = vpop.f32.mrf.mxu0
    %v8363 = vadd.f32 %v8350, %v8362
    %v8364 = vpop.f32.mrf.mxu0
    %8365 = vdwg.mxu0
    %8366 = vmatpush.bf16.msra.mxu0 %v8191
    %8367 = vmatpush.bf16.msra.mxu0 %v8187
    %8368 = vmatpush.bf16.msra.mxu0 %v8183
    %8369 = vmatpush.bf16.msra.mxu0 %v8179
    %8370 = vmatpush.bf16.msra.mxu0 %v8175
    %8371 = vmatpush.bf16.msra.mxu0 %v8171
    %8372 = vmatpush.bf16.msra.mxu0 %v8167
    %8373 = vmatpush.bf16.msra.mxu0 %v8163
    %8374 = vmatmul.bf16.gmra.mxu0 %v7964
    %v8375 = vpop.f32.mrf.mxu0
    %v8376 = vadd.f32 %v470, %v8375
    %v8377 = vpop.f32.mrf.mxu0
    %8378 = vdwg.mxu0
    %8379 = vmatpush.bf16.msra.mxu0 %v8223
    %8380 = vmatpush.bf16.msra.mxu0 %v8219
    %8381 = vmatpush.bf16.msra.mxu0 %v8215
    %8382 = vmatpush.bf16.msra.mxu0 %v8211
    %8383 = vmatpush.bf16.msra.mxu0 %v8207
    %8384 = vmatpush.bf16.msra.mxu0 %v8203
    %8385 = vmatpush.bf16.msra.mxu0 %v8199
    %8386 = vmatpush.bf16.msra.mxu0 %v8195
    %8387 = vmatmul.bf16.gmra.mxu0 %v7965
    %v8388 = vpop.f32.mrf.mxu0
    %v8389 = vadd.f32 %v8376, %v8388
    %v8390 = vpop.f32.mrf.mxu0
    %8391 = vdwg.mxu0
    %v8392 = vmul.f32 %v8311, 0.5
    %v8393 = vtanh.pop %v8392
    %v8394 = vmul.f32 %v8393, 0.5
    %v8395 = vadd.f32 %v8394, 0.5
    %v8396 = vmul.f32 %v8337, 0.5
    %v8397 = vtanh.pop %v8396
    %v8398 = vmul.f32 %v8397, 0.5
    %v8399 = vadd.f32 %v8398, 0.5
    %v8400 = vtanh.pop %v8363
    %v8401 = vmul.f32 %v8389, 0.5
    %v8402 = vtanh.pop %v8401
    %v8403 = vmul.f32 %v8402, 0.5
    %v8404 = vadd.f32 %v8403, 0.5
    %v8405 = vmul.f32 %v8399, %v7613
    %v8406 = vmul.f32 %v8395, %v8400
    %v8407 = vadd.f32 %v8405, %v8406
    %v8408 = vtanh.pop %v8407
    %v8409 = vmul.f32 %v8404, %v8408
    %v8410 = vpack.c.bf16 %v8409, %v8409
    %8411 = vst [vmem:[#allocation4 + $0x4] sm:$0xf] %v8410
    %s8412 = scalar_lea.vmem [#allocation3], 72
    %8413 = vst [vmem:[%s8412] sm:$0xff] %v8409
    %s8414 = smul.u32 10, 4
    %s8415 = smul.addr %s8414, 8
    %s8416 = scalar_lea.vmem [#allocation2], %s8415
    %v8417 = vld [vmem:[%s8416] sm:$0xff]
    %v8418 = vld [vmem:[%s8416 + $0x8] sm:$0xff]
    %v8419 = vld [vmem:[%s8416 + $0x10] sm:$0xff]
    %v8420 = vld [vmem:[%s8416 + $0x18] sm:$0xff]
    %v8421 = vld [vmem:[#allocation4] sm:$0xf]
    %v8422 = vld [vmem:[#allocation10] sm:$0xff]
    %v8423 = vld [vmem:[#allocation10 + $0x8] sm:$0xff]
    %v8424 = vld [vmem:[#allocation10 + $0x10] sm:$0xff]
    %v8425 = vld [vmem:[#allocation10 + $0x18] sm:$0xff]
    %v8426 = vld [vmem:[#allocation10 + $0x20] sm:$0xff]
    %v8427 = vld [vmem:[#allocation10 + $0x28] sm:$0xff]
    %v8428 = vld [vmem:[#allocation10 + $0x30] sm:$0xff]
    %v8429 = vld [vmem:[#allocation10 + $0x38] sm:$0xff]
    %v8430 = vld [vmem:[#allocation10 + $0x40] sm:$0xff]
    %v8431 = vld [vmem:[#allocation10 + $0x48] sm:$0xff]
    %v8432 = vld [vmem:[#allocation10 + $0x50] sm:$0xff]
    %v8433 = vld [vmem:[#allocation10 + $0x58] sm:$0xff]
    %v8434 = vld [vmem:[#allocation10 + $0x60] sm:$0xff]
    %v8435 = vld [vmem:[#allocation10 + $0x68] sm:$0xff]
    %v8436 = vld [vmem:[#allocation10 + $0x70] sm:$0xff]
    %v8437 = vld [vmem:[#allocation10 + $0x78] sm:$0xff]
    %v8438 = vld [vmem:[#allocation10 + $0x80] sm:$0xff]
    %v8439 = vld [vmem:[#allocation10 + $0x88] sm:$0xff]
    %v8440 = vld [vmem:[#allocation10 + $0x90] sm:$0xff]
    %v8441 = vld [vmem:[#allocation10 + $0x98] sm:$0xff]
    %v8442 = vld [vmem:[#allocation10 + $0xa0] sm:$0xff]
    %v8443 = vld [vmem:[#allocation10 + $0xa8] sm:$0xff]
    %v8444 = vld [vmem:[#allocation10 + $0xb0] sm:$0xff]
    %v8445 = vld [vmem:[#allocation10 + $0xb8] sm:$0xff]
    %v8446 = vld [vmem:[#allocation10 + $0xc0] sm:$0xff]
    %v8447 = vld [vmem:[#allocation10 + $0xc8] sm:$0xff]
    %v8448 = vld [vmem:[#allocation10 + $0xd0] sm:$0xff]
    %v8449 = vld [vmem:[#allocation10 + $0xd8] sm:$0xff]
    %v8450 = vld [vmem:[#allocation10 + $0xe0] sm:$0xff]
    %v8451 = vld [vmem:[#allocation10 + $0xe8] sm:$0xff]
    %v8452 = vld [vmem:[#allocation10 + $0xf0] sm:$0xff]
    %v8453 = vld [vmem:[#allocation10 + $0xf8] sm:$0xff]
    %v8486 = vunpack.c.l.b16 %v8422
    %v8487 = vunpack.c.h.b16 %v8422
    %v8488 = vunpack.c.l.b16 %v8423
    %v8489 = vunpack.c.h.b16 %v8423
    %v8490 = vunpack.c.l.b16 %v8424
    %v8491 = vunpack.c.h.b16 %v8424
    %v8492 = vunpack.c.l.b16 %v8425
    %v8493 = vunpack.c.h.b16 %v8425
    %v8494 = vunpack.c.l.b16 %v8426
    %v8495 = vunpack.c.h.b16 %v8426
    %v8496 = vunpack.c.l.b16 %v8427
    %v8497 = vunpack.c.h.b16 %v8427
    %v8498 = vunpack.c.l.b16 %v8428
    %v8499 = vunpack.c.h.b16 %v8428
    %v8500 = vunpack.c.l.b16 %v8429
    %v8501 = vunpack.c.h.b16 %v8429
    %v8502 = vunpack.c.l.b16 %v8430
    %v8503 = vunpack.c.h.b16 %v8430
    %v8504 = vunpack.c.l.b16 %v8431
    %v8505 = vunpack.c.h.b16 %v8431
    %v8506 = vunpack.c.l.b16 %v8432
    %v8507 = vunpack.c.h.b16 %v8432
    %v8508 = vunpack.c.l.b16 %v8433
    %v8509 = vunpack.c.h.b16 %v8433
    %v8510 = vunpack.c.l.b16 %v8434
    %v8511 = vunpack.c.h.b16 %v8434
    %v8512 = vunpack.c.l.b16 %v8435
    %v8513 = vunpack.c.h.b16 %v8435
    %v8514 = vunpack.c.l.b16 %v8436
    %v8515 = vunpack.c.h.b16 %v8436
    %v8516 = vunpack.c.l.b16 %v8437
    %v8517 = vunpack.c.h.b16 %v8437
    %v8518 = vunpack.c.l.b16 %v8438
    %v8519 = vunpack.c.h.b16 %v8438
    %v8520 = vunpack.c.l.b16 %v8439
    %v8521 = vunpack.c.h.b16 %v8439
    %v8522 = vunpack.c.l.b16 %v8440
    %v8523 = vunpack.c.h.b16 %v8440
    %v8524 = vunpack.c.l.b16 %v8441
    %v8525 = vunpack.c.h.b16 %v8441
    %v8526 = vunpack.c.l.b16 %v8442
    %v8527 = vunpack.c.h.b16 %v8442
    %v8528 = vunpack.c.l.b16 %v8443
    %v8529 = vunpack.c.h.b16 %v8443
    %v8530 = vunpack.c.l.b16 %v8444
    %v8531 = vunpack.c.h.b16 %v8444
    %v8532 = vunpack.c.l.b16 %v8445
    %v8533 = vunpack.c.h.b16 %v8445
    %v8534 = vunpack.c.l.b16 %v8446
    %v8535 = vunpack.c.h.b16 %v8446
    %v8536 = vunpack.c.l.b16 %v8447
    %v8537 = vunpack.c.h.b16 %v8447
    %v8538 = vunpack.c.l.b16 %v8448
    %v8539 = vunpack.c.h.b16 %v8448
    %v8540 = vunpack.c.l.b16 %v8449
    %v8541 = vunpack.c.h.b16 %v8449
    %v8542 = vunpack.c.l.b16 %v8450
    %v8543 = vunpack.c.h.b16 %v8450
    %v8544 = vunpack.c.l.b16 %v8451
    %v8545 = vunpack.c.h.b16 %v8451
    %v8546 = vunpack.c.l.b16 %v8452
    %v8547 = vunpack.c.h.b16 %v8452
    %v8548 = vunpack.c.l.b16 %v8453
    %v8549 = vunpack.c.h.b16 %v8453
    %v8550 = vpack.c.b16 %v8490, %v8486
    %v8551 = vpack.c.b16 %v8491, %v8487
    %v8552 = vpack.c.b16 %v8492, %v8488
    %v8553 = vpack.c.b16 %v8493, %v8489
    %v8554 = vpack.c.b16 %v8498, %v8494
    %v8555 = vpack.c.b16 %v8499, %v8495
    %v8556 = vpack.c.b16 %v8500, %v8496
    %v8557 = vpack.c.b16 %v8501, %v8497
    %v8558 = vpack.c.b16 %v8506, %v8502
    %v8559 = vpack.c.b16 %v8507, %v8503
    %v8560 = vpack.c.b16 %v8508, %v8504
    %v8561 = vpack.c.b16 %v8509, %v8505
    %v8562 = vpack.c.b16 %v8514, %v8510
    %v8563 = vpack.c.b16 %v8515, %v8511
    %v8564 = vpack.c.b16 %v8516, %v8512
    %v8565 = vpack.c.b16 %v8517, %v8513
    %v8566 = vpack.c.b16 %v8522, %v8518
    %v8567 = vpack.c.b16 %v8523, %v8519
    %v8568 = vpack.c.b16 %v8524, %v8520
    %v8569 = vpack.c.b16 %v8525, %v8521
    %v8570 = vpack.c.b16 %v8530, %v8526
    %v8571 = vpack.c.b16 %v8531, %v8527
    %v8572 = vpack.c.b16 %v8532, %v8528
    %v8573 = vpack.c.b16 %v8533, %v8529
    %v8574 = vpack.c.b16 %v8538, %v8534
    %v8575 = vpack.c.b16 %v8539, %v8535
    %v8576 = vpack.c.b16 %v8540, %v8536
    %v8577 = vpack.c.b16 %v8541, %v8537
    %v8578 = vpack.c.b16 %v8546, %v8542
    %v8579 = vpack.c.b16 %v8547, %v8543
    %v8580 = vpack.c.b16 %v8548, %v8544
    %v8581 = vpack.c.b16 %v8549, %v8545
    %8614 = vmatpush.bf16.msra.mxu0 %v8578
    %8615 = vmatpush.bf16.msra.mxu0 %v8574
    %8616 = vmatpush.bf16.msra.mxu0 %v8570
    %8617 = vmatpush.bf16.msra.mxu0 %v8566
    %8618 = vmatpush.bf16.msra.mxu0 %v8562
    %8619 = vmatpush.bf16.msra.mxu0 %v8558
    %8620 = vmatpush.bf16.msra.mxu0 %v8554
    %8621 = vmatpush.bf16.msra.mxu0 %v8550
    %8622 = vmatmul.bf16.gmra.mxu0 %v8421
    %v8623 = vpop.f32.mrf.mxu0
    %v8624 = vadd.f32 0.0, %v8623
    %v8625 = vpop.f32.mrf.mxu0
    %8626 = vdwg.mxu0
    %8627 = vmatpush.bf16.msra.mxu0 %v8579
    %8628 = vmatpush.bf16.msra.mxu0 %v8575
    %8629 = vmatpush.bf16.msra.mxu0 %v8571
    %8630 = vmatpush.bf16.msra.mxu0 %v8567
    %8631 = vmatpush.bf16.msra.mxu0 %v8563
    %8632 = vmatpush.bf16.msra.mxu0 %v8559
    %8633 = vmatpush.bf16.msra.mxu0 %v8555
    %8634 = vmatpush.bf16.msra.mxu0 %v8551
    %8635 = vmatmul.bf16.gmra.mxu0 %v8421
    %v8636 = vpop.f32.mrf.mxu0
    %v8637 = vadd.f32 0.0, %v8636
    %v8638 = vpop.f32.mrf.mxu0
    %8639 = vdwg.mxu0
    %8640 = vmatpush.bf16.msra.mxu0 %v8580
    %8641 = vmatpush.bf16.msra.mxu0 %v8576
    %8642 = vmatpush.bf16.msra.mxu0 %v8572
    %8643 = vmatpush.bf16.msra.mxu0 %v8568
    %8644 = vmatpush.bf16.msra.mxu0 %v8564
    %8645 = vmatpush.bf16.msra.mxu0 %v8560
    %8646 = vmatpush.bf16.msra.mxu0 %v8556
    %8647 = vmatpush.bf16.msra.mxu0 %v8552
    %8648 = vmatmul.bf16.gmra.mxu0 %v8421
    %v8649 = vpop.f32.mrf.mxu0
    %v8650 = vadd.f32 0.0, %v8649
    %v8651 = vpop.f32.mrf.mxu0
    %8652 = vdwg.mxu0
    %8653 = vmatpush.bf16.msra.mxu0 %v8581
    %8654 = vmatpush.bf16.msra.mxu0 %v8577
    %8655 = vmatpush.bf16.msra.mxu0 %v8573
    %8656 = vmatpush.bf16.msra.mxu0 %v8569
    %8657 = vmatpush.bf16.msra.mxu0 %v8565
    %8658 = vmatpush.bf16.msra.mxu0 %v8561
    %8659 = vmatpush.bf16.msra.mxu0 %v8557
    %8660 = vmatpush.bf16.msra.mxu0 %v8553
    %8661 = vmatmul.bf16.gmra.mxu0 %v8421
    %v8662 = vpop.f32.mrf.mxu0
    %v8663 = vadd.f32 0.0, %v8662
    %v8664 = vpop.f32.mrf.mxu0
    %8665 = vdwg.mxu0
    %v8666 = vadd.f32 %v8417, %v8624
    %v8667 = vadd.f32 %v8418, %v8637
    %v8668 = vadd.f32 %v8419, %v8650
    %v8669 = vadd.f32 %v8420, %v8663
    %v8670 = vmul.f32 %v8666, 0.5
    %v8671 = vtanh.pop %v8670
    %v8672 = vmul.f32 %v8671, 0.5
    %v8673 = vadd.f32 %v8672, 0.5
    %v8674 = vmul.f32 %v8667, 0.5
    %v8675 = vtanh.pop %v8674
    %v8676 = vmul.f32 %v8675, 0.5
    %v8677 = vadd.f32 %v8676, 0.5
    %v8678 = vtanh.pop %v8668
    %v8679 = vmul.f32 %v8669, 0.5
    %v8680 = vtanh.pop %v8679
    %v8681 = vmul.f32 %v8680, 0.5
    %v8682 = vadd.f32 %v8681, 0.5
    %v8683 = vmul.f32 %v8677, %v7891
    %v8684 = vmul.f32 %v8673, %v8678
    %v8685 = vadd.f32 %v8683, %v8684
    %v8686 = vtanh.pop %v8685
    %v8687 = vmul.f32 %v8682, %v8686
    %v8688 = vpack.c.bf16 %v8687, %v8687
    %8689 = vst [vmem:[#allocation4] sm:$0xf] %v8688
    %v8690 = vld [vmem:[#allocation4] sm:$0xff]
    %v8691 = vld [vmem:[#allocation11] sm:$0xff]
    %v8692 = vld [vmem:[#allocation11 + $0x8] sm:$0xff]
    %v8693 = vld [vmem:[#allocation11 + $0x10] sm:$0xff]
    %v8694 = vld [vmem:[#allocation11 + $0x18] sm:$0xff]
    %v8695 = vld [vmem:[#allocation11 + $0x20] sm:$0xff]
    %v8696 = vld [vmem:[#allocation11 + $0x28] sm:$0xff]
    %v8697 = vld [vmem:[#allocation11 + $0x30] sm:$0xff]
    %v8698 = vld [vmem:[#allocation11 + $0x38] sm:$0xff]
    %v8699 = vld [vmem:[#allocation11 + $0x40] sm:$0xff]
    %v8700 = vld [vmem:[#allocation11 + $0x48] sm:$0xff]
    %v8701 = vld [vmem:[#allocation11 + $0x50] sm:$0xff]
    %v8702 = vld [vmem:[#allocation11 + $0x58] sm:$0xff]
    %v8703 = vld [vmem:[#allocation11 + $0x60] sm:$0xff]
    %v8704 = vld [vmem:[#allocation11 + $0x68] sm:$0xff]
    %v8705 = vld [vmem:[#allocation11 + $0x70] sm:$0xff]
    %v8706 = vld [vmem:[#allocation11 + $0x78] sm:$0xff]
    %v8707 = vld [vmem:[#allocation11 + $0x80] sm:$0xff]
    %v8708 = vld [vmem:[#allocation11 + $0x88] sm:$0xff]
    %v8709 = vld [vmem:[#allocation11 + $0x90] sm:$0xff]
    %v8710 = vld [vmem:[#allocation11 + $0x98] sm:$0xff]
    %v8711 = vld [vmem:[#allocation11 + $0xa0] sm:$0xff]
    %v8712 = vld [vmem:[#allocation11 + $0xa8] sm:$0xff]
    %v8713 = vld [vmem:[#allocation11 + $0xb0] sm:$0xff]
    %v8714 = vld [vmem:[#allocation11 + $0xb8] sm:$0xff]
    %v8715 = vld [vmem:[#allocation11 + $0xc0] sm:$0xff]
    %v8716 = vld [vmem:[#allocation11 + $0xc8] sm:$0xff]
    %v8717 = vld [vmem:[#allocation11 + $0xd0] sm:$0xff]
    %v8718 = vld [vmem:[#allocation11 + $0xd8] sm:$0xff]
    %v8719 = vld [vmem:[#allocation11 + $0xe0] sm:$0xff]
    %v8720 = vld [vmem:[#allocation11 + $0xe8] sm:$0xff]
    %v8721 = vld [vmem:[#allocation11 + $0xf0] sm:$0xff]
    %v8722 = vld [vmem:[#allocation11 + $0xf8] sm:$0xff]
    %v8723 = vld [vmem:[#allocation11 + $0x100] sm:$0xff]
    %v8724 = vld [vmem:[#allocation11 + $0x108] sm:$0xff]
    %v8725 = vld [vmem:[#allocation11 + $0x110] sm:$0xff]
    %v8726 = vld [vmem:[#allocation11 + $0x118] sm:$0xff]
    %v8727 = vld [vmem:[#allocation11 + $0x120] sm:$0xff]
    %v8728 = vld [vmem:[#allocation11 + $0x128] sm:$0xff]
    %v8729 = vld [vmem:[#allocation11 + $0x130] sm:$0xff]
    %v8730 = vld [vmem:[#allocation11 + $0x138] sm:$0xff]
    %v8731 = vld [vmem:[#allocation11 + $0x140] sm:$0xff]
    %v8732 = vld [vmem:[#allocation11 + $0x148] sm:$0xff]
    %v8733 = vld [vmem:[#allocation11 + $0x150] sm:$0xff]
    %v8734 = vld [vmem:[#allocation11 + $0x158] sm:$0xff]
    %v8735 = vld [vmem:[#allocation11 + $0x160] sm:$0xff]
    %v8736 = vld [vmem:[#allocation11 + $0x168] sm:$0xff]
    %v8737 = vld [vmem:[#allocation11 + $0x170] sm:$0xff]
    %v8738 = vld [vmem:[#allocation11 + $0x178] sm:$0xff]
    %v8739 = vld [vmem:[#allocation11 + $0x180] sm:$0xff]
    %v8740 = vld [vmem:[#allocation11 + $0x188] sm:$0xff]
    %v8741 = vld [vmem:[#allocation11 + $0x190] sm:$0xff]
    %v8742 = vld [vmem:[#allocation11 + $0x198] sm:$0xff]
    %v8743 = vld [vmem:[#allocation11 + $0x1a0] sm:$0xff]
    %v8744 = vld [vmem:[#allocation11 + $0x1a8] sm:$0xff]
    %v8745 = vld [vmem:[#allocation11 + $0x1b0] sm:$0xff]
    %v8746 = vld [vmem:[#allocation11 + $0x1b8] sm:$0xff]
    %v8747 = vld [vmem:[#allocation11 + $0x1c0] sm:$0xff]
    %v8748 = vld [vmem:[#allocation11 + $0x1c8] sm:$0xff]
    %v8749 = vld [vmem:[#allocation11 + $0x1d0] sm:$0xff]
    %v8750 = vld [vmem:[#allocation11 + $0x1d8] sm:$0xff]
    %v8751 = vld [vmem:[#allocation11 + $0x1e0] sm:$0xff]
    %v8752 = vld [vmem:[#allocation11 + $0x1e8] sm:$0xff]
    %v8753 = vld [vmem:[#allocation11 + $0x1f0] sm:$0xff]
    %v8754 = vld [vmem:[#allocation11 + $0x1f8] sm:$0xff]
    %v8756 = vunpack.c.l.b16 %v8690
    %v8757 = vunpack.c.h.b16 %v8690
    %v8758 = vpack.c.b16 %v8756, %v8756
    %v8759 = vpack.c.b16 %v8757, %v8757
    %v8826 = vunpack.c.l.b16 %v8691
    %v8827 = vunpack.c.h.b16 %v8691
    %v8828 = vunpack.c.l.b16 %v8692
    %v8829 = vunpack.c.h.b16 %v8692
    %v8830 = vunpack.c.l.b16 %v8693
    %v8831 = vunpack.c.h.b16 %v8693
    %v8832 = vunpack.c.l.b16 %v8694
    %v8833 = vunpack.c.h.b16 %v8694
    %v8834 = vunpack.c.l.b16 %v8695
    %v8835 = vunpack.c.h.b16 %v8695
    %v8836 = vunpack.c.l.b16 %v8696
    %v8837 = vunpack.c.h.b16 %v8696
    %v8838 = vunpack.c.l.b16 %v8697
    %v8839 = vunpack.c.h.b16 %v8697
    %v8840 = vunpack.c.l.b16 %v8698
    %v8841 = vunpack.c.h.b16 %v8698
    %v8842 = vunpack.c.l.b16 %v8699
    %v8843 = vunpack.c.h.b16 %v8699
    %v8844 = vunpack.c.l.b16 %v8700
    %v8845 = vunpack.c.h.b16 %v8700
    %v8846 = vunpack.c.l.b16 %v8701
    %v8847 = vunpack.c.h.b16 %v8701
    %v8848 = vunpack.c.l.b16 %v8702
    %v8849 = vunpack.c.h.b16 %v8702
    %v8850 = vunpack.c.l.b16 %v8703
    %v8851 = vunpack.c.h.b16 %v8703
    %v8852 = vunpack.c.l.b16 %v8704
    %v8853 = vunpack.c.h.b16 %v8704
    %v8854 = vunpack.c.l.b16 %v8705
    %v8855 = vunpack.c.h.b16 %v8705
    %v8856 = vunpack.c.l.b16 %v8706
    %v8857 = vunpack.c.h.b16 %v8706
    %v8858 = vunpack.c.l.b16 %v8707
    %v8859 = vunpack.c.h.b16 %v8707
    %v8860 = vunpack.c.l.b16 %v8708
    %v8861 = vunpack.c.h.b16 %v8708
    %v8862 = vunpack.c.l.b16 %v8709
    %v8863 = vunpack.c.h.b16 %v8709
    %v8864 = vunpack.c.l.b16 %v8710
    %v8865 = vunpack.c.h.b16 %v8710
    %v8866 = vunpack.c.l.b16 %v8711
    %v8867 = vunpack.c.h.b16 %v8711
    %v8868 = vunpack.c.l.b16 %v8712
    %v8869 = vunpack.c.h.b16 %v8712
    %v8870 = vunpack.c.l.b16 %v8713
    %v8871 = vunpack.c.h.b16 %v8713
    %v8872 = vunpack.c.l.b16 %v8714
    %v8873 = vunpack.c.h.b16 %v8714
    %v8874 = vunpack.c.l.b16 %v8715
    %v8875 = vunpack.c.h.b16 %v8715
    %v8876 = vunpack.c.l.b16 %v8716
    %v8877 = vunpack.c.h.b16 %v8716
    %v8878 = vunpack.c.l.b16 %v8717
    %v8879 = vunpack.c.h.b16 %v8717
    %v8880 = vunpack.c.l.b16 %v8718
    %v8881 = vunpack.c.h.b16 %v8718
    %v8882 = vunpack.c.l.b16 %v8719
    %v8883 = vunpack.c.h.b16 %v8719
    %v8884 = vunpack.c.l.b16 %v8720
    %v8885 = vunpack.c.h.b16 %v8720
    %v8886 = vunpack.c.l.b16 %v8721
    %v8887 = vunpack.c.h.b16 %v8721
    %v8888 = vunpack.c.l.b16 %v8722
    %v8889 = vunpack.c.h.b16 %v8722
    %v8890 = vunpack.c.l.b16 %v8723
    %v8891 = vunpack.c.h.b16 %v8723
    %v8892 = vunpack.c.l.b16 %v8724
    %v8893 = vunpack.c.h.b16 %v8724
    %v8894 = vunpack.c.l.b16 %v8725
    %v8895 = vunpack.c.h.b16 %v8725
    %v8896 = vunpack.c.l.b16 %v8726
    %v8897 = vunpack.c.h.b16 %v8726
    %v8898 = vunpack.c.l.b16 %v8727
    %v8899 = vunpack.c.h.b16 %v8727
    %v8900 = vunpack.c.l.b16 %v8728
    %v8901 = vunpack.c.h.b16 %v8728
    %v8902 = vunpack.c.l.b16 %v8729
    %v8903 = vunpack.c.h.b16 %v8729
    %v8904 = vunpack.c.l.b16 %v8730
    %v8905 = vunpack.c.h.b16 %v8730
    %v8906 = vunpack.c.l.b16 %v8731
    %v8907 = vunpack.c.h.b16 %v8731
    %v8908 = vunpack.c.l.b16 %v8732
    %v8909 = vunpack.c.h.b16 %v8732
    %v8910 = vunpack.c.l.b16 %v8733
    %v8911 = vunpack.c.h.b16 %v8733
    %v8912 = vunpack.c.l.b16 %v8734
    %v8913 = vunpack.c.h.b16 %v8734
    %v8914 = vunpack.c.l.b16 %v8735
    %v8915 = vunpack.c.h.b16 %v8735
    %v8916 = vunpack.c.l.b16 %v8736
    %v8917 = vunpack.c.h.b16 %v8736
    %v8918 = vunpack.c.l.b16 %v8737
    %v8919 = vunpack.c.h.b16 %v8737
    %v8920 = vunpack.c.l.b16 %v8738
    %v8921 = vunpack.c.h.b16 %v8738
    %v8922 = vunpack.c.l.b16 %v8739
    %v8923 = vunpack.c.h.b16 %v8739
    %v8924 = vunpack.c.l.b16 %v8740
    %v8925 = vunpack.c.h.b16 %v8740
    %v8926 = vunpack.c.l.b16 %v8741
    %v8927 = vunpack.c.h.b16 %v8741
    %v8928 = vunpack.c.l.b16 %v8742
    %v8929 = vunpack.c.h.b16 %v8742
    %v8930 = vunpack.c.l.b16 %v8743
    %v8931 = vunpack.c.h.b16 %v8743
    %v8932 = vunpack.c.l.b16 %v8744
    %v8933 = vunpack.c.h.b16 %v8744
    %v8934 = vunpack.c.l.b16 %v8745
    %v8935 = vunpack.c.h.b16 %v8745
    %v8936 = vunpack.c.l.b16 %v8746
    %v8937 = vunpack.c.h.b16 %v8746
    %v8938 = vunpack.c.l.b16 %v8747
    %v8939 = vunpack.c.h.b16 %v8747
    %v8940 = vunpack.c.l.b16 %v8748
    %v8941 = vunpack.c.h.b16 %v8748
    %v8942 = vunpack.c.l.b16 %v8749
    %v8943 = vunpack.c.h.b16 %v8749
    %v8944 = vunpack.c.l.b16 %v8750
    %v8945 = vunpack.c.h.b16 %v8750
    %v8946 = vunpack.c.l.b16 %v8751
    %v8947 = vunpack.c.h.b16 %v8751
    %v8948 = vunpack.c.l.b16 %v8752
    %v8949 = vunpack.c.h.b16 %v8752
    %v8950 = vunpack.c.l.b16 %v8753
    %v8951 = vunpack.c.h.b16 %v8753
    %v8952 = vunpack.c.l.b16 %v8754
    %v8953 = vunpack.c.h.b16 %v8754
    %v8954 = vpack.c.b16 %v8830, %v8826
    %v8955 = vpack.c.b16 %v8831, %v8827
    %v8956 = vpack.c.b16 %v8832, %v8828
    %v8957 = vpack.c.b16 %v8833, %v8829
    %v8958 = vpack.c.b16 %v8838, %v8834
    %v8959 = vpack.c.b16 %v8839, %v8835
    %v8960 = vpack.c.b16 %v8840, %v8836
    %v8961 = vpack.c.b16 %v8841, %v8837
    %v8962 = vpack.c.b16 %v8846, %v8842
    %v8963 = vpack.c.b16 %v8847, %v8843
    %v8964 = vpack.c.b16 %v8848, %v8844
    %v8965 = vpack.c.b16 %v8849, %v8845
    %v8966 = vpack.c.b16 %v8854, %v8850
    %v8967 = vpack.c.b16 %v8855, %v8851
    %v8968 = vpack.c.b16 %v8856, %v8852
    %v8969 = vpack.c.b16 %v8857, %v8853
    %v8970 = vpack.c.b16 %v8862, %v8858
    %v8971 = vpack.c.b16 %v8863, %v8859
    %v8972 = vpack.c.b16 %v8864, %v8860
    %v8973 = vpack.c.b16 %v8865, %v8861
    %v8974 = vpack.c.b16 %v8870, %v8866
    %v8975 = vpack.c.b16 %v8871, %v8867
    %v8976 = vpack.c.b16 %v8872, %v8868
    %v8977 = vpack.c.b16 %v8873, %v8869
    %v8978 = vpack.c.b16 %v8878, %v8874
    %v8979 = vpack.c.b16 %v8879, %v8875
    %v8980 = vpack.c.b16 %v8880, %v8876
    %v8981 = vpack.c.b16 %v8881, %v8877
    %v8982 = vpack.c.b16 %v8886, %v8882
    %v8983 = vpack.c.b16 %v8887, %v8883
    %v8984 = vpack.c.b16 %v8888, %v8884
    %v8985 = vpack.c.b16 %v8889, %v8885
    %v8986 = vpack.c.b16 %v8894, %v8890
    %v8987 = vpack.c.b16 %v8895, %v8891
    %v8988 = vpack.c.b16 %v8896, %v8892
    %v8989 = vpack.c.b16 %v8897, %v8893
    %v8990 = vpack.c.b16 %v8902, %v8898
    %v8991 = vpack.c.b16 %v8903, %v8899
    %v8992 = vpack.c.b16 %v8904, %v8900
    %v8993 = vpack.c.b16 %v8905, %v8901
    %v8994 = vpack.c.b16 %v8910, %v8906
    %v8995 = vpack.c.b16 %v8911, %v8907
    %v8996 = vpack.c.b16 %v8912, %v8908
    %v8997 = vpack.c.b16 %v8913, %v8909
    %v8998 = vpack.c.b16 %v8918, %v8914
    %v8999 = vpack.c.b16 %v8919, %v8915
    %v9000 = vpack.c.b16 %v8920, %v8916
    %v9001 = vpack.c.b16 %v8921, %v8917
    %v9002 = vpack.c.b16 %v8926, %v8922
    %v9003 = vpack.c.b16 %v8927, %v8923
    %v9004 = vpack.c.b16 %v8928, %v8924
    %v9005 = vpack.c.b16 %v8929, %v8925
    %v9006 = vpack.c.b16 %v8934, %v8930
    %v9007 = vpack.c.b16 %v8935, %v8931
    %v9008 = vpack.c.b16 %v8936, %v8932
    %v9009 = vpack.c.b16 %v8937, %v8933
    %v9010 = vpack.c.b16 %v8942, %v8938
    %v9011 = vpack.c.b16 %v8943, %v8939
    %v9012 = vpack.c.b16 %v8944, %v8940
    %v9013 = vpack.c.b16 %v8945, %v8941
    %v9014 = vpack.c.b16 %v8950, %v8946
    %v9015 = vpack.c.b16 %v8951, %v8947
    %v9016 = vpack.c.b16 %v8952, %v8948
    %v9017 = vpack.c.b16 %v8953, %v8949
    %9082 = vmatpush.bf16.msra.mxu0 %v8982
    %9083 = vmatpush.bf16.msra.mxu0 %v8978
    %9084 = vmatpush.bf16.msra.mxu0 %v8974
    %9085 = vmatpush.bf16.msra.mxu0 %v8970
    %9086 = vmatpush.bf16.msra.mxu0 %v8966
    %9087 = vmatpush.bf16.msra.mxu0 %v8962
    %9088 = vmatpush.bf16.msra.mxu0 %v8958
    %9089 = vmatpush.bf16.msra.mxu0 %v8954
    %9090 = vmatmul.bf16.gmra.mxu0 %v8758
    %v9091 = vpop.f32.mrf.mxu0
    %v9092 = vadd.f32 %v467, %v9091
    %v9093 = vpop.f32.mrf.mxu0
    %9094 = vdwg.mxu0
    %9095 = vmatpush.bf16.msra.mxu0 %v9014
    %9096 = vmatpush.bf16.msra.mxu0 %v9010
    %9097 = vmatpush.bf16.msra.mxu0 %v9006
    %9098 = vmatpush.bf16.msra.mxu0 %v9002
    %9099 = vmatpush.bf16.msra.mxu0 %v8998
    %9100 = vmatpush.bf16.msra.mxu0 %v8994
    %9101 = vmatpush.bf16.msra.mxu0 %v8990
    %9102 = vmatpush.bf16.msra.mxu0 %v8986
    %9103 = vmatmul.bf16.gmra.mxu0 %v8759
    %v9104 = vpop.f32.mrf.mxu0
    %v9105 = vadd.f32 %v9092, %v9104
    %v9106 = vpop.f32.mrf.mxu0
    %9107 = vdwg.mxu0
    %9108 = vmatpush.bf16.msra.mxu0 %v8983
    %9109 = vmatpush.bf16.msra.mxu0 %v8979
    %9110 = vmatpush.bf16.msra.mxu0 %v8975
    %9111 = vmatpush.bf16.msra.mxu0 %v8971
    %9112 = vmatpush.bf16.msra.mxu0 %v8967
    %9113 = vmatpush.bf16.msra.mxu0 %v8963
    %9114 = vmatpush.bf16.msra.mxu0 %v8959
    %9115 = vmatpush.bf16.msra.mxu0 %v8955
    %9116 = vmatmul.bf16.gmra.mxu0 %v8758
    %v9117 = vpop.f32.mrf.mxu0
    %v9118 = vadd.f32 %v468, %v9117
    %v9119 = vpop.f32.mrf.mxu0
    %9120 = vdwg.mxu0
    %9121 = vmatpush.bf16.msra.mxu0 %v9015
    %9122 = vmatpush.bf16.msra.mxu0 %v9011
    %9123 = vmatpush.bf16.msra.mxu0 %v9007
    %9124 = vmatpush.bf16.msra.mxu0 %v9003
    %9125 = vmatpush.bf16.msra.mxu0 %v8999
    %9126 = vmatpush.bf16.msra.mxu0 %v8995
    %9127 = vmatpush.bf16.msra.mxu0 %v8991
    %9128 = vmatpush.bf16.msra.mxu0 %v8987
    %9129 = vmatmul.bf16.gmra.mxu0 %v8759
    %v9130 = vpop.f32.mrf.mxu0
    %v9131 = vadd.f32 %v9118, %v9130
    %v9132 = vpop.f32.mrf.mxu0
    %9133 = vdwg.mxu0
    %9134 = vmatpush.bf16.msra.mxu0 %v8984
    %9135 = vmatpush.bf16.msra.mxu0 %v8980
    %9136 = vmatpush.bf16.msra.mxu0 %v8976
    %9137 = vmatpush.bf16.msra.mxu0 %v8972
    %9138 = vmatpush.bf16.msra.mxu0 %v8968
    %9139 = vmatpush.bf16.msra.mxu0 %v8964
    %9140 = vmatpush.bf16.msra.mxu0 %v8960
    %9141 = vmatpush.bf16.msra.mxu0 %v8956
    %9142 = vmatmul.bf16.gmra.mxu0 %v8758
    %v9143 = vpop.f32.mrf.mxu0
    %v9144 = vadd.f32 %v469, %v9143
    %v9145 = vpop.f32.mrf.mxu0
    %9146 = vdwg.mxu0
    %9147 = vmatpush.bf16.msra.mxu0 %v9016
    %9148 = vmatpush.bf16.msra.mxu0 %v9012
    %9149 = vmatpush.bf16.msra.mxu0 %v9008
    %9150 = vmatpush.bf16.msra.mxu0 %v9004
    %9151 = vmatpush.bf16.msra.mxu0 %v9000
    %9152 = vmatpush.bf16.msra.mxu0 %v8996
    %9153 = vmatpush.bf16.msra.mxu0 %v8992
    %9154 = vmatpush.bf16.msra.mxu0 %v8988
    %9155 = vmatmul.bf16.gmra.mxu0 %v8759
    %v9156 = vpop.f32.mrf.mxu0
    %v9157 = vadd.f32 %v9144, %v9156
    %v9158 = vpop.f32.mrf.mxu0
    %9159 = vdwg.mxu0
    %9160 = vmatpush.bf16.msra.mxu0 %v8985
    %9161 = vmatpush.bf16.msra.mxu0 %v8981
    %9162 = vmatpush.bf16.msra.mxu0 %v8977
    %9163 = vmatpush.bf16.msra.mxu0 %v8973
    %9164 = vmatpush.bf16.msra.mxu0 %v8969
    %9165 = vmatpush.bf16.msra.mxu0 %v8965
    %9166 = vmatpush.bf16.msra.mxu0 %v8961
    %9167 = vmatpush.bf16.msra.mxu0 %v8957
    %9168 = vmatmul.bf16.gmra.mxu0 %v8758
    %v9169 = vpop.f32.mrf.mxu0
    %v9170 = vadd.f32 %v470, %v9169
    %v9171 = vpop.f32.mrf.mxu0
    %9172 = vdwg.mxu0
    %9173 = vmatpush.bf16.msra.mxu0 %v9017
    %9174 = vmatpush.bf16.msra.mxu0 %v9013
    %9175 = vmatpush.bf16.msra.mxu0 %v9009
    %9176 = vmatpush.bf16.msra.mxu0 %v9005
    %9177 = vmatpush.bf16.msra.mxu0 %v9001
    %9178 = vmatpush.bf16.msra.mxu0 %v8997
    %9179 = vmatpush.bf16.msra.mxu0 %v8993
    %9180 = vmatpush.bf16.msra.mxu0 %v8989
    %9181 = vmatmul.bf16.gmra.mxu0 %v8759
    %v9182 = vpop.f32.mrf.mxu0
    %v9183 = vadd.f32 %v9170, %v9182
    %v9184 = vpop.f32.mrf.mxu0
    %9185 = vdwg.mxu0
    %v9186 = vmul.f32 %v9105, 0.5
    %v9187 = vtanh.pop %v9186
    %v9188 = vmul.f32 %v9187, 0.5
    %v9189 = vadd.f32 %v9188, 0.5
    %v9190 = vmul.f32 %v9131, 0.5
    %v9191 = vtanh.pop %v9190
    %v9192 = vmul.f32 %v9191, 0.5
    %v9193 = vadd.f32 %v9192, 0.5
    %v9194 = vtanh.pop %v9157
    %v9195 = vmul.f32 %v9183, 0.5
    %v9196 = vtanh.pop %v9195
    %v9197 = vmul.f32 %v9196, 0.5
    %v9198 = vadd.f32 %v9197, 0.5
    %v9199 = vmul.f32 %v9193, %v8407
    %v9200 = vmul.f32 %v9189, %v9194
    %v9201 = vadd.f32 %v9199, %v9200
    %v9202 = vtanh.pop %v9201
    %v9203 = vmul.f32 %v9198, %v9202
    %v9204 = vpack.c.bf16 %v9203, %v9203
    %9205 = vst [vmem:[#allocation4 + $0x4] sm:$0xf] %v9204
    %s9206 = scalar_lea.vmem [#allocation3], 80
    %9207 = vst [vmem:[%s9206] sm:$0xff] %v9203
    %s9208 = smul.u32 11, 4
    %s9209 = smul.addr %s9208, 8
    %s9210 = scalar_lea.vmem [#allocation2], %s9209
    %v9211 = vld [vmem:[%s9210] sm:$0xff]
    %v9212 = vld [vmem:[%s9210 + $0x8] sm:$0xff]
    %v9213 = vld [vmem:[%s9210 + $0x10] sm:$0xff]
    %v9214 = vld [vmem:[%s9210 + $0x18] sm:$0xff]
    %v9215 = vld [vmem:[#allocation4] sm:$0xf]
    %v9216 = vld [vmem:[#allocation10] sm:$0xff]
    %v9217 = vld [vmem:[#allocation10 + $0x8] sm:$0xff]
    %v9218 = vld [vmem:[#allocation10 + $0x10] sm:$0xff]
    %v9219 = vld [vmem:[#allocation10 + $0x18] sm:$0xff]
    %v9220 = vld [vmem:[#allocation10 + $0x20] sm:$0xff]
    %v9221 = vld [vmem:[#allocation10 + $0x28] sm:$0xff]
    %v9222 = vld [vmem:[#allocation10 + $0x30] sm:$0xff]
    %v9223 = vld [vmem:[#allocation10 + $0x38] sm:$0xff]
    %v9224 = vld [vmem:[#allocation10 + $0x40] sm:$0xff]
    %v9225 = vld [vmem:[#allocation10 + $0x48] sm:$0xff]
    %v9226 = vld [vmem:[#allocation10 + $0x50] sm:$0xff]
    %v9227 = vld [vmem:[#allocation10 + $0x58] sm:$0xff]
    %v9228 = vld [vmem:[#allocation10 + $0x60] sm:$0xff]
    %v9229 = vld [vmem:[#allocation10 + $0x68] sm:$0xff]
    %v9230 = vld [vmem:[#allocation10 + $0x70] sm:$0xff]
    %v9231 = vld [vmem:[#allocation10 + $0x78] sm:$0xff]
    %v9232 = vld [vmem:[#allocation10 + $0x80] sm:$0xff]
    %v9233 = vld [vmem:[#allocation10 + $0x88] sm:$0xff]
    %v9234 = vld [vmem:[#allocation10 + $0x90] sm:$0xff]
    %v9235 = vld [vmem:[#allocation10 + $0x98] sm:$0xff]
    %v9236 = vld [vmem:[#allocation10 + $0xa0] sm:$0xff]
    %v9237 = vld [vmem:[#allocation10 + $0xa8] sm:$0xff]
    %v9238 = vld [vmem:[#allocation10 + $0xb0] sm:$0xff]
    %v9239 = vld [vmem:[#allocation10 + $0xb8] sm:$0xff]
    %v9240 = vld [vmem:[#allocation10 + $0xc0] sm:$0xff]
    %v9241 = vld [vmem:[#allocation10 + $0xc8] sm:$0xff]
    %v9242 = vld [vmem:[#allocation10 + $0xd0] sm:$0xff]
    %v9243 = vld [vmem:[#allocation10 + $0xd8] sm:$0xff]
    %v9244 = vld [vmem:[#allocation10 + $0xe0] sm:$0xff]
    %v9245 = vld [vmem:[#allocation10 + $0xe8] sm:$0xff]
    %v9246 = vld [vmem:[#allocation10 + $0xf0] sm:$0xff]
    %v9247 = vld [vmem:[#allocation10 + $0xf8] sm:$0xff]
    %v9280 = vunpack.c.l.b16 %v9216
    %v9281 = vunpack.c.h.b16 %v9216
    %v9282 = vunpack.c.l.b16 %v9217
    %v9283 = vunpack.c.h.b16 %v9217
    %v9284 = vunpack.c.l.b16 %v9218
    %v9285 = vunpack.c.h.b16 %v9218
    %v9286 = vunpack.c.l.b16 %v9219
    %v9287 = vunpack.c.h.b16 %v9219
    %v9288 = vunpack.c.l.b16 %v9220
    %v9289 = vunpack.c.h.b16 %v9220
    %v9290 = vunpack.c.l.b16 %v9221
    %v9291 = vunpack.c.h.b16 %v9221
    %v9292 = vunpack.c.l.b16 %v9222
    %v9293 = vunpack.c.h.b16 %v9222
    %v9294 = vunpack.c.l.b16 %v9223
    %v9295 = vunpack.c.h.b16 %v9223
    %v9296 = vunpack.c.l.b16 %v9224
    %v9297 = vunpack.c.h.b16 %v9224
    %v9298 = vunpack.c.l.b16 %v9225
    %v9299 = vunpack.c.h.b16 %v9225
    %v9300 = vunpack.c.l.b16 %v9226
    %v9301 = vunpack.c.h.b16 %v9226
    %v9302 = vunpack.c.l.b16 %v9227
    %v9303 = vunpack.c.h.b16 %v9227
    %v9304 = vunpack.c.l.b16 %v9228
    %v9305 = vunpack.c.h.b16 %v9228
    %v9306 = vunpack.c.l.b16 %v9229
    %v9307 = vunpack.c.h.b16 %v9229
    %v9308 = vunpack.c.l.b16 %v9230
    %v9309 = vunpack.c.h.b16 %v9230
    %v9310 = vunpack.c.l.b16 %v9231
    %v9311 = vunpack.c.h.b16 %v9231
    %v9312 = vunpack.c.l.b16 %v9232
    %v9313 = vunpack.c.h.b16 %v9232
    %v9314 = vunpack.c.l.b16 %v9233
    %v9315 = vunpack.c.h.b16 %v9233
    %v9316 = vunpack.c.l.b16 %v9234
    %v9317 = vunpack.c.h.b16 %v9234
    %v9318 = vunpack.c.l.b16 %v9235
    %v9319 = vunpack.c.h.b16 %v9235
    %v9320 = vunpack.c.l.b16 %v9236
    %v9321 = vunpack.c.h.b16 %v9236
    %v9322 = vunpack.c.l.b16 %v9237
    %v9323 = vunpack.c.h.b16 %v9237
    %v9324 = vunpack.c.l.b16 %v9238
    %v9325 = vunpack.c.h.b16 %v9238
    %v9326 = vunpack.c.l.b16 %v9239
    %v9327 = vunpack.c.h.b16 %v9239
    %v9328 = vunpack.c.l.b16 %v9240
    %v9329 = vunpack.c.h.b16 %v9240
    %v9330 = vunpack.c.l.b16 %v9241
    %v9331 = vunpack.c.h.b16 %v9241
    %v9332 = vunpack.c.l.b16 %v9242
    %v9333 = vunpack.c.h.b16 %v9242
    %v9334 = vunpack.c.l.b16 %v9243
    %v9335 = vunpack.c.h.b16 %v9243
    %v9336 = vunpack.c.l.b16 %v9244
    %v9337 = vunpack.c.h.b16 %v9244
    %v9338 = vunpack.c.l.b16 %v9245
    %v9339 = vunpack.c.h.b16 %v9245
    %v9340 = vunpack.c.l.b16 %v9246
    %v9341 = vunpack.c.h.b16 %v9246
    %v9342 = vunpack.c.l.b16 %v9247
    %v9343 = vunpack.c.h.b16 %v9247
    %v9344 = vpack.c.b16 %v9284, %v9280
    %v9345 = vpack.c.b16 %v9285, %v9281
    %v9346 = vpack.c.b16 %v9286, %v9282
    %v9347 = vpack.c.b16 %v9287, %v9283
    %v9348 = vpack.c.b16 %v9292, %v9288
    %v9349 = vpack.c.b16 %v9293, %v9289
    %v9350 = vpack.c.b16 %v9294, %v9290
    %v9351 = vpack.c.b16 %v9295, %v9291
    %v9352 = vpack.c.b16 %v9300, %v9296
    %v9353 = vpack.c.b16 %v9301, %v9297
    %v9354 = vpack.c.b16 %v9302, %v9298
    %v9355 = vpack.c.b16 %v9303, %v9299
    %v9356 = vpack.c.b16 %v9308, %v9304
    %v9357 = vpack.c.b16 %v9309, %v9305
    %v9358 = vpack.c.b16 %v9310, %v9306
    %v9359 = vpack.c.b16 %v9311, %v9307
    %v9360 = vpack.c.b16 %v9316, %v9312
    %v9361 = vpack.c.b16 %v9317, %v9313
    %v9362 = vpack.c.b16 %v9318, %v9314
    %v9363 = vpack.c.b16 %v9319, %v9315
    %v9364 = vpack.c.b16 %v9324, %v9320
    %v9365 = vpack.c.b16 %v9325, %v9321
    %v9366 = vpack.c.b16 %v9326, %v9322
    %v9367 = vpack.c.b16 %v9327, %v9323
    %v9368 = vpack.c.b16 %v9332, %v9328
    %v9369 = vpack.c.b16 %v9333, %v9329
    %v9370 = vpack.c.b16 %v9334, %v9330
    %v9371 = vpack.c.b16 %v9335, %v9331
    %v9372 = vpack.c.b16 %v9340, %v9336
    %v9373 = vpack.c.b16 %v9341, %v9337
    %v9374 = vpack.c.b16 %v9342, %v9338
    %v9375 = vpack.c.b16 %v9343, %v9339
    %9408 = vmatpush.bf16.msra.mxu0 %v9372
    %9409 = vmatpush.bf16.msra.mxu0 %v9368
    %9410 = vmatpush.bf16.msra.mxu0 %v9364
    %9411 = vmatpush.bf16.msra.mxu0 %v9360
    %9412 = vmatpush.bf16.msra.mxu0 %v9356
    %9413 = vmatpush.bf16.msra.mxu0 %v9352
    %9414 = vmatpush.bf16.msra.mxu0 %v9348
    %9415 = vmatpush.bf16.msra.mxu0 %v9344
    %9416 = vmatmul.bf16.gmra.mxu0 %v9215
    %v9417 = vpop.f32.mrf.mxu0
    %v9418 = vadd.f32 0.0, %v9417
    %v9419 = vpop.f32.mrf.mxu0
    %9420 = vdwg.mxu0
    %9421 = vmatpush.bf16.msra.mxu0 %v9373
    %9422 = vmatpush.bf16.msra.mxu0 %v9369
    %9423 = vmatpush.bf16.msra.mxu0 %v9365
    %9424 = vmatpush.bf16.msra.mxu0 %v9361
    %9425 = vmatpush.bf16.msra.mxu0 %v9357
    %9426 = vmatpush.bf16.msra.mxu0 %v9353
    %9427 = vmatpush.bf16.msra.mxu0 %v9349
    %9428 = vmatpush.bf16.msra.mxu0 %v9345
    %9429 = vmatmul.bf16.gmra.mxu0 %v9215
    %v9430 = vpop.f32.mrf.mxu0
    %v9431 = vadd.f32 0.0, %v9430
    %v9432 = vpop.f32.mrf.mxu0
    %9433 = vdwg.mxu0
    %9434 = vmatpush.bf16.msra.mxu0 %v9374
    %9435 = vmatpush.bf16.msra.mxu0 %v9370
    %9436 = vmatpush.bf16.msra.mxu0 %v9366
    %9437 = vmatpush.bf16.msra.mxu0 %v9362
    %9438 = vmatpush.bf16.msra.mxu0 %v9358
    %9439 = vmatpush.bf16.msra.mxu0 %v9354
    %9440 = vmatpush.bf16.msra.mxu0 %v9350
    %9441 = vmatpush.bf16.msra.mxu0 %v9346
    %9442 = vmatmul.bf16.gmra.mxu0 %v9215
    %v9443 = vpop.f32.mrf.mxu0
    %v9444 = vadd.f32 0.0, %v9443
    %v9445 = vpop.f32.mrf.mxu0
    %9446 = vdwg.mxu0
    %9447 = vmatpush.bf16.msra.mxu0 %v9375
    %9448 = vmatpush.bf16.msra.mxu0 %v9371
    %9449 = vmatpush.bf16.msra.mxu0 %v9367
    %9450 = vmatpush.bf16.msra.mxu0 %v9363
    %9451 = vmatpush.bf16.msra.mxu0 %v9359
    %9452 = vmatpush.bf16.msra.mxu0 %v9355
    %9453 = vmatpush.bf16.msra.mxu0 %v9351
    %9454 = vmatpush.bf16.msra.mxu0 %v9347
    %9455 = vmatmul.bf16.gmra.mxu0 %v9215
    %v9456 = vpop.f32.mrf.mxu0
    %v9457 = vadd.f32 0.0, %v9456
    %v9458 = vpop.f32.mrf.mxu0
    %9459 = vdwg.mxu0
    %v9460 = vadd.f32 %v9211, %v9418
    %v9461 = vadd.f32 %v9212, %v9431
    %v9462 = vadd.f32 %v9213, %v9444
    %v9463 = vadd.f32 %v9214, %v9457
    %v9464 = vmul.f32 %v9460, 0.5
    %v9465 = vtanh.pop %v9464
    %v9466 = vmul.f32 %v9465, 0.5
    %v9467 = vadd.f32 %v9466, 0.5
    %v9468 = vmul.f32 %v9461, 0.5
    %v9469 = vtanh.pop %v9468
    %v9470 = vmul.f32 %v9469, 0.5
    %v9471 = vadd.f32 %v9470, 0.5
    %v9472 = vtanh.pop %v9462
    %v9473 = vmul.f32 %v9463, 0.5
    %v9474 = vtanh.pop %v9473
    %v9475 = vmul.f32 %v9474, 0.5
    %v9476 = vadd.f32 %v9475, 0.5
    %v9477 = vmul.f32 %v9471, %v8685
    %v9478 = vmul.f32 %v9467, %v9472
    %v9479 = vadd.f32 %v9477, %v9478
    %v9480 = vtanh.pop %v9479
    %v9481 = vmul.f32 %v9476, %v9480
    %v9482 = vpack.c.bf16 %v9481, %v9481
    %9483 = vst [vmem:[#allocation4] sm:$0xf] %v9482
    %v9484 = vld [vmem:[#allocation4] sm:$0xff]
    %v9485 = vld [vmem:[#allocation11] sm:$0xff]
    %v9486 = vld [vmem:[#allocation11 + $0x8] sm:$0xff]
    %v9487 = vld [vmem:[#allocation11 + $0x10] sm:$0xff]
    %v9488 = vld [vmem:[#allocation11 + $0x18] sm:$0xff]
    %v9489 = vld [vmem:[#allocation11 + $0x20] sm:$0xff]
    %v9490 = vld [vmem:[#allocation11 + $0x28] sm:$0xff]
    %v9491 = vld [vmem:[#allocation11 + $0x30] sm:$0xff]
    %v9492 = vld [vmem:[#allocation11 + $0x38] sm:$0xff]
    %v9493 = vld [vmem:[#allocation11 + $0x40] sm:$0xff]
    %v9494 = vld [vmem:[#allocation11 + $0x48] sm:$0xff]
    %v9495 = vld [vmem:[#allocation11 + $0x50] sm:$0xff]
    %v9496 = vld [vmem:[#allocation11 + $0x58] sm:$0xff]
    %v9497 = vld [vmem:[#allocation11 + $0x60] sm:$0xff]
    %v9498 = vld [vmem:[#allocation11 + $0x68] sm:$0xff]
    %v9499 = vld [vmem:[#allocation11 + $0x70] sm:$0xff]
    %v9500 = vld [vmem:[#allocation11 + $0x78] sm:$0xff]
    %v9501 = vld [vmem:[#allocation11 + $0x80] sm:$0xff]
    %v9502 = vld [vmem:[#allocation11 + $0x88] sm:$0xff]
    %v9503 = vld [vmem:[#allocation11 + $0x90] sm:$0xff]
    %v9504 = vld [vmem:[#allocation11 + $0x98] sm:$0xff]
    %v9505 = vld [vmem:[#allocation11 + $0xa0] sm:$0xff]
    %v9506 = vld [vmem:[#allocation11 + $0xa8] sm:$0xff]
    %v9507 = vld [vmem:[#allocation11 + $0xb0] sm:$0xff]
    %v9508 = vld [vmem:[#allocation11 + $0xb8] sm:$0xff]
    %v9509 = vld [vmem:[#allocation11 + $0xc0] sm:$0xff]
    %v9510 = vld [vmem:[#allocation11 + $0xc8] sm:$0xff]
    %v9511 = vld [vmem:[#allocation11 + $0xd0] sm:$0xff]
    %v9512 = vld [vmem:[#allocation11 + $0xd8] sm:$0xff]
    %v9513 = vld [vmem:[#allocation11 + $0xe0] sm:$0xff]
    %v9514 = vld [vmem:[#allocation11 + $0xe8] sm:$0xff]
    %v9515 = vld [vmem:[#allocation11 + $0xf0] sm:$0xff]
    %v9516 = vld [vmem:[#allocation11 + $0xf8] sm:$0xff]
    %v9517 = vld [vmem:[#allocation11 + $0x100] sm:$0xff]
    %v9518 = vld [vmem:[#allocation11 + $0x108] sm:$0xff]
    %v9519 = vld [vmem:[#allocation11 + $0x110] sm:$0xff]
    %v9520 = vld [vmem:[#allocation11 + $0x118] sm:$0xff]
    %v9521 = vld [vmem:[#allocation11 + $0x120] sm:$0xff]
    %v9522 = vld [vmem:[#allocation11 + $0x128] sm:$0xff]
    %v9523 = vld [vmem:[#allocation11 + $0x130] sm:$0xff]
    %v9524 = vld [vmem:[#allocation11 + $0x138] sm:$0xff]
    %v9525 = vld [vmem:[#allocation11 + $0x140] sm:$0xff]
    %v9526 = vld [vmem:[#allocation11 + $0x148] sm:$0xff]
    %v9527 = vld [vmem:[#allocation11 + $0x150] sm:$0xff]
    %v9528 = vld [vmem:[#allocation11 + $0x158] sm:$0xff]
    %v9529 = vld [vmem:[#allocation11 + $0x160] sm:$0xff]
    %v9530 = vld [vmem:[#allocation11 + $0x168] sm:$0xff]
    %v9531 = vld [vmem:[#allocation11 + $0x170] sm:$0xff]
    %v9532 = vld [vmem:[#allocation11 + $0x178] sm:$0xff]
    %v9533 = vld [vmem:[#allocation11 + $0x180] sm:$0xff]
    %v9534 = vld [vmem:[#allocation11 + $0x188] sm:$0xff]
    %v9535 = vld [vmem:[#allocation11 + $0x190] sm:$0xff]
    %v9536 = vld [vmem:[#allocation11 + $0x198] sm:$0xff]
    %v9537 = vld [vmem:[#allocation11 + $0x1a0] sm:$0xff]
    %v9538 = vld [vmem:[#allocation11 + $0x1a8] sm:$0xff]
    %v9539 = vld [vmem:[#allocation11 + $0x1b0] sm:$0xff]
    %v9540 = vld [vmem:[#allocation11 + $0x1b8] sm:$0xff]
    %v9541 = vld [vmem:[#allocation11 + $0x1c0] sm:$0xff]
    %v9542 = vld [vmem:[#allocation11 + $0x1c8] sm:$0xff]
    %v9543 = vld [vmem:[#allocation11 + $0x1d0] sm:$0xff]
    %v9544 = vld [vmem:[#allocation11 + $0x1d8] sm:$0xff]
    %v9545 = vld [vmem:[#allocation11 + $0x1e0] sm:$0xff]
    %v9546 = vld [vmem:[#allocation11 + $0x1e8] sm:$0xff]
    %v9547 = vld [vmem:[#allocation11 + $0x1f0] sm:$0xff]
    %v9548 = vld [vmem:[#allocation11 + $0x1f8] sm:$0xff]
    %v9550 = vunpack.c.l.b16 %v9484
    %v9551 = vunpack.c.h.b16 %v9484
    %v9552 = vpack.c.b16 %v9550, %v9550
    %v9553 = vpack.c.b16 %v9551, %v9551
    %v9620 = vunpack.c.l.b16 %v9485
    %v9621 = vunpack.c.h.b16 %v9485
    %v9622 = vunpack.c.l.b16 %v9486
    %v9623 = vunpack.c.h.b16 %v9486
    %v9624 = vunpack.c.l.b16 %v9487
    %v9625 = vunpack.c.h.b16 %v9487
    %v9626 = vunpack.c.l.b16 %v9488
    %v9627 = vunpack.c.h.b16 %v9488
    %v9628 = vunpack.c.l.b16 %v9489
    %v9629 = vunpack.c.h.b16 %v9489
    %v9630 = vunpack.c.l.b16 %v9490
    %v9631 = vunpack.c.h.b16 %v9490
    %v9632 = vunpack.c.l.b16 %v9491
    %v9633 = vunpack.c.h.b16 %v9491
    %v9634 = vunpack.c.l.b16 %v9492
    %v9635 = vunpack.c.h.b16 %v9492
    %v9636 = vunpack.c.l.b16 %v9493
    %v9637 = vunpack.c.h.b16 %v9493
    %v9638 = vunpack.c.l.b16 %v9494
    %v9639 = vunpack.c.h.b16 %v9494
    %v9640 = vunpack.c.l.b16 %v9495
    %v9641 = vunpack.c.h.b16 %v9495
    %v9642 = vunpack.c.l.b16 %v9496
    %v9643 = vunpack.c.h.b16 %v9496
    %v9644 = vunpack.c.l.b16 %v9497
    %v9645 = vunpack.c.h.b16 %v9497
    %v9646 = vunpack.c.l.b16 %v9498
    %v9647 = vunpack.c.h.b16 %v9498
    %v9648 = vunpack.c.l.b16 %v9499
    %v9649 = vunpack.c.h.b16 %v9499
    %v9650 = vunpack.c.l.b16 %v9500
    %v9651 = vunpack.c.h.b16 %v9500
    %v9652 = vunpack.c.l.b16 %v9501
    %v9653 = vunpack.c.h.b16 %v9501
    %v9654 = vunpack.c.l.b16 %v9502
    %v9655 = vunpack.c.h.b16 %v9502
    %v9656 = vunpack.c.l.b16 %v9503
    %v9657 = vunpack.c.h.b16 %v9503
    %v9658 = vunpack.c.l.b16 %v9504
    %v9659 = vunpack.c.h.b16 %v9504
    %v9660 = vunpack.c.l.b16 %v9505
    %v9661 = vunpack.c.h.b16 %v9505
    %v9662 = vunpack.c.l.b16 %v9506
    %v9663 = vunpack.c.h.b16 %v9506
    %v9664 = vunpack.c.l.b16 %v9507
    %v9665 = vunpack.c.h.b16 %v9507
    %v9666 = vunpack.c.l.b16 %v9508
    %v9667 = vunpack.c.h.b16 %v9508
    %v9668 = vunpack.c.l.b16 %v9509
    %v9669 = vunpack.c.h.b16 %v9509
    %v9670 = vunpack.c.l.b16 %v9510
    %v9671 = vunpack.c.h.b16 %v9510
    %v9672 = vunpack.c.l.b16 %v9511
    %v9673 = vunpack.c.h.b16 %v9511
    %v9674 = vunpack.c.l.b16 %v9512
    %v9675 = vunpack.c.h.b16 %v9512
    %v9676 = vunpack.c.l.b16 %v9513
    %v9677 = vunpack.c.h.b16 %v9513
    %v9678 = vunpack.c.l.b16 %v9514
    %v9679 = vunpack.c.h.b16 %v9514
    %v9680 = vunpack.c.l.b16 %v9515
    %v9681 = vunpack.c.h.b16 %v9515
    %v9682 = vunpack.c.l.b16 %v9516
    %v9683 = vunpack.c.h.b16 %v9516
    %v9684 = vunpack.c.l.b16 %v9517
    %v9685 = vunpack.c.h.b16 %v9517
    %v9686 = vunpack.c.l.b16 %v9518
    %v9687 = vunpack.c.h.b16 %v9518
    %v9688 = vunpack.c.l.b16 %v9519
    %v9689 = vunpack.c.h.b16 %v9519
    %v9690 = vunpack.c.l.b16 %v9520
    %v9691 = vunpack.c.h.b16 %v9520
    %v9692 = vunpack.c.l.b16 %v9521
    %v9693 = vunpack.c.h.b16 %v9521
    %v9694 = vunpack.c.l.b16 %v9522
    %v9695 = vunpack.c.h.b16 %v9522
    %v9696 = vunpack.c.l.b16 %v9523
    %v9697 = vunpack.c.h.b16 %v9523
    %v9698 = vunpack.c.l.b16 %v9524
    %v9699 = vunpack.c.h.b16 %v9524
    %v9700 = vunpack.c.l.b16 %v9525
    %v9701 = vunpack.c.h.b16 %v9525
    %v9702 = vunpack.c.l.b16 %v9526
    %v9703 = vunpack.c.h.b16 %v9526
    %v9704 = vunpack.c.l.b16 %v9527
    %v9705 = vunpack.c.h.b16 %v9527
    %v9706 = vunpack.c.l.b16 %v9528
    %v9707 = vunpack.c.h.b16 %v9528
    %v9708 = vunpack.c.l.b16 %v9529
    %v9709 = vunpack.c.h.b16 %v9529
    %v9710 = vunpack.c.l.b16 %v9530
    %v9711 = vunpack.c.h.b16 %v9530
    %v9712 = vunpack.c.l.b16 %v9531
    %v9713 = vunpack.c.h.b16 %v9531
    %v9714 = vunpack.c.l.b16 %v9532
    %v9715 = vunpack.c.h.b16 %v9532
    %v9716 = vunpack.c.l.b16 %v9533
    %v9717 = vunpack.c.h.b16 %v9533
    %v9718 = vunpack.c.l.b16 %v9534
    %v9719 = vunpack.c.h.b16 %v9534
    %v9720 = vunpack.c.l.b16 %v9535
    %v9721 = vunpack.c.h.b16 %v9535
    %v9722 = vunpack.c.l.b16 %v9536
    %v9723 = vunpack.c.h.b16 %v9536
    %v9724 = vunpack.c.l.b16 %v9537
    %v9725 = vunpack.c.h.b16 %v9537
    %v9726 = vunpack.c.l.b16 %v9538
    %v9727 = vunpack.c.h.b16 %v9538
    %v9728 = vunpack.c.l.b16 %v9539
    %v9729 = vunpack.c.h.b16 %v9539
    %v9730 = vunpack.c.l.b16 %v9540
    %v9731 = vunpack.c.h.b16 %v9540
    %v9732 = vunpack.c.l.b16 %v9541
    %v9733 = vunpack.c.h.b16 %v9541
    %v9734 = vunpack.c.l.b16 %v9542
    %v9735 = vunpack.c.h.b16 %v9542
    %v9736 = vunpack.c.l.b16 %v9543
    %v9737 = vunpack.c.h.b16 %v9543
    %v9738 = vunpack.c.l.b16 %v9544
    %v9739 = vunpack.c.h.b16 %v9544
    %v9740 = vunpack.c.l.b16 %v9545
    %v9741 = vunpack.c.h.b16 %v9545
    %v9742 = vunpack.c.l.b16 %v9546
    %v9743 = vunpack.c.h.b16 %v9546
    %v9744 = vunpack.c.l.b16 %v9547
    %v9745 = vunpack.c.h.b16 %v9547
    %v9746 = vunpack.c.l.b16 %v9548
    %v9747 = vunpack.c.h.b16 %v9548
    %v9748 = vpack.c.b16 %v9624, %v9620
    %v9749 = vpack.c.b16 %v9625, %v9621
    %v9750 = vpack.c.b16 %v9626, %v9622
    %v9751 = vpack.c.b16 %v9627, %v9623
    %v9752 = vpack.c.b16 %v9632, %v9628
    %v9753 = vpack.c.b16 %v9633, %v9629
    %v9754 = vpack.c.b16 %v9634, %v9630
    %v9755 = vpack.c.b16 %v9635, %v9631
    %v9756 = vpack.c.b16 %v9640, %v9636
    %v9757 = vpack.c.b16 %v9641, %v9637
    %v9758 = vpack.c.b16 %v9642, %v9638
    %v9759 = vpack.c.b16 %v9643, %v9639
    %v9760 = vpack.c.b16 %v9648, %v9644
    %v9761 = vpack.c.b16 %v9649, %v9645
    %v9762 = vpack.c.b16 %v9650, %v9646
    %v9763 = vpack.c.b16 %v9651, %v9647
    %v9764 = vpack.c.b16 %v9656, %v9652
    %v9765 = vpack.c.b16 %v9657, %v9653
    %v9766 = vpack.c.b16 %v9658, %v9654
    %v9767 = vpack.c.b16 %v9659, %v9655
    %v9768 = vpack.c.b16 %v9664, %v9660
    %v9769 = vpack.c.b16 %v9665, %v9661
    %v9770 = vpack.c.b16 %v9666, %v9662
    %v9771 = vpack.c.b16 %v9667, %v9663
    %v9772 = vpack.c.b16 %v9672, %v9668
    %v9773 = vpack.c.b16 %v9673, %v9669
    %v9774 = vpack.c.b16 %v9674, %v9670
    %v9775 = vpack.c.b16 %v9675, %v9671
    %v9776 = vpack.c.b16 %v9680, %v9676
    %v9777 = vpack.c.b16 %v9681, %v9677
    %v9778 = vpack.c.b16 %v9682, %v9678
    %v9779 = vpack.c.b16 %v9683, %v9679
    %v9780 = vpack.c.b16 %v9688, %v9684
    %v9781 = vpack.c.b16 %v9689, %v9685
    %v9782 = vpack.c.b16 %v9690, %v9686
    %v9783 = vpack.c.b16 %v9691, %v9687
    %v9784 = vpack.c.b16 %v9696, %v9692
    %v9785 = vpack.c.b16 %v9697, %v9693
    %v9786 = vpack.c.b16 %v9698, %v9694
    %v9787 = vpack.c.b16 %v9699, %v9695
    %v9788 = vpack.c.b16 %v9704, %v9700
    %v9789 = vpack.c.b16 %v9705, %v9701
    %v9790 = vpack.c.b16 %v9706, %v9702
    %v9791 = vpack.c.b16 %v9707, %v9703
    %v9792 = vpack.c.b16 %v9712, %v9708
    %v9793 = vpack.c.b16 %v9713, %v9709
    %v9794 = vpack.c.b16 %v9714, %v9710
    %v9795 = vpack.c.b16 %v9715, %v9711
    %v9796 = vpack.c.b16 %v9720, %v9716
    %v9797 = vpack.c.b16 %v9721, %v9717
    %v9798 = vpack.c.b16 %v9722, %v9718
    %v9799 = vpack.c.b16 %v9723, %v9719
    %v9800 = vpack.c.b16 %v9728, %v9724
    %v9801 = vpack.c.b16 %v9729, %v9725
    %v9802 = vpack.c.b16 %v9730, %v9726
    %v9803 = vpack.c.b16 %v9731, %v9727
    %v9804 = vpack.c.b16 %v9736, %v9732
    %v9805 = vpack.c.b16 %v9737, %v9733
    %v9806 = vpack.c.b16 %v9738, %v9734
    %v9807 = vpack.c.b16 %v9739, %v9735
    %v9808 = vpack.c.b16 %v9744, %v9740
    %v9809 = vpack.c.b16 %v9745, %v9741
    %v9810 = vpack.c.b16 %v9746, %v9742
    %v9811 = vpack.c.b16 %v9747, %v9743
    %9876 = vmatpush.bf16.msra.mxu0 %v9776
    %9877 = vmatpush.bf16.msra.mxu0 %v9772
    %9878 = vmatpush.bf16.msra.mxu0 %v9768
    %9879 = vmatpush.bf16.msra.mxu0 %v9764
    %9880 = vmatpush.bf16.msra.mxu0 %v9760
    %9881 = vmatpush.bf16.msra.mxu0 %v9756
    %9882 = vmatpush.bf16.msra.mxu0 %v9752
    %9883 = vmatpush.bf16.msra.mxu0 %v9748
    %9884 = vmatmul.bf16.gmra.mxu0 %v9552
    %v9885 = vpop.f32.mrf.mxu0
    %v9886 = vadd.f32 %v467, %v9885
    %v9887 = vpop.f32.mrf.mxu0
    %9888 = vdwg.mxu0
    %9889 = vmatpush.bf16.msra.mxu0 %v9808
    %9890 = vmatpush.bf16.msra.mxu0 %v9804
    %9891 = vmatpush.bf16.msra.mxu0 %v9800
    %9892 = vmatpush.bf16.msra.mxu0 %v9796
    %9893 = vmatpush.bf16.msra.mxu0 %v9792
    %9894 = vmatpush.bf16.msra.mxu0 %v9788
    %9895 = vmatpush.bf16.msra.mxu0 %v9784
    %9896 = vmatpush.bf16.msra.mxu0 %v9780
    %9897 = vmatmul.bf16.gmra.mxu0 %v9553
    %v9898 = vpop.f32.mrf.mxu0
    %v9899 = vadd.f32 %v9886, %v9898
    %v9900 = vpop.f32.mrf.mxu0
    %9901 = vdwg.mxu0
    %9902 = vmatpush.bf16.msra.mxu0 %v9777
    %9903 = vmatpush.bf16.msra.mxu0 %v9773
    %9904 = vmatpush.bf16.msra.mxu0 %v9769
    %9905 = vmatpush.bf16.msra.mxu0 %v9765
    %9906 = vmatpush.bf16.msra.mxu0 %v9761
    %9907 = vmatpush.bf16.msra.mxu0 %v9757
    %9908 = vmatpush.bf16.msra.mxu0 %v9753
    %9909 = vmatpush.bf16.msra.mxu0 %v9749
    %9910 = vmatmul.bf16.gmra.mxu0 %v9552
    %v9911 = vpop.f32.mrf.mxu0
    %v9912 = vadd.f32 %v468, %v9911
    %v9913 = vpop.f32.mrf.mxu0
    %9914 = vdwg.mxu0
    %9915 = vmatpush.bf16.msra.mxu0 %v9809
    %9916 = vmatpush.bf16.msra.mxu0 %v9805
    %9917 = vmatpush.bf16.msra.mxu0 %v9801
    %9918 = vmatpush.bf16.msra.mxu0 %v9797
    %9919 = vmatpush.bf16.msra.mxu0 %v9793
    %9920 = vmatpush.bf16.msra.mxu0 %v9789
    %9921 = vmatpush.bf16.msra.mxu0 %v9785
    %9922 = vmatpush.bf16.msra.mxu0 %v9781
    %9923 = vmatmul.bf16.gmra.mxu0 %v9553
    %v9924 = vpop.f32.mrf.mxu0
    %v9925 = vadd.f32 %v9912, %v9924
    %v9926 = vpop.f32.mrf.mxu0
    %9927 = vdwg.mxu0
    %9928 = vmatpush.bf16.msra.mxu0 %v9778
    %9929 = vmatpush.bf16.msra.mxu0 %v9774
    %9930 = vmatpush.bf16.msra.mxu0 %v9770
    %9931 = vmatpush.bf16.msra.mxu0 %v9766
    %9932 = vmatpush.bf16.msra.mxu0 %v9762
    %9933 = vmatpush.bf16.msra.mxu0 %v9758
    %9934 = vmatpush.bf16.msra.mxu0 %v9754
    %9935 = vmatpush.bf16.msra.mxu0 %v9750
    %9936 = vmatmul.bf16.gmra.mxu0 %v9552
    %v9937 = vpop.f32.mrf.mxu0
    %v9938 = vadd.f32 %v469, %v9937
    %v9939 = vpop.f32.mrf.mxu0
    %9940 = vdwg.mxu0
    %9941 = vmatpush.bf16.msra.mxu0 %v9810
    %9942 = vmatpush.bf16.msra.mxu0 %v9806
    %9943 = vmatpush.bf16.msra.mxu0 %v9802
    %9944 = vmatpush.bf16.msra.mxu0 %v9798
    %9945 = vmatpush.bf16.msra.mxu0 %v9794
    %9946 = vmatpush.bf16.msra.mxu0 %v9790
    %9947 = vmatpush.bf16.msra.mxu0 %v9786
    %9948 = vmatpush.bf16.msra.mxu0 %v9782
    %9949 = vmatmul.bf16.gmra.mxu0 %v9553
    %v9950 = vpop.f32.mrf.mxu0
    %v9951 = vadd.f32 %v9938, %v9950
    %v9952 = vpop.f32.mrf.mxu0
    %9953 = vdwg.mxu0
    %9954 = vmatpush.bf16.msra.mxu0 %v9779
    %9955 = vmatpush.bf16.msra.mxu0 %v9775
    %9956 = vmatpush.bf16.msra.mxu0 %v9771
    %9957 = vmatpush.bf16.msra.mxu0 %v9767
    %9958 = vmatpush.bf16.msra.mxu0 %v9763
    %9959 = vmatpush.bf16.msra.mxu0 %v9759
    %9960 = vmatpush.bf16.msra.mxu0 %v9755
    %9961 = vmatpush.bf16.msra.mxu0 %v9751
    %9962 = vmatmul.bf16.gmra.mxu0 %v9552
    %v9963 = vpop.f32.mrf.mxu0
    %v9964 = vadd.f32 %v470, %v9963
    %v9965 = vpop.f32.mrf.mxu0
    %9966 = vdwg.mxu0
    %9967 = vmatpush.bf16.msra.mxu0 %v9811
    %9968 = vmatpush.bf16.msra.mxu0 %v9807
    %9969 = vmatpush.bf16.msra.mxu0 %v9803
    %9970 = vmatpush.bf16.msra.mxu0 %v9799
    %9971 = vmatpush.bf16.msra.mxu0 %v9795
    %9972 = vmatpush.bf16.msra.mxu0 %v9791
    %9973 = vmatpush.bf16.msra.mxu0 %v9787
    %9974 = vmatpush.bf16.msra.mxu0 %v9783
    %9975 = vmatmul.bf16.gmra.mxu0 %v9553
    %v9976 = vpop.f32.mrf.mxu0
    %v9977 = vadd.f32 %v9964, %v9976
    %v9978 = vpop.f32.mrf.mxu0
    %9979 = vdwg.mxu0
    %v9980 = vmul.f32 %v9899, 0.5
    %v9981 = vtanh.pop %v9980
    %v9982 = vmul.f32 %v9981, 0.5
    %v9983 = vadd.f32 %v9982, 0.5
    %v9984 = vmul.f32 %v9925, 0.5
    %v9985 = vtanh.pop %v9984
    %v9986 = vmul.f32 %v9985, 0.5
    %v9987 = vadd.f32 %v9986, 0.5
    %v9988 = vtanh.pop %v9951
    %v9989 = vmul.f32 %v9977, 0.5
    %v9990 = vtanh.pop %v9989
    %v9991 = vmul.f32 %v9990, 0.5
    %v9992 = vadd.f32 %v9991, 0.5
    %v9993 = vmul.f32 %v9987, %v9201
    %v9994 = vmul.f32 %v9983, %v9988
    %v9995 = vadd.f32 %v9993, %v9994
    %v9996 = vtanh.pop %v9995
    %v9997 = vmul.f32 %v9992, %v9996
    %v9998 = vpack.c.bf16 %v9997, %v9997
    %9999 = vst [vmem:[#allocation4 + $0x4] sm:$0xf] %v9998
    %s10000 = scalar_lea.vmem [#allocation3], 88
    %10001 = vst [vmem:[%s10000] sm:$0xff] %v9997
    %v10002 = vld [vmem:[#allocation3] sm:$0xff]
    %v10003 = vld [vmem:[#allocation3 + $0x8] sm:$0xff]
    %v10004 = vld [vmem:[#allocation3 + $0x10] sm:$0xff]
    %v10005 = vld [vmem:[#allocation3 + $0x18] sm:$0xff]
    %v10006 = vld [vmem:[#allocation3 + $0x20] sm:$0xff]
    %v10007 = vld [vmem:[#allocation3 + $0x28] sm:$0xff]
    %v10008 = vld [vmem:[#allocation3 + $0x30] sm:$0xff]
    %v10009 = vld [vmem:[#allocation3 + $0x38] sm:$0xff]
    %v10010 = vld [vmem:[#allocation3 + $0x40] sm:$0xff]
    %v10011 = vld [vmem:[#allocation3 + $0x48] sm:$0xff]
    %v10012 = vld [vmem:[#allocation3 + $0x50] sm:$0xff]
    %v10013 = vld [vmem:[#allocation3 + $0x58] sm:$0xff]
    %v10014 = vpack.c.bf16 %v10003, %v10002
    %v10015 = vpack.c.bf16 %v10005, %v10004
    %v10016 = vpack.c.bf16 %v10007, %v10006
    %v10017 = vpack.c.bf16 %v10009, %v10008
    %v10018 = vpack.c.bf16 %v10011, %v10010
    %v10019 = vpack.c.bf16 %v10013, %v10012
    %v10020 = vld [vmem:[%s6] sm:$0xf]
    %v10021 = vld [vmem:[%s6 + $0x4] sm:$0xf]
    %v10022 = vld [vmem:[%s6 + $0x8] sm:$0xf]
    %v10023 = vld [vmem:[%s6 + $0xc] sm:$0xf]
    %v10024 = vld [vmem:[%s6 + $0x10] sm:$0xf]
    %v10025 = vld [vmem:[%s6 + $0x14] sm:$0xf]
    %v10026 = vld [vmem:[%s6 + $0x18] sm:$0xf]
    %v10027 = vld [vmem:[%s6 + $0x1c] sm:$0xf]
    %v10028 = vld [vmem:[%s6 + $0x20] sm:$0xf]
    %v10029 = vld [vmem:[%s6 + $0x24] sm:$0xf]
    %v10030 = vld [vmem:[%s6 + $0x28] sm:$0xf]
    %v10031 = vld [vmem:[%s6 + $0x2c] sm:$0xf]
    %v10032 = vld [vmem:[%s6 + $0x30] sm:$0xf]
    %v10033 = vld [vmem:[%s6 + $0x34] sm:$0xf]
    %v10034 = vld [vmem:[%s6 + $0x38] sm:$0xf]
    %v10035 = vld [vmem:[%s6 + $0x3c] sm:$0xf]
    %v10036 = vld [vmem:[%s7] sm:$0x1]
    %v10038 = vperm.slane %v10036, 0
    %v10056 = vunpack.c.l.b16 %v10020
    %v10057 = vunpack.c.l.b16 %v10021
    %v10058 = vunpack.c.l.b16 %v10022
    %v10059 = vunpack.c.l.b16 %v10023
    %v10060 = vunpack.c.l.b16 %v10024
    %v10061 = vunpack.c.l.b16 %v10025
    %v10062 = vunpack.c.l.b16 %v10026
    %v10063 = vunpack.c.l.b16 %v10027
    %v10064 = vunpack.c.l.b16 %v10028
    %v10065 = vunpack.c.l.b16 %v10029
    %v10066 = vunpack.c.l.b16 %v10030
    %v10067 = vunpack.c.l.b16 %v10031
    %v10068 = vunpack.c.l.b16 %v10032
    %v10069 = vunpack.c.l.b16 %v10033
    %v10070 = vunpack.c.l.b16 %v10034
    %v10071 = vunpack.c.l.b16 %v10035
    %v10072 = vpack.c.b16 %v10057, %v10056
    %v10073 = vpack.c.b16 %v10059, %v10058
    %v10074 = vpack.c.b16 %v10061, %v10060
    %v10075 = vpack.c.b16 %v10063, %v10062
    %v10076 = vpack.c.b16 %v10065, %v10064
    %v10077 = vpack.c.b16 %v10067, %v10066
    %v10078 = vpack.c.b16 %v10069, %v10068
    %v10079 = vpack.c.b16 %v10071, %v10070
    %10088 = vmatpush.bf16.msra.mxu0 %v10079
    %10089 = vmatpush.bf16.msra.mxu0 %v10078
    %10090 = vmatpush.bf16.msra.mxu0 %v10077
    %10091 = vmatpush.bf16.msra.mxu0 %v10076
    %10092 = vmatpush.bf16.msra.mxu0 %v10075
    %10093 = vmatpush.bf16.msra.mxu0 %v10074
    %10094 = vmatpush.bf16.msra.mxu0 %v10073
    %10095 = vmatpush.bf16.msra.mxu0 %v10072
    %10096 = vmatmul.bf16.gmra.mxu0 %v10014
    %v10097 = vpop.f32.mrf.mxu0
    %v10098 = vadd.f32 %v10038, %v10097
    %v10099 = vpop.f32.mrf.mxu0
    %v10100 = vadd.f32 %v10038, %v10099
    %10101 = vmatmul.bf16.gmra.mxu0 %v10015
    %v10102 = vpop.f32.mrf.mxu0
    %v10103 = vadd.f32 %v10038, %v10102
    %v10104 = vpop.f32.mrf.mxu0
    %v10105 = vadd.f32 %v10038, %v10104
    %10106 = vmatmul.bf16.gmra.mxu0 %v10016
    %v10107 = vpop.f32.mrf.mxu0
    %v10108 = vadd.f32 %v10038, %v10107
    %v10109 = vpop.f32.mrf.mxu0
    %v10110 = vadd.f32 %v10038, %v10109
    %10111 = vmatmul.bf16.gmra.mxu0 %v10017
    %v10112 = vpop.f32.mrf.mxu0
    %v10113 = vadd.f32 %v10038, %v10112
    %v10114 = vpop.f32.mrf.mxu0
    %v10115 = vadd.f32 %v10038, %v10114
    %10116 = vmatmul.bf16.gmra.mxu0 %v10018
    %v10117 = vpop.f32.mrf.mxu0
    %v10118 = vadd.f32 %v10038, %v10117
    %v10119 = vpop.f32.mrf.mxu0
    %v10120 = vadd.f32 %v10038, %v10119
    %10121 = vmatmul.bf16.gmra.mxu0 %v10019
    %v10122 = vpop.f32.mrf.mxu0
    %v10123 = vadd.f32 %v10038, %v10122
    %v10124 = vpop.f32.mrf.mxu0
    %v10125 = vadd.f32 %v10038, %v10124
    %10126 = vdwg.mxu0
    %v10127 = vlaneseq
    %v10128 = vand.u32 %v10127, 127
    %vm10129 = vcmp.lt.s32.totalorder %v10128, 2
    %v10130 = vmax.f32 %v10098, 0.0
    %v10131 = vmax.f32 %v10100, 0.0
    %v10132 = vmax.f32 %v10103, 0.0
    %v10133 = vmax.f32 %v10105, 0.0
    %v10134 = vmax.f32 %v10108, 0.0
    %v10135 = vmax.f32 %v10110, 0.0
    %v10136 = vmax.f32 %v10113, 0.0
    %v10137 = vmax.f32 %v10115, 0.0
    %v10138 = vmax.f32 %v10118, 0.0
    %v10139 = vmax.f32 %v10120, 0.0
    %v10140 = vmax.f32 %v10123, 0.0
    %v10141 = vmax.f32 %v10125, 0.0
    %vm10142 = vcmp.ne.f32.partialorder %v10098, %v10098
    %vm10143 = vcmp.ne.f32.partialorder %v10100, %v10100
    %vm10144 = vcmp.ne.f32.partialorder %v10103, %v10103
    %vm10145 = vcmp.ne.f32.partialorder %v10105, %v10105
    %vm10146 = vcmp.ne.f32.partialorder %v10108, %v10108
    %vm10147 = vcmp.ne.f32.partialorder %v10110, %v10110
    %vm10148 = vcmp.ne.f32.partialorder %v10113, %v10113
    %vm10149 = vcmp.ne.f32.partialorder %v10115, %v10115
    %vm10150 = vcmp.ne.f32.partialorder %v10118, %v10118
    %vm10151 = vcmp.ne.f32.partialorder %v10120, %v10120
    %vm10152 = vcmp.ne.f32.partialorder %v10123, %v10123
    %vm10153 = vcmp.ne.f32.partialorder %v10125, %v10125
    %v10154 = vadd.f32 %v10098, 0.0
    %v10155 = vadd.f32 %v10100, 0.0
    %v10156 = vadd.f32 %v10103, 0.0
    %v10157 = vadd.f32 %v10105, 0.0
    %v10158 = vadd.f32 %v10108, 0.0
    %v10159 = vadd.f32 %v10110, 0.0
    %v10160 = vadd.f32 %v10113, 0.0
    %v10161 = vadd.f32 %v10115, 0.0
    %v10162 = vadd.f32 %v10118, 0.0
    %v10163 = vadd.f32 %v10120, 0.0
    %v10164 = vadd.f32 %v10123, 0.0
    %v10165 = vadd.f32 %v10125, 0.0
    %v10166 = vand.u32 2147483647, %v10098
    %v10167 = vand.u32 2147483647, %v10100
    %v10168 = vand.u32 2147483647, %v10103
    %v10169 = vand.u32 2147483647, %v10105
    %v10170 = vand.u32 2147483647, %v10108
    %v10171 = vand.u32 2147483647, %v10110
    %v10172 = vand.u32 2147483647, %v10113
    %v10173 = vand.u32 2147483647, %v10115
    %v10174 = vand.u32 2147483647, %v10118
    %v10175 = vand.u32 2147483647, %v10120
    %v10176 = vand.u32 2147483647, %v10123
    %v10177 = vand.u32 2147483647, %v10125
    %v10178 = vsub.f32 0.0, %v10166
    %v10179 = vsub.f32 0.0, %v10167
    %v10180 = vsub.f32 0.0, %v10168
    %v10181 = vsub.f32 0.0, %v10169
    %v10182 = vsub.f32 0.0, %v10170
    %v10183 = vsub.f32 0.0, %v10171
    %v10184 = vsub.f32 0.0, %v10172
    %v10185 = vsub.f32 0.0, %v10173
    %v10186 = vsub.f32 0.0, %v10174
    %v10187 = vsub.f32 0.0, %v10175
    %v10188 = vsub.f32 0.0, %v10176
    %v10189 = vsub.f32 0.0, %v10177
    %v10190 = vmul.f32 %v10178, 1.442695
    %v10191 = vpow.pop %v10190
    %v10192 = vmul.f32 %v10179, 1.442695
    %v10193 = vpow.pop %v10192
    %v10194 = vmul.f32 %v10180, 1.442695
    %v10195 = vpow.pop %v10194
    %v10196 = vmul.f32 %v10181, 1.442695
    %v10197 = vpow.pop %v10196
    %v10198 = vmul.f32 %v10182, 1.442695
    %v10199 = vpow.pop %v10198
    %v10200 = vmul.f32 %v10183, 1.442695
    %v10201 = vpow.pop %v10200
    %v10202 = vmul.f32 %v10184, 1.442695
    %v10203 = vpow.pop %v10202
    %v10204 = vmul.f32 %v10185, 1.442695
    %v10205 = vpow.pop %v10204
    %v10206 = vmul.f32 %v10186, 1.442695
    %v10207 = vpow.pop %v10206
    %v10208 = vmul.f32 %v10187, 1.442695
    %v10209 = vpow.pop %v10208
    %v10210 = vmul.f32 %v10188, 1.442695
    %v10211 = vpow.pop %v10210
    %v10212 = vmul.f32 %v10189, 1.442695
    %v10213 = vpow.pop %v10212
    %v10214 = vadd.f32 %v10191, 1.0
    %v10215 = vlog2.pop %v10214
    %v10216 = vmul.f32 %v10215, 0.6931472
    %v10217 = vmul.f32 -0.5, %v10191
    %v10218 = vadd.f32 %v10217, 1.0
    %v10219 = vmul.f32 %v10218, %v10191
    %v10220 = vand.u32 2147483647, %v10191
    %vm10221 = vcmp.lt.f32.partialorder %v10220, 0.0004427343
    %v10222 = vsel %vm10221, %v10219, %v10216
    %v10223 = vadd.f32 %v10193, 1.0
    %v10224 = vlog2.pop %v10223
    %v10225 = vmul.f32 %v10224, 0.6931472
    %v10226 = vmul.f32 -0.5, %v10193
    %v10227 = vadd.f32 %v10226, 1.0
    %v10228 = vmul.f32 %v10227, %v10193
    %v10229 = vand.u32 2147483647, %v10193
    %vm10230 = vcmp.lt.f32.partialorder %v10229, 0.0004427343
    %v10231 = vsel %vm10230, %v10228, %v10225
    %v10232 = vadd.f32 %v10195, 1.0
    %v10233 = vlog2.pop %v10232
    %v10234 = vmul.f32 %v10233, 0.6931472
    %v10235 = vmul.f32 -0.5, %v10195
    %v10236 = vadd.f32 %v10235, 1.0
    %v10237 = vmul.f32 %v10236, %v10195
    %v10238 = vand.u32 2147483647, %v10195
    %vm10239 = vcmp.lt.f32.partialorder %v10238, 0.0004427343
    %v10240 = vsel %vm10239, %v10237, %v10234
    %v10241 = vadd.f32 %v10197, 1.0
    %v10242 = vlog2.pop %v10241
    %v10243 = vmul.f32 %v10242, 0.6931472
    %v10244 = vmul.f32 -0.5, %v10197
    %v10245 = vadd.f32 %v10244, 1.0
    %v10246 = vmul.f32 %v10245, %v10197
    %v10247 = vand.u32 2147483647, %v10197
    %vm10248 = vcmp.lt.f32.partialorder %v10247, 0.0004427343
    %v10249 = vsel %vm10248, %v10246, %v10243
    %v10250 = vadd.f32 %v10199, 1.0
    %v10251 = vlog2.pop %v10250
    %v10252 = vmul.f32 %v10251, 0.6931472
    %v10253 = vmul.f32 -0.5, %v10199
    %v10254 = vadd.f32 %v10253, 1.0
    %v10255 = vmul.f32 %v10254, %v10199
    %v10256 = vand.u32 2147483647, %v10199
    %vm10257 = vcmp.lt.f32.partialorder %v10256, 0.0004427343
    %v10258 = vsel %vm10257, %v10255, %v10252
    %v10259 = vadd.f32 %v10201, 1.0
    %v10260 = vlog2.pop %v10259
    %v10261 = vmul.f32 %v10260, 0.6931472
    %v10262 = vmul.f32 -0.5, %v10201
    %v10263 = vadd.f32 %v10262, 1.0
    %v10264 = vmul.f32 %v10263, %v10201
    %v10265 = vand.u32 2147483647, %v10201
    %vm10266 = vcmp.lt.f32.partialorder %v10265, 0.0004427343
    %v10267 = vsel %vm10266, %v10264, %v10261
    %v10268 = vadd.f32 %v10203, 1.0
    %v10269 = vlog2.pop %v10268
    %v10270 = vmul.f32 %v10269, 0.6931472
    %v10271 = vmul.f32 -0.5, %v10203
    %v10272 = vadd.f32 %v10271, 1.0
    %v10273 = vmul.f32 %v10272, %v10203
    %v10274 = vand.u32 2147483647, %v10203
    %vm10275 = vcmp.lt.f32.partialorder %v10274, 0.0004427343
    %v10276 = vsel %vm10275, %v10273, %v10270
    %v10277 = vadd.f32 %v10205, 1.0
    %v10278 = vlog2.pop %v10277
    %v10279 = vmul.f32 %v10278, 0.6931472
    %v10280 = vmul.f32 -0.5, %v10205
    %v10281 = vadd.f32 %v10280, 1.0
    %v10282 = vmul.f32 %v10281, %v10205
    %v10283 = vand.u32 2147483647, %v10205
    %vm10284 = vcmp.lt.f32.partialorder %v10283, 0.0004427343
    %v10285 = vsel %vm10284, %v10282, %v10279
    %v10286 = vadd.f32 %v10207, 1.0
    %v10287 = vlog2.pop %v10286
    %v10288 = vmul.f32 %v10287, 0.6931472
    %v10289 = vmul.f32 -0.5, %v10207
    %v10290 = vadd.f32 %v10289, 1.0
    %v10291 = vmul.f32 %v10290, %v10207
    %v10292 = vand.u32 2147483647, %v10207
    %vm10293 = vcmp.lt.f32.partialorder %v10292, 0.0004427343
    %v10294 = vsel %vm10293, %v10291, %v10288
    %v10295 = vadd.f32 %v10209, 1.0
    %v10296 = vlog2.pop %v10295
    %v10297 = vmul.f32 %v10296, 0.6931472
    %v10298 = vmul.f32 -0.5, %v10209
    %v10299 = vadd.f32 %v10298, 1.0
    %v10300 = vmul.f32 %v10299, %v10209
    %v10301 = vand.u32 2147483647, %v10209
    %vm10302 = vcmp.lt.f32.partialorder %v10301, 0.0004427343
    %v10303 = vsel %vm10302, %v10300, %v10297
    %v10304 = vadd.f32 %v10211, 1.0
    %v10305 = vlog2.pop %v10304
    %v10306 = vmul.f32 %v10305, 0.6931472
    %v10307 = vmul.f32 -0.5, %v10211
    %v10308 = vadd.f32 %v10307, 1.0
    %v10309 = vmul.f32 %v10308, %v10211
    %v10310 = vand.u32 2147483647, %v10211
    %vm10311 = vcmp.lt.f32.partialorder %v10310, 0.0004427343
    %v10312 = vsel %vm10311, %v10309, %v10306
    %v10313 = vadd.f32 %v10213, 1.0
    %v10314 = vlog2.pop %v10313
    %v10315 = vmul.f32 %v10314, 0.6931472
    %v10316 = vmul.f32 -0.5, %v10213
    %v10317 = vadd.f32 %v10316, 1.0
    %v10318 = vmul.f32 %v10317, %v10213
    %v10319 = vand.u32 2147483647, %v10213
    %vm10320 = vcmp.lt.f32.partialorder %v10319, 0.0004427343
    %v10321 = vsel %vm10320, %v10318, %v10315
    %v10322 = vadd.f32 %v10130, %v10222
    %v10323 = vadd.f32 %v10131, %v10231
    %v10324 = vadd.f32 %v10132, %v10240
    %v10325 = vadd.f32 %v10133, %v10249
    %v10326 = vadd.f32 %v10134, %v10258
    %v10327 = vadd.f32 %v10135, %v10267
    %v10328 = vadd.f32 %v10136, %v10276
    %v10329 = vadd.f32 %v10137, %v10285
    %v10330 = vadd.f32 %v10138, %v10294
    %v10331 = vadd.f32 %v10139, %v10303
    %v10332 = vadd.f32 %v10140, %v10312
    %v10333 = vadd.f32 %v10141, %v10321
    %v10334 = vsel %vm10142, %v10154, %v10322
    %v10335 = vsel %vm10143, %v10155, %v10323
    %v10336 = vsel %vm10144, %v10156, %v10324
    %v10337 = vsel %vm10145, %v10157, %v10325
    %v10338 = vsel %vm10146, %v10158, %v10326
    %v10339 = vsel %vm10147, %v10159, %v10327
    %v10340 = vsel %vm10148, %v10160, %v10328
    %v10341 = vsel %vm10149, %v10161, %v10329
    %v10342 = vsel %vm10150, %v10162, %v10330
    %v10343 = vsel %vm10151, %v10163, %v10331
    %v10344 = vsel %vm10152, %v10164, %v10332
    %v10345 = vsel %vm10153, %v10165, %v10333
    %v10346 = vsel %vm10129, %v10098, %v10334
    %v10347 = vsel %vm10129, %v10100, %v10335
    %v10348 = vsel %vm10129, %v10103, %v10336
    %v10349 = vsel %vm10129, %v10105, %v10337
    %v10350 = vsel %vm10129, %v10108, %v10338
    %v10351 = vsel %vm10129, %v10110, %v10339
    %v10352 = vsel %vm10129, %v10113, %v10340
    %v10353 = vsel %vm10129, %v10115, %v10341
    %v10354 = vsel %vm10129, %v10118, %v10342
    %v10355 = vsel %vm10129, %v10120, %v10343
    %v10356 = vsel %vm10129, %v10123, %v10344
    %v10357 = vsel %vm10129, %v10125, %v10345
    %v10358 = vld [vmem:[#allocation14] sm:$0xff]
    %v10359 = vmul.f32 %v10346, %v10358
    %v10360 = vmul.f32 %v10347, %v10358
    %v10361 = vmul.f32 %v10348, %v10358
    %v10362 = vmul.f32 %v10349, %v10358
    %v10363 = vmul.f32 %v10350, %v10358
    %v10364 = vmul.f32 %v10351, %v10358
    %v10365 = vmul.f32 %v10352, %v10358
    %v10366 = vmul.f32 %v10353, %v10358
    %v10367 = vmul.f32 %v10354, %v10358
    %v10368 = vmul.f32 %v10355, %v10358
    %v10369 = vmul.f32 %v10356, %v10358
    %v10370 = vmul.f32 %v10357, %v10358
    %v10371 = vld [vmem:[#allocation16] sm:$0xff]
    %v10372 = vadd.f32 %v10359, %v10371
    %v10373 = vadd.f32 %v10360, %v10371
    %v10374 = vadd.f32 %v10361, %v10371
    %v10375 = vadd.f32 %v10362, %v10371
    %v10376 = vadd.f32 %v10363, %v10371
    %v10377 = vadd.f32 %v10364, %v10371
    %v10378 = vadd.f32 %v10365, %v10371
    %v10379 = vadd.f32 %v10366, %v10371
    %v10380 = vadd.f32 %v10367, %v10371
    %v10381 = vadd.f32 %v10368, %v10371
    %v10382 = vadd.f32 %v10369, %v10371
    %v10383 = vadd.f32 %v10370, %v10371
    %10384 = vst [vmem:[#allocation17] sm:$0xff] %v10372
    %10385 = vst [vmem:[#allocation17 + $0x8] sm:$0xff] %v10373
    %10386 = vst [vmem:[#allocation17 + $0x10] sm:$0xff] %v10374
    %10387 = vst [vmem:[#allocation17 + $0x18] sm:$0xff] %v10375
    %10388 = vst [vmem:[#allocation17 + $0x20] sm:$0xff] %v10376
    %10389 = vst [vmem:[#allocation17 + $0x28] sm:$0xff] %v10377
    %10390 = vst [vmem:[#allocation17 + $0x30] sm:$0xff] %v10378
    %10391 = vst [vmem:[#allocation17 + $0x38] sm:$0xff] %v10379
    %10392 = vst [vmem:[#allocation17 + $0x40] sm:$0xff] %v10380
    %10393 = vst [vmem:[#allocation17 + $0x48] sm:$0xff] %v10381
    %10394 = vst [vmem:[#allocation17 + $0x50] sm:$0xff] %v10382
    %10395 = vst [vmem:[#allocation17 + $0x58] sm:$0xff] %v10383
    // Predicated region
    $region70: #{tpu_custom_call.1} parent=1 // pred_check
      _
    $region71: #{tpu_custom_call.1} parent=1 // pred_check_branch
      %10397 = sbr.rel (0) target = $region73
    $region72: #{tpu_custom_call.1} parent=1 // pred_region
      %10399 = vsyncadd [#allocation7], 0
      %s10400 = sshll.u32 [#allocation17], 4
      %s10401 = int_to_ptr.vmem [resolvable:$true] %s10400
      %s10402 = sshll.u32 %s10, 4
      %s10403 = int_to_ptr.hbm [resolvable:$true] %s10402
      %10408 = dma.vmem_to_hbm [thread:$0]  %s10401, 1536, %s10403, [#allocation7], 128, 128, 8
    $region73: #{tpu_custom_call.1} parent=1 // pred_fallthru
      _
    // Predicated region
    $region74: #{tpu_custom_call.1} parent=1 // pred_check
      _
    $region75: #{tpu_custom_call.1} parent=1 // pred_check_branch
      %10410 = sbr.rel (0) target = $region77
    $region76: #{tpu_custom_call.1} parent=1 // pred_region
      %10412 = dma.done [#allocation7], 1536
    $region77: #{tpu_custom_call.1} parent=1 // pred_fallthru
      _
    %10413 = vsyncpa [#allocation6], 1
    %10414 = vsyncpa [#allocation9], 1
    %10415 = vsyncpa [#allocation12], 1
    %10416 = vsyncpa [#allocation15], 1
    %10417 = vsyncpa [#allocation7], 1

</llo_original>
